<compile_context>
chip_gen: v5e
topology: v5e:2x2
jax: 0.10.0
libtpu: 0.0.40
codegen_flags: <defaults>
</compile_context>

<pallas_src>
import functools

import jax
import jax.numpy as jnp
from jax.experimental import pallas as pl
from jax.experimental.pallas import tpu as pltpu


_MAX_TK = 16384              # reduction tile: 16384x128 bf16 weight tile = 4 MiB
_MAX_TM = 1024               # row tile for the im2col matmuls
_MAX_X_TILE_BYTES = 2 << 20  # cap on the bf16 activation tile (per buffer)


def _round_up(x, m):
    return (x + m - 1) // m * m


def _pick_tk(k):
    return min(_MAX_TK, _round_up(k, 128))


def _pick_tm(m, tk):
    cap = max(8, (_MAX_X_TILE_BYTES // (tk * 2)) // 8 * 8)
    return min(_MAX_TM, _round_up(m, 8), cap)


# -----------------------------------------------------------------------------
# Kernel 1: out = act(x @ w + b)   (used for conv1/conv2 im2col matmuls)
# Grid = (M tiles, N tiles, K tiles); K last, "arbitrary"; partial sums
# accumulate directly into the resident output block (no scratch accumulator).
# -----------------------------------------------------------------------------
def _matmul_bias_act_kernel(x_ref, w_ref, b_ref, o_ref, *, apply_relu, n_k):
    def epilogue(acc):
        y = acc + b_ref[...]
        if apply_relu:
            y = jnp.maximum(y, 0.0)
        return y.astype(o_ref.dtype)

    if n_k == 1:
        acc = jnp.dot(x_ref[...], w_ref[...], preferred_element_type=jnp.float32)
        o_ref[...] = epilogue(acc)
    else:
        k = pl.program_id(2)  # top level only (safe on Mosaic and interpret)

        @pl.when(k == 0)
        def _():
            o_ref[...] = jnp.zeros(o_ref.shape, o_ref.dtype)

        o_ref[...] += jnp.dot(x_ref[...], w_ref[...],
                              preferred_element_type=jnp.float32)

        @pl.when(k == n_k - 1)
        def _():
            o_ref[...] = epilogue(o_ref[...])


# -----------------------------------------------------------------------------
# Kernel 2: fused head  out = (mask * relu(x @ w1 + b1)) @ w2 + b2
# (fc1 + dropout + fc2 in one kernel; mask is a pre-scaled keep mask).
# -----------------------------------------------------------------------------
def _fc_head_kernel(x_ref, w1_ref, b1_ref, mask_ref, w2_ref, b2_ref, o_ref, *,
                    n_k):
    def epilogue(acc):
        h = jnp.maximum(acc + b1_ref[...], 0.0)          # fc1 bias + ReLU
        h = h * mask_ref[...]                            # inverted dropout
        y = jnp.dot(h.astype(jnp.bfloat16), w2_ref[...],
                    preferred_element_type=jnp.float32) + b2_ref[...]
        return y.astype(o_ref.dtype)

    if n_k == 1:
        acc = jnp.dot(x_ref[...], w1_ref[...], preferred_element_type=jnp.float32)
        o_ref[...] = epilogue(acc)
    else:
        k = pl.program_id(2)

        @pl.when(k == 0)
        def _():
            o_ref[...] = jnp.zeros(o_ref.shape, o_ref.dtype)

        o_ref[...] += jnp.dot(x_ref[...], w1_ref[...],
                              preferred_element_type=jnp.float32)

        @pl.when(k == n_k - 1)
        def _():
            o_ref[...] = epilogue(o_ref[...])


# -----------------------------------------------------------------------------
# Wrappers
# -----------------------------------------------------------------------------
def fused_linear(x, w_pad, b_pad, *, n_out, apply_relu, out_dtype=jnp.float32):
    """x: (M, K); w_pad: (Kp, Np) bf16 pre-padded; b_pad: (1, Np) f32."""
    M, K = x.shape
    Kp, Np = w_pad.shape
    tk = _pick_tk(K)
    tn = 128
    assert Kp == _round_up(K, tk) and Np == _round_up(n_out, tn), \
        "weights must be prepared with prepare_params"
    tm = _pick_tm(M, tk)
    Mp = _round_up(M, tm)
    n_k = Kp // tk
    out_dtype = jnp.dtype(out_dtype)
    if n_k > 1:
        # Multi-step K accumulates into the resident output block -> needs f32.
        assert out_dtype == jnp.dtype(jnp.float32)

    xp = x.astype(jnp.bfloat16)
    if (Mp, Kp) != (M, K):
        xp = jnp.pad(xp, ((0, Mp - M), (0, Kp - K)))

    out = pl.pallas_call(
        functools.partial(_matmul_bias_act_kernel,
                          apply_relu=apply_relu, n_k=n_k),
        out_shape=jax.ShapeDtypeStruct((Mp, Np), out_dtype),
        grid_spec=pltpu.PrefetchScalarGridSpec(
            num_scalar_prefetch=0,
            grid=(Mp // tm, Np // tn, n_k),
            in_specs=[
                pl.BlockSpec((tm, tk), lambda i, j, k: (i, k)),
                pl.BlockSpec((tk, tn), lambda i, j, k: (k, j)),
                pl.BlockSpec((1, tn), lambda i, j, k: (0, j)),
            ],
            out_specs=pl.BlockSpec((tm, tn), lambda i, j, k: (i, j)),
        ),
        compiler_params=pltpu.CompilerParams(
            dimension_semantics=("parallel", "parallel", "arbitrary")),
    )(xp, w_pad, b_pad)
    return out[:M, :n_out]


def fc_head(x, w1_pad, b1_pad, mask, w2_pad, b2_pad, *, n_classes):
    """Fused fc1 (+ReLU) + dropout-mask + fc2 (+bias)."""
    M, K = x.shape
    Kp, hidden = w1_pad.shape
    h2, ncp = w2_pad.shape
    assert hidden == 128 and h2 == hidden and ncp == 128
    tk = _pick_tk(K)
    assert Kp == _round_up(K, tk)
    tm = _pick_tm(M, tk)
    Mp = _round_up(M, tm)
    n_k = Kp // tk

    xp = x.astype(jnp.bfloat16)
    if (Mp, Kp) != (M, K):
        xp = jnp.pad(xp, ((0, Mp - M), (0, Kp - K)))
    maskp = mask.astype(jnp.float32)
    if maskp.shape != (Mp, hidden):
        maskp = jnp.pad(maskp, ((0, Mp - maskp.shape[0]),
                                (0, hidden - maskp.shape[1])))

    # TODO(synk): on v7x, split K across a leading size-2 "parallel" (core)
    # axis with two partial outputs summed outside, so both TensorCores stream
    # half of the fc1 weight; the (Mp//tm, 1, n_k) grid below uses one core.
    out = pl.pallas_call(
        functools.partial(_fc_head_kernel, n_k=n_k),
        out_shape=jax.ShapeDtypeStruct((Mp, ncp), jnp.float32),
        grid_spec=pltpu.PrefetchScalarGridSpec(
            num_scalar_prefetch=0,
            grid=(Mp // tm, 1, n_k),
            in_specs=[
                pl.BlockSpec((tm, tk), lambda i, j, k: (i, k)),        # x
                pl.BlockSpec((tk, hidden), lambda i, j, k: (k, 0)),    # w1
                pl.BlockSpec((1, hidden), lambda i, j, k: (0, 0)),     # b1
                pl.BlockSpec((tm, hidden), lambda i, j, k: (i, 0)),    # mask
                pl.BlockSpec((hidden, ncp), lambda i, j, k: (0, 0)),   # w2
                pl.BlockSpec((1, ncp), lambda i, j, k: (0, 0)),        # b2
            ],
            out_specs=pl.BlockSpec((tm, ncp), lambda i, j, k: (i, 0)),
        ),
        compiler_params=pltpu.CompilerParams(
            dimension_semantics=("parallel", "parallel", "arbitrary")),
    )(xp, w1_pad, b1_pad, maskp, w2_pad, b2_pad)
    return out[:M, :n_classes]


# -----------------------------------------------------------------------------
# Conv2d(3x3, pad=1) as im2col (glue, bf16) + Pallas fused matmul (hot path).
# -----------------------------------------------------------------------------
def im2col_3x3_pad1(x_nhwc):
    """x: (B, H, W, C) -> patches (B*H*W, C*9), column order (ci, kh, kw)."""
    B, H, W, C = x_nhwc.shape
    xp = jnp.pad(x_nhwc, ((0, 0), (1, 1), (1, 1), (0, 0)))
    taps = [xp[:, i:i + H, j:j + W, :] for i in range(3) for j in range(3)]
    patches = jnp.stack(taps, axis=-1)            # (B, H, W, C, 9)
    return patches.reshape(B * H * W, C * 9)


def conv3x3_relu(x_nhwc, w_pad, b_pad, *, n_out):
    """w_pad: tile-padded (Cin*9 -> Kp, Cout -> 128) bf16; returns NHWC bf16."""
    B, H, W, _ = x_nhwc.shape
    # TODO(synk): fold im2col into the Pallas kernel (9 shifted-tap matmuls on
    # a resident NHWC tile) to avoid materializing the patch matrix in HBM;
    # for now patches are emitted in bf16 to halve that traffic.
    patches = im2col_3x3_pad1(x_nhwc.astype(jnp.bfloat16))
    y = fused_linear(patches, w_pad, b_pad, n_out=n_out, apply_relu=True,
                     out_dtype=jnp.bfloat16)
    return y.reshape(B, H, W, n_out)


# -----------------------------------------------------------------------------
# Full model forward.
# -----------------------------------------------------------------------------
def cnn_model_forward(x_nchw, prepared, *, num_classes, dropout_prob,
                      dropout_seed, training=True):
    x = jnp.transpose(x_nchw, (0, 2, 3, 1))                         # NCHW->NHWC
    x = conv3x3_relu(x, prepared["conv1_wm"], prepared["conv1_b"], n_out=32)
    x = conv3x3_relu(x, prepared["conv2_wm"], prepared["conv2_b"], n_out=64)
    B, H, W, C = x.shape
    # Flatten directly in NHWC order; fc1's weight columns were permuted once
    # at parameter-prep time to match (removes the runtime NCHW transpose).
    x = x.reshape(B, H * W * C)

    hidden = prepared["fc1_wm"].shape[1]                             # 128
    if training and dropout_prob > 0.0:
        key = jax.random.PRNGKey(dropout_seed)
        keep = jax.random.bernoulli(key, 1.0 - dropout_prob, (B, hidden))
        mask = keep.astype(jnp.float32) / (1.0 - dropout_prob)
    else:
        mask = jnp.ones((B, hidden), jnp.float32)

    return fc_head(x, prepared["fc1_wm"], prepared["fc1_b"], mask,
                   prepared["fc2_wm"], prepared["fc2_b"],
                   n_classes=num_classes)


# -----------------------------------------------------------------------------
# Parameters (PyTorch layouts) and one-time preparation for the kernels.
# -----------------------------------------------------------------------------
def init_params(key, in_ch, hw, num_classes):
    """Parameters in PyTorch layouts (Conv2d OIHW, Linear (out, in))."""
    H, W = hw
    flat = 64 * H * W
    ks = jax.random.split(key, 8)
    scale = 0.02
    return {
        "conv1_w": scale * jax.random.normal(ks[0], (32, in_ch, 3, 3), jnp.float32),
        "conv1_b": scale * jax.random.normal(ks[1], (32,), jnp.float32),
        "conv2_w": scale * jax.random.normal(ks[2], (64, 32, 3, 3), jnp.float32),
        "conv2_b": scale * jax.random.normal(ks[3], (64,), jnp.float32),
        "fc1_w": scale * jax.random.normal(ks[4], (128, flat), jnp.float32),
        "fc1_b": scale * jax.random.normal(ks[5], (128,), jnp.float32),
        "fc2_w": scale * jax.random.normal(ks[6], (num_classes, 128), jnp.float32),
        "fc2_b": scale * jax.random.normal(ks[7], (num_classes,), jnp.float32),
    }


def _prep_linear(w_t, b):
    """w_t: (K, N) in x@w orientation -> bf16 (Kp, Np) weight + f32 (1, Np) bias,
    zero-padded once to the kernel's tile multiples (no per-forward pad copies)."""
    K, N = w_t.shape
    tk = _pick_tk(K)
    Kp, Np = _round_up(K, tk), _round_up(N, 128)
    wp = jnp.pad(w_t.astype(jnp.bfloat16), ((0, Kp - K), (0, Np - N)))
    bp = jnp.pad(b.astype(jnp.float32), (0, Np - N)).reshape(1, Np)
    return wp, bp


def prepare_params(params, H, W):
    """One-time reshape/permute/pad/cast of PyTorch-layout params."""
    conv1_wm, conv1_b = _prep_linear(params["conv1_w"].reshape(32, -1).T,
                                     params["conv1_b"])
    conv2_wm, conv2_b = _prep_linear(params["conv2_w"].reshape(64, -1).T,
                                     params["conv2_b"])
    fc1_w = params["fc1_w"]                       # (128, 64*H*W), NCHW-flatten cols
    n_hidden = fc1_w.shape[0]
    fc1_w_nhwc = (fc1_w.reshape(n_hidden, 64, H, W)
                  .transpose(0, 2, 3, 1)
                  .reshape(n_hidden, 64 * H * W))  # cols in NHWC-flatten order
    fc1_wm, fc1_b = _prep_linear(fc1_w_nhwc.T, params["fc1_b"])
    fc2_wm, fc2_b = _prep_linear(params["fc2_w"].T, params["fc2_b"])
    return {
        "conv1_wm": conv1_wm, "conv1_b": conv1_b,
        "conv2_wm": conv2_wm, "conv2_b": conv2_b,
        "fc1_wm": fc1_wm, "fc1_b": fc1_b,
        "fc2_wm": fc2_wm, "fc2_b": fc2_b,
    }


if __name__ == "__main__":
    key = jax.random.PRNGKey(0)
    k_x, k_p = jax.random.split(key)

    B, C, H, W = 2, 1, 16, 16
    num_classes = 10
    dropout_prob = 0.5

    x = jax.random.normal(k_x, (B, C, H, W), jnp.float32)
    params = init_params(k_p, C, (H, W), num_classes)
    prepared = prepare_params(params, H, W)

    fwd = jax.jit(functools.partial(cnn_model_forward,
                                    num_classes=num_classes,
                                    dropout_prob=dropout_prob,
                                    dropout_seed=1234,
                                    training=True))
    out = jax.block_until_ready(fwd(x, prepared))

    assert out.shape == (B, num_classes), out.shape
    assert bool(jnp.all(jnp.isfinite(out)))
    print("KERNEL_OK")
</pallas_src>

<mosaic_0001>
module attributes {stable_mosaic.version = 11 : i64} {
  func.func @_matmul_bias_act_kernel(%arg0: i32, %arg1: i32, %arg2: i32, %arg3: memref<512x128xbf16, #tpu.memory_space<vmem>>, %arg4: memref<128x128xbf16, #tpu.memory_space<vmem>>, %arg5: memref<1x128xf32, #tpu.memory_space<vmem>>, %arg6: memref<512x128xbf16, #tpu.memory_space<vmem>>) attributes {dimension_semantics = [#tpu.dimension_semantics<parallel>, #tpu.dimension_semantics<parallel>, #tpu.dimension_semantics<arbitrary>], iteration_bounds = array<i64: 1, 1, 1>, scalar_prefetch = 0 : i64, scratch_operands = 0 : i64, tpu.core_type = #tpu.core_type<tc>, window_params = [{transform_indices = @transform_0, window_bounds = array<i64: 512, 128>}, {transform_indices = @transform_1, window_bounds = array<i64: 128, 128>}, {transform_indices = @transform_2, window_bounds = array<i64: 1, 128>}, {transform_indices = @transform_3, window_bounds = array<i64: 512, 128>}]} {
    %c0 = arith.constant 0 : index
    %c0_0 = arith.constant 0 : index
    %0 = vector.load %arg3[%c0, %c0_0] : memref<512x128xbf16, #tpu.memory_space<vmem>>, vector<512x128xbf16>
    %c0_1 = arith.constant 0 : index
    %c0_2 = arith.constant 0 : index
    %1 = vector.load %arg4[%c0_1, %c0_2] : memref<128x128xbf16, #tpu.memory_space<vmem>>, vector<128x128xbf16>
    %cst = arith.constant dense<0.000000e+00> : vector<512x128xf32>
    %2 = tpu.matmul %0, %1, %cst {dimension_numbers = #tpu.dot_dimension_numbers<[1], [0], [0], [1], [0, 0, 1, 1], [], []>} : vector<512x128xbf16>, vector<128x128xbf16>, vector<512x128xf32> -> vector<512x128xf32>
    %c0_3 = arith.constant 0 : index
    %c0_4 = arith.constant 0 : index
    %3 = vector.load %arg5[%c0_3, %c0_4] : memref<1x128xf32, #tpu.memory_space<vmem>>, vector<1x128xf32>
    %4 = vector.broadcast %3 : vector<1x128xf32> to vector<512x128xf32>
    %5 = arith.addf %2, %4 : vector<512x128xf32>
    %cst_5 = arith.constant 0.000000e+00 : f32
    %6 = vector.broadcast %cst_5 : f32 to vector<512x128xf32>
    %7 = arith.maximumf %5, %6 : vector<512x128xf32>
    %8 = arith.truncf %7 : vector<512x128xf32> to vector<512x128xbf16>
    %c0_6 = arith.constant 0 : index
    %c0_7 = arith.constant 0 : index
    %9 = vector.load %arg6[%c0_6, %c0_7] : memref<512x128xbf16, #tpu.memory_space<vmem>>, vector<512x128xbf16>
    tpu.vector_store %arg6[%c0_6, %c0_7], %8 {strides = array<i32>} : memref<512x128xbf16, #tpu.memory_space<vmem>>, vector<512x128xbf16>,
    return
  }
  func.func @transform_0(%arg0: i32, %arg1: i32, %arg2: i32) -> (i32, i32) {
    %c0_i32 = arith.constant 0 : i32
    return %arg0, %arg2 : i32, i32
  }
  func.func @transform_1(%arg0: i32, %arg1: i32, %arg2: i32) -> (i32, i32) {
    %c0_i32 = arith.constant 0 : i32
    return %arg2, %arg1 : i32, i32
  }
  func.func @transform_2(%arg0: i32, %arg1: i32, %arg2: i32) -> (i32, i32) {
    %c0_i32 = arith.constant 0 : i32
    %c0_i32_0 = arith.constant 0 : i32
    return %c0_i32, %arg1 : i32, i32
  }
  func.func @transform_3(%arg0: i32, %arg1: i32, %arg2: i32) -> (i32, i32) {
    %c0_i32 = arith.constant 0 : i32
    return %arg0, %arg1 : i32, i32
  }
}

module attributes {stable_mosaic.version = 11 : i64} {
  func.func @_matmul_bias_act_kernel(%arg0: i32, %arg1: i32, %arg2: i32, %arg3: memref<512x384xbf16, #tpu.memory_space<vmem>>, %arg4: memref<384x128xbf16, #tpu.memory_space<vmem>>, %arg5: memref<1x128xf32, #tpu.memory_space<vmem>>, %arg6: memref<512x128xbf16, #tpu.memory_space<vmem>>) attributes {dimension_semantics = [#tpu.dimension_semantics<parallel>, #tpu.dimension_semantics<parallel>, #tpu.dimension_semantics<arbitrary>], iteration_bounds = array<i64: 1, 1, 1>, scalar_prefetch = 0 : i64, scratch_operands = 0 : i64, tpu.core_type = #tpu.core_type<tc>, window_params = [{transform_indices = @transform_0, window_bounds = array<i64: 512, 384>}, {transform_indices = @transform_1, window_bounds = array<i64: 384, 128>}, {transform_indices = @transform_2, window_bounds = array<i64: 1, 128>}, {transform_indices = @transform_3, window_bounds = array<i64: 512, 128>}]} {
    %c0 = arith.constant 0 : index
    %c0_0 = arith.constant 0 : index
    %0 = vector.load %arg3[%c0, %c0_0] : memref<512x384xbf16, #tpu.memory_space<vmem>>, vector<512x384xbf16>
    %c0_1 = arith.constant 0 : index
    %c0_2 = arith.constant 0 : index
    %1 = vector.load %arg4[%c0_1, %c0_2] : memref<384x128xbf16, #tpu.memory_space<vmem>>, vector<384x128xbf16>
    %cst = arith.constant dense<0.000000e+00> : vector<512x128xf32>
    %2 = tpu.matmul %0, %1, %cst {dimension_numbers = #tpu.dot_dimension_numbers<[1], [0], [0], [1], [0, 0, 1, 1], [], []>} : vector<512x384xbf16>, vector<384x128xbf16>, vector<512x128xf32> -> vector<512x128xf32>
    %c0_3 = arith.constant 0 : index
    %c0_4 = arith.constant 0 : index
    %3 = vector.load %arg5[%c0_3, %c0_4] : memref<1x128xf32, #tpu.memory_space<vmem>>, vector<1x128xf32>
    %4 = vector.broadcast %3 : vector<1x128xf32> to vector<512x128xf32>
    %5 = arith.addf %2, %4 : vector<512x128xf32>
    %cst_5 = arith.constant 0.000000e+00 : f32
    %6 = vector.broadcast %cst_5 : f32 to vector<512x128xf32>
    %7 = arith.maximumf %5, %6 : vector<512x128xf32>
    %8 = arith.truncf %7 : vector<512x128xf32> to vector<512x128xbf16>
    %c0_6 = arith.constant 0 : index
    %c0_7 = arith.constant 0 : index
    %9 = vector.load %arg6[%c0_6, %c0_7] : memref<512x128xbf16, #tpu.memory_space<vmem>>, vector<512x128xbf16>
    tpu.vector_store %arg6[%c0_6, %c0_7], %8 {strides = array<i32>} : memref<512x128xbf16, #tpu.memory_space<vmem>>, vector<512x128xbf16>,
    return
  }
  func.func @transform_0(%arg0: i32, %arg1: i32, %arg2: i32) -> (i32, i32) {
    %c0_i32 = arith.constant 0 : i32
    return %arg0, %arg2 : i32, i32
  }
  func.func @transform_1(%arg0: i32, %arg1: i32, %arg2: i32) -> (i32, i32) {
    %c0_i32 = arith.constant 0 : i32
    return %arg2, %arg1 : i32, i32
  }
  func.func @transform_2(%arg0: i32, %arg1: i32, %arg2: i32) -> (i32, i32) {
    %c0_i32 = arith.constant 0 : i32
    %c0_i32_0 = arith.constant 0 : i32
    return %c0_i32, %arg1 : i32, i32
  }
  func.func @transform_3(%arg0: i32, %arg1: i32, %arg2: i32) -> (i32, i32) {
    %c0_i32 = arith.constant 0 : i32
    return %arg0, %arg1 : i32, i32
  }
}

module attributes {stable_mosaic.version = 11 : i64} {
  func.func @_fc_head_kernel(%arg0: i32, %arg1: i32, %arg2: i32, %arg3: memref<8x16384xbf16, #tpu.memory_space<vmem>>, %arg4: memref<16384x128xbf16, #tpu.memory_space<vmem>>, %arg5: memref<1x128xf32, #tpu.memory_space<vmem>>, %arg6: memref<8x128xf32, #tpu.memory_space<vmem>>, %arg7: memref<128x128xbf16, #tpu.memory_space<vmem>>, %arg8: memref<1x128xf32, #tpu.memory_space<vmem>>, %arg9: memref<8x128xf32, #tpu.memory_space<vmem>>) attributes {dimension_semantics = [#tpu.dimension_semantics<parallel>, #tpu.dimension_semantics<parallel>, #tpu.dimension_semantics<arbitrary>], iteration_bounds = array<i64: 1, 1, 1>, scalar_prefetch = 0 : i64, scratch_operands = 0 : i64, tpu.core_type = #tpu.core_type<tc>, window_params = [{transform_indices = @transform_0, window_bounds = array<i64: 8, 16384>}, {transform_indices = @transform_1, window_bounds = array<i64: 16384, 128>}, {pipeline_mode = #tpu.pipeline_mode<synchronous>, transform_indices = @transform_2, window_bounds = array<i64: 1, 128>}, {transform_indices = @transform_3, window_bounds = array<i64: 8, 128>}, {pipeline_mode = #tpu.pipeline_mode<synchronous>, transform_indices = @transform_4, window_bounds = array<i64: 128, 128>}, {pipeline_mode = #tpu.pipeline_mode<synchronous>, transform_indices = @transform_5, window_bounds = array<i64: 1, 128>}, {transform_indices = @transform_6, window_bounds = array<i64: 8, 128>}]} {
    %c0 = arith.constant 0 : index
    %c0_0 = arith.constant 0 : index
    %0 = vector.load %arg3[%c0, %c0_0] : memref<8x16384xbf16, #tpu.memory_space<vmem>>, vector<8x16384xbf16>
    %c0_1 = arith.constant 0 : index
    %c0_2 = arith.constant 0 : index
    %1 = vector.load %arg4[%c0_1, %c0_2] : memref<16384x128xbf16, #tpu.memory_space<vmem>>, vector<16384x128xbf16>
    %cst = arith.constant dense<0.000000e+00> : vector<8x128xf32>
    %2 = tpu.matmul %0, %1, %cst {dimension_numbers = #tpu.dot_dimension_numbers<[1], [0], [0], [1], [0, 0, 1, 1], [], []>} : vector<8x16384xbf16>, vector<16384x128xbf16>, vector<8x128xf32> -> vector<8x128xf32>
    %c0_3 = arith.constant 0 : index
    %c0_4 = arith.constant 0 : index
    %3 = vector.load %arg5[%c0_3, %c0_4] : memref<1x128xf32, #tpu.memory_space<vmem>>, vector<1x128xf32>
    %4 = vector.broadcast %3 : vector<1x128xf32> to vector<8x128xf32>
    %5 = arith.addf %2, %4 : vector<8x128xf32>
    %cst_5 = arith.constant 0.000000e+00 : f32
    %6 = vector.broadcast %cst_5 : f32 to vector<8x128xf32>
    %7 = arith.maximumf %5, %6 : vector<8x128xf32>
    %c0_6 = arith.constant 0 : index
    %c0_7 = arith.constant 0 : index
    %8 = vector.load %arg6[%c0_6, %c0_7] : memref<8x128xf32, #tpu.memory_space<vmem>>, vector<8x128xf32>
    %9 = arith.mulf %7, %8 : vector<8x128xf32>
    %10 = arith.truncf %9 : vector<8x128xf32> to vector<8x128xbf16>
    %c0_8 = arith.constant 0 : index
    %c0_9 = arith.constant 0 : index
    %11 = vector.load %arg7[%c0_8, %c0_9] : memref<128x128xbf16, #tpu.memory_space<vmem>>, vector<128x128xbf16>
    %cst_10 = arith.constant dense<0.000000e+00> : vector<8x128xf32>
    %12 = tpu.matmul %10, %11, %cst_10 {dimension_numbers = #tpu.dot_dimension_numbers<[1], [0], [0], [1], [0, 0, 1, 1], [], []>} : vector<8x128xbf16>, vector<128x128xbf16>, vector<8x128xf32> -> vector<8x128xf32>
    %c0_11 = arith.constant 0 : index
    %c0_12 = arith.constant 0 : index
    %13 = vector.load %arg8[%c0_11, %c0_12] : memref<1x128xf32, #tpu.memory_space<vmem>>, vector<1x128xf32>
    %14 = vector.broadcast %13 : vector<1x128xf32> to vector<8x128xf32>
    %15 = arith.addf %12, %14 : vector<8x128xf32>
    %c0_13 = arith.constant 0 : index
    %c0_14 = arith.constant 0 : index
    %16 = vector.load %arg9[%c0_13, %c0_14] : memref<8x128xf32, #tpu.memory_space<vmem>>, vector<8x128xf32>
    tpu.vector_store %arg9[%c0_13, %c0_14], %15 {strides = array<i32>} : memref<8x128xf32, #tpu.memory_space<vmem>>, vector<8x128xf32>,
    return
  }
  func.func @transform_0(%arg0: i32, %arg1: i32, %arg2: i32) -> (i32, i32) {
    %c0_i32 = arith.constant 0 : i32
    return %arg0, %arg2 : i32, i32
  }
  func.func @transform_1(%arg0: i32, %arg1: i32, %arg2: i32) -> (i32, i32) {
    %c0_i32 = arith.constant 0 : i32
    %c0_i32_0 = arith.constant 0 : i32
    return %arg2, %c0_i32 : i32, i32
  }
  func.func @transform_2(%arg0: i32, %arg1: i32, %arg2: i32) -> (i32, i32) {
    %c0_i32 = arith.constant 0 : i32
    %c0_i32_0 = arith.constant 0 : i32
    %c0_i32_1 = arith.constant 0 : i32
    return %c0_i32, %c0_i32_0 : i32, i32
  }
  func.func @transform_3(%arg0: i32, %arg1: i32, %arg2: i32) -> (i32, i32) {
    %c0_i32 = arith.constant 0 : i32
    %c0_i32_0 = arith.constant 0 : i32
    return %arg0, %c0_i32 : i32, i32
  }
  func.func @transform_4(%arg0: i32, %arg1: i32, %arg2: i32) -> (i32, i32) {
    %c0_i32 = arith.constant 0 : i32
    %c0_i32_0 = arith.constant 0 : i32
    %c0_i32_1 = arith.constant 0 : i32
    return %c0_i32, %c0_i32_0 : i32, i32
  }
  func.func @transform_5(%arg0: i32, %arg1: i32, %arg2: i32) -> (i32, i32) {
    %c0_i32 = arith.constant 0 : i32
    %c0_i32_0 = arith.constant 0 : i32
    %c0_i32_1 = arith.constant 0 : i32
    return %c0_i32, %c0_i32_0 : i32, i32
  }
  func.func @transform_6(%arg0: i32, %arg1: i32, %arg2: i32) -> (i32, i32) {
    %c0_i32 = arith.constant 0 : i32
    %c0_i32_0 = arith.constant 0 : i32
    return %arg0, %c0_i32 : i32, i32
  }
}

</mosaic_0001>

<llo_original>
// kernel: cnn_model_forward.3
$region0: #{cnn_model_forward.3}
  #allocation0 [shape = 'u32[]', space=smem, size = 0x4, offset = 0x4, fixed_abs, tag = 'smem constant byte address 0x4 - core index']
  #allocation1 [shape = 'u32[72,128]{1,0:T(1,128)}', space=vmem, size = 0x9000, scoped, tag = 'internal scratch']
  %s0 = inlined_call_operand.vmem [shape: bf16[512,128], index: 0, kind: input, shape index: {}]
  %s1 = inlined_call_operand.hbm [shape: bf16[128,128], index: 1, kind: input, shape index: {}]
  %s2 = inlined_call_operand.hbm [shape: f32[1,128], index: 2, kind: input, shape index: {}]
  %s3 = inlined_call_operand.vmem [shape: bf16[512,128], index: 3, kind: output, shape index: {}]
  %s4 = sld [smem:[#allocation0]]
  $region30: #{cnn_model_forward.3} parent=0
    _
  %s6 = ssub.s32 1, %s4
  %s7 = scalar_select 0, %s6, %s4
  $region1: #{cnn_model_forward.3} parent=0
    #allocation2 [shape = 'u8[32768]{0}', space=vmem, size = 0x8000, scoped, tag = 'input window, operand 1, single buffered']
    #allocation3 [shape = 's32[1]{0}', space=sflag, size = 0x4, scoped, tag = 'scoped memory for cnn_model_forward.3']
    #allocation4 [shape = 'u8[512]{0}', space=vmem, size = 0x400, scoped, tag = 'input window, operand 2, single buffered']
    #allocation5 [shape = 's32[1]{0}', space=sflag, size = 0x4, scoped, tag = 'scoped memory for cnn_model_forward.3']
    %8 = vsyncpa [#allocation3], 0
    %9 = vsyncpa [#allocation5], 0
    // Predicated region
    $region2: #{cnn_model_forward.3} parent=1 // pred_check
      _
    $region3: #{cnn_model_forward.3} parent=1 // pred_check_branch
      %11 = sbr.rel (0) target = $region5
    $region4: #{cnn_model_forward.3} parent=1 // pred_region
      _
    $region5: #{cnn_model_forward.3} parent=1 // pred_fallthru
      _
    // Predicated region
    $region6: #{cnn_model_forward.3} parent=1 // pred_check
      _
    $region7: #{cnn_model_forward.3} parent=1 // pred_check_branch
      %13 = sbr.rel (0) target = $region9
    $region8: #{cnn_model_forward.3} parent=1 // pred_region
      %15 = vsyncadd [#allocation3], 0
      %s16 = sshll.u32 %s1, 4
      %s17 = int_to_ptr.hbm [resolvable:$true] %s16
      %s18 = sshll.u32 [#allocation2], 4
      %s19 = int_to_ptr.vmem [resolvable:$true] %s18
      %24 = dma.hbm_to_vmem [thread:$0]  %s17, 1024, %s19, [#allocation3], 64, 64, 4
    $region9: #{cnn_model_forward.3} parent=1 // pred_fallthru
      _
    // Predicated region
    $region10: #{cnn_model_forward.3} parent=1 // pred_check
      _
    $region11: #{cnn_model_forward.3} parent=1 // pred_check_branch
      %26 = sbr.rel (0) target = $region13
    $region12: #{cnn_model_forward.3} parent=1 // pred_region
      %28 = vsyncadd [#allocation5], 0
      %s30 = sshll.u32 %s2, 4
      %s31 = int_to_ptr.hbm [resolvable:$true] %s30
      %s32 = sshll.u32 [#allocation4], 4
      %s33 = int_to_ptr.vmem [resolvable:$true] %s32
      %35 = dma.hbm_to_vmem [thread:$0]  %s31, 16, %s33, [#allocation5]
    $region13: #{cnn_model_forward.3} parent=1 // pred_fallthru
      _
    // Predicated region
    $region14: #{cnn_model_forward.3} parent=1 // pred_check
      _
    $region15: #{cnn_model_forward.3} parent=1 // pred_check_branch
      %37 = sbr.rel (0) target = $region17
    $region16: #{cnn_model_forward.3} parent=1 // pred_region
      %39 = dma.done [#allocation3], 1024
    $region17: #{cnn_model_forward.3} parent=1 // pred_fallthru
      _
    // Predicated region
    $region18: #{cnn_model_forward.3} parent=1 // pred_check
      _
    $region19: #{cnn_model_forward.3} parent=1 // pred_check_branch
      %41 = sbr.rel (0) target = $region21
    $region20: #{cnn_model_forward.3} parent=1 // pred_region
      %43 = dma.done [#allocation5], 16
    $region21: #{cnn_model_forward.3} parent=1 // pred_fallthru
      _
    %v44 = vld [vmem:[%s0] sm:$0xf]
    %v45 = vld [vmem:[%s0 + $0x4] sm:$0xf]
    %v46 = vld [vmem:[%s0 + $0x8] sm:$0xf]
    %v47 = vld [vmem:[%s0 + $0xc] sm:$0xf]
    %v48 = vld [vmem:[%s0 + $0x10] sm:$0xf]
    %v49 = vld [vmem:[%s0 + $0x14] sm:$0xf]
    %v50 = vld [vmem:[%s0 + $0x18] sm:$0xf]
    %v51 = vld [vmem:[%s0 + $0x1c] sm:$0xf]
    %v52 = vld [vmem:[%s0 + $0x20] sm:$0xf]
    %v53 = vld [vmem:[%s0 + $0x24] sm:$0xf]
    %v54 = vld [vmem:[%s0 + $0x28] sm:$0xf]
    %v55 = vld [vmem:[%s0 + $0x2c] sm:$0xf]
    %v56 = vld [vmem:[%s0 + $0x30] sm:$0xf]
    %v57 = vld [vmem:[%s0 + $0x34] sm:$0xf]
    %v58 = vld [vmem:[%s0 + $0x38] sm:$0xf]
    %v59 = vld [vmem:[%s0 + $0x3c] sm:$0xf]
    %v60 = vld [vmem:[%s0 + $0x40] sm:$0xf]
    %v61 = vld [vmem:[%s0 + $0x44] sm:$0xf]
    %v62 = vld [vmem:[%s0 + $0x48] sm:$0xf]
    %v63 = vld [vmem:[%s0 + $0x4c] sm:$0xf]
    %v64 = vld [vmem:[%s0 + $0x50] sm:$0xf]
    %v65 = vld [vmem:[%s0 + $0x54] sm:$0xf]
    %v66 = vld [vmem:[%s0 + $0x58] sm:$0xf]
    %v67 = vld [vmem:[%s0 + $0x5c] sm:$0xf]
    %v68 = vld [vmem:[%s0 + $0x60] sm:$0xf]
    %v69 = vld [vmem:[%s0 + $0x64] sm:$0xf]
    %v70 = vld [vmem:[%s0 + $0x68] sm:$0xf]
    %v71 = vld [vmem:[%s0 + $0x6c] sm:$0xf]
    %v72 = vld [vmem:[%s0 + $0x70] sm:$0xf]
    %v73 = vld [vmem:[%s0 + $0x74] sm:$0xf]
    %v74 = vld [vmem:[%s0 + $0x78] sm:$0xf]
    %v75 = vld [vmem:[%s0 + $0x7c] sm:$0xf]
    %v76 = vld [vmem:[%s0 + $0x80] sm:$0xf]
    %v77 = vld [vmem:[%s0 + $0x84] sm:$0xf]
    %v78 = vld [vmem:[%s0 + $0x88] sm:$0xf]
    %v79 = vld [vmem:[%s0 + $0x8c] sm:$0xf]
    %v80 = vld [vmem:[%s0 + $0x90] sm:$0xf]
    %v81 = vld [vmem:[%s0 + $0x94] sm:$0xf]
    %v82 = vld [vmem:[%s0 + $0x98] sm:$0xf]
    %v83 = vld [vmem:[%s0 + $0x9c] sm:$0xf]
    %v84 = vld [vmem:[%s0 + $0xa0] sm:$0xf]
    %v85 = vld [vmem:[%s0 + $0xa4] sm:$0xf]
    %v86 = vld [vmem:[%s0 + $0xa8] sm:$0xf]
    %v87 = vld [vmem:[%s0 + $0xac] sm:$0xf]
    %v88 = vld [vmem:[%s0 + $0xb0] sm:$0xf]
    %v89 = vld [vmem:[%s0 + $0xb4] sm:$0xf]
    %v90 = vld [vmem:[%s0 + $0xb8] sm:$0xf]
    %v91 = vld [vmem:[%s0 + $0xbc] sm:$0xf]
    %v92 = vld [vmem:[%s0 + $0xc0] sm:$0xf]
    %v93 = vld [vmem:[%s0 + $0xc4] sm:$0xf]
    %v94 = vld [vmem:[%s0 + $0xc8] sm:$0xf]
    %v95 = vld [vmem:[%s0 + $0xcc] sm:$0xf]
    %v96 = vld [vmem:[%s0 + $0xd0] sm:$0xf]
    %v97 = vld [vmem:[%s0 + $0xd4] sm:$0xf]
    %v98 = vld [vmem:[%s0 + $0xd8] sm:$0xf]
    %v99 = vld [vmem:[%s0 + $0xdc] sm:$0xf]
    %v100 = vld [vmem:[%s0 + $0xe0] sm:$0xf]
    %v101 = vld [vmem:[%s0 + $0xe4] sm:$0xf]
    %v102 = vld [vmem:[%s0 + $0xe8] sm:$0xf]
    %v103 = vld [vmem:[%s0 + $0xec] sm:$0xf]
    %v104 = vld [vmem:[%s0 + $0xf0] sm:$0xf]
    %v105 = vld [vmem:[%s0 + $0xf4] sm:$0xf]
    %v106 = vld [vmem:[%s0 + $0xf8] sm:$0xf]
    %v107 = vld [vmem:[%s0 + $0xfc] sm:$0xf]
    %v108 = vld [vmem:[#allocation2] sm:$0xf]
    %v109 = vld [vmem:[#allocation2 + $0x4] sm:$0xf]
    %v110 = vld [vmem:[#allocation2 + $0x8] sm:$0xf]
    %v111 = vld [vmem:[#allocation2 + $0xc] sm:$0xf]
    %v112 = vld [vmem:[#allocation2 + $0x10] sm:$0xf]
    %v113 = vld [vmem:[#allocation2 + $0x14] sm:$0xf]
    %v114 = vld [vmem:[#allocation2 + $0x18] sm:$0xf]
    %v115 = vld [vmem:[#allocation2 + $0x1c] sm:$0xf]
    %v116 = vld [vmem:[#allocation2 + $0x20] sm:$0xf]
    %v117 = vld [vmem:[#allocation2 + $0x24] sm:$0xf]
    %v118 = vld [vmem:[#allocation2 + $0x28] sm:$0xf]
    %v119 = vld [vmem:[#allocation2 + $0x2c] sm:$0xf]
    %v120 = vld [vmem:[#allocation2 + $0x30] sm:$0xf]
    %v121 = vld [vmem:[#allocation2 + $0x34] sm:$0xf]
    %v122 = vld [vmem:[#allocation2 + $0x38] sm:$0xf]
    %v123 = vld [vmem:[#allocation2 + $0x3c] sm:$0xf]
    %v124 = vld [vmem:[#allocation4] sm:$0x1]
    %v126 = vperm.slane %v124, 0
    %v192 = vunpack.c.l.b16 %v44
    %v193 = vunpack.c.l.b16 %v45
    %v194 = vunpack.c.l.b16 %v46
    %v195 = vunpack.c.l.b16 %v47
    %v196 = vunpack.c.l.b16 %v48
    %v197 = vunpack.c.l.b16 %v49
    %v198 = vunpack.c.l.b16 %v50
    %v199 = vunpack.c.l.b16 %v51
    %v200 = vunpack.c.l.b16 %v52
    %v201 = vunpack.c.l.b16 %v53
    %v202 = vunpack.c.l.b16 %v54
    %v203 = vunpack.c.l.b16 %v55
    %v204 = vunpack.c.l.b16 %v56
    %v205 = vunpack.c.l.b16 %v57
    %v206 = vunpack.c.l.b16 %v58
    %v207 = vunpack.c.l.b16 %v59
    %v208 = vunpack.c.l.b16 %v60
    %v209 = vunpack.c.l.b16 %v61
    %v210 = vunpack.c.l.b16 %v62
    %v211 = vunpack.c.l.b16 %v63
    %v212 = vunpack.c.l.b16 %v64
    %v213 = vunpack.c.l.b16 %v65
    %v214 = vunpack.c.l.b16 %v66
    %v215 = vunpack.c.l.b16 %v67
    %v216 = vunpack.c.l.b16 %v68
    %v217 = vunpack.c.l.b16 %v69
    %v218 = vunpack.c.l.b16 %v70
    %v219 = vunpack.c.l.b16 %v71
    %v220 = vunpack.c.l.b16 %v72
    %v221 = vunpack.c.l.b16 %v73
    %v222 = vunpack.c.l.b16 %v74
    %v223 = vunpack.c.l.b16 %v75
    %v224 = vunpack.c.l.b16 %v76
    %v225 = vunpack.c.l.b16 %v77
    %v226 = vunpack.c.l.b16 %v78
    %v227 = vunpack.c.l.b16 %v79
    %v228 = vunpack.c.l.b16 %v80
    %v229 = vunpack.c.l.b16 %v81
    %v230 = vunpack.c.l.b16 %v82
    %v231 = vunpack.c.l.b16 %v83
    %v232 = vunpack.c.l.b16 %v84
    %v233 = vunpack.c.l.b16 %v85
    %v234 = vunpack.c.l.b16 %v86
    %v235 = vunpack.c.l.b16 %v87
    %v236 = vunpack.c.l.b16 %v88
    %v237 = vunpack.c.l.b16 %v89
    %v238 = vunpack.c.l.b16 %v90
    %v239 = vunpack.c.l.b16 %v91
    %v240 = vunpack.c.l.b16 %v92
    %v241 = vunpack.c.l.b16 %v93
    %v242 = vunpack.c.l.b16 %v94
    %v243 = vunpack.c.l.b16 %v95
    %v244 = vunpack.c.l.b16 %v96
    %v245 = vunpack.c.l.b16 %v97
    %v246 = vunpack.c.l.b16 %v98
    %v247 = vunpack.c.l.b16 %v99
    %v248 = vunpack.c.l.b16 %v100
    %v249 = vunpack.c.l.b16 %v101
    %v250 = vunpack.c.l.b16 %v102
    %v251 = vunpack.c.l.b16 %v103
    %v252 = vunpack.c.l.b16 %v104
    %v253 = vunpack.c.l.b16 %v105
    %v254 = vunpack.c.l.b16 %v106
    %v255 = vunpack.c.l.b16 %v107
    %v256 = vpack.c.b16 %v193, %v192
    %v257 = vpack.c.b16 %v195, %v194
    %v258 = vpack.c.b16 %v197, %v196
    %v259 = vpack.c.b16 %v199, %v198
    %v260 = vpack.c.b16 %v201, %v200
    %v261 = vpack.c.b16 %v203, %v202
    %v262 = vpack.c.b16 %v205, %v204
    %v263 = vpack.c.b16 %v207, %v206
    %v264 = vpack.c.b16 %v209, %v208
    %v265 = vpack.c.b16 %v211, %v210
    %v266 = vpack.c.b16 %v213, %v212
    %v267 = vpack.c.b16 %v215, %v214
    %v268 = vpack.c.b16 %v217, %v216
    %v269 = vpack.c.b16 %v219, %v218
    %v270 = vpack.c.b16 %v221, %v220
    %v271 = vpack.c.b16 %v223, %v222
    %v272 = vpack.c.b16 %v225, %v224
    %v273 = vpack.c.b16 %v227, %v226
    %v274 = vpack.c.b16 %v229, %v228
    %v275 = vpack.c.b16 %v231, %v230
    %v276 = vpack.c.b16 %v233, %v232
    %v277 = vpack.c.b16 %v235, %v234
    %v278 = vpack.c.b16 %v237, %v236
    %v279 = vpack.c.b16 %v239, %v238
    %v280 = vpack.c.b16 %v241, %v240
    %v281 = vpack.c.b16 %v243, %v242
    %v282 = vpack.c.b16 %v245, %v244
    %v283 = vpack.c.b16 %v247, %v246
    %v284 = vpack.c.b16 %v249, %v248
    %v285 = vpack.c.b16 %v251, %v250
    %v286 = vpack.c.b16 %v253, %v252
    %v287 = vpack.c.b16 %v255, %v254
    %v336 = vunpack.c.l.b16 %v108
    %v337 = vunpack.c.l.b16 %v109
    %v338 = vunpack.c.l.b16 %v110
    %v339 = vunpack.c.l.b16 %v111
    %v340 = vunpack.c.l.b16 %v112
    %v341 = vunpack.c.l.b16 %v113
    %v342 = vunpack.c.l.b16 %v114
    %v343 = vunpack.c.l.b16 %v115
    %v344 = vunpack.c.l.b16 %v116
    %v345 = vunpack.c.l.b16 %v117
    %v346 = vunpack.c.l.b16 %v118
    %v347 = vunpack.c.l.b16 %v119
    %v348 = vunpack.c.l.b16 %v120
    %v349 = vunpack.c.l.b16 %v121
    %v350 = vunpack.c.l.b16 %v122
    %v351 = vunpack.c.l.b16 %v123
    %v352 = vpack.c.b16 %v337, %v336
    %v353 = vpack.c.b16 %v339, %v338
    %v354 = vpack.c.b16 %v341, %v340
    %v355 = vpack.c.b16 %v343, %v342
    %v356 = vpack.c.b16 %v345, %v344
    %v357 = vpack.c.b16 %v347, %v346
    %v358 = vpack.c.b16 %v349, %v348
    %v359 = vpack.c.b16 %v351, %v350
    %368 = vmatpush.bf16.msra.mxu0 %v359
    %369 = vmatpush.bf16.msra.mxu0 %v358
    %370 = vmatpush.bf16.msra.mxu0 %v357
    %371 = vmatpush.bf16.msra.mxu0 %v356
    %372 = vmatpush.bf16.msra.mxu0 %v355
    %373 = vmatpush.bf16.msra.mxu0 %v354
    %374 = vmatpush.bf16.msra.mxu0 %v353
    %375 = vmatpush.bf16.msra.mxu0 %v352
    %376 = vmatmul.bf16.gmra.mxu0 %v256
    %v377 = vpop.f32.mrf.mxu0
    %v378 = vadd.f32 %v126, %v377
    %v379 = vpop.f32.mrf.mxu0
    %v380 = vadd.f32 %v126, %v379
    %381 = vmatmul.bf16.gmra.mxu0 %v257
    %v382 = vpop.f32.mrf.mxu0
    %v383 = vadd.f32 %v126, %v382
    %v384 = vpop.f32.mrf.mxu0
    %v385 = vadd.f32 %v126, %v384
    %386 = vmatmul.bf16.gmra.mxu0 %v258
    %v387 = vpop.f32.mrf.mxu0
    %v388 = vadd.f32 %v126, %v387
    %v389 = vpop.f32.mrf.mxu0
    %v390 = vadd.f32 %v126, %v389
    %391 = vmatmul.bf16.gmra.mxu0 %v259
    %v392 = vpop.f32.mrf.mxu0
    %v393 = vadd.f32 %v126, %v392
    %v394 = vpop.f32.mrf.mxu0
    %v395 = vadd.f32 %v126, %v394
    %396 = vmatmul.bf16.gmra.mxu0 %v260
    %v397 = vpop.f32.mrf.mxu0
    %v398 = vadd.f32 %v126, %v397
    %v399 = vpop.f32.mrf.mxu0
    %v400 = vadd.f32 %v126, %v399
    %401 = vmatmul.bf16.gmra.mxu0 %v261
    %v402 = vpop.f32.mrf.mxu0
    %v403 = vadd.f32 %v126, %v402
    %v404 = vpop.f32.mrf.mxu0
    %v405 = vadd.f32 %v126, %v404
    %406 = vmatmul.bf16.gmra.mxu0 %v262
    %v407 = vpop.f32.mrf.mxu0
    %v408 = vadd.f32 %v126, %v407
    %v409 = vpop.f32.mrf.mxu0
    %v410 = vadd.f32 %v126, %v409
    %411 = vmatmul.bf16.gmra.mxu0 %v263
    %v412 = vpop.f32.mrf.mxu0
    %v413 = vadd.f32 %v126, %v412
    %v414 = vpop.f32.mrf.mxu0
    %v415 = vadd.f32 %v126, %v414
    %416 = vmatmul.bf16.gmra.mxu0 %v264
    %v417 = vpop.f32.mrf.mxu0
    %v418 = vadd.f32 %v126, %v417
    %v419 = vpop.f32.mrf.mxu0
    %v420 = vadd.f32 %v126, %v419
    %421 = vmatmul.bf16.gmra.mxu0 %v265
    %v422 = vpop.f32.mrf.mxu0
    %v423 = vadd.f32 %v126, %v422
    %v424 = vpop.f32.mrf.mxu0
    %v425 = vadd.f32 %v126, %v424
    %426 = vmatmul.bf16.gmra.mxu0 %v266
    %v427 = vpop.f32.mrf.mxu0
    %v428 = vadd.f32 %v126, %v427
    %v429 = vpop.f32.mrf.mxu0
    %v430 = vadd.f32 %v126, %v429
    %431 = vmatmul.bf16.gmra.mxu0 %v267
    %v432 = vpop.f32.mrf.mxu0
    %v433 = vadd.f32 %v126, %v432
    %v434 = vpop.f32.mrf.mxu0
    %v435 = vadd.f32 %v126, %v434
    %436 = vmatmul.bf16.gmra.mxu0 %v268
    %v437 = vpop.f32.mrf.mxu0
    %v438 = vadd.f32 %v126, %v437
    %v439 = vpop.f32.mrf.mxu0
    %v440 = vadd.f32 %v126, %v439
    %441 = vmatmul.bf16.gmra.mxu0 %v269
    %v442 = vpop.f32.mrf.mxu0
    %v443 = vadd.f32 %v126, %v442
    %v444 = vpop.f32.mrf.mxu0
    %v445 = vadd.f32 %v126, %v444
    %446 = vmatmul.bf16.gmra.mxu0 %v270
    %v447 = vpop.f32.mrf.mxu0
    %v448 = vadd.f32 %v126, %v447
    %v449 = vpop.f32.mrf.mxu0
    %v450 = vadd.f32 %v126, %v449
    %451 = vmatmul.bf16.gmra.mxu0 %v271
    %v452 = vpop.f32.mrf.mxu0
    %v453 = vadd.f32 %v126, %v452
    %v454 = vpop.f32.mrf.mxu0
    %v455 = vadd.f32 %v126, %v454
    %456 = vmatmul.bf16.gmra.mxu0 %v272
    %v457 = vpop.f32.mrf.mxu0
    %v458 = vadd.f32 %v126, %v457
    %v459 = vpop.f32.mrf.mxu0
    %v460 = vadd.f32 %v126, %v459
    %461 = vmatmul.bf16.gmra.mxu0 %v273
    %v462 = vpop.f32.mrf.mxu0
    %v463 = vadd.f32 %v126, %v462
    %v464 = vpop.f32.mrf.mxu0
    %v465 = vadd.f32 %v126, %v464
    %466 = vmatmul.bf16.gmra.mxu0 %v274
    %v467 = vpop.f32.mrf.mxu0
    %v468 = vadd.f32 %v126, %v467
    %v469 = vpop.f32.mrf.mxu0
    %v470 = vadd.f32 %v126, %v469
    %471 = vmatmul.bf16.gmra.mxu0 %v275
    %v472 = vpop.f32.mrf.mxu0
    %v473 = vadd.f32 %v126, %v472
    %v474 = vpop.f32.mrf.mxu0
    %v475 = vadd.f32 %v126, %v474
    %476 = vmatmul.bf16.gmra.mxu0 %v276
    %v477 = vpop.f32.mrf.mxu0
    %v478 = vadd.f32 %v126, %v477
    %v479 = vpop.f32.mrf.mxu0
    %v480 = vadd.f32 %v126, %v479
    %481 = vmatmul.bf16.gmra.mxu0 %v277
    %v482 = vpop.f32.mrf.mxu0
    %v483 = vadd.f32 %v126, %v482
    %v484 = vpop.f32.mrf.mxu0
    %v485 = vadd.f32 %v126, %v484
    %486 = vmatmul.bf16.gmra.mxu0 %v278
    %v487 = vpop.f32.mrf.mxu0
    %v488 = vadd.f32 %v126, %v487
    %v489 = vpop.f32.mrf.mxu0
    %v490 = vadd.f32 %v126, %v489
    %491 = vmatmul.bf16.gmra.mxu0 %v279
    %v492 = vpop.f32.mrf.mxu0
    %v493 = vadd.f32 %v126, %v492
    %v494 = vpop.f32.mrf.mxu0
    %v495 = vadd.f32 %v126, %v494
    %496 = vmatmul.bf16.gmra.mxu0 %v280
    %v497 = vpop.f32.mrf.mxu0
    %v498 = vadd.f32 %v126, %v497
    %v499 = vpop.f32.mrf.mxu0
    %v500 = vadd.f32 %v126, %v499
    %501 = vmatmul.bf16.gmra.mxu0 %v281
    %v502 = vpop.f32.mrf.mxu0
    %v503 = vadd.f32 %v126, %v502
    %v504 = vpop.f32.mrf.mxu0
    %v505 = vadd.f32 %v126, %v504
    %506 = vmatmul.bf16.gmra.mxu0 %v282
    %v507 = vpop.f32.mrf.mxu0
    %v508 = vadd.f32 %v126, %v507
    %v509 = vpop.f32.mrf.mxu0
    %v510 = vadd.f32 %v126, %v509
    %511 = vmatmul.bf16.gmra.mxu0 %v283
    %v512 = vpop.f32.mrf.mxu0
    %v513 = vadd.f32 %v126, %v512
    %v514 = vpop.f32.mrf.mxu0
    %v515 = vadd.f32 %v126, %v514
    %516 = vmatmul.bf16.gmra.mxu0 %v284
    %v517 = vpop.f32.mrf.mxu0
    %v518 = vadd.f32 %v126, %v517
    %v519 = vpop.f32.mrf.mxu0
    %v520 = vadd.f32 %v126, %v519
    %521 = vmatmul.bf16.gmra.mxu0 %v285
    %v522 = vpop.f32.mrf.mxu0
    %v523 = vadd.f32 %v126, %v522
    %v524 = vpop.f32.mrf.mxu0
    %v525 = vadd.f32 %v126, %v524
    %526 = vmatmul.bf16.gmra.mxu0 %v286
    %v527 = vpop.f32.mrf.mxu0
    %v528 = vadd.f32 %v126, %v527
    %v529 = vpop.f32.mrf.mxu0
    %v530 = vadd.f32 %v126, %v529
    %531 = vmatmul.bf16.gmra.mxu0 %v287
    %v532 = vpop.f32.mrf.mxu0
    %v533 = vadd.f32 %v126, %v532
    %v534 = vpop.f32.mrf.mxu0
    %v535 = vadd.f32 %v126, %v534
    %536 = vdwg.mxu0
    %v537 = vmax.f32 %v378, 0.0
    %v538 = vmax.f32 %v380, 0.0
    %v539 = vmax.f32 %v383, 0.0
    %v540 = vmax.f32 %v385, 0.0
    %v541 = vmax.f32 %v388, 0.0
    %v542 = vmax.f32 %v390, 0.0
    %v543 = vmax.f32 %v393, 0.0
    %v544 = vmax.f32 %v395, 0.0
    %v545 = vmax.f32 %v398, 0.0
    %v546 = vmax.f32 %v400, 0.0
    %v547 = vmax.f32 %v403, 0.0
    %v548 = vmax.f32 %v405, 0.0
    %v549 = vmax.f32 %v408, 0.0
    %v550 = vmax.f32 %v410, 0.0
    %v551 = vmax.f32 %v413, 0.0
    %v552 = vmax.f32 %v415, 0.0
    %v553 = vmax.f32 %v418, 0.0
    %v554 = vmax.f32 %v420, 0.0
    %v555 = vmax.f32 %v423, 0.0
    %v556 = vmax.f32 %v425, 0.0
    %v557 = vmax.f32 %v428, 0.0
    %v558 = vmax.f32 %v430, 0.0
    %v559 = vmax.f32 %v433, 0.0
    %v560 = vmax.f32 %v435, 0.0
    %v561 = vmax.f32 %v438, 0.0
    %v562 = vmax.f32 %v440, 0.0
    %v563 = vmax.f32 %v443, 0.0
    %v564 = vmax.f32 %v445, 0.0
    %v565 = vmax.f32 %v448, 0.0
    %v566 = vmax.f32 %v450, 0.0
    %v567 = vmax.f32 %v453, 0.0
    %v568 = vmax.f32 %v455, 0.0
    %v569 = vmax.f32 %v458, 0.0
    %v570 = vmax.f32 %v460, 0.0
    %v571 = vmax.f32 %v463, 0.0
    %v572 = vmax.f32 %v465, 0.0
    %v573 = vmax.f32 %v468, 0.0
    %v574 = vmax.f32 %v470, 0.0
    %v575 = vmax.f32 %v473, 0.0
    %v576 = vmax.f32 %v475, 0.0
    %v577 = vmax.f32 %v478, 0.0
    %v578 = vmax.f32 %v480, 0.0
    %v579 = vmax.f32 %v483, 0.0
    %v580 = vmax.f32 %v485, 0.0
    %v581 = vmax.f32 %v488, 0.0
    %v582 = vmax.f32 %v490, 0.0
    %v583 = vmax.f32 %v493, 0.0
    %v584 = vmax.f32 %v495, 0.0
    %v585 = vmax.f32 %v498, 0.0
    %v586 = vmax.f32 %v500, 0.0
    %v587 = vmax.f32 %v503, 0.0
    %v588 = vmax.f32 %v505, 0.0
    %v589 = vmax.f32 %v508, 0.0
    %v590 = vmax.f32 %v510, 0.0
    %v591 = vmax.f32 %v513, 0.0
    %v592 = vmax.f32 %v515, 0.0
    %v593 = vmax.f32 %v518, 0.0
    %v594 = vmax.f32 %v520, 0.0
    %v595 = vmax.f32 %v523, 0.0
    %v596 = vmax.f32 %v525, 0.0
    %v597 = vmax.f32 %v528, 0.0
    %v598 = vmax.f32 %v530, 0.0
    %v599 = vmax.f32 %v533, 0.0
    %v600 = vmax.f32 %v535, 0.0
    %v601 = vpack.c.bf16 %v537, %v537
    %v602 = vpack.c.bf16 %v538, %v538
    %v603 = vpack.c.bf16 %v539, %v539
    %v604 = vpack.c.bf16 %v540, %v540
    %v605 = vpack.c.bf16 %v541, %v541
    %v606 = vpack.c.bf16 %v542, %v542
    %v607 = vpack.c.bf16 %v543, %v543
    %v608 = vpack.c.bf16 %v544, %v544
    %v609 = vpack.c.bf16 %v545, %v545
    %v610 = vpack.c.bf16 %v546, %v546
    %v611 = vpack.c.bf16 %v547, %v547
    %v612 = vpack.c.bf16 %v548, %v548
    %v613 = vpack.c.bf16 %v549, %v549
    %v614 = vpack.c.bf16 %v550, %v550
    %v615 = vpack.c.bf16 %v551, %v551
    %v616 = vpack.c.bf16 %v552, %v552
    %v617 = vpack.c.bf16 %v553, %v553
    %v618 = vpack.c.bf16 %v554, %v554
    %v619 = vpack.c.bf16 %v555, %v555
    %v620 = vpack.c.bf16 %v556, %v556
    %v621 = vpack.c.bf16 %v557, %v557
    %v622 = vpack.c.bf16 %v558, %v558
    %v623 = vpack.c.bf16 %v559, %v559
    %v624 = vpack.c.bf16 %v560, %v560
    %v625 = vpack.c.bf16 %v561, %v561
    %v626 = vpack.c.bf16 %v562, %v562
    %v627 = vpack.c.bf16 %v563, %v563
    %v628 = vpack.c.bf16 %v564, %v564
    %v629 = vpack.c.bf16 %v565, %v565
    %v630 = vpack.c.bf16 %v566, %v566
    %v631 = vpack.c.bf16 %v567, %v567
    %v632 = vpack.c.bf16 %v568, %v568
    %v633 = vpack.c.bf16 %v569, %v569
    %v634 = vpack.c.bf16 %v570, %v570
    %v635 = vpack.c.bf16 %v571, %v571
    %v636 = vpack.c.bf16 %v572, %v572
    %v637 = vpack.c.bf16 %v573, %v573
    %v638 = vpack.c.bf16 %v574, %v574
    %v639 = vpack.c.bf16 %v575, %v575
    %v640 = vpack.c.bf16 %v576, %v576
    %v641 = vpack.c.bf16 %v577, %v577
    %v642 = vpack.c.bf16 %v578, %v578
    %v643 = vpack.c.bf16 %v579, %v579
    %v644 = vpack.c.bf16 %v580, %v580
    %v645 = vpack.c.bf16 %v581, %v581
    %v646 = vpack.c.bf16 %v582, %v582
    %v647 = vpack.c.bf16 %v583, %v583
    %v648 = vpack.c.bf16 %v584, %v584
    %v649 = vpack.c.bf16 %v585, %v585
    %v650 = vpack.c.bf16 %v586, %v586
    %v651 = vpack.c.bf16 %v587, %v587
    %v652 = vpack.c.bf16 %v588, %v588
    %v653 = vpack.c.bf16 %v589, %v589
    %v654 = vpack.c.bf16 %v590, %v590
    %v655 = vpack.c.bf16 %v591, %v591
    %v656 = vpack.c.bf16 %v592, %v592
    %v657 = vpack.c.bf16 %v593, %v593
    %v658 = vpack.c.bf16 %v594, %v594
    %v659 = vpack.c.bf16 %v595, %v595
    %v660 = vpack.c.bf16 %v596, %v596
    %v661 = vpack.c.bf16 %v597, %v597
    %v662 = vpack.c.bf16 %v598, %v598
    %v663 = vpack.c.bf16 %v599, %v599
    %v664 = vpack.c.bf16 %v600, %v600
    %665 = vst [vmem:[%s3] sm:$0xf] %v601
    %666 = vst [vmem:[%s3 + $0x4] sm:$0xf] %v602
    %667 = vst [vmem:[%s3 + $0x8] sm:$0xf] %v603
    %668 = vst [vmem:[%s3 + $0xc] sm:$0xf] %v604
    %669 = vst [vmem:[%s3 + $0x10] sm:$0xf] %v605
    %670 = vst [vmem:[%s3 + $0x14] sm:$0xf] %v606
    %671 = vst [vmem:[%s3 + $0x18] sm:$0xf] %v607
    %672 = vst [vmem:[%s3 + $0x1c] sm:$0xf] %v608
    %673 = vst [vmem:[%s3 + $0x20] sm:$0xf] %v609
    %674 = vst [vmem:[%s3 + $0x24] sm:$0xf] %v610
    %675 = vst [vmem:[%s3 + $0x28] sm:$0xf] %v611
    %676 = vst [vmem:[%s3 + $0x2c] sm:$0xf] %v612
    %677 = vst [vmem:[%s3 + $0x30] sm:$0xf] %v613
    %678 = vst [vmem:[%s3 + $0x34] sm:$0xf] %v614
    %679 = vst [vmem:[%s3 + $0x38] sm:$0xf] %v615
    %680 = vst [vmem:[%s3 + $0x3c] sm:$0xf] %v616
    %681 = vst [vmem:[%s3 + $0x40] sm:$0xf] %v617
    %682 = vst [vmem:[%s3 + $0x44] sm:$0xf] %v618
    %683 = vst [vmem:[%s3 + $0x48] sm:$0xf] %v619
    %684 = vst [vmem:[%s3 + $0x4c] sm:$0xf] %v620
    %685 = vst [vmem:[%s3 + $0x50] sm:$0xf] %v621
    %686 = vst [vmem:[%s3 + $0x54] sm:$0xf] %v622
    %687 = vst [vmem:[%s3 + $0x58] sm:$0xf] %v623
    %688 = vst [vmem:[%s3 + $0x5c] sm:$0xf] %v624
    %689 = vst [vmem:[%s3 + $0x60] sm:$0xf] %v625
    %690 = vst [vmem:[%s3 + $0x64] sm:$0xf] %v626
    %691 = vst [vmem:[%s3 + $0x68] sm:$0xf] %v627
    %692 = vst [vmem:[%s3 + $0x6c] sm:$0xf] %v628
    %693 = vst [vmem:[%s3 + $0x70] sm:$0xf] %v629
    %694 = vst [vmem:[%s3 + $0x74] sm:$0xf] %v630
    %695 = vst [vmem:[%s3 + $0x78] sm:$0xf] %v631
    %696 = vst [vmem:[%s3 + $0x7c] sm:$0xf] %v632
    %697 = vst [vmem:[%s3 + $0x80] sm:$0xf] %v633
    %698 = vst [vmem:[%s3 + $0x84] sm:$0xf] %v634
    %699 = vst [vmem:[%s3 + $0x88] sm:$0xf] %v635
    %700 = vst [vmem:[%s3 + $0x8c] sm:$0xf] %v636
    %701 = vst [vmem:[%s3 + $0x90] sm:$0xf] %v637
    %702 = vst [vmem:[%s3 + $0x94] sm:$0xf] %v638
    %703 = vst [vmem:[%s3 + $0x98] sm:$0xf] %v639
    %704 = vst [vmem:[%s3 + $0x9c] sm:$0xf] %v640
    %705 = vst [vmem:[%s3 + $0xa0] sm:$0xf] %v641
    %706 = vst [vmem:[%s3 + $0xa4] sm:$0xf] %v642
    %707 = vst [vmem:[%s3 + $0xa8] sm:$0xf] %v643
    %708 = vst [vmem:[%s3 + $0xac] sm:$0xf] %v644
    %709 = vst [vmem:[%s3 + $0xb0] sm:$0xf] %v645
    %710 = vst [vmem:[%s3 + $0xb4] sm:$0xf] %v646
    %711 = vst [vmem:[%s3 + $0xb8] sm:$0xf] %v647
    %712 = vst [vmem:[%s3 + $0xbc] sm:$0xf] %v648
    %713 = vst [vmem:[%s3 + $0xc0] sm:$0xf] %v649
    %714 = vst [vmem:[%s3 + $0xc4] sm:$0xf] %v650
    %715 = vst [vmem:[%s3 + $0xc8] sm:$0xf] %v651
    %716 = vst [vmem:[%s3 + $0xcc] sm:$0xf] %v652
    %717 = vst [vmem:[%s3 + $0xd0] sm:$0xf] %v653
    %718 = vst [vmem:[%s3 + $0xd4] sm:$0xf] %v654
    %719 = vst [vmem:[%s3 + $0xd8] sm:$0xf] %v655
    %720 = vst [vmem:[%s3 + $0xdc] sm:$0xf] %v656
    %721 = vst [vmem:[%s3 + $0xe0] sm:$0xf] %v657
    %722 = vst [vmem:[%s3 + $0xe4] sm:$0xf] %v658
    %723 = vst [vmem:[%s3 + $0xe8] sm:$0xf] %v659
    %724 = vst [vmem:[%s3 + $0xec] sm:$0xf] %v660
    %725 = vst [vmem:[%s3 + $0xf0] sm:$0xf] %v661
    %726 = vst [vmem:[%s3 + $0xf4] sm:$0xf] %v662
    %727 = vst [vmem:[%s3 + $0xf8] sm:$0xf] %v663
    %728 = vst [vmem:[%s3 + $0xfc] sm:$0xf] %v664
    // Predicated region
    $region22: #{cnn_model_forward.3} parent=1 // pred_check
      _
    $region23: #{cnn_model_forward.3} parent=1 // pred_check_branch
      %730 = sbr.rel (0) target = $region25
    $region24: #{cnn_model_forward.3} parent=1 // pred_region
      _
    $region25: #{cnn_model_forward.3} parent=1 // pred_fallthru
      _
    // Predicated region
    $region26: #{cnn_model_forward.3} parent=1 // pred_check
      _
    $region27: #{cnn_model_forward.3} parent=1 // pred_check_branch
      %732 = sbr.rel (0) target = $region29
    $region28: #{cnn_model_forward.3} parent=1 // pred_region
      _
    $region29: #{cnn_model_forward.3} parent=1 // pred_fallthru
      _
    %733 = vsyncpa [#allocation3], 1
    %734 = vsyncpa [#allocation5], 1

// kernel: cnn_model_forward.4
$region0: #{cnn_model_forward.4}
  #allocation0 [shape = 'u32[]', space=smem, size = 0x4, offset = 0x4, fixed_abs, tag = 'smem constant byte address 0x4 - core index']
  #allocation1 [shape = 'u32[72,128]{1,0:T(1,128)}', space=vmem, size = 0x9000, scoped, tag = 'internal scratch']
  %s0 = inlined_call_operand.vmem [shape: bf16[512,384], index: 0, kind: input, shape index: {}]
  %s1 = inlined_call_operand.vmem [shape: bf16[384,128], index: 1, kind: input, shape index: {}]
  %s2 = inlined_call_operand.vmem [shape: f32[1,128], index: 2, kind: input, shape index: {}]
  %s3 = inlined_call_operand.vmem [shape: bf16[512,128], index: 3, kind: output, shape index: {}]
  %s4 = sld [smem:[#allocation0]]
  $region22: #{cnn_model_forward.4} parent=0
    _
  %s6 = ssub.s32 1, %s4
  %s7 = scalar_select 0, %s6, %s4
  // Predicated region
  $region2: #{cnn_model_forward.4} parent=0 // pred_check
    _
  $region3: #{cnn_model_forward.4} parent=0 // pred_check_branch
    %9 = sbr.rel (0) target = $region5
  $region4: #{cnn_model_forward.4} parent=0 // pred_region
    _
  $region5: #{cnn_model_forward.4} parent=0 // pred_fallthru
    _
  // Predicated region
  $region6: #{cnn_model_forward.4} parent=0 // pred_check
    _
  $region7: #{cnn_model_forward.4} parent=0 // pred_check_branch
    %11 = sbr.rel (0) target = $region9
  $region8: #{cnn_model_forward.4} parent=0 // pred_region
    _
  $region9: #{cnn_model_forward.4} parent=0 // pred_fallthru
    _
  // Predicated region
  $region10: #{cnn_model_forward.4} parent=0 // pred_check
    _
  $region11: #{cnn_model_forward.4} parent=0 // pred_check_branch
    %13 = sbr.rel (0) target = $region13
  $region12: #{cnn_model_forward.4} parent=0 // pred_region
    _
  $region13: #{cnn_model_forward.4} parent=0 // pred_fallthru
    _
  %v14 = vld [vmem:[%s0] sm:$0xff]
  %v15 = vld [vmem:[%s0 + $0x8] sm:$0xf]
  %v16 = vld [vmem:[%s0 + $0xc] sm:$0xff]
  %v17 = vld [vmem:[%s0 + $0x14] sm:$0xf]
  %v18 = vld [vmem:[%s0 + $0x18] sm:$0xff]
  %v19 = vld [vmem:[%s0 + $0x20] sm:$0xf]
  %v20 = vld [vmem:[%s0 + $0x24] sm:$0xff]
  %v21 = vld [vmem:[%s0 + $0x2c] sm:$0xf]
  %v22 = vld [vmem:[%s0 + $0x30] sm:$0xff]
  %v23 = vld [vmem:[%s0 + $0x38] sm:$0xf]
  %v24 = vld [vmem:[%s0 + $0x3c] sm:$0xff]
  %v25 = vld [vmem:[%s0 + $0x44] sm:$0xf]
  %v26 = vld [vmem:[%s0 + $0x48] sm:$0xff]
  %v27 = vld [vmem:[%s0 + $0x50] sm:$0xf]
  %v28 = vld [vmem:[%s0 + $0x54] sm:$0xff]
  %v29 = vld [vmem:[%s0 + $0x5c] sm:$0xf]
  %v30 = vld [vmem:[%s0 + $0x60] sm:$0xff]
  %v31 = vld [vmem:[%s0 + $0x68] sm:$0xf]
  %v32 = vld [vmem:[%s0 + $0x6c] sm:$0xff]
  %v33 = vld [vmem:[%s0 + $0x74] sm:$0xf]
  %v34 = vld [vmem:[%s0 + $0x78] sm:$0xff]
  %v35 = vld [vmem:[%s0 + $0x80] sm:$0xf]
  %v36 = vld [vmem:[%s0 + $0x84] sm:$0xff]
  %v37 = vld [vmem:[%s0 + $0x8c] sm:$0xf]
  %v38 = vld [vmem:[%s0 + $0x90] sm:$0xff]
  %v39 = vld [vmem:[%s0 + $0x98] sm:$0xf]
  %v40 = vld [vmem:[%s0 + $0x9c] sm:$0xff]
  %v41 = vld [vmem:[%s0 + $0xa4] sm:$0xf]
  %v42 = vld [vmem:[%s0 + $0xa8] sm:$0xff]
  %v43 = vld [vmem:[%s0 + $0xb0] sm:$0xf]
  %v44 = vld [vmem:[%s0 + $0xb4] sm:$0xff]
  %v45 = vld [vmem:[%s0 + $0xbc] sm:$0xf]
  %v46 = vld [vmem:[%s0 + $0xc0] sm:$0xff]
  %v47 = vld [vmem:[%s0 + $0xc8] sm:$0xf]
  %v48 = vld [vmem:[%s0 + $0xcc] sm:$0xff]
  %v49 = vld [vmem:[%s0 + $0xd4] sm:$0xf]
  %v50 = vld [vmem:[%s0 + $0xd8] sm:$0xff]
  %v51 = vld [vmem:[%s0 + $0xe0] sm:$0xf]
  %v52 = vld [vmem:[%s0 + $0xe4] sm:$0xff]
  %v53 = vld [vmem:[%s0 + $0xec] sm:$0xf]
  %v54 = vld [vmem:[%s0 + $0xf0] sm:$0xff]
  %v55 = vld [vmem:[%s0 + $0xf8] sm:$0xf]
  %v56 = vld [vmem:[%s0 + $0xfc] sm:$0xff]
  %v57 = vld [vmem:[%s0 + $0x104] sm:$0xf]
  %v58 = vld [vmem:[%s0 + $0x108] sm:$0xff]
  %v59 = vld [vmem:[%s0 + $0x110] sm:$0xf]
  %v60 = vld [vmem:[%s0 + $0x114] sm:$0xff]
  %v61 = vld [vmem:[%s0 + $0x11c] sm:$0xf]
  %v62 = vld [vmem:[%s0 + $0x120] sm:$0xff]
  %v63 = vld [vmem:[%s0 + $0x128] sm:$0xf]
  %v64 = vld [vmem:[%s0 + $0x12c] sm:$0xff]
  %v65 = vld [vmem:[%s0 + $0x134] sm:$0xf]
  %v66 = vld [vmem:[%s0 + $0x138] sm:$0xff]
  %v67 = vld [vmem:[%s0 + $0x140] sm:$0xf]
  %v68 = vld [vmem:[%s0 + $0x144] sm:$0xff]
  %v69 = vld [vmem:[%s0 + $0x14c] sm:$0xf]
  %v70 = vld [vmem:[%s0 + $0x150] sm:$0xff]
  %v71 = vld [vmem:[%s0 + $0x158] sm:$0xf]
  %v72 = vld [vmem:[%s0 + $0x15c] sm:$0xff]
  %v73 = vld [vmem:[%s0 + $0x164] sm:$0xf]
  %v74 = vld [vmem:[%s0 + $0x168] sm:$0xff]
  %v75 = vld [vmem:[%s0 + $0x170] sm:$0xf]
  %v76 = vld [vmem:[%s0 + $0x174] sm:$0xff]
  %v77 = vld [vmem:[%s0 + $0x17c] sm:$0xf]
  %v78 = vld [vmem:[%s0 + $0x180] sm:$0xff]
  %v79 = vld [vmem:[%s0 + $0x188] sm:$0xf]
  %v80 = vld [vmem:[%s0 + $0x18c] sm:$0xff]
  %v81 = vld [vmem:[%s0 + $0x194] sm:$0xf]
  %v82 = vld [vmem:[%s0 + $0x198] sm:$0xff]
  %v83 = vld [vmem:[%s0 + $0x1a0] sm:$0xf]
  %v84 = vld [vmem:[%s0 + $0x1a4] sm:$0xff]
  %v85 = vld [vmem:[%s0 + $0x1ac] sm:$0xf]
  %v86 = vld [vmem:[%s0 + $0x1b0] sm:$0xff]
  %v87 = vld [vmem:[%s0 + $0x1b8] sm:$0xf]
  %v88 = vld [vmem:[%s0 + $0x1bc] sm:$0xff]
  %v89 = vld [vmem:[%s0 + $0x1c4] sm:$0xf]
  %v90 = vld [vmem:[%s0 + $0x1c8] sm:$0xff]
  %v91 = vld [vmem:[%s0 + $0x1d0] sm:$0xf]
  %v92 = vld [vmem:[%s0 + $0x1d4] sm:$0xff]
  %v93 = vld [vmem:[%s0 + $0x1dc] sm:$0xf]
  %v94 = vld [vmem:[%s0 + $0x1e0] sm:$0xff]
  %v95 = vld [vmem:[%s0 + $0x1e8] sm:$0xf]
  %v96 = vld [vmem:[%s0 + $0x1ec] sm:$0xff]
  %v97 = vld [vmem:[%s0 + $0x1f4] sm:$0xf]
  %v98 = vld [vmem:[%s0 + $0x1f8] sm:$0xff]
  %v99 = vld [vmem:[%s0 + $0x200] sm:$0xf]
  %v100 = vld [vmem:[%s0 + $0x204] sm:$0xff]
  %v101 = vld [vmem:[%s0 + $0x20c] sm:$0xf]
  %v102 = vld [vmem:[%s0 + $0x210] sm:$0xff]
  %v103 = vld [vmem:[%s0 + $0x218] sm:$0xf]
  %v104 = vld [vmem:[%s0 + $0x21c] sm:$0xff]
  %v105 = vld [vmem:[%s0 + $0x224] sm:$0xf]
  %v106 = vld [vmem:[%s0 + $0x228] sm:$0xff]
  %v107 = vld [vmem:[%s0 + $0x230] sm:$0xf]
  %v108 = vld [vmem:[%s0 + $0x234] sm:$0xff]
  %v109 = vld [vmem:[%s0 + $0x23c] sm:$0xf]
  %v110 = vld [vmem:[%s0 + $0x240] sm:$0xff]
  %v111 = vld [vmem:[%s0 + $0x248] sm:$0xf]
  %v112 = vld [vmem:[%s0 + $0x24c] sm:$0xff]
  %v113 = vld [vmem:[%s0 + $0x254] sm:$0xf]
  %v114 = vld [vmem:[%s0 + $0x258] sm:$0xff]
  %v115 = vld [vmem:[%s0 + $0x260] sm:$0xf]
  %v116 = vld [vmem:[%s0 + $0x264] sm:$0xff]
  %v117 = vld [vmem:[%s0 + $0x26c] sm:$0xf]
  %v118 = vld [vmem:[%s0 + $0x270] sm:$0xff]
  %v119 = vld [vmem:[%s0 + $0x278] sm:$0xf]
  %v120 = vld [vmem:[%s0 + $0x27c] sm:$0xff]
  %v121 = vld [vmem:[%s0 + $0x284] sm:$0xf]
  %v122 = vld [vmem:[%s0 + $0x288] sm:$0xff]
  %v123 = vld [vmem:[%s0 + $0x290] sm:$0xf]
  %v124 = vld [vmem:[%s0 + $0x294] sm:$0xff]
  %v125 = vld [vmem:[%s0 + $0x29c] sm:$0xf]
  %v126 = vld [vmem:[%s0 + $0x2a0] sm:$0xff]
  %v127 = vld [vmem:[%s0 + $0x2a8] sm:$0xf]
  %v128 = vld [vmem:[%s0 + $0x2ac] sm:$0xff]
  %v129 = vld [vmem:[%s0 + $0x2b4] sm:$0xf]
  %v130 = vld [vmem:[%s0 + $0x2b8] sm:$0xff]
  %v131 = vld [vmem:[%s0 + $0x2c0] sm:$0xf]
  %v132 = vld [vmem:[%s0 + $0x2c4] sm:$0xff]
  %v133 = vld [vmem:[%s0 + $0x2cc] sm:$0xf]
  %v134 = vld [vmem:[%s0 + $0x2d0] sm:$0xff]
  %v135 = vld [vmem:[%s0 + $0x2d8] sm:$0xf]
  %v136 = vld [vmem:[%s0 + $0x2dc] sm:$0xff]
  %v137 = vld [vmem:[%s0 + $0x2e4] sm:$0xf]
  %v138 = vld [vmem:[%s0 + $0x2e8] sm:$0xff]
  %v139 = vld [vmem:[%s0 + $0x2f0] sm:$0xf]
  %v140 = vld [vmem:[%s0 + $0x2f4] sm:$0xff]
  %v141 = vld [vmem:[%s0 + $0x2fc] sm:$0xf]
  %v142 = vld [vmem:[%s1] sm:$0xf]
  %v143 = vld [vmem:[%s1 + $0x4] sm:$0xf]
  %v144 = vld [vmem:[%s1 + $0x8] sm:$0xf]
  %v145 = vld [vmem:[%s1 + $0xc] sm:$0xf]
  %v146 = vld [vmem:[%s1 + $0x10] sm:$0xf]
  %v147 = vld [vmem:[%s1 + $0x14] sm:$0xf]
  %v148 = vld [vmem:[%s1 + $0x18] sm:$0xf]
  %v149 = vld [vmem:[%s1 + $0x1c] sm:$0xf]
  %v150 = vld [vmem:[%s1 + $0x20] sm:$0xf]
  %v151 = vld [vmem:[%s1 + $0x24] sm:$0xf]
  %v152 = vld [vmem:[%s1 + $0x28] sm:$0xf]
  %v153 = vld [vmem:[%s1 + $0x2c] sm:$0xf]
  %v154 = vld [vmem:[%s1 + $0x30] sm:$0xf]
  %v155 = vld [vmem:[%s1 + $0x34] sm:$0xf]
  %v156 = vld [vmem:[%s1 + $0x38] sm:$0xf]
  %v157 = vld [vmem:[%s1 + $0x3c] sm:$0xf]
  %v158 = vld [vmem:[%s1 + $0x40] sm:$0xf]
  %v159 = vld [vmem:[%s1 + $0x44] sm:$0xf]
  %v160 = vld [vmem:[%s1 + $0x48] sm:$0xf]
  %v161 = vld [vmem:[%s1 + $0x4c] sm:$0xf]
  %v162 = vld [vmem:[%s1 + $0x50] sm:$0xf]
  %v163 = vld [vmem:[%s1 + $0x54] sm:$0xf]
  %v164 = vld [vmem:[%s1 + $0x58] sm:$0xf]
  %v165 = vld [vmem:[%s1 + $0x5c] sm:$0xf]
  %v166 = vld [vmem:[%s1 + $0x60] sm:$0xf]
  %v167 = vld [vmem:[%s1 + $0x64] sm:$0xf]
  %v168 = vld [vmem:[%s1 + $0x68] sm:$0xf]
  %v169 = vld [vmem:[%s1 + $0x6c] sm:$0xf]
  %v170 = vld [vmem:[%s1 + $0x70] sm:$0xf]
  %v171 = vld [vmem:[%s1 + $0x74] sm:$0xf]
  %v172 = vld [vmem:[%s1 + $0x78] sm:$0xf]
  %v173 = vld [vmem:[%s1 + $0x7c] sm:$0xf]
  %v174 = vld [vmem:[%s1 + $0x80] sm:$0xf]
  %v175 = vld [vmem:[%s1 + $0x84] sm:$0xf]
  %v176 = vld [vmem:[%s1 + $0x88] sm:$0xf]
  %v177 = vld [vmem:[%s1 + $0x8c] sm:$0xf]
  %v178 = vld [vmem:[%s1 + $0x90] sm:$0xf]
  %v179 = vld [vmem:[%s1 + $0x94] sm:$0xf]
  %v180 = vld [vmem:[%s1 + $0x98] sm:$0xf]
  %v181 = vld [vmem:[%s1 + $0x9c] sm:$0xf]
  %v182 = vld [vmem:[%s1 + $0xa0] sm:$0xf]
  %v183 = vld [vmem:[%s1 + $0xa4] sm:$0xf]
  %v184 = vld [vmem:[%s1 + $0xa8] sm:$0xf]
  %v185 = vld [vmem:[%s1 + $0xac] sm:$0xf]
  %v186 = vld [vmem:[%s1 + $0xb0] sm:$0xf]
  %v187 = vld [vmem:[%s1 + $0xb4] sm:$0xf]
  %v188 = vld [vmem:[%s1 + $0xb8] sm:$0xf]
  %v189 = vld [vmem:[%s1 + $0xbc] sm:$0xf]
  %v190 = vld [vmem:[%s2] sm:$0x1]
  %v192 = vperm.slane %v190, 0
  %v322 = vunpack.c.l.b16 %v14
  %v323 = vunpack.c.h.b16 %v14
  %v324 = vunpack.c.l.b16 %v15
  %v325 = vunpack.c.l.b16 %v16
  %v326 = vunpack.c.h.b16 %v16
  %v327 = vunpack.c.l.b16 %v17
  %v328 = vunpack.c.l.b16 %v18
  %v329 = vunpack.c.h.b16 %v18
  %v330 = vunpack.c.l.b16 %v19
  %v331 = vunpack.c.l.b16 %v20
  %v332 = vunpack.c.h.b16 %v20
  %v333 = vunpack.c.l.b16 %v21
  %v334 = vunpack.c.l.b16 %v22
  %v335 = vunpack.c.h.b16 %v22
  %v336 = vunpack.c.l.b16 %v23
  %v337 = vunpack.c.l.b16 %v24
  %v338 = vunpack.c.h.b16 %v24
  %v339 = vunpack.c.l.b16 %v25
  %v340 = vunpack.c.l.b16 %v26
  %v341 = vunpack.c.h.b16 %v26
  %v342 = vunpack.c.l.b16 %v27
  %v343 = vunpack.c.l.b16 %v28
  %v344 = vunpack.c.h.b16 %v28
  %v345 = vunpack.c.l.b16 %v29
  %v346 = vunpack.c.l.b16 %v30
  %v347 = vunpack.c.h.b16 %v30
  %v348 = vunpack.c.l.b16 %v31
  %v349 = vunpack.c.l.b16 %v32
  %v350 = vunpack.c.h.b16 %v32
  %v351 = vunpack.c.l.b16 %v33
  %v352 = vunpack.c.l.b16 %v34
  %v353 = vunpack.c.h.b16 %v34
  %v354 = vunpack.c.l.b16 %v35
  %v355 = vunpack.c.l.b16 %v36
  %v356 = vunpack.c.h.b16 %v36
  %v357 = vunpack.c.l.b16 %v37
  %v358 = vunpack.c.l.b16 %v38
  %v359 = vunpack.c.h.b16 %v38
  %v360 = vunpack.c.l.b16 %v39
  %v361 = vunpack.c.l.b16 %v40
  %v362 = vunpack.c.h.b16 %v40
  %v363 = vunpack.c.l.b16 %v41
  %v364 = vunpack.c.l.b16 %v42
  %v365 = vunpack.c.h.b16 %v42
  %v366 = vunpack.c.l.b16 %v43
  %v367 = vunpack.c.l.b16 %v44
  %v368 = vunpack.c.h.b16 %v44
  %v369 = vunpack.c.l.b16 %v45
  %v370 = vunpack.c.l.b16 %v46
  %v371 = vunpack.c.h.b16 %v46
  %v372 = vunpack.c.l.b16 %v47
  %v373 = vunpack.c.l.b16 %v48
  %v374 = vunpack.c.h.b16 %v48
  %v375 = vunpack.c.l.b16 %v49
  %v376 = vunpack.c.l.b16 %v50
  %v377 = vunpack.c.h.b16 %v50
  %v378 = vunpack.c.l.b16 %v51
  %v379 = vunpack.c.l.b16 %v52
  %v380 = vunpack.c.h.b16 %v52
  %v381 = vunpack.c.l.b16 %v53
  %v382 = vunpack.c.l.b16 %v54
  %v383 = vunpack.c.h.b16 %v54
  %v384 = vunpack.c.l.b16 %v55
  %v385 = vunpack.c.l.b16 %v56
  %v386 = vunpack.c.h.b16 %v56
  %v387 = vunpack.c.l.b16 %v57
  %v388 = vunpack.c.l.b16 %v58
  %v389 = vunpack.c.h.b16 %v58
  %v390 = vunpack.c.l.b16 %v59
  %v391 = vunpack.c.l.b16 %v60
  %v392 = vunpack.c.h.b16 %v60
  %v393 = vunpack.c.l.b16 %v61
  %v394 = vunpack.c.l.b16 %v62
  %v395 = vunpack.c.h.b16 %v62
  %v396 = vunpack.c.l.b16 %v63
  %v397 = vunpack.c.l.b16 %v64
  %v398 = vunpack.c.h.b16 %v64
  %v399 = vunpack.c.l.b16 %v65
  %v400 = vunpack.c.l.b16 %v66
  %v401 = vunpack.c.h.b16 %v66
  %v402 = vunpack.c.l.b16 %v67
  %v403 = vunpack.c.l.b16 %v68
  %v404 = vunpack.c.h.b16 %v68
  %v405 = vunpack.c.l.b16 %v69
  %v406 = vunpack.c.l.b16 %v70
  %v407 = vunpack.c.h.b16 %v70
  %v408 = vunpack.c.l.b16 %v71
  %v409 = vunpack.c.l.b16 %v72
  %v410 = vunpack.c.h.b16 %v72
  %v411 = vunpack.c.l.b16 %v73
  %v412 = vunpack.c.l.b16 %v74
  %v413 = vunpack.c.h.b16 %v74
  %v414 = vunpack.c.l.b16 %v75
  %v415 = vunpack.c.l.b16 %v76
  %v416 = vunpack.c.h.b16 %v76
  %v417 = vunpack.c.l.b16 %v77
  %v418 = vunpack.c.l.b16 %v78
  %v419 = vunpack.c.h.b16 %v78
  %v420 = vunpack.c.l.b16 %v79
  %v421 = vunpack.c.l.b16 %v80
  %v422 = vunpack.c.h.b16 %v80
  %v423 = vunpack.c.l.b16 %v81
  %v424 = vunpack.c.l.b16 %v82
  %v425 = vunpack.c.h.b16 %v82
  %v426 = vunpack.c.l.b16 %v83
  %v427 = vunpack.c.l.b16 %v84
  %v428 = vunpack.c.h.b16 %v84
  %v429 = vunpack.c.l.b16 %v85
  %v430 = vunpack.c.l.b16 %v86
  %v431 = vunpack.c.h.b16 %v86
  %v432 = vunpack.c.l.b16 %v87
  %v433 = vunpack.c.l.b16 %v88
  %v434 = vunpack.c.h.b16 %v88
  %v435 = vunpack.c.l.b16 %v89
  %v436 = vunpack.c.l.b16 %v90
  %v437 = vunpack.c.h.b16 %v90
  %v438 = vunpack.c.l.b16 %v91
  %v439 = vunpack.c.l.b16 %v92
  %v440 = vunpack.c.h.b16 %v92
  %v441 = vunpack.c.l.b16 %v93
  %v442 = vunpack.c.l.b16 %v94
  %v443 = vunpack.c.h.b16 %v94
  %v444 = vunpack.c.l.b16 %v95
  %v445 = vunpack.c.l.b16 %v96
  %v446 = vunpack.c.h.b16 %v96
  %v447 = vunpack.c.l.b16 %v97
  %v448 = vunpack.c.l.b16 %v98
  %v449 = vunpack.c.h.b16 %v98
  %v450 = vunpack.c.l.b16 %v99
  %v451 = vunpack.c.l.b16 %v100
  %v452 = vunpack.c.h.b16 %v100
  %v453 = vunpack.c.l.b16 %v101
  %v454 = vunpack.c.l.b16 %v102
  %v455 = vunpack.c.h.b16 %v102
  %v456 = vunpack.c.l.b16 %v103
  %v457 = vunpack.c.l.b16 %v104
  %v458 = vunpack.c.h.b16 %v104
  %v459 = vunpack.c.l.b16 %v105
  %v460 = vunpack.c.l.b16 %v106
  %v461 = vunpack.c.h.b16 %v106
  %v462 = vunpack.c.l.b16 %v107
  %v463 = vunpack.c.l.b16 %v108
  %v464 = vunpack.c.h.b16 %v108
  %v465 = vunpack.c.l.b16 %v109
  %v466 = vunpack.c.l.b16 %v110
  %v467 = vunpack.c.h.b16 %v110
  %v468 = vunpack.c.l.b16 %v111
  %v469 = vunpack.c.l.b16 %v112
  %v470 = vunpack.c.h.b16 %v112
  %v471 = vunpack.c.l.b16 %v113
  %v472 = vunpack.c.l.b16 %v114
  %v473 = vunpack.c.h.b16 %v114
  %v474 = vunpack.c.l.b16 %v115
  %v475 = vunpack.c.l.b16 %v116
  %v476 = vunpack.c.h.b16 %v116
  %v477 = vunpack.c.l.b16 %v117
  %v478 = vunpack.c.l.b16 %v118
  %v479 = vunpack.c.h.b16 %v118
  %v480 = vunpack.c.l.b16 %v119
  %v481 = vunpack.c.l.b16 %v120
  %v482 = vunpack.c.h.b16 %v120
  %v483 = vunpack.c.l.b16 %v121
  %v484 = vunpack.c.l.b16 %v122
  %v485 = vunpack.c.h.b16 %v122
  %v486 = vunpack.c.l.b16 %v123
  %v487 = vunpack.c.l.b16 %v124
  %v488 = vunpack.c.h.b16 %v124
  %v489 = vunpack.c.l.b16 %v125
  %v490 = vunpack.c.l.b16 %v126
  %v491 = vunpack.c.h.b16 %v126
  %v492 = vunpack.c.l.b16 %v127
  %v493 = vunpack.c.l.b16 %v128
  %v494 = vunpack.c.h.b16 %v128
  %v495 = vunpack.c.l.b16 %v129
  %v496 = vunpack.c.l.b16 %v130
  %v497 = vunpack.c.h.b16 %v130
  %v498 = vunpack.c.l.b16 %v131
  %v499 = vunpack.c.l.b16 %v132
  %v500 = vunpack.c.h.b16 %v132
  %v501 = vunpack.c.l.b16 %v133
  %v502 = vunpack.c.l.b16 %v134
  %v503 = vunpack.c.h.b16 %v134
  %v504 = vunpack.c.l.b16 %v135
  %v505 = vunpack.c.l.b16 %v136
  %v506 = vunpack.c.h.b16 %v136
  %v507 = vunpack.c.l.b16 %v137
  %v508 = vunpack.c.l.b16 %v138
  %v509 = vunpack.c.h.b16 %v138
  %v510 = vunpack.c.l.b16 %v139
  %v511 = vunpack.c.l.b16 %v140
  %v512 = vunpack.c.h.b16 %v140
  %v513 = vunpack.c.l.b16 %v141
  %v514 = vpack.c.b16 %v325, %v322
  %v515 = vpack.c.b16 %v326, %v323
  %v516 = vpack.c.b16 %v327, %v324
  %v517 = vpack.c.b16 %v331, %v328
  %v518 = vpack.c.b16 %v332, %v329
  %v519 = vpack.c.b16 %v333, %v330
  %v520 = vpack.c.b16 %v337, %v334
  %v521 = vpack.c.b16 %v338, %v335
  %v522 = vpack.c.b16 %v339, %v336
  %v523 = vpack.c.b16 %v343, %v340
  %v524 = vpack.c.b16 %v344, %v341
  %v525 = vpack.c.b16 %v345, %v342
  %v526 = vpack.c.b16 %v349, %v346
  %v527 = vpack.c.b16 %v350, %v347
  %v528 = vpack.c.b16 %v351, %v348
  %v529 = vpack.c.b16 %v355, %v352
  %v530 = vpack.c.b16 %v356, %v353
  %v531 = vpack.c.b16 %v357, %v354
  %v532 = vpack.c.b16 %v361, %v358
  %v533 = vpack.c.b16 %v362, %v359
  %v534 = vpack.c.b16 %v363, %v360
  %v535 = vpack.c.b16 %v367, %v364
  %v536 = vpack.c.b16 %v368, %v365
  %v537 = vpack.c.b16 %v369, %v366
  %v538 = vpack.c.b16 %v373, %v370
  %v539 = vpack.c.b16 %v374, %v371
  %v540 = vpack.c.b16 %v375, %v372
  %v541 = vpack.c.b16 %v379, %v376
  %v542 = vpack.c.b16 %v380, %v377
  %v543 = vpack.c.b16 %v381, %v378
  %v544 = vpack.c.b16 %v385, %v382
  %v545 = vpack.c.b16 %v386, %v383
  %v546 = vpack.c.b16 %v387, %v384
  %v547 = vpack.c.b16 %v391, %v388
  %v548 = vpack.c.b16 %v392, %v389
  %v549 = vpack.c.b16 %v393, %v390
  %v550 = vpack.c.b16 %v397, %v394
  %v551 = vpack.c.b16 %v398, %v395
  %v552 = vpack.c.b16 %v399, %v396
  %v553 = vpack.c.b16 %v403, %v400
  %v554 = vpack.c.b16 %v404, %v401
  %v555 = vpack.c.b16 %v405, %v402
  %v556 = vpack.c.b16 %v409, %v406
  %v557 = vpack.c.b16 %v410, %v407
  %v558 = vpack.c.b16 %v411, %v408
  %v559 = vpack.c.b16 %v415, %v412
  %v560 = vpack.c.b16 %v416, %v413
  %v561 = vpack.c.b16 %v417, %v414
  %v562 = vpack.c.b16 %v421, %v418
  %v563 = vpack.c.b16 %v422, %v419
  %v564 = vpack.c.b16 %v423, %v420
  %v565 = vpack.c.b16 %v427, %v424
  %v566 = vpack.c.b16 %v428, %v425
  %v567 = vpack.c.b16 %v429, %v426
  %v568 = vpack.c.b16 %v433, %v430
  %v569 = vpack.c.b16 %v434, %v431
  %v570 = vpack.c.b16 %v435, %v432
  %v571 = vpack.c.b16 %v439, %v436
  %v572 = vpack.c.b16 %v440, %v437
  %v573 = vpack.c.b16 %v441, %v438
  %v574 = vpack.c.b16 %v445, %v442
  %v575 = vpack.c.b16 %v446, %v443
  %v576 = vpack.c.b16 %v447, %v444
  %v577 = vpack.c.b16 %v451, %v448
  %v578 = vpack.c.b16 %v452, %v449
  %v579 = vpack.c.b16 %v453, %v450
  %v580 = vpack.c.b16 %v457, %v454
  %v581 = vpack.c.b16 %v458, %v455
  %v582 = vpack.c.b16 %v459, %v456
  %v583 = vpack.c.b16 %v463, %v460
  %v584 = vpack.c.b16 %v464, %v461
  %v585 = vpack.c.b16 %v465, %v462
  %v586 = vpack.c.b16 %v469, %v466
  %v587 = vpack.c.b16 %v470, %v467
  %v588 = vpack.c.b16 %v471, %v468
  %v589 = vpack.c.b16 %v475, %v472
  %v590 = vpack.c.b16 %v476, %v473
  %v591 = vpack.c.b16 %v477, %v474
  %v592 = vpack.c.b16 %v481, %v478
  %v593 = vpack.c.b16 %v482, %v479
  %v594 = vpack.c.b16 %v483, %v480
  %v595 = vpack.c.b16 %v487, %v484
  %v596 = vpack.c.b16 %v488, %v485
  %v597 = vpack.c.b16 %v489, %v486
  %v598 = vpack.c.b16 %v493, %v490
  %v599 = vpack.c.b16 %v494, %v491
  %v600 = vpack.c.b16 %v495, %v492
  %v601 = vpack.c.b16 %v499, %v496
  %v602 = vpack.c.b16 %v500, %v497
  %v603 = vpack.c.b16 %v501, %v498
  %v604 = vpack.c.b16 %v505, %v502
  %v605 = vpack.c.b16 %v506, %v503
  %v606 = vpack.c.b16 %v507, %v504
  %v607 = vpack.c.b16 %v511, %v508
  %v608 = vpack.c.b16 %v512, %v509
  %v609 = vpack.c.b16 %v513, %v510
  %v754 = vunpack.c.l.b16 %v142
  %v755 = vunpack.c.l.b16 %v143
  %v756 = vunpack.c.l.b16 %v144
  %v757 = vunpack.c.l.b16 %v145
  %v758 = vunpack.c.l.b16 %v146
  %v759 = vunpack.c.l.b16 %v147
  %v760 = vunpack.c.l.b16 %v148
  %v761 = vunpack.c.l.b16 %v149
  %v762 = vunpack.c.l.b16 %v150
  %v763 = vunpack.c.l.b16 %v151
  %v764 = vunpack.c.l.b16 %v152
  %v765 = vunpack.c.l.b16 %v153
  %v766 = vunpack.c.l.b16 %v154
  %v767 = vunpack.c.l.b16 %v155
  %v768 = vunpack.c.l.b16 %v156
  %v769 = vunpack.c.l.b16 %v157
  %v770 = vunpack.c.l.b16 %v158
  %v771 = vunpack.c.l.b16 %v159
  %v772 = vunpack.c.l.b16 %v160
  %v773 = vunpack.c.l.b16 %v161
  %v774 = vunpack.c.l.b16 %v162
  %v775 = vunpack.c.l.b16 %v163
  %v776 = vunpack.c.l.b16 %v164
  %v777 = vunpack.c.l.b16 %v165
  %v778 = vunpack.c.l.b16 %v166
  %v779 = vunpack.c.l.b16 %v167
  %v780 = vunpack.c.l.b16 %v168
  %v781 = vunpack.c.l.b16 %v169
  %v782 = vunpack.c.l.b16 %v170
  %v783 = vunpack.c.l.b16 %v171
  %v784 = vunpack.c.l.b16 %v172
  %v785 = vunpack.c.l.b16 %v173
  %v786 = vunpack.c.l.b16 %v174
  %v787 = vunpack.c.l.b16 %v175
  %v788 = vunpack.c.l.b16 %v176
  %v789 = vunpack.c.l.b16 %v177
  %v790 = vunpack.c.l.b16 %v178
  %v791 = vunpack.c.l.b16 %v179
  %v792 = vunpack.c.l.b16 %v180
  %v793 = vunpack.c.l.b16 %v181
  %v794 = vunpack.c.l.b16 %v182
  %v795 = vunpack.c.l.b16 %v183
  %v796 = vunpack.c.l.b16 %v184
  %v797 = vunpack.c.l.b16 %v185
  %v798 = vunpack.c.l.b16 %v186
  %v799 = vunpack.c.l.b16 %v187
  %v800 = vunpack.c.l.b16 %v188
  %v801 = vunpack.c.l.b16 %v189
  %v802 = vpack.c.b16 %v755, %v754
  %v803 = vpack.c.b16 %v757, %v756
  %v804 = vpack.c.b16 %v759, %v758
  %v805 = vpack.c.b16 %v761, %v760
  %v806 = vpack.c.b16 %v763, %v762
  %v807 = vpack.c.b16 %v765, %v764
  %v808 = vpack.c.b16 %v767, %v766
  %v809 = vpack.c.b16 %v769, %v768
  %v810 = vpack.c.b16 %v771, %v770
  %v811 = vpack.c.b16 %v773, %v772
  %v812 = vpack.c.b16 %v775, %v774
  %v813 = vpack.c.b16 %v777, %v776
  %v814 = vpack.c.b16 %v779, %v778
  %v815 = vpack.c.b16 %v781, %v780
  %v816 = vpack.c.b16 %v783, %v782
  %v817 = vpack.c.b16 %v785, %v784
  %v818 = vpack.c.b16 %v787, %v786
  %v819 = vpack.c.b16 %v789, %v788
  %v820 = vpack.c.b16 %v791, %v790
  %v821 = vpack.c.b16 %v793, %v792
  %v822 = vpack.c.b16 %v795, %v794
  %v823 = vpack.c.b16 %v797, %v796
  %v824 = vpack.c.b16 %v799, %v798
  %v825 = vpack.c.b16 %v801, %v800
  %850 = vmatpush.bf16.msra.mxu0 %v809
  %851 = vmatpush.bf16.msra.mxu0 %v808
  %852 = vmatpush.bf16.msra.mxu0 %v807
  %853 = vmatpush.bf16.msra.mxu0 %v806
  %854 = vmatpush.bf16.msra.mxu0 %v805
  %855 = vmatpush.bf16.msra.mxu0 %v804
  %856 = vmatpush.bf16.msra.mxu0 %v803
  %857 = vmatpush.bf16.msra.mxu0 %v802
  %858 = vmatmul.bf16.gmra.mxu0 %v514
  %v859 = vpop.f32.mrf.mxu0
  %v860 = vadd.f32 %v192, %v859
  %v861 = vpop.f32.mrf.mxu0
  %v862 = vadd.f32 %v192, %v861
  %863 = vmatmul.bf16.gmra.mxu0 %v517
  %v864 = vpop.f32.mrf.mxu0
  %v865 = vadd.f32 %v192, %v864
  %v866 = vpop.f32.mrf.mxu0
  %v867 = vadd.f32 %v192, %v866
  %868 = vmatmul.bf16.gmra.mxu0 %v520
  %v869 = vpop.f32.mrf.mxu0
  %v870 = vadd.f32 %v192, %v869
  %v871 = vpop.f32.mrf.mxu0
  %v872 = vadd.f32 %v192, %v871
  %873 = vmatmul.bf16.gmra.mxu0 %v523
  %v874 = vpop.f32.mrf.mxu0
  %v875 = vadd.f32 %v192, %v874
  %v876 = vpop.f32.mrf.mxu0
  %v877 = vadd.f32 %v192, %v876
  %878 = vmatmul.bf16.gmra.mxu0 %v526
  %v879 = vpop.f32.mrf.mxu0
  %v880 = vadd.f32 %v192, %v879
  %v881 = vpop.f32.mrf.mxu0
  %v882 = vadd.f32 %v192, %v881
  %883 = vmatmul.bf16.gmra.mxu0 %v529
  %v884 = vpop.f32.mrf.mxu0
  %v885 = vadd.f32 %v192, %v884
  %v886 = vpop.f32.mrf.mxu0
  %v887 = vadd.f32 %v192, %v886
  %888 = vmatmul.bf16.gmra.mxu0 %v532
  %v889 = vpop.f32.mrf.mxu0
  %v890 = vadd.f32 %v192, %v889
  %v891 = vpop.f32.mrf.mxu0
  %v892 = vadd.f32 %v192, %v891
  %893 = vmatmul.bf16.gmra.mxu0 %v535
  %v894 = vpop.f32.mrf.mxu0
  %v895 = vadd.f32 %v192, %v894
  %v896 = vpop.f32.mrf.mxu0
  %v897 = vadd.f32 %v192, %v896
  %898 = vmatmul.bf16.gmra.mxu0 %v538
  %v899 = vpop.f32.mrf.mxu0
  %v900 = vadd.f32 %v192, %v899
  %v901 = vpop.f32.mrf.mxu0
  %v902 = vadd.f32 %v192, %v901
  %903 = vmatmul.bf16.gmra.mxu0 %v541
  %v904 = vpop.f32.mrf.mxu0
  %v905 = vadd.f32 %v192, %v904
  %v906 = vpop.f32.mrf.mxu0
  %v907 = vadd.f32 %v192, %v906
  %908 = vmatmul.bf16.gmra.mxu0 %v544
  %v909 = vpop.f32.mrf.mxu0
  %v910 = vadd.f32 %v192, %v909
  %v911 = vpop.f32.mrf.mxu0
  %v912 = vadd.f32 %v192, %v911
  %913 = vmatmul.bf16.gmra.mxu0 %v547
  %v914 = vpop.f32.mrf.mxu0
  %v915 = vadd.f32 %v192, %v914
  %v916 = vpop.f32.mrf.mxu0
  %v917 = vadd.f32 %v192, %v916
  %918 = vmatmul.bf16.gmra.mxu0 %v550
  %v919 = vpop.f32.mrf.mxu0
  %v920 = vadd.f32 %v192, %v919
  %v921 = vpop.f32.mrf.mxu0
  %v922 = vadd.f32 %v192, %v921
  %923 = vmatmul.bf16.gmra.mxu0 %v553
  %v924 = vpop.f32.mrf.mxu0
  %v925 = vadd.f32 %v192, %v924
  %v926 = vpop.f32.mrf.mxu0
  %v927 = vadd.f32 %v192, %v926
  %928 = vmatmul.bf16.gmra.mxu0 %v556
  %v929 = vpop.f32.mrf.mxu0
  %v930 = vadd.f32 %v192, %v929
  %v931 = vpop.f32.mrf.mxu0
  %v932 = vadd.f32 %v192, %v931
  %933 = vmatmul.bf16.gmra.mxu0 %v559
  %v934 = vpop.f32.mrf.mxu0
  %v935 = vadd.f32 %v192, %v934
  %v936 = vpop.f32.mrf.mxu0
  %v937 = vadd.f32 %v192, %v936
  %938 = vmatmul.bf16.gmra.mxu0 %v562
  %v939 = vpop.f32.mrf.mxu0
  %v940 = vadd.f32 %v192, %v939
  %v941 = vpop.f32.mrf.mxu0
  %v942 = vadd.f32 %v192, %v941
  %943 = vmatmul.bf16.gmra.mxu0 %v565
  %v944 = vpop.f32.mrf.mxu0
  %v945 = vadd.f32 %v192, %v944
  %v946 = vpop.f32.mrf.mxu0
  %v947 = vadd.f32 %v192, %v946
  %948 = vmatmul.bf16.gmra.mxu0 %v568
  %v949 = vpop.f32.mrf.mxu0
  %v950 = vadd.f32 %v192, %v949
  %v951 = vpop.f32.mrf.mxu0
  %v952 = vadd.f32 %v192, %v951
  %953 = vmatmul.bf16.gmra.mxu0 %v571
  %v954 = vpop.f32.mrf.mxu0
  %v955 = vadd.f32 %v192, %v954
  %v956 = vpop.f32.mrf.mxu0
  %v957 = vadd.f32 %v192, %v956
  %958 = vmatmul.bf16.gmra.mxu0 %v574
  %v959 = vpop.f32.mrf.mxu0
  %v960 = vadd.f32 %v192, %v959
  %v961 = vpop.f32.mrf.mxu0
  %v962 = vadd.f32 %v192, %v961
  %963 = vmatmul.bf16.gmra.mxu0 %v577
  %v964 = vpop.f32.mrf.mxu0
  %v965 = vadd.f32 %v192, %v964
  %v966 = vpop.f32.mrf.mxu0
  %v967 = vadd.f32 %v192, %v966
  %968 = vmatmul.bf16.gmra.mxu0 %v580
  %v969 = vpop.f32.mrf.mxu0
  %v970 = vadd.f32 %v192, %v969
  %v971 = vpop.f32.mrf.mxu0
  %v972 = vadd.f32 %v192, %v971
  %973 = vmatmul.bf16.gmra.mxu0 %v583
  %v974 = vpop.f32.mrf.mxu0
  %v975 = vadd.f32 %v192, %v974
  %v976 = vpop.f32.mrf.mxu0
  %v977 = vadd.f32 %v192, %v976
  %978 = vmatmul.bf16.gmra.mxu0 %v586
  %v979 = vpop.f32.mrf.mxu0
  %v980 = vadd.f32 %v192, %v979
  %v981 = vpop.f32.mrf.mxu0
  %v982 = vadd.f32 %v192, %v981
  %983 = vmatmul.bf16.gmra.mxu0 %v589
  %v984 = vpop.f32.mrf.mxu0
  %v985 = vadd.f32 %v192, %v984
  %v986 = vpop.f32.mrf.mxu0
  %v987 = vadd.f32 %v192, %v986
  %988 = vmatmul.bf16.gmra.mxu0 %v592
  %v989 = vpop.f32.mrf.mxu0
  %v990 = vadd.f32 %v192, %v989
  %v991 = vpop.f32.mrf.mxu0
  %v992 = vadd.f32 %v192, %v991
  %993 = vmatmul.bf16.gmra.mxu0 %v595
  %v994 = vpop.f32.mrf.mxu0
  %v995 = vadd.f32 %v192, %v994
  %v996 = vpop.f32.mrf.mxu0
  %v997 = vadd.f32 %v192, %v996
  %998 = vmatmul.bf16.gmra.mxu0 %v598
  %v999 = vpop.f32.mrf.mxu0
  %v1000 = vadd.f32 %v192, %v999
  %v1001 = vpop.f32.mrf.mxu0
  %v1002 = vadd.f32 %v192, %v1001
  %1003 = vmatmul.bf16.gmra.mxu0 %v601
  %v1004 = vpop.f32.mrf.mxu0
  %v1005 = vadd.f32 %v192, %v1004
  %v1006 = vpop.f32.mrf.mxu0
  %v1007 = vadd.f32 %v192, %v1006
  %1008 = vmatmul.bf16.gmra.mxu0 %v604
  %v1009 = vpop.f32.mrf.mxu0
  %v1010 = vadd.f32 %v192, %v1009
  %v1011 = vpop.f32.mrf.mxu0
  %v1012 = vadd.f32 %v192, %v1011
  %1013 = vmatmul.bf16.gmra.mxu0 %v607
  %v1014 = vpop.f32.mrf.mxu0
  %v1015 = vadd.f32 %v192, %v1014
  %v1016 = vpop.f32.mrf.mxu0
  %v1017 = vadd.f32 %v192, %v1016
  %1018 = vdwg.mxu0
  %1019 = vmatpush.bf16.msra.mxu0 %v817
  %1020 = vmatpush.bf16.msra.mxu0 %v816
  %1021 = vmatpush.bf16.msra.mxu0 %v815
  %1022 = vmatpush.bf16.msra.mxu0 %v814
  %1023 = vmatpush.bf16.msra.mxu0 %v813
  %1024 = vmatpush.bf16.msra.mxu0 %v812
  %1025 = vmatpush.bf16.msra.mxu0 %v811
  %1026 = vmatpush.bf16.msra.mxu0 %v810
  %1027 = vmatmul.bf16.gmra.mxu0 %v515
  %v1028 = vpop.f32.mrf.mxu0
  %v1029 = vadd.f32 %v860, %v1028
  %v1030 = vpop.f32.mrf.mxu0
  %v1031 = vadd.f32 %v862, %v1030
  %1032 = vmatmul.bf16.gmra.mxu0 %v518
  %v1033 = vpop.f32.mrf.mxu0
  %v1034 = vadd.f32 %v865, %v1033
  %v1035 = vpop.f32.mrf.mxu0
  %v1036 = vadd.f32 %v867, %v1035
  %1037 = vmatmul.bf16.gmra.mxu0 %v521
  %v1038 = vpop.f32.mrf.mxu0
  %v1039 = vadd.f32 %v870, %v1038
  %v1040 = vpop.f32.mrf.mxu0
  %v1041 = vadd.f32 %v872, %v1040
  %1042 = vmatmul.bf16.gmra.mxu0 %v524
  %v1043 = vpop.f32.mrf.mxu0
  %v1044 = vadd.f32 %v875, %v1043
  %v1045 = vpop.f32.mrf.mxu0
  %v1046 = vadd.f32 %v877, %v1045
  %1047 = vmatmul.bf16.gmra.mxu0 %v527
  %v1048 = vpop.f32.mrf.mxu0
  %v1049 = vadd.f32 %v880, %v1048
  %v1050 = vpop.f32.mrf.mxu0
  %v1051 = vadd.f32 %v882, %v1050
  %1052 = vmatmul.bf16.gmra.mxu0 %v530
  %v1053 = vpop.f32.mrf.mxu0
  %v1054 = vadd.f32 %v885, %v1053
  %v1055 = vpop.f32.mrf.mxu0
  %v1056 = vadd.f32 %v887, %v1055
  %1057 = vmatmul.bf16.gmra.mxu0 %v533
  %v1058 = vpop.f32.mrf.mxu0
  %v1059 = vadd.f32 %v890, %v1058
  %v1060 = vpop.f32.mrf.mxu0
  %v1061 = vadd.f32 %v892, %v1060
  %1062 = vmatmul.bf16.gmra.mxu0 %v536
  %v1063 = vpop.f32.mrf.mxu0
  %v1064 = vadd.f32 %v895, %v1063
  %v1065 = vpop.f32.mrf.mxu0
  %v1066 = vadd.f32 %v897, %v1065
  %1067 = vmatmul.bf16.gmra.mxu0 %v539
  %v1068 = vpop.f32.mrf.mxu0
  %v1069 = vadd.f32 %v900, %v1068
  %v1070 = vpop.f32.mrf.mxu0
  %v1071 = vadd.f32 %v902, %v1070
  %1072 = vmatmul.bf16.gmra.mxu0 %v542
  %v1073 = vpop.f32.mrf.mxu0
  %v1074 = vadd.f32 %v905, %v1073
  %v1075 = vpop.f32.mrf.mxu0
  %v1076 = vadd.f32 %v907, %v1075
  %1077 = vmatmul.bf16.gmra.mxu0 %v545
  %v1078 = vpop.f32.mrf.mxu0
  %v1079 = vadd.f32 %v910, %v1078
  %v1080 = vpop.f32.mrf.mxu0
  %v1081 = vadd.f32 %v912, %v1080
  %1082 = vmatmul.bf16.gmra.mxu0 %v548
  %v1083 = vpop.f32.mrf.mxu0
  %v1084 = vadd.f32 %v915, %v1083
  %v1085 = vpop.f32.mrf.mxu0
  %v1086 = vadd.f32 %v917, %v1085
  %1087 = vmatmul.bf16.gmra.mxu0 %v551
  %v1088 = vpop.f32.mrf.mxu0
  %v1089 = vadd.f32 %v920, %v1088
  %v1090 = vpop.f32.mrf.mxu0
  %v1091 = vadd.f32 %v922, %v1090
  %1092 = vmatmul.bf16.gmra.mxu0 %v554
  %v1093 = vpop.f32.mrf.mxu0
  %v1094 = vadd.f32 %v925, %v1093
  %v1095 = vpop.f32.mrf.mxu0
  %v1096 = vadd.f32 %v927, %v1095
  %1097 = vmatmul.bf16.gmra.mxu0 %v557
  %v1098 = vpop.f32.mrf.mxu0
  %v1099 = vadd.f32 %v930, %v1098
  %v1100 = vpop.f32.mrf.mxu0
  %v1101 = vadd.f32 %v932, %v1100
  %1102 = vmatmul.bf16.gmra.mxu0 %v560
  %v1103 = vpop.f32.mrf.mxu0
  %v1104 = vadd.f32 %v935, %v1103
  %v1105 = vpop.f32.mrf.mxu0
  %v1106 = vadd.f32 %v937, %v1105
  %1107 = vmatmul.bf16.gmra.mxu0 %v563
  %v1108 = vpop.f32.mrf.mxu0
  %v1109 = vadd.f32 %v940, %v1108
  %v1110 = vpop.f32.mrf.mxu0
  %v1111 = vadd.f32 %v942, %v1110
  %1112 = vmatmul.bf16.gmra.mxu0 %v566
  %v1113 = vpop.f32.mrf.mxu0
  %v1114 = vadd.f32 %v945, %v1113
  %v1115 = vpop.f32.mrf.mxu0
  %v1116 = vadd.f32 %v947, %v1115
  %1117 = vmatmul.bf16.gmra.mxu0 %v569
  %v1118 = vpop.f32.mrf.mxu0
  %v1119 = vadd.f32 %v950, %v1118
  %v1120 = vpop.f32.mrf.mxu0
  %v1121 = vadd.f32 %v952, %v1120
  %1122 = vmatmul.bf16.gmra.mxu0 %v572
  %v1123 = vpop.f32.mrf.mxu0
  %v1124 = vadd.f32 %v955, %v1123
  %v1125 = vpop.f32.mrf.mxu0
  %v1126 = vadd.f32 %v957, %v1125
  %1127 = vmatmul.bf16.gmra.mxu0 %v575
  %v1128 = vpop.f32.mrf.mxu0
  %v1129 = vadd.f32 %v960, %v1128
  %v1130 = vpop.f32.mrf.mxu0
  %v1131 = vadd.f32 %v962, %v1130
  %1132 = vmatmul.bf16.gmra.mxu0 %v578
  %v1133 = vpop.f32.mrf.mxu0
  %v1134 = vadd.f32 %v965, %v1133
  %v1135 = vpop.f32.mrf.mxu0
  %v1136 = vadd.f32 %v967, %v1135
  %1137 = vmatmul.bf16.gmra.mxu0 %v581
  %v1138 = vpop.f32.mrf.mxu0
  %v1139 = vadd.f32 %v970, %v1138
  %v1140 = vpop.f32.mrf.mxu0
  %v1141 = vadd.f32 %v972, %v1140
  %1142 = vmatmul.bf16.gmra.mxu0 %v584
  %v1143 = vpop.f32.mrf.mxu0
  %v1144 = vadd.f32 %v975, %v1143
  %v1145 = vpop.f32.mrf.mxu0
  %v1146 = vadd.f32 %v977, %v1145
  %1147 = vmatmul.bf16.gmra.mxu0 %v587
  %v1148 = vpop.f32.mrf.mxu0
  %v1149 = vadd.f32 %v980, %v1148
  %v1150 = vpop.f32.mrf.mxu0
  %v1151 = vadd.f32 %v982, %v1150
  %1152 = vmatmul.bf16.gmra.mxu0 %v590
  %v1153 = vpop.f32.mrf.mxu0
  %v1154 = vadd.f32 %v985, %v1153
  %v1155 = vpop.f32.mrf.mxu0
  %v1156 = vadd.f32 %v987, %v1155
  %1157 = vmatmul.bf16.gmra.mxu0 %v593
  %v1158 = vpop.f32.mrf.mxu0
  %v1159 = vadd.f32 %v990, %v1158
  %v1160 = vpop.f32.mrf.mxu0
  %v1161 = vadd.f32 %v992, %v1160
  %1162 = vmatmul.bf16.gmra.mxu0 %v596
  %v1163 = vpop.f32.mrf.mxu0
  %v1164 = vadd.f32 %v995, %v1163
  %v1165 = vpop.f32.mrf.mxu0
  %v1166 = vadd.f32 %v997, %v1165
  %1167 = vmatmul.bf16.gmra.mxu0 %v599
  %v1168 = vpop.f32.mrf.mxu0
  %v1169 = vadd.f32 %v1000, %v1168
  %v1170 = vpop.f32.mrf.mxu0
  %v1171 = vadd.f32 %v1002, %v1170
  %1172 = vmatmul.bf16.gmra.mxu0 %v602
  %v1173 = vpop.f32.mrf.mxu0
  %v1174 = vadd.f32 %v1005, %v1173
  %v1175 = vpop.f32.mrf.mxu0
  %v1176 = vadd.f32 %v1007, %v1175
  %1177 = vmatmul.bf16.gmra.mxu0 %v605
  %v1178 = vpop.f32.mrf.mxu0
  %v1179 = vadd.f32 %v1010, %v1178
  %v1180 = vpop.f32.mrf.mxu0
  %v1181 = vadd.f32 %v1012, %v1180
  %1182 = vmatmul.bf16.gmra.mxu0 %v608
  %v1183 = vpop.f32.mrf.mxu0
  %v1184 = vadd.f32 %v1015, %v1183
  %v1185 = vpop.f32.mrf.mxu0
  %v1186 = vadd.f32 %v1017, %v1185
  %1187 = vdwg.mxu0
  %1188 = vmatpush.bf16.msra.mxu0 %v825
  %1189 = vmatpush.bf16.msra.mxu0 %v824
  %1190 = vmatpush.bf16.msra.mxu0 %v823
  %1191 = vmatpush.bf16.msra.mxu0 %v822
  %1192 = vmatpush.bf16.msra.mxu0 %v821
  %1193 = vmatpush.bf16.msra.mxu0 %v820
  %1194 = vmatpush.bf16.msra.mxu0 %v819
  %1195 = vmatpush.bf16.msra.mxu0 %v818
  %1196 = vmatmul.bf16.gmra.mxu0 %v516
  %v1197 = vpop.f32.mrf.mxu0
  %v1198 = vadd.f32 %v1029, %v1197
  %v1199 = vpop.f32.mrf.mxu0
  %v1200 = vadd.f32 %v1031, %v1199
  %1201 = vmatmul.bf16.gmra.mxu0 %v519
  %v1202 = vpop.f32.mrf.mxu0
  %v1203 = vadd.f32 %v1034, %v1202
  %v1204 = vpop.f32.mrf.mxu0
  %v1205 = vadd.f32 %v1036, %v1204
  %1206 = vmatmul.bf16.gmra.mxu0 %v522
  %v1207 = vpop.f32.mrf.mxu0
  %v1208 = vadd.f32 %v1039, %v1207
  %v1209 = vpop.f32.mrf.mxu0
  %v1210 = vadd.f32 %v1041, %v1209
  %1211 = vmatmul.bf16.gmra.mxu0 %v525
  %v1212 = vpop.f32.mrf.mxu0
  %v1213 = vadd.f32 %v1044, %v1212
  %v1214 = vpop.f32.mrf.mxu0
  %v1215 = vadd.f32 %v1046, %v1214
  %1216 = vmatmul.bf16.gmra.mxu0 %v528
  %v1217 = vpop.f32.mrf.mxu0
  %v1218 = vadd.f32 %v1049, %v1217
  %v1219 = vpop.f32.mrf.mxu0
  %v1220 = vadd.f32 %v1051, %v1219
  %1221 = vmatmul.bf16.gmra.mxu0 %v531
  %v1222 = vpop.f32.mrf.mxu0
  %v1223 = vadd.f32 %v1054, %v1222
  %v1224 = vpop.f32.mrf.mxu0
  %v1225 = vadd.f32 %v1056, %v1224
  %1226 = vmatmul.bf16.gmra.mxu0 %v534
  %v1227 = vpop.f32.mrf.mxu0
  %v1228 = vadd.f32 %v1059, %v1227
  %v1229 = vpop.f32.mrf.mxu0
  %v1230 = vadd.f32 %v1061, %v1229
  %1231 = vmatmul.bf16.gmra.mxu0 %v537
  %v1232 = vpop.f32.mrf.mxu0
  %v1233 = vadd.f32 %v1064, %v1232
  %v1234 = vpop.f32.mrf.mxu0
  %v1235 = vadd.f32 %v1066, %v1234
  %1236 = vmatmul.bf16.gmra.mxu0 %v540
  %v1237 = vpop.f32.mrf.mxu0
  %v1238 = vadd.f32 %v1069, %v1237
  %v1239 = vpop.f32.mrf.mxu0
  %v1240 = vadd.f32 %v1071, %v1239
  %1241 = vmatmul.bf16.gmra.mxu0 %v543
  %v1242 = vpop.f32.mrf.mxu0
  %v1243 = vadd.f32 %v1074, %v1242
  %v1244 = vpop.f32.mrf.mxu0
  %v1245 = vadd.f32 %v1076, %v1244
  %1246 = vmatmul.bf16.gmra.mxu0 %v546
  %v1247 = vpop.f32.mrf.mxu0
  %v1248 = vadd.f32 %v1079, %v1247
  %v1249 = vpop.f32.mrf.mxu0
  %v1250 = vadd.f32 %v1081, %v1249
  %1251 = vmatmul.bf16.gmra.mxu0 %v549
  %v1252 = vpop.f32.mrf.mxu0
  %v1253 = vadd.f32 %v1084, %v1252
  %v1254 = vpop.f32.mrf.mxu0
  %v1255 = vadd.f32 %v1086, %v1254
  %1256 = vmatmul.bf16.gmra.mxu0 %v552
  %v1257 = vpop.f32.mrf.mxu0
  %v1258 = vadd.f32 %v1089, %v1257
  %v1259 = vpop.f32.mrf.mxu0
  %v1260 = vadd.f32 %v1091, %v1259
  %1261 = vmatmul.bf16.gmra.mxu0 %v555
  %v1262 = vpop.f32.mrf.mxu0
  %v1263 = vadd.f32 %v1094, %v1262
  %v1264 = vpop.f32.mrf.mxu0
  %v1265 = vadd.f32 %v1096, %v1264
  %1266 = vmatmul.bf16.gmra.mxu0 %v558
  %v1267 = vpop.f32.mrf.mxu0
  %v1268 = vadd.f32 %v1099, %v1267
  %v1269 = vpop.f32.mrf.mxu0
  %v1270 = vadd.f32 %v1101, %v1269
  %1271 = vmatmul.bf16.gmra.mxu0 %v561
  %v1272 = vpop.f32.mrf.mxu0
  %v1273 = vadd.f32 %v1104, %v1272
  %v1274 = vpop.f32.mrf.mxu0
  %v1275 = vadd.f32 %v1106, %v1274
  %1276 = vmatmul.bf16.gmra.mxu0 %v564
  %v1277 = vpop.f32.mrf.mxu0
  %v1278 = vadd.f32 %v1109, %v1277
  %v1279 = vpop.f32.mrf.mxu0
  %v1280 = vadd.f32 %v1111, %v1279
  %1281 = vmatmul.bf16.gmra.mxu0 %v567
  %v1282 = vpop.f32.mrf.mxu0
  %v1283 = vadd.f32 %v1114, %v1282
  %v1284 = vpop.f32.mrf.mxu0
  %v1285 = vadd.f32 %v1116, %v1284
  %1286 = vmatmul.bf16.gmra.mxu0 %v570
  %v1287 = vpop.f32.mrf.mxu0
  %v1288 = vadd.f32 %v1119, %v1287
  %v1289 = vpop.f32.mrf.mxu0
  %v1290 = vadd.f32 %v1121, %v1289
  %1291 = vmatmul.bf16.gmra.mxu0 %v573
  %v1292 = vpop.f32.mrf.mxu0
  %v1293 = vadd.f32 %v1124, %v1292
  %v1294 = vpop.f32.mrf.mxu0
  %v1295 = vadd.f32 %v1126, %v1294
  %1296 = vmatmul.bf16.gmra.mxu0 %v576
  %v1297 = vpop.f32.mrf.mxu0
  %v1298 = vadd.f32 %v1129, %v1297
  %v1299 = vpop.f32.mrf.mxu0
  %v1300 = vadd.f32 %v1131, %v1299
  %1301 = vmatmul.bf16.gmra.mxu0 %v579
  %v1302 = vpop.f32.mrf.mxu0
  %v1303 = vadd.f32 %v1134, %v1302
  %v1304 = vpop.f32.mrf.mxu0
  %v1305 = vadd.f32 %v1136, %v1304
  %1306 = vmatmul.bf16.gmra.mxu0 %v582
  %v1307 = vpop.f32.mrf.mxu0
  %v1308 = vadd.f32 %v1139, %v1307
  %v1309 = vpop.f32.mrf.mxu0
  %v1310 = vadd.f32 %v1141, %v1309
  %1311 = vmatmul.bf16.gmra.mxu0 %v585
  %v1312 = vpop.f32.mrf.mxu0
  %v1313 = vadd.f32 %v1144, %v1312
  %v1314 = vpop.f32.mrf.mxu0
  %v1315 = vadd.f32 %v1146, %v1314
  %1316 = vmatmul.bf16.gmra.mxu0 %v588
  %v1317 = vpop.f32.mrf.mxu0
  %v1318 = vadd.f32 %v1149, %v1317
  %v1319 = vpop.f32.mrf.mxu0
  %v1320 = vadd.f32 %v1151, %v1319
  %1321 = vmatmul.bf16.gmra.mxu0 %v591
  %v1322 = vpop.f32.mrf.mxu0
  %v1323 = vadd.f32 %v1154, %v1322
  %v1324 = vpop.f32.mrf.mxu0
  %v1325 = vadd.f32 %v1156, %v1324
  %1326 = vmatmul.bf16.gmra.mxu0 %v594
  %v1327 = vpop.f32.mrf.mxu0
  %v1328 = vadd.f32 %v1159, %v1327
  %v1329 = vpop.f32.mrf.mxu0
  %v1330 = vadd.f32 %v1161, %v1329
  %1331 = vmatmul.bf16.gmra.mxu0 %v597
  %v1332 = vpop.f32.mrf.mxu0
  %v1333 = vadd.f32 %v1164, %v1332
  %v1334 = vpop.f32.mrf.mxu0
  %v1335 = vadd.f32 %v1166, %v1334
  %1336 = vmatmul.bf16.gmra.mxu0 %v600
  %v1337 = vpop.f32.mrf.mxu0
  %v1338 = vadd.f32 %v1169, %v1337
  %v1339 = vpop.f32.mrf.mxu0
  %v1340 = vadd.f32 %v1171, %v1339
  %1341 = vmatmul.bf16.gmra.mxu0 %v603
  %v1342 = vpop.f32.mrf.mxu0
  %v1343 = vadd.f32 %v1174, %v1342
  %v1344 = vpop.f32.mrf.mxu0
  %v1345 = vadd.f32 %v1176, %v1344
  %1346 = vmatmul.bf16.gmra.mxu0 %v606
  %v1347 = vpop.f32.mrf.mxu0
  %v1348 = vadd.f32 %v1179, %v1347
  %v1349 = vpop.f32.mrf.mxu0
  %v1350 = vadd.f32 %v1181, %v1349
  %1351 = vmatmul.bf16.gmra.mxu0 %v609
  %v1352 = vpop.f32.mrf.mxu0
  %v1353 = vadd.f32 %v1184, %v1352
  %v1354 = vpop.f32.mrf.mxu0
  %v1355 = vadd.f32 %v1186, %v1354
  %1356 = vdwg.mxu0
  %v1357 = vmax.f32 %v1198, 0.0
  %v1358 = vmax.f32 %v1200, 0.0
  %v1359 = vmax.f32 %v1203, 0.0
  %v1360 = vmax.f32 %v1205, 0.0
  %v1361 = vmax.f32 %v1208, 0.0
  %v1362 = vmax.f32 %v1210, 0.0
  %v1363 = vmax.f32 %v1213, 0.0
  %v1364 = vmax.f32 %v1215, 0.0
  %v1365 = vmax.f32 %v1218, 0.0
  %v1366 = vmax.f32 %v1220, 0.0
  %v1367 = vmax.f32 %v1223, 0.0
  %v1368 = vmax.f32 %v1225, 0.0
  %v1369 = vmax.f32 %v1228, 0.0
  %v1370 = vmax.f32 %v1230, 0.0
  %v1371 = vmax.f32 %v1233, 0.0
  %v1372 = vmax.f32 %v1235, 0.0
  %v1373 = vmax.f32 %v1238, 0.0
  %v1374 = vmax.f32 %v1240, 0.0
  %v1375 = vmax.f32 %v1243, 0.0
  %v1376 = vmax.f32 %v1245, 0.0
  %v1377 = vmax.f32 %v1248, 0.0
  %v1378 = vmax.f32 %v1250, 0.0
  %v1379 = vmax.f32 %v1253, 0.0
  %v1380 = vmax.f32 %v1255, 0.0
  %v1381 = vmax.f32 %v1258, 0.0
  %v1382 = vmax.f32 %v1260, 0.0
  %v1383 = vmax.f32 %v1263, 0.0
  %v1384 = vmax.f32 %v1265, 0.0
  %v1385 = vmax.f32 %v1268, 0.0
  %v1386 = vmax.f32 %v1270, 0.0
  %v1387 = vmax.f32 %v1273, 0.0
  %v1388 = vmax.f32 %v1275, 0.0
  %v1389 = vmax.f32 %v1278, 0.0
  %v1390 = vmax.f32 %v1280, 0.0
  %v1391 = vmax.f32 %v1283, 0.0
  %v1392 = vmax.f32 %v1285, 0.0
  %v1393 = vmax.f32 %v1288, 0.0
  %v1394 = vmax.f32 %v1290, 0.0
  %v1395 = vmax.f32 %v1293, 0.0
  %v1396 = vmax.f32 %v1295, 0.0
  %v1397 = vmax.f32 %v1298, 0.0
  %v1398 = vmax.f32 %v1300, 0.0
  %v1399 = vmax.f32 %v1303, 0.0
  %v1400 = vmax.f32 %v1305, 0.0
  %v1401 = vmax.f32 %v1308, 0.0
  %v1402 = vmax.f32 %v1310, 0.0
  %v1403 = vmax.f32 %v1313, 0.0
  %v1404 = vmax.f32 %v1315, 0.0
  %v1405 = vmax.f32 %v1318, 0.0
  %v1406 = vmax.f32 %v1320, 0.0
  %v1407 = vmax.f32 %v1323, 0.0
  %v1408 = vmax.f32 %v1325, 0.0
  %v1409 = vmax.f32 %v1328, 0.0
  %v1410 = vmax.f32 %v1330, 0.0
  %v1411 = vmax.f32 %v1333, 0.0
  %v1412 = vmax.f32 %v1335, 0.0
  %v1413 = vmax.f32 %v1338, 0.0
  %v1414 = vmax.f32 %v1340, 0.0
  %v1415 = vmax.f32 %v1343, 0.0
  %v1416 = vmax.f32 %v1345, 0.0
  %v1417 = vmax.f32 %v1348, 0.0
  %v1418 = vmax.f32 %v1350, 0.0
  %v1419 = vmax.f32 %v1353, 0.0
  %v1420 = vmax.f32 %v1355, 0.0
  %v1421 = vpack.c.bf16 %v1357, %v1357
  %v1422 = vpack.c.bf16 %v1358, %v1358
  %v1423 = vpack.c.bf16 %v1359, %v1359
  %v1424 = vpack.c.bf16 %v1360, %v1360
  %v1425 = vpack.c.bf16 %v1361, %v1361
  %v1426 = vpack.c.bf16 %v1362, %v1362
  %v1427 = vpack.c.bf16 %v1363, %v1363
  %v1428 = vpack.c.bf16 %v1364, %v1364
  %v1429 = vpack.c.bf16 %v1365, %v1365
  %v1430 = vpack.c.bf16 %v1366, %v1366
  %v1431 = vpack.c.bf16 %v1367, %v1367
  %v1432 = vpack.c.bf16 %v1368, %v1368
  %v1433 = vpack.c.bf16 %v1369, %v1369
  %v1434 = vpack.c.bf16 %v1370, %v1370
  %v1435 = vpack.c.bf16 %v1371, %v1371
  %v1436 = vpack.c.bf16 %v1372, %v1372
  %v1437 = vpack.c.bf16 %v1373, %v1373
  %v1438 = vpack.c.bf16 %v1374, %v1374
  %v1439 = vpack.c.bf16 %v1375, %v1375
  %v1440 = vpack.c.bf16 %v1376, %v1376
  %v1441 = vpack.c.bf16 %v1377, %v1377
  %v1442 = vpack.c.bf16 %v1378, %v1378
  %v1443 = vpack.c.bf16 %v1379, %v1379
  %v1444 = vpack.c.bf16 %v1380, %v1380
  %v1445 = vpack.c.bf16 %v1381, %v1381
  %v1446 = vpack.c.bf16 %v1382, %v1382
  %v1447 = vpack.c.bf16 %v1383, %v1383
  %v1448 = vpack.c.bf16 %v1384, %v1384
  %v1449 = vpack.c.bf16 %v1385, %v1385
  %v1450 = vpack.c.bf16 %v1386, %v1386
  %v1451 = vpack.c.bf16 %v1387, %v1387
  %v1452 = vpack.c.bf16 %v1388, %v1388
  %v1453 = vpack.c.bf16 %v1389, %v1389
  %v1454 = vpack.c.bf16 %v1390, %v1390
  %v1455 = vpack.c.bf16 %v1391, %v1391
  %v1456 = vpack.c.bf16 %v1392, %v1392
  %v1457 = vpack.c.bf16 %v1393, %v1393
  %v1458 = vpack.c.bf16 %v1394, %v1394
  %v1459 = vpack.c.bf16 %v1395, %v1395
  %v1460 = vpack.c.bf16 %v1396, %v1396
  %v1461 = vpack.c.bf16 %v1397, %v1397
  %v1462 = vpack.c.bf16 %v1398, %v1398
  %v1463 = vpack.c.bf16 %v1399, %v1399
  %v1464 = vpack.c.bf16 %v1400, %v1400
  %v1465 = vpack.c.bf16 %v1401, %v1401
  %v1466 = vpack.c.bf16 %v1402, %v1402
  %v1467 = vpack.c.bf16 %v1403, %v1403
  %v1468 = vpack.c.bf16 %v1404, %v1404
  %v1469 = vpack.c.bf16 %v1405, %v1405
  %v1470 = vpack.c.bf16 %v1406, %v1406
  %v1471 = vpack.c.bf16 %v1407, %v1407
  %v1472 = vpack.c.bf16 %v1408, %v1408
  %v1473 = vpack.c.bf16 %v1409, %v1409
  %v1474 = vpack.c.bf16 %v1410, %v1410
  %v1475 = vpack.c.bf16 %v1411, %v1411
  %v1476 = vpack.c.bf16 %v1412, %v1412
  %v1477 = vpack.c.bf16 %v1413, %v1413
  %v1478 = vpack.c.bf16 %v1414, %v1414
  %v1479 = vpack.c.bf16 %v1415, %v1415
  %v1480 = vpack.c.bf16 %v1416, %v1416
  %v1481 = vpack.c.bf16 %v1417, %v1417
  %v1482 = vpack.c.bf16 %v1418, %v1418
  %v1483 = vpack.c.bf16 %v1419, %v1419
  %v1484 = vpack.c.bf16 %v1420, %v1420
  %1485 = vst [vmem:[%s3] sm:$0xf] %v1421
  %1486 = vst [vmem:[%s3 + $0x4] sm:$0xf] %v1422
  %1487 = vst [vmem:[%s3 + $0x8] sm:$0xf] %v1423
  %1488 = vst [vmem:[%s3 + $0xc] sm:$0xf] %v1424
  %1489 = vst [vmem:[%s3 + $0x10] sm:$0xf] %v1425
  %1490 = vst [vmem:[%s3 + $0x14] sm:$0xf] %v1426
  %1491 = vst [vmem:[%s3 + $0x18] sm:$0xf] %v1427
  %1492 = vst [vmem:[%s3 + $0x1c] sm:$0xf] %v1428
  %1493 = vst [vmem:[%s3 + $0x20] sm:$0xf] %v1429
  %1494 = vst [vmem:[%s3 + $0x24] sm:$0xf] %v1430
  %1495 = vst [vmem:[%s3 + $0x28] sm:$0xf] %v1431
  %1496 = vst [vmem:[%s3 + $0x2c] sm:$0xf] %v1432
  %1497 = vst [vmem:[%s3 + $0x30] sm:$0xf] %v1433
  %1498 = vst [vmem:[%s3 + $0x34] sm:$0xf] %v1434
  %1499 = vst [vmem:[%s3 + $0x38] sm:$0xf] %v1435
  %1500 = vst [vmem:[%s3 + $0x3c] sm:$0xf] %v1436
  %1501 = vst [vmem:[%s3 + $0x40] sm:$0xf] %v1437
  %1502 = vst [vmem:[%s3 + $0x44] sm:$0xf] %v1438
  %1503 = vst [vmem:[%s3 + $0x48] sm:$0xf] %v1439
  %1504 = vst [vmem:[%s3 + $0x4c] sm:$0xf] %v1440
  %1505 = vst [vmem:[%s3 + $0x50] sm:$0xf] %v1441
  %1506 = vst [vmem:[%s3 + $0x54] sm:$0xf] %v1442
  %1507 = vst [vmem:[%s3 + $0x58] sm:$0xf] %v1443
  %1508 = vst [vmem:[%s3 + $0x5c] sm:$0xf] %v1444
  %1509 = vst [vmem:[%s3 + $0x60] sm:$0xf] %v1445
  %1510 = vst [vmem:[%s3 + $0x64] sm:$0xf] %v1446
  %1511 = vst [vmem:[%s3 + $0x68] sm:$0xf] %v1447
  %1512 = vst [vmem:[%s3 + $0x6c] sm:$0xf] %v1448
  %1513 = vst [vmem:[%s3 + $0x70] sm:$0xf] %v1449
  %1514 = vst [vmem:[%s3 + $0x74] sm:$0xf] %v1450
  %1515 = vst [vmem:[%s3 + $0x78] sm:$0xf] %v1451
  %1516 = vst [vmem:[%s3 + $0x7c] sm:$0xf] %v1452
  %1517 = vst [vmem:[%s3 + $0x80] sm:$0xf] %v1453
  %1518 = vst [vmem:[%s3 + $0x84] sm:$0xf] %v1454
  %1519 = vst [vmem:[%s3 + $0x88] sm:$0xf] %v1455
  %1520 = vst [vmem:[%s3 + $0x8c] sm:$0xf] %v1456
  %1521 = vst [vmem:[%s3 + $0x90] sm:$0xf] %v1457
  %1522 = vst [vmem:[%s3 + $0x94] sm:$0xf] %v1458
  %1523 = vst [vmem:[%s3 + $0x98] sm:$0xf] %v1459
  %1524 = vst [vmem:[%s3 + $0x9c] sm:$0xf] %v1460
  %1525 = vst [vmem:[%s3 + $0xa0] sm:$0xf] %v1461
  %1526 = vst [vmem:[%s3 + $0xa4] sm:$0xf] %v1462
  %1527 = vst [vmem:[%s3 + $0xa8] sm:$0xf] %v1463
  %1528 = vst [vmem:[%s3 + $0xac] sm:$0xf] %v1464
  %1529 = vst [vmem:[%s3 + $0xb0] sm:$0xf] %v1465
  %1530 = vst [vmem:[%s3 + $0xb4] sm:$0xf] %v1466
  %1531 = vst [vmem:[%s3 + $0xb8] sm:$0xf] %v1467
  %1532 = vst [vmem:[%s3 + $0xbc] sm:$0xf] %v1468
  %1533 = vst [vmem:[%s3 + $0xc0] sm:$0xf] %v1469
  %1534 = vst [vmem:[%s3 + $0xc4] sm:$0xf] %v1470
  %1535 = vst [vmem:[%s3 + $0xc8] sm:$0xf] %v1471
  %1536 = vst [vmem:[%s3 + $0xcc] sm:$0xf] %v1472
  %1537 = vst [vmem:[%s3 + $0xd0] sm:$0xf] %v1473
  %1538 = vst [vmem:[%s3 + $0xd4] sm:$0xf] %v1474
  %1539 = vst [vmem:[%s3 + $0xd8] sm:$0xf] %v1475
  %1540 = vst [vmem:[%s3 + $0xdc] sm:$0xf] %v1476
  %1541 = vst [vmem:[%s3 + $0xe0] sm:$0xf] %v1477
  %1542 = vst [vmem:[%s3 + $0xe4] sm:$0xf] %v1478
  %1543 = vst [vmem:[%s3 + $0xe8] sm:$0xf] %v1479
  %1544 = vst [vmem:[%s3 + $0xec] sm:$0xf] %v1480
  %1545 = vst [vmem:[%s3 + $0xf0] sm:$0xf] %v1481
  %1546 = vst [vmem:[%s3 + $0xf4] sm:$0xf] %v1482
  %1547 = vst [vmem:[%s3 + $0xf8] sm:$0xf] %v1483
  %1548 = vst [vmem:[%s3 + $0xfc] sm:$0xf] %v1484
  // Predicated region
  $region14: #{cnn_model_forward.4} parent=0 // pred_check
    _
  $region15: #{cnn_model_forward.4} parent=0 // pred_check_branch
    %1550 = sbr.rel (0) target = $region17
  $region16: #{cnn_model_forward.4} parent=0 // pred_region
    _
  $region17: #{cnn_model_forward.4} parent=0 // pred_fallthru
    _
  // Predicated region
  $region18: #{cnn_model_forward.4} parent=0 // pred_check
    _
  $region19: #{cnn_model_forward.4} parent=0 // pred_check_branch
    %1552 = sbr.rel (0) target = $region21
  $region20: #{cnn_model_forward.4} parent=0 // pred_region
    _
  $region21: #{cnn_model_forward.4} parent=0 // pred_fallthru
    _

// kernel: cnn_model_forward.5
$region0: #{cnn_model_forward.5}
  #allocation0 [shape = 'u32[]', space=smem, size = 0x4, offset = 0x4, fixed_abs, tag = 'smem constant byte address 0x4 - core index']
  #allocation1 [shape = 'u32[72,128]{1,0:T(1,128)}', space=vmem, size = 0x9000, scoped, tag = 'internal scratch']
  %s0 = inlined_call_operand.vmem [shape: bf16[8,16384], index: 0, kind: input, shape index: {}]
  %s1 = inlined_call_operand.vmem [shape: bf16[16384,128], index: 1, kind: input, shape index: {}]
  %s2 = inlined_call_operand.vmem [shape: f32[1,128], index: 2, kind: input, shape index: {}]
  %s3 = inlined_call_operand.vmem [shape: f32[8,128], index: 3, kind: input, shape index: {}]
  %s4 = inlined_call_operand.vmem [shape: bf16[128,128], index: 4, kind: input, shape index: {}]
  %s5 = inlined_call_operand.vmem [shape: f32[1,128], index: 5, kind: input, shape index: {}]
  %s6 = inlined_call_operand.vmem [shape: f32[8,128], index: 6, kind: output, shape index: {}]
  %s7 = sld [smem:[#allocation0]]
  $region34: #{cnn_model_forward.5} parent=0
    _
  %s9 = ssub.s32 1, %s7
  %s10 = scalar_select 0, %s9, %s7
  // Predicated region
  $region2: #{cnn_model_forward.5} parent=0 // pred_check
    _
  $region3: #{cnn_model_forward.5} parent=0 // pred_check_branch
    %12 = sbr.rel (0) target = $region5
  $region4: #{cnn_model_forward.5} parent=0 // pred_region
    _
  $region5: #{cnn_model_forward.5} parent=0 // pred_fallthru
    _
  // Predicated region
  $region6: #{cnn_model_forward.5} parent=0 // pred_check
    _
  $region7: #{cnn_model_forward.5} parent=0 // pred_check_branch
    %14 = sbr.rel (0) target = $region9
  $region8: #{cnn_model_forward.5} parent=0 // pred_region
    _
  $region9: #{cnn_model_forward.5} parent=0 // pred_fallthru
    _
  // Predicated region
  $region10: #{cnn_model_forward.5} parent=0 // pred_check
    _
  $region11: #{cnn_model_forward.5} parent=0 // pred_check_branch
    %16 = sbr.rel (0) target = $region13
  $region12: #{cnn_model_forward.5} parent=0 // pred_region
    _
  $region13: #{cnn_model_forward.5} parent=0 // pred_fallthru
    _
  // Predicated region
  $region14: #{cnn_model_forward.5} parent=0 // pred_check
    _
  $region15: #{cnn_model_forward.5} parent=0 // pred_check_branch
    %18 = sbr.rel (0) target = $region17
  $region16: #{cnn_model_forward.5} parent=0 // pred_region
    _
  $region17: #{cnn_model_forward.5} parent=0 // pred_fallthru
    _
  // Predicated region
  $region18: #{cnn_model_forward.5} parent=0 // pred_check
    _
  $region19: #{cnn_model_forward.5} parent=0 // pred_check_branch
    %20 = sbr.rel (0) target = $region21
  $region20: #{cnn_model_forward.5} parent=0 // pred_region
    _
  $region21: #{cnn_model_forward.5} parent=0 // pred_fallthru
    _
  // Predicated region
  $region22: #{cnn_model_forward.5} parent=0 // pred_check
    _
  $region23: #{cnn_model_forward.5} parent=0 // pred_check_branch
    %22 = sbr.rel (0) target = $region25
  $region24: #{cnn_model_forward.5} parent=0 // pred_region
    _
  $region25: #{cnn_model_forward.5} parent=0 // pred_fallthru
    _
  %v23 = vld [vmem:[%s0] sm:$0xff]
  %v24 = vld [vmem:[%s0 + $0x8] sm:$0xff]
  %v25 = vld [vmem:[%s0 + $0x10] sm:$0xff]
  %v26 = vld [vmem:[%s0 + $0x18] sm:$0xff]
  %v27 = vld [vmem:[%s0 + $0x20] sm:$0xff]
  %v28 = vld [vmem:[%s0 + $0x28] sm:$0xff]
  %v29 = vld [vmem:[%s0 + $0x30] sm:$0xff]
  %v30 = vld [vmem:[%s0 + $0x38] sm:$0xff]
  %v31 = vld [vmem:[%s0 + $0x40] sm:$0xff]
  %v32 = vld [vmem:[%s0 + $0x48] sm:$0xff]
  %v33 = vld [vmem:[%s0 + $0x50] sm:$0xff]
  %v34 = vld [vmem:[%s0 + $0x58] sm:$0xff]
  %v35 = vld [vmem:[%s0 + $0x60] sm:$0xff]
  %v36 = vld [vmem:[%s0 + $0x68] sm:$0xff]
  %v37 = vld [vmem:[%s0 + $0x70] sm:$0xff]
  %v38 = vld [vmem:[%s0 + $0x78] sm:$0xff]
  %v39 = vld [vmem:[%s0 + $0x80] sm:$0xff]
  %v40 = vld [vmem:[%s0 + $0x88] sm:$0xff]
  %v41 = vld [vmem:[%s0 + $0x90] sm:$0xff]
  %v42 = vld [vmem:[%s0 + $0x98] sm:$0xff]
  %v43 = vld [vmem:[%s0 + $0xa0] sm:$0xff]
  %v44 = vld [vmem:[%s0 + $0xa8] sm:$0xff]
  %v45 = vld [vmem:[%s0 + $0xb0] sm:$0xff]
  %v46 = vld [vmem:[%s0 + $0xb8] sm:$0xff]
  %v47 = vld [vmem:[%s0 + $0xc0] sm:$0xff]
  %v48 = vld [vmem:[%s0 + $0xc8] sm:$0xff]
  %v49 = vld [vmem:[%s0 + $0xd0] sm:$0xff]
  %v50 = vld [vmem:[%s0 + $0xd8] sm:$0xff]
  %v51 = vld [vmem:[%s0 + $0xe0] sm:$0xff]
  %v52 = vld [vmem:[%s0 + $0xe8] sm:$0xff]
  %v53 = vld [vmem:[%s0 + $0xf0] sm:$0xff]
  %v54 = vld [vmem:[%s0 + $0xf8] sm:$0xff]
  %v55 = vld [vmem:[%s0 + $0x100] sm:$0xff]
  %v56 = vld [vmem:[%s0 + $0x108] sm:$0xff]
  %v57 = vld [vmem:[%s0 + $0x110] sm:$0xff]
  %v58 = vld [vmem:[%s0 + $0x118] sm:$0xff]
  %v59 = vld [vmem:[%s0 + $0x120] sm:$0xff]
  %v60 = vld [vmem:[%s0 + $0x128] sm:$0xff]
  %v61 = vld [vmem:[%s0 + $0x130] sm:$0xff]
  %v62 = vld [vmem:[%s0 + $0x138] sm:$0xff]
  %v63 = vld [vmem:[%s0 + $0x140] sm:$0xff]
  %v64 = vld [vmem:[%s0 + $0x148] sm:$0xff]
  %v65 = vld [vmem:[%s0 + $0x150] sm:$0xff]
  %v66 = vld [vmem:[%s0 + $0x158] sm:$0xff]
  %v67 = vld [vmem:[%s0 + $0x160] sm:$0xff]
  %v68 = vld [vmem:[%s0 + $0x168] sm:$0xff]
  %v69 = vld [vmem:[%s0 + $0x170] sm:$0xff]
  %v70 = vld [vmem:[%s0 + $0x178] sm:$0xff]
  %v71 = vld [vmem:[%s0 + $0x180] sm:$0xff]
  %v72 = vld [vmem:[%s0 + $0x188] sm:$0xff]
  %v73 = vld [vmem:[%s0 + $0x190] sm:$0xff]
  %v74 = vld [vmem:[%s0 + $0x198] sm:$0xff]
  %v75 = vld [vmem:[%s0 + $0x1a0] sm:$0xff]
  %v76 = vld [vmem:[%s0 + $0x1a8] sm:$0xff]
  %v77 = vld [vmem:[%s0 + $0x1b0] sm:$0xff]
  %v78 = vld [vmem:[%s0 + $0x1b8] sm:$0xff]
  %v79 = vld [vmem:[%s0 + $0x1c0] sm:$0xff]
  %v80 = vld [vmem:[%s0 + $0x1c8] sm:$0xff]
  %v81 = vld [vmem:[%s0 + $0x1d0] sm:$0xff]
  %v82 = vld [vmem:[%s0 + $0x1d8] sm:$0xff]
  %v83 = vld [vmem:[%s0 + $0x1e0] sm:$0xff]
  %v84 = vld [vmem:[%s0 + $0x1e8] sm:$0xff]
  %v85 = vld [vmem:[%s0 + $0x1f0] sm:$0xff]
  %v86 = vld [vmem:[%s0 + $0x1f8] sm:$0xff]
  %v87 = vld [vmem:[%s1] sm:$0xf]
  %v88 = vld [vmem:[%s1 + $0x4] sm:$0xf]
  %v89 = vld [vmem:[%s1 + $0x8] sm:$0xf]
  %v90 = vld [vmem:[%s1 + $0xc] sm:$0xf]
  %v91 = vld [vmem:[%s1 + $0x10] sm:$0xf]
  %v92 = vld [vmem:[%s1 + $0x14] sm:$0xf]
  %v93 = vld [vmem:[%s1 + $0x18] sm:$0xf]
  %v94 = vld [vmem:[%s1 + $0x1c] sm:$0xf]
  %v95 = vld [vmem:[%s1 + $0x20] sm:$0xf]
  %v96 = vld [vmem:[%s1 + $0x24] sm:$0xf]
  %v97 = vld [vmem:[%s1 + $0x28] sm:$0xf]
  %v98 = vld [vmem:[%s1 + $0x2c] sm:$0xf]
  %v99 = vld [vmem:[%s1 + $0x30] sm:$0xf]
  %v100 = vld [vmem:[%s1 + $0x34] sm:$0xf]
  %v101 = vld [vmem:[%s1 + $0x38] sm:$0xf]
  %v102 = vld [vmem:[%s1 + $0x3c] sm:$0xf]
  %v103 = vld [vmem:[%s1 + $0x40] sm:$0xf]
  %v104 = vld [vmem:[%s1 + $0x44] sm:$0xf]
  %v105 = vld [vmem:[%s1 + $0x48] sm:$0xf]
  %v106 = vld [vmem:[%s1 + $0x4c] sm:$0xf]
  %v107 = vld [vmem:[%s1 + $0x50] sm:$0xf]
  %v108 = vld [vmem:[%s1 + $0x54] sm:$0xf]
  %v109 = vld [vmem:[%s1 + $0x58] sm:$0xf]
  %v110 = vld [vmem:[%s1 + $0x5c] sm:$0xf]
  %v111 = vld [vmem:[%s1 + $0x60] sm:$0xf]
  %v112 = vld [vmem:[%s1 + $0x64] sm:$0xf]
  %v113 = vld [vmem:[%s1 + $0x68] sm:$0xf]
  %v114 = vld [vmem:[%s1 + $0x6c] sm:$0xf]
  %v115 = vld [vmem:[%s1 + $0x70] sm:$0xf]
  %v116 = vld [vmem:[%s1 + $0x74] sm:$0xf]
  %v117 = vld [vmem:[%s1 + $0x78] sm:$0xf]
  %v118 = vld [vmem:[%s1 + $0x7c] sm:$0xf]
  %v119 = vld [vmem:[%s1 + $0x80] sm:$0xf]
  %v120 = vld [vmem:[%s1 + $0x84] sm:$0xf]
  %v121 = vld [vmem:[%s1 + $0x88] sm:$0xf]
  %v122 = vld [vmem:[%s1 + $0x8c] sm:$0xf]
  %v123 = vld [vmem:[%s1 + $0x90] sm:$0xf]
  %v124 = vld [vmem:[%s1 + $0x94] sm:$0xf]
  %v125 = vld [vmem:[%s1 + $0x98] sm:$0xf]
  %v126 = vld [vmem:[%s1 + $0x9c] sm:$0xf]
  %v127 = vld [vmem:[%s1 + $0xa0] sm:$0xf]
  %v128 = vld [vmem:[%s1 + $0xa4] sm:$0xf]
  %v129 = vld [vmem:[%s1 + $0xa8] sm:$0xf]
  %v130 = vld [vmem:[%s1 + $0xac] sm:$0xf]
  %v131 = vld [vmem:[%s1 + $0xb0] sm:$0xf]
  %v132 = vld [vmem:[%s1 + $0xb4] sm:$0xf]
  %v133 = vld [vmem:[%s1 + $0xb8] sm:$0xf]
  %v134 = vld [vmem:[%s1 + $0xbc] sm:$0xf]
  %v135 = vld [vmem:[%s1 + $0xc0] sm:$0xf]
  %v136 = vld [vmem:[%s1 + $0xc4] sm:$0xf]
  %v137 = vld [vmem:[%s1 + $0xc8] sm:$0xf]
  %v138 = vld [vmem:[%s1 + $0xcc] sm:$0xf]
  %v139 = vld [vmem:[%s1 + $0xd0] sm:$0xf]
  %v140 = vld [vmem:[%s1 + $0xd4] sm:$0xf]
  %v141 = vld [vmem:[%s1 + $0xd8] sm:$0xf]
  %v142 = vld [vmem:[%s1 + $0xdc] sm:$0xf]
  %v143 = vld [vmem:[%s1 + $0xe0] sm:$0xf]
  %v144 = vld [vmem:[%s1 + $0xe4] sm:$0xf]
  %v145 = vld [vmem:[%s1 + $0xe8] sm:$0xf]
  %v146 = vld [vmem:[%s1 + $0xec] sm:$0xf]
  %v147 = vld [vmem:[%s1 + $0xf0] sm:$0xf]
  %v148 = vld [vmem:[%s1 + $0xf4] sm:$0xf]
  %v149 = vld [vmem:[%s1 + $0xf8] sm:$0xf]
  %v150 = vld [vmem:[%s1 + $0xfc] sm:$0xf]
  %v151 = vld [vmem:[%s1 + $0x100] sm:$0xf]
  %v152 = vld [vmem:[%s1 + $0x104] sm:$0xf]
  %v153 = vld [vmem:[%s1 + $0x108] sm:$0xf]
  %v154 = vld [vmem:[%s1 + $0x10c] sm:$0xf]
  %v155 = vld [vmem:[%s1 + $0x110] sm:$0xf]
  %v156 = vld [vmem:[%s1 + $0x114] sm:$0xf]
  %v157 = vld [vmem:[%s1 + $0x118] sm:$0xf]
  %v158 = vld [vmem:[%s1 + $0x11c] sm:$0xf]
  %v159 = vld [vmem:[%s1 + $0x120] sm:$0xf]
  %v160 = vld [vmem:[%s1 + $0x124] sm:$0xf]
  %v161 = vld [vmem:[%s1 + $0x128] sm:$0xf]
  %v162 = vld [vmem:[%s1 + $0x12c] sm:$0xf]
  %v163 = vld [vmem:[%s1 + $0x130] sm:$0xf]
  %v164 = vld [vmem:[%s1 + $0x134] sm:$0xf]
  %v165 = vld [vmem:[%s1 + $0x138] sm:$0xf]
  %v166 = vld [vmem:[%s1 + $0x13c] sm:$0xf]
  %v167 = vld [vmem:[%s1 + $0x140] sm:$0xf]
  %v168 = vld [vmem:[%s1 + $0x144] sm:$0xf]
  %v169 = vld [vmem:[%s1 + $0x148] sm:$0xf]
  %v170 = vld [vmem:[%s1 + $0x14c] sm:$0xf]
  %v171 = vld [vmem:[%s1 + $0x150] sm:$0xf]
  %v172 = vld [vmem:[%s1 + $0x154] sm:$0xf]
  %v173 = vld [vmem:[%s1 + $0x158] sm:$0xf]
  %v174 = vld [vmem:[%s1 + $0x15c] sm:$0xf]
  %v175 = vld [vmem:[%s1 + $0x160] sm:$0xf]
  %v176 = vld [vmem:[%s1 + $0x164] sm:$0xf]
  %v177 = vld [vmem:[%s1 + $0x168] sm:$0xf]
  %v178 = vld [vmem:[%s1 + $0x16c] sm:$0xf]
  %v179 = vld [vmem:[%s1 + $0x170] sm:$0xf]
  %v180 = vld [vmem:[%s1 + $0x174] sm:$0xf]
  %v181 = vld [vmem:[%s1 + $0x178] sm:$0xf]
  %v182 = vld [vmem:[%s1 + $0x17c] sm:$0xf]
  %v183 = vld [vmem:[%s1 + $0x180] sm:$0xf]
  %v184 = vld [vmem:[%s1 + $0x184] sm:$0xf]
  %v185 = vld [vmem:[%s1 + $0x188] sm:$0xf]
  %v186 = vld [vmem:[%s1 + $0x18c] sm:$0xf]
  %v187 = vld [vmem:[%s1 + $0x190] sm:$0xf]
  %v188 = vld [vmem:[%s1 + $0x194] sm:$0xf]
  %v189 = vld [vmem:[%s1 + $0x198] sm:$0xf]
  %v190 = vld [vmem:[%s1 + $0x19c] sm:$0xf]
  %v191 = vld [vmem:[%s1 + $0x1a0] sm:$0xf]
  %v192 = vld [vmem:[%s1 + $0x1a4] sm:$0xf]
  %v193 = vld [vmem:[%s1 + $0x1a8] sm:$0xf]
  %v194 = vld [vmem:[%s1 + $0x1ac] sm:$0xf]
  %v195 = vld [vmem:[%s1 + $0x1b0] sm:$0xf]
  %v196 = vld [vmem:[%s1 + $0x1b4] sm:$0xf]
  %v197 = vld [vmem:[%s1 + $0x1b8] sm:$0xf]
  %v198 = vld [vmem:[%s1 + $0x1bc] sm:$0xf]
  %v199 = vld [vmem:[%s1 + $0x1c0] sm:$0xf]
  %v200 = vld [vmem:[%s1 + $0x1c4] sm:$0xf]
  %v201 = vld [vmem:[%s1 + $0x1c8] sm:$0xf]
  %v202 = vld [vmem:[%s1 + $0x1cc] sm:$0xf]
  %v203 = vld [vmem:[%s1 + $0x1d0] sm:$0xf]
  %v204 = vld [vmem:[%s1 + $0x1d4] sm:$0xf]
  %v205 = vld [vmem:[%s1 + $0x1d8] sm:$0xf]
  %v206 = vld [vmem:[%s1 + $0x1dc] sm:$0xf]
  %v207 = vld [vmem:[%s1 + $0x1e0] sm:$0xf]
  %v208 = vld [vmem:[%s1 + $0x1e4] sm:$0xf]
  %v209 = vld [vmem:[%s1 + $0x1e8] sm:$0xf]
  %v210 = vld [vmem:[%s1 + $0x1ec] sm:$0xf]
  %v211 = vld [vmem:[%s1 + $0x1f0] sm:$0xf]
  %v212 = vld [vmem:[%s1 + $0x1f4] sm:$0xf]
  %v213 = vld [vmem:[%s1 + $0x1f8] sm:$0xf]
  %v214 = vld [vmem:[%s1 + $0x1fc] sm:$0xf]
  %v215 = vld [vmem:[%s1 + $0x200] sm:$0xf]
  %v216 = vld [vmem:[%s1 + $0x204] sm:$0xf]
  %v217 = vld [vmem:[%s1 + $0x208] sm:$0xf]
  %v218 = vld [vmem:[%s1 + $0x20c] sm:$0xf]
  %v219 = vld [vmem:[%s1 + $0x210] sm:$0xf]
  %v220 = vld [vmem:[%s1 + $0x214] sm:$0xf]
  %v221 = vld [vmem:[%s1 + $0x218] sm:$0xf]
  %v222 = vld [vmem:[%s1 + $0x21c] sm:$0xf]
  %v223 = vld [vmem:[%s1 + $0x220] sm:$0xf]
  %v224 = vld [vmem:[%s1 + $0x224] sm:$0xf]
  %v225 = vld [vmem:[%s1 + $0x228] sm:$0xf]
  %v226 = vld [vmem:[%s1 + $0x22c] sm:$0xf]
  %v227 = vld [vmem:[%s1 + $0x230] sm:$0xf]
  %v228 = vld [vmem:[%s1 + $0x234] sm:$0xf]
  %v229 = vld [vmem:[%s1 + $0x238] sm:$0xf]
  %v230 = vld [vmem:[%s1 + $0x23c] sm:$0xf]
  %v231 = vld [vmem:[%s1 + $0x240] sm:$0xf]
  %v232 = vld [vmem:[%s1 + $0x244] sm:$0xf]
  %v233 = vld [vmem:[%s1 + $0x248] sm:$0xf]
  %v234 = vld [vmem:[%s1 + $0x24c] sm:$0xf]
  %v235 = vld [vmem:[%s1 + $0x250] sm:$0xf]
  %v236 = vld [vmem:[%s1 + $0x254] sm:$0xf]
  %v237 = vld [vmem:[%s1 + $0x258] sm:$0xf]
  %v238 = vld [vmem:[%s1 + $0x25c] sm:$0xf]
  %v239 = vld [vmem:[%s1 + $0x260] sm:$0xf]
  %v240 = vld [vmem:[%s1 + $0x264] sm:$0xf]
  %v241 = vld [vmem:[%s1 + $0x268] sm:$0xf]
  %v242 = vld [vmem:[%s1 + $0x26c] sm:$0xf]
  %v243 = vld [vmem:[%s1 + $0x270] sm:$0xf]
  %v244 = vld [vmem:[%s1 + $0x274] sm:$0xf]
  %v245 = vld [vmem:[%s1 + $0x278] sm:$0xf]
  %v246 = vld [vmem:[%s1 + $0x27c] sm:$0xf]
  %v247 = vld [vmem:[%s1 + $0x280] sm:$0xf]
  %v248 = vld [vmem:[%s1 + $0x284] sm:$0xf]
  %v249 = vld [vmem:[%s1 + $0x288] sm:$0xf]
  %v250 = vld [vmem:[%s1 + $0x28c] sm:$0xf]
  %v251 = vld [vmem:[%s1 + $0x290] sm:$0xf]
  %v252 = vld [vmem:[%s1 + $0x294] sm:$0xf]
  %v253 = vld [vmem:[%s1 + $0x298] sm:$0xf]
  %v254 = vld [vmem:[%s1 + $0x29c] sm:$0xf]
  %v255 = vld [vmem:[%s1 + $0x2a0] sm:$0xf]
  %v256 = vld [vmem:[%s1 + $0x2a4] sm:$0xf]
  %v257 = vld [vmem:[%s1 + $0x2a8] sm:$0xf]
  %v258 = vld [vmem:[%s1 + $0x2ac] sm:$0xf]
  %v259 = vld [vmem:[%s1 + $0x2b0] sm:$0xf]
  %v260 = vld [vmem:[%s1 + $0x2b4] sm:$0xf]
  %v261 = vld [vmem:[%s1 + $0x2b8] sm:$0xf]
  %v262 = vld [vmem:[%s1 + $0x2bc] sm:$0xf]
  %v263 = vld [vmem:[%s1 + $0x2c0] sm:$0xf]
  %v264 = vld [vmem:[%s1 + $0x2c4] sm:$0xf]
  %v265 = vld [vmem:[%s1 + $0x2c8] sm:$0xf]
  %v266 = vld [vmem:[%s1 + $0x2cc] sm:$0xf]
  %v267 = vld [vmem:[%s1 + $0x2d0] sm:$0xf]
  %v268 = vld [vmem:[%s1 + $0x2d4] sm:$0xf]
  %v269 = vld [vmem:[%s1 + $0x2d8] sm:$0xf]
  %v270 = vld [vmem:[%s1 + $0x2dc] sm:$0xf]
  %v271 = vld [vmem:[%s1 + $0x2e0] sm:$0xf]
  %v272 = vld [vmem:[%s1 + $0x2e4] sm:$0xf]
  %v273 = vld [vmem:[%s1 + $0x2e8] sm:$0xf]
  %v274 = vld [vmem:[%s1 + $0x2ec] sm:$0xf]
  %v275 = vld [vmem:[%s1 + $0x2f0] sm:$0xf]
  %v276 = vld [vmem:[%s1 + $0x2f4] sm:$0xf]
  %v277 = vld [vmem:[%s1 + $0x2f8] sm:$0xf]
  %v278 = vld [vmem:[%s1 + $0x2fc] sm:$0xf]
  %v279 = vld [vmem:[%s1 + $0x300] sm:$0xf]
  %v280 = vld [vmem:[%s1 + $0x304] sm:$0xf]
  %v281 = vld [vmem:[%s1 + $0x308] sm:$0xf]
  %v282 = vld [vmem:[%s1 + $0x30c] sm:$0xf]
  %v283 = vld [vmem:[%s1 + $0x310] sm:$0xf]
  %v284 = vld [vmem:[%s1 + $0x314] sm:$0xf]
  %v285 = vld [vmem:[%s1 + $0x318] sm:$0xf]
  %v286 = vld [vmem:[%s1 + $0x31c] sm:$0xf]
  %v287 = vld [vmem:[%s1 + $0x320] sm:$0xf]
  %v288 = vld [vmem:[%s1 + $0x324] sm:$0xf]
  %v289 = vld [vmem:[%s1 + $0x328] sm:$0xf]
  %v290 = vld [vmem:[%s1 + $0x32c] sm:$0xf]
  %v291 = vld [vmem:[%s1 + $0x330] sm:$0xf]
  %v292 = vld [vmem:[%s1 + $0x334] sm:$0xf]
  %v293 = vld [vmem:[%s1 + $0x338] sm:$0xf]
  %v294 = vld [vmem:[%s1 + $0x33c] sm:$0xf]
  %v295 = vld [vmem:[%s1 + $0x340] sm:$0xf]
  %v296 = vld [vmem:[%s1 + $0x344] sm:$0xf]
  %v297 = vld [vmem:[%s1 + $0x348] sm:$0xf]
  %v298 = vld [vmem:[%s1 + $0x34c] sm:$0xf]
  %v299 = vld [vmem:[%s1 + $0x350] sm:$0xf]
  %v300 = vld [vmem:[%s1 + $0x354] sm:$0xf]
  %v301 = vld [vmem:[%s1 + $0x358] sm:$0xf]
  %v302 = vld [vmem:[%s1 + $0x35c] sm:$0xf]
  %v303 = vld [vmem:[%s1 + $0x360] sm:$0xf]
  %v304 = vld [vmem:[%s1 + $0x364] sm:$0xf]
  %v305 = vld [vmem:[%s1 + $0x368] sm:$0xf]
  %v306 = vld [vmem:[%s1 + $0x36c] sm:$0xf]
  %v307 = vld [vmem:[%s1 + $0x370] sm:$0xf]
  %v308 = vld [vmem:[%s1 + $0x374] sm:$0xf]
  %v309 = vld [vmem:[%s1 + $0x378] sm:$0xf]
  %v310 = vld [vmem:[%s1 + $0x37c] sm:$0xf]
  %v311 = vld [vmem:[%s1 + $0x380] sm:$0xf]
  %v312 = vld [vmem:[%s1 + $0x384] sm:$0xf]
  %v313 = vld [vmem:[%s1 + $0x388] sm:$0xf]
  %v314 = vld [vmem:[%s1 + $0x38c] sm:$0xf]
  %v315 = vld [vmem:[%s1 + $0x390] sm:$0xf]
  %v316 = vld [vmem:[%s1 + $0x394] sm:$0xf]
  %v317 = vld [vmem:[%s1 + $0x398] sm:$0xf]
  %v318 = vld [vmem:[%s1 + $0x39c] sm:$0xf]
  %v319 = vld [vmem:[%s1 + $0x3a0] sm:$0xf]
  %v320 = vld [vmem:[%s1 + $0x3a4] sm:$0xf]
  %v321 = vld [vmem:[%s1 + $0x3a8] sm:$0xf]
  %v322 = vld [vmem:[%s1 + $0x3ac] sm:$0xf]
  %v323 = vld [vmem:[%s1 + $0x3b0] sm:$0xf]
  %v324 = vld [vmem:[%s1 + $0x3b4] sm:$0xf]
  %v325 = vld [vmem:[%s1 + $0x3b8] sm:$0xf]
  %v326 = vld [vmem:[%s1 + $0x3bc] sm:$0xf]
  %v327 = vld [vmem:[%s1 + $0x3c0] sm:$0xf]
  %v328 = vld [vmem:[%s1 + $0x3c4] sm:$0xf]
  %v329 = vld [vmem:[%s1 + $0x3c8] sm:$0xf]
  %v330 = vld [vmem:[%s1 + $0x3cc] sm:$0xf]
  %v331 = vld [vmem:[%s1 + $0x3d0] sm:$0xf]
  %v332 = vld [vmem:[%s1 + $0x3d4] sm:$0xf]
  %v333 = vld [vmem:[%s1 + $0x3d8] sm:$0xf]
  %v334 = vld [vmem:[%s1 + $0x3dc] sm:$0xf]
  %v335 = vld [vmem:[%s1 + $0x3e0] sm:$0xf]
  %v336 = vld [vmem:[%s1 + $0x3e4] sm:$0xf]
  %v337 = vld [vmem:[%s1 + $0x3e8] sm:$0xf]
  %v338 = vld [vmem:[%s1 + $0x3ec] sm:$0xf]
  %v339 = vld [vmem:[%s1 + $0x3f0] sm:$0xf]
  %v340 = vld [vmem:[%s1 + $0x3f4] sm:$0xf]
  %v341 = vld [vmem:[%s1 + $0x3f8] sm:$0xf]
  %v342 = vld [vmem:[%s1 + $0x3fc] sm:$0xf]
  %v343 = vld [vmem:[%s1 + $0x400] sm:$0xf]
  %v344 = vld [vmem:[%s1 + $0x404] sm:$0xf]
  %v345 = vld [vmem:[%s1 + $0x408] sm:$0xf]
  %v346 = vld [vmem:[%s1 + $0x40c] sm:$0xf]
  %v347 = vld [vmem:[%s1 + $0x410] sm:$0xf]
  %v348 = vld [vmem:[%s1 + $0x414] sm:$0xf]
  %v349 = vld [vmem:[%s1 + $0x418] sm:$0xf]
  %v350 = vld [vmem:[%s1 + $0x41c] sm:$0xf]
  %v351 = vld [vmem:[%s1 + $0x420] sm:$0xf]
  %v352 = vld [vmem:[%s1 + $0x424] sm:$0xf]
  %v353 = vld [vmem:[%s1 + $0x428] sm:$0xf]
  %v354 = vld [vmem:[%s1 + $0x42c] sm:$0xf]
  %v355 = vld [vmem:[%s1 + $0x430] sm:$0xf]
  %v356 = vld [vmem:[%s1 + $0x434] sm:$0xf]
  %v357 = vld [vmem:[%s1 + $0x438] sm:$0xf]
  %v358 = vld [vmem:[%s1 + $0x43c] sm:$0xf]
  %v359 = vld [vmem:[%s1 + $0x440] sm:$0xf]
  %v360 = vld [vmem:[%s1 + $0x444] sm:$0xf]
  %v361 = vld [vmem:[%s1 + $0x448] sm:$0xf]
  %v362 = vld [vmem:[%s1 + $0x44c] sm:$0xf]
  %v363 = vld [vmem:[%s1 + $0x450] sm:$0xf]
  %v364 = vld [vmem:[%s1 + $0x454] sm:$0xf]
  %v365 = vld [vmem:[%s1 + $0x458] sm:$0xf]
  %v366 = vld [vmem:[%s1 + $0x45c] sm:$0xf]
  %v367 = vld [vmem:[%s1 + $0x460] sm:$0xf]
  %v368 = vld [vmem:[%s1 + $0x464] sm:$0xf]
  %v369 = vld [vmem:[%s1 + $0x468] sm:$0xf]
  %v370 = vld [vmem:[%s1 + $0x46c] sm:$0xf]
  %v371 = vld [vmem:[%s1 + $0x470] sm:$0xf]
  %v372 = vld [vmem:[%s1 + $0x474] sm:$0xf]
  %v373 = vld [vmem:[%s1 + $0x478] sm:$0xf]
  %v374 = vld [vmem:[%s1 + $0x47c] sm:$0xf]
  %v375 = vld [vmem:[%s1 + $0x480] sm:$0xf]
  %v376 = vld [vmem:[%s1 + $0x484] sm:$0xf]
  %v377 = vld [vmem:[%s1 + $0x488] sm:$0xf]
  %v378 = vld [vmem:[%s1 + $0x48c] sm:$0xf]
  %v379 = vld [vmem:[%s1 + $0x490] sm:$0xf]
  %v380 = vld [vmem:[%s1 + $0x494] sm:$0xf]
  %v381 = vld [vmem:[%s1 + $0x498] sm:$0xf]
  %v382 = vld [vmem:[%s1 + $0x49c] sm:$0xf]
  %v383 = vld [vmem:[%s1 + $0x4a0] sm:$0xf]
  %v384 = vld [vmem:[%s1 + $0x4a4] sm:$0xf]
  %v385 = vld [vmem:[%s1 + $0x4a8] sm:$0xf]
  %v386 = vld [vmem:[%s1 + $0x4ac] sm:$0xf]
  %v387 = vld [vmem:[%s1 + $0x4b0] sm:$0xf]
  %v388 = vld [vmem:[%s1 + $0x4b4] sm:$0xf]
  %v389 = vld [vmem:[%s1 + $0x4b8] sm:$0xf]
  %v390 = vld [vmem:[%s1 + $0x4bc] sm:$0xf]
  %v391 = vld [vmem:[%s1 + $0x4c0] sm:$0xf]
  %v392 = vld [vmem:[%s1 + $0x4c4] sm:$0xf]
  %v393 = vld [vmem:[%s1 + $0x4c8] sm:$0xf]
  %v394 = vld [vmem:[%s1 + $0x4cc] sm:$0xf]
  %v395 = vld [vmem:[%s1 + $0x4d0] sm:$0xf]
  %v396 = vld [vmem:[%s1 + $0x4d4] sm:$0xf]
  %v397 = vld [vmem:[%s1 + $0x4d8] sm:$0xf]
  %v398 = vld [vmem:[%s1 + $0x4dc] sm:$0xf]
  %v399 = vld [vmem:[%s1 + $0x4e0] sm:$0xf]
  %v400 = vld [vmem:[%s1 + $0x4e4] sm:$0xf]
  %v401 = vld [vmem:[%s1 + $0x4e8] sm:$0xf]
  %v402 = vld [vmem:[%s1 + $0x4ec] sm:$0xf]
  %v403 = vld [vmem:[%s1 + $0x4f0] sm:$0xf]
  %v404 = vld [vmem:[%s1 + $0x4f4] sm:$0xf]
  %v405 = vld [vmem:[%s1 + $0x4f8] sm:$0xf]
  %v406 = vld [vmem:[%s1 + $0x4fc] sm:$0xf]
  %v407 = vld [vmem:[%s1 + $0x500] sm:$0xf]
  %v408 = vld [vmem:[%s1 + $0x504] sm:$0xf]
  %v409 = vld [vmem:[%s1 + $0x508] sm:$0xf]
  %v410 = vld [vmem:[%s1 + $0x50c] sm:$0xf]
  %v411 = vld [vmem:[%s1 + $0x510] sm:$0xf]
  %v412 = vld [vmem:[%s1 + $0x514] sm:$0xf]
  %v413 = vld [vmem:[%s1 + $0x518] sm:$0xf]
  %v414 = vld [vmem:[%s1 + $0x51c] sm:$0xf]
  %v415 = vld [vmem:[%s1 + $0x520] sm:$0xf]
  %v416 = vld [vmem:[%s1 + $0x524] sm:$0xf]
  %v417 = vld [vmem:[%s1 + $0x528] sm:$0xf]
  %v418 = vld [vmem:[%s1 + $0x52c] sm:$0xf]
  %v419 = vld [vmem:[%s1 + $0x530] sm:$0xf]
  %v420 = vld [vmem:[%s1 + $0x534] sm:$0xf]
  %v421 = vld [vmem:[%s1 + $0x538] sm:$0xf]
  %v422 = vld [vmem:[%s1 + $0x53c] sm:$0xf]
  %v423 = vld [vmem:[%s1 + $0x540] sm:$0xf]
  %v424 = vld [vmem:[%s1 + $0x544] sm:$0xf]
  %v425 = vld [vmem:[%s1 + $0x548] sm:$0xf]
  %v426 = vld [vmem:[%s1 + $0x54c] sm:$0xf]
  %v427 = vld [vmem:[%s1 + $0x550] sm:$0xf]
  %v428 = vld [vmem:[%s1 + $0x554] sm:$0xf]
  %v429 = vld [vmem:[%s1 + $0x558] sm:$0xf]
  %v430 = vld [vmem:[%s1 + $0x55c] sm:$0xf]
  %v431 = vld [vmem:[%s1 + $0x560] sm:$0xf]
  %v432 = vld [vmem:[%s1 + $0x564] sm:$0xf]
  %v433 = vld [vmem:[%s1 + $0x568] sm:$0xf]
  %v434 = vld [vmem:[%s1 + $0x56c] sm:$0xf]
  %v435 = vld [vmem:[%s1 + $0x570] sm:$0xf]
  %v436 = vld [vmem:[%s1 + $0x574] sm:$0xf]
  %v437 = vld [vmem:[%s1 + $0x578] sm:$0xf]
  %v438 = vld [vmem:[%s1 + $0x57c] sm:$0xf]
  %v439 = vld [vmem:[%s1 + $0x580] sm:$0xf]
  %v440 = vld [vmem:[%s1 + $0x584] sm:$0xf]
  %v441 = vld [vmem:[%s1 + $0x588] sm:$0xf]
  %v442 = vld [vmem:[%s1 + $0x58c] sm:$0xf]
  %v443 = vld [vmem:[%s1 + $0x590] sm:$0xf]
  %v444 = vld [vmem:[%s1 + $0x594] sm:$0xf]
  %v445 = vld [vmem:[%s1 + $0x598] sm:$0xf]
  %v446 = vld [vmem:[%s1 + $0x59c] sm:$0xf]
  %v447 = vld [vmem:[%s1 + $0x5a0] sm:$0xf]
  %v448 = vld [vmem:[%s1 + $0x5a4] sm:$0xf]
  %v449 = vld [vmem:[%s1 + $0x5a8] sm:$0xf]
  %v450 = vld [vmem:[%s1 + $0x5ac] sm:$0xf]
  %v451 = vld [vmem:[%s1 + $0x5b0] sm:$0xf]
  %v452 = vld [vmem:[%s1 + $0x5b4] sm:$0xf]
  %v453 = vld [vmem:[%s1 + $0x5b8] sm:$0xf]
  %v454 = vld [vmem:[%s1 + $0x5bc] sm:$0xf]
  %v455 = vld [vmem:[%s1 + $0x5c0] sm:$0xf]
  %v456 = vld [vmem:[%s1 + $0x5c4] sm:$0xf]
  %v457 = vld [vmem:[%s1 + $0x5c8] sm:$0xf]
  %v458 = vld [vmem:[%s1 + $0x5cc] sm:$0xf]
  %v459 = vld [vmem:[%s1 + $0x5d0] sm:$0xf]
  %v460 = vld [vmem:[%s1 + $0x5d4] sm:$0xf]
  %v461 = vld [vmem:[%s1 + $0x5d8] sm:$0xf]
  %v462 = vld [vmem:[%s1 + $0x5dc] sm:$0xf]
  %v463 = vld [vmem:[%s1 + $0x5e0] sm:$0xf]
  %v464 = vld [vmem:[%s1 + $0x5e4] sm:$0xf]
  %v465 = vld [vmem:[%s1 + $0x5e8] sm:$0xf]
  %v466 = vld [vmem:[%s1 + $0x5ec] sm:$0xf]
  %v467 = vld [vmem:[%s1 + $0x5f0] sm:$0xf]
  %v468 = vld [vmem:[%s1 + $0x5f4] sm:$0xf]
  %v469 = vld [vmem:[%s1 + $0x5f8] sm:$0xf]
  %v470 = vld [vmem:[%s1 + $0x5fc] sm:$0xf]
  %v471 = vld [vmem:[%s1 + $0x600] sm:$0xf]
  %v472 = vld [vmem:[%s1 + $0x604] sm:$0xf]
  %v473 = vld [vmem:[%s1 + $0x608] sm:$0xf]
  %v474 = vld [vmem:[%s1 + $0x60c] sm:$0xf]
  %v475 = vld [vmem:[%s1 + $0x610] sm:$0xf]
  %v476 = vld [vmem:[%s1 + $0x614] sm:$0xf]
  %v477 = vld [vmem:[%s1 + $0x618] sm:$0xf]
  %v478 = vld [vmem:[%s1 + $0x61c] sm:$0xf]
  %v479 = vld [vmem:[%s1 + $0x620] sm:$0xf]
  %v480 = vld [vmem:[%s1 + $0x624] sm:$0xf]
  %v481 = vld [vmem:[%s1 + $0x628] sm:$0xf]
  %v482 = vld [vmem:[%s1 + $0x62c] sm:$0xf]
  %v483 = vld [vmem:[%s1 + $0x630] sm:$0xf]
  %v484 = vld [vmem:[%s1 + $0x634] sm:$0xf]
  %v485 = vld [vmem:[%s1 + $0x638] sm:$0xf]
  %v486 = vld [vmem:[%s1 + $0x63c] sm:$0xf]
  %v487 = vld [vmem:[%s1 + $0x640] sm:$0xf]
  %v488 = vld [vmem:[%s1 + $0x644] sm:$0xf]
  %v489 = vld [vmem:[%s1 + $0x648] sm:$0xf]
  %v490 = vld [vmem:[%s1 + $0x64c] sm:$0xf]
  %v491 = vld [vmem:[%s1 + $0x650] sm:$0xf]
  %v492 = vld [vmem:[%s1 + $0x654] sm:$0xf]
  %v493 = vld [vmem:[%s1 + $0x658] sm:$0xf]
  %v494 = vld [vmem:[%s1 + $0x65c] sm:$0xf]
  %v495 = vld [vmem:[%s1 + $0x660] sm:$0xf]
  %v496 = vld [vmem:[%s1 + $0x664] sm:$0xf]
  %v497 = vld [vmem:[%s1 + $0x668] sm:$0xf]
  %v498 = vld [vmem:[%s1 + $0x66c] sm:$0xf]
  %v499 = vld [vmem:[%s1 + $0x670] sm:$0xf]
  %v500 = vld [vmem:[%s1 + $0x674] sm:$0xf]
  %v501 = vld [vmem:[%s1 + $0x678] sm:$0xf]
  %v502 = vld [vmem:[%s1 + $0x67c] sm:$0xf]
  %v503 = vld [vmem:[%s1 + $0x680] sm:$0xf]
  %v504 = vld [vmem:[%s1 + $0x684] sm:$0xf]
  %v505 = vld [vmem:[%s1 + $0x688] sm:$0xf]
  %v506 = vld [vmem:[%s1 + $0x68c] sm:$0xf]
  %v507 = vld [vmem:[%s1 + $0x690] sm:$0xf]
  %v508 = vld [vmem:[%s1 + $0x694] sm:$0xf]
  %v509 = vld [vmem:[%s1 + $0x698] sm:$0xf]
  %v510 = vld [vmem:[%s1 + $0x69c] sm:$0xf]
  %v511 = vld [vmem:[%s1 + $0x6a0] sm:$0xf]
  %v512 = vld [vmem:[%s1 + $0x6a4] sm:$0xf]
  %v513 = vld [vmem:[%s1 + $0x6a8] sm:$0xf]
  %v514 = vld [vmem:[%s1 + $0x6ac] sm:$0xf]
  %v515 = vld [vmem:[%s1 + $0x6b0] sm:$0xf]
  %v516 = vld [vmem:[%s1 + $0x6b4] sm:$0xf]
  %v517 = vld [vmem:[%s1 + $0x6b8] sm:$0xf]
  %v518 = vld [vmem:[%s1 + $0x6bc] sm:$0xf]
  %v519 = vld [vmem:[%s1 + $0x6c0] sm:$0xf]
  %v520 = vld [vmem:[%s1 + $0x6c4] sm:$0xf]
  %v521 = vld [vmem:[%s1 + $0x6c8] sm:$0xf]
  %v522 = vld [vmem:[%s1 + $0x6cc] sm:$0xf]
  %v523 = vld [vmem:[%s1 + $0x6d0] sm:$0xf]
  %v524 = vld [vmem:[%s1 + $0x6d4] sm:$0xf]
  %v525 = vld [vmem:[%s1 + $0x6d8] sm:$0xf]
  %v526 = vld [vmem:[%s1 + $0x6dc] sm:$0xf]
  %v527 = vld [vmem:[%s1 + $0x6e0] sm:$0xf]
  %v528 = vld [vmem:[%s1 + $0x6e4] sm:$0xf]
  %v529 = vld [vmem:[%s1 + $0x6e8] sm:$0xf]
  %v530 = vld [vmem:[%s1 + $0x6ec] sm:$0xf]
  %v531 = vld [vmem:[%s1 + $0x6f0] sm:$0xf]
  %v532 = vld [vmem:[%s1 + $0x6f4] sm:$0xf]
  %v533 = vld [vmem:[%s1 + $0x6f8] sm:$0xf]
  %v534 = vld [vmem:[%s1 + $0x6fc] sm:$0xf]
  %v535 = vld [vmem:[%s1 + $0x700] sm:$0xf]
  %v536 = vld [vmem:[%s1 + $0x704] sm:$0xf]
  %v537 = vld [vmem:[%s1 + $0x708] sm:$0xf]
  %v538 = vld [vmem:[%s1 + $0x70c] sm:$0xf]
  %v539 = vld [vmem:[%s1 + $0x710] sm:$0xf]
  %v540 = vld [vmem:[%s1 + $0x714] sm:$0xf]
  %v541 = vld [vmem:[%s1 + $0x718] sm:$0xf]
  %v542 = vld [vmem:[%s1 + $0x71c] sm:$0xf]
  %v543 = vld [vmem:[%s1 + $0x720] sm:$0xf]
  %v544 = vld [vmem:[%s1 + $0x724] sm:$0xf]
  %v545 = vld [vmem:[%s1 + $0x728] sm:$0xf]
  %v546 = vld [vmem:[%s1 + $0x72c] sm:$0xf]
  %v547 = vld [vmem:[%s1 + $0x730] sm:$0xf]
  %v548 = vld [vmem:[%s1 + $0x734] sm:$0xf]
  %v549 = vld [vmem:[%s1 + $0x738] sm:$0xf]
  %v550 = vld [vmem:[%s1 + $0x73c] sm:$0xf]
  %v551 = vld [vmem:[%s1 + $0x740] sm:$0xf]
  %v552 = vld [vmem:[%s1 + $0x744] sm:$0xf]
  %v553 = vld [vmem:[%s1 + $0x748] sm:$0xf]
  %v554 = vld [vmem:[%s1 + $0x74c] sm:$0xf]
  %v555 = vld [vmem:[%s1 + $0x750] sm:$0xf]
  %v556 = vld [vmem:[%s1 + $0x754] sm:$0xf]
  %v557 = vld [vmem:[%s1 + $0x758] sm:$0xf]
  %v558 = vld [vmem:[%s1 + $0x75c] sm:$0xf]
  %v559 = vld [vmem:[%s1 + $0x760] sm:$0xf]
  %v560 = vld [vmem:[%s1 + $0x764] sm:$0xf]
  %v561 = vld [vmem:[%s1 + $0x768] sm:$0xf]
  %v562 = vld [vmem:[%s1 + $0x76c] sm:$0xf]
  %v563 = vld [vmem:[%s1 + $0x770] sm:$0xf]
  %v564 = vld [vmem:[%s1 + $0x774] sm:$0xf]
  %v565 = vld [vmem:[%s1 + $0x778] sm:$0xf]
  %v566 = vld [vmem:[%s1 + $0x77c] sm:$0xf]
  %v567 = vld [vmem:[%s1 + $0x780] sm:$0xf]
  %v568 = vld [vmem:[%s1 + $0x784] sm:$0xf]
  %v569 = vld [vmem:[%s1 + $0x788] sm:$0xf]
  %v570 = vld [vmem:[%s1 + $0x78c] sm:$0xf]
  %v571 = vld [vmem:[%s1 + $0x790] sm:$0xf]
  %v572 = vld [vmem:[%s1 + $0x794] sm:$0xf]
  %v573 = vld [vmem:[%s1 + $0x798] sm:$0xf]
  %v574 = vld [vmem:[%s1 + $0x79c] sm:$0xf]
  %v575 = vld [vmem:[%s1 + $0x7a0] sm:$0xf]
  %v576 = vld [vmem:[%s1 + $0x7a4] sm:$0xf]
  %v577 = vld [vmem:[%s1 + $0x7a8] sm:$0xf]
  %v578 = vld [vmem:[%s1 + $0x7ac] sm:$0xf]
  %v579 = vld [vmem:[%s1 + $0x7b0] sm:$0xf]
  %v580 = vld [vmem:[%s1 + $0x7b4] sm:$0xf]
  %v581 = vld [vmem:[%s1 + $0x7b8] sm:$0xf]
  %v582 = vld [vmem:[%s1 + $0x7bc] sm:$0xf]
  %v583 = vld [vmem:[%s1 + $0x7c0] sm:$0xf]
  %v584 = vld [vmem:[%s1 + $0x7c4] sm:$0xf]
  %v585 = vld [vmem:[%s1 + $0x7c8] sm:$0xf]
  %v586 = vld [vmem:[%s1 + $0x7cc] sm:$0xf]
  %v587 = vld [vmem:[%s1 + $0x7d0] sm:$0xf]
  %v588 = vld [vmem:[%s1 + $0x7d4] sm:$0xf]
  %v589 = vld [vmem:[%s1 + $0x7d8] sm:$0xf]
  %v590 = vld [vmem:[%s1 + $0x7dc] sm:$0xf]
  %v591 = vld [vmem:[%s1 + $0x7e0] sm:$0xf]
  %v592 = vld [vmem:[%s1 + $0x7e4] sm:$0xf]
  %v593 = vld [vmem:[%s1 + $0x7e8] sm:$0xf]
  %v594 = vld [vmem:[%s1 + $0x7ec] sm:$0xf]
  %v595 = vld [vmem:[%s1 + $0x7f0] sm:$0xf]
  %v596 = vld [vmem:[%s1 + $0x7f4] sm:$0xf]
  %v597 = vld [vmem:[%s1 + $0x7f8] sm:$0xf]
  %v598 = vld [vmem:[%s1 + $0x7fc] sm:$0xf]
  %v599 = vld [vmem:[%s1 + $0x800] sm:$0xf]
  %v600 = vld [vmem:[%s1 + $0x804] sm:$0xf]
  %v601 = vld [vmem:[%s1 + $0x808] sm:$0xf]
  %v602 = vld [vmem:[%s1 + $0x80c] sm:$0xf]
  %v603 = vld [vmem:[%s1 + $0x810] sm:$0xf]
  %v604 = vld [vmem:[%s1 + $0x814] sm:$0xf]
  %v605 = vld [vmem:[%s1 + $0x818] sm:$0xf]
  %v606 = vld [vmem:[%s1 + $0x81c] sm:$0xf]
  %v607 = vld [vmem:[%s1 + $0x820] sm:$0xf]
  %v608 = vld [vmem:[%s1 + $0x824] sm:$0xf]
  %v609 = vld [vmem:[%s1 + $0x828] sm:$0xf]
  %v610 = vld [vmem:[%s1 + $0x82c] sm:$0xf]
  %v611 = vld [vmem:[%s1 + $0x830] sm:$0xf]
  %v612 = vld [vmem:[%s1 + $0x834] sm:$0xf]
  %v613 = vld [vmem:[%s1 + $0x838] sm:$0xf]
  %v614 = vld [vmem:[%s1 + $0x83c] sm:$0xf]
  %v615 = vld [vmem:[%s1 + $0x840] sm:$0xf]
  %v616 = vld [vmem:[%s1 + $0x844] sm:$0xf]
  %v617 = vld [vmem:[%s1 + $0x848] sm:$0xf]
  %v618 = vld [vmem:[%s1 + $0x84c] sm:$0xf]
  %v619 = vld [vmem:[%s1 + $0x850] sm:$0xf]
  %v620 = vld [vmem:[%s1 + $0x854] sm:$0xf]
  %v621 = vld [vmem:[%s1 + $0x858] sm:$0xf]
  %v622 = vld [vmem:[%s1 + $0x85c] sm:$0xf]
  %v623 = vld [vmem:[%s1 + $0x860] sm:$0xf]
  %v624 = vld [vmem:[%s1 + $0x864] sm:$0xf]
  %v625 = vld [vmem:[%s1 + $0x868] sm:$0xf]
  %v626 = vld [vmem:[%s1 + $0x86c] sm:$0xf]
  %v627 = vld [vmem:[%s1 + $0x870] sm:$0xf]
  %v628 = vld [vmem:[%s1 + $0x874] sm:$0xf]
  %v629 = vld [vmem:[%s1 + $0x878] sm:$0xf]
  %v630 = vld [vmem:[%s1 + $0x87c] sm:$0xf]
  %v631 = vld [vmem:[%s1 + $0x880] sm:$0xf]
  %v632 = vld [vmem:[%s1 + $0x884] sm:$0xf]
  %v633 = vld [vmem:[%s1 + $0x888] sm:$0xf]
  %v634 = vld [vmem:[%s1 + $0x88c] sm:$0xf]
  %v635 = vld [vmem:[%s1 + $0x890] sm:$0xf]
  %v636 = vld [vmem:[%s1 + $0x894] sm:$0xf]
  %v637 = vld [vmem:[%s1 + $0x898] sm:$0xf]
  %v638 = vld [vmem:[%s1 + $0x89c] sm:$0xf]
  %v639 = vld [vmem:[%s1 + $0x8a0] sm:$0xf]
  %v640 = vld [vmem:[%s1 + $0x8a4] sm:$0xf]
  %v641 = vld [vmem:[%s1 + $0x8a8] sm:$0xf]
  %v642 = vld [vmem:[%s1 + $0x8ac] sm:$0xf]
  %v643 = vld [vmem:[%s1 + $0x8b0] sm:$0xf]
  %v644 = vld [vmem:[%s1 + $0x8b4] sm:$0xf]
  %v645 = vld [vmem:[%s1 + $0x8b8] sm:$0xf]
  %v646 = vld [vmem:[%s1 + $0x8bc] sm:$0xf]
  %v647 = vld [vmem:[%s1 + $0x8c0] sm:$0xf]
  %v648 = vld [vmem:[%s1 + $0x8c4] sm:$0xf]
  %v649 = vld [vmem:[%s1 + $0x8c8] sm:$0xf]
  %v650 = vld [vmem:[%s1 + $0x8cc] sm:$0xf]
  %v651 = vld [vmem:[%s1 + $0x8d0] sm:$0xf]
  %v652 = vld [vmem:[%s1 + $0x8d4] sm:$0xf]
  %v653 = vld [vmem:[%s1 + $0x8d8] sm:$0xf]
  %v654 = vld [vmem:[%s1 + $0x8dc] sm:$0xf]
  %v655 = vld [vmem:[%s1 + $0x8e0] sm:$0xf]
  %v656 = vld [vmem:[%s1 + $0x8e4] sm:$0xf]
  %v657 = vld [vmem:[%s1 + $0x8e8] sm:$0xf]
  %v658 = vld [vmem:[%s1 + $0x8ec] sm:$0xf]
  %v659 = vld [vmem:[%s1 + $0x8f0] sm:$0xf]
  %v660 = vld [vmem:[%s1 + $0x8f4] sm:$0xf]
  %v661 = vld [vmem:[%s1 + $0x8f8] sm:$0xf]
  %v662 = vld [vmem:[%s1 + $0x8fc] sm:$0xf]
  %v663 = vld [vmem:[%s1 + $0x900] sm:$0xf]
  %v664 = vld [vmem:[%s1 + $0x904] sm:$0xf]
  %v665 = vld [vmem:[%s1 + $0x908] sm:$0xf]
  %v666 = vld [vmem:[%s1 + $0x90c] sm:$0xf]
  %v667 = vld [vmem:[%s1 + $0x910] sm:$0xf]
  %v668 = vld [vmem:[%s1 + $0x914] sm:$0xf]
  %v669 = vld [vmem:[%s1 + $0x918] sm:$0xf]
  %v670 = vld [vmem:[%s1 + $0x91c] sm:$0xf]
  %v671 = vld [vmem:[%s1 + $0x920] sm:$0xf]
  %v672 = vld [vmem:[%s1 + $0x924] sm:$0xf]
  %v673 = vld [vmem:[%s1 + $0x928] sm:$0xf]
  %v674 = vld [vmem:[%s1 + $0x92c] sm:$0xf]
  %v675 = vld [vmem:[%s1 + $0x930] sm:$0xf]
  %v676 = vld [vmem:[%s1 + $0x934] sm:$0xf]
  %v677 = vld [vmem:[%s1 + $0x938] sm:$0xf]
  %v678 = vld [vmem:[%s1 + $0x93c] sm:$0xf]
  %v679 = vld [vmem:[%s1 + $0x940] sm:$0xf]
  %v680 = vld [vmem:[%s1 + $0x944] sm:$0xf]
  %v681 = vld [vmem:[%s1 + $0x948] sm:$0xf]
  %v682 = vld [vmem:[%s1 + $0x94c] sm:$0xf]
  %v683 = vld [vmem:[%s1 + $0x950] sm:$0xf]
  %v684 = vld [vmem:[%s1 + $0x954] sm:$0xf]
  %v685 = vld [vmem:[%s1 + $0x958] sm:$0xf]
  %v686 = vld [vmem:[%s1 + $0x95c] sm:$0xf]
  %v687 = vld [vmem:[%s1 + $0x960] sm:$0xf]
  %v688 = vld [vmem:[%s1 + $0x964] sm:$0xf]
  %v689 = vld [vmem:[%s1 + $0x968] sm:$0xf]
  %v690 = vld [vmem:[%s1 + $0x96c] sm:$0xf]
  %v691 = vld [vmem:[%s1 + $0x970] sm:$0xf]
  %v692 = vld [vmem:[%s1 + $0x974] sm:$0xf]
  %v693 = vld [vmem:[%s1 + $0x978] sm:$0xf]
  %v694 = vld [vmem:[%s1 + $0x97c] sm:$0xf]
  %v695 = vld [vmem:[%s1 + $0x980] sm:$0xf]
  %v696 = vld [vmem:[%s1 + $0x984] sm:$0xf]
  %v697 = vld [vmem:[%s1 + $0x988] sm:$0xf]
  %v698 = vld [vmem:[%s1 + $0x98c] sm:$0xf]
  %v699 = vld [vmem:[%s1 + $0x990] sm:$0xf]
  %v700 = vld [vmem:[%s1 + $0x994] sm:$0xf]
  %v701 = vld [vmem:[%s1 + $0x998] sm:$0xf]
  %v702 = vld [vmem:[%s1 + $0x99c] sm:$0xf]
  %v703 = vld [vmem:[%s1 + $0x9a0] sm:$0xf]
  %v704 = vld [vmem:[%s1 + $0x9a4] sm:$0xf]
  %v705 = vld [vmem:[%s1 + $0x9a8] sm:$0xf]
  %v706 = vld [vmem:[%s1 + $0x9ac] sm:$0xf]
  %v707 = vld [vmem:[%s1 + $0x9b0] sm:$0xf]
  %v708 = vld [vmem:[%s1 + $0x9b4] sm:$0xf]
  %v709 = vld [vmem:[%s1 + $0x9b8] sm:$0xf]
  %v710 = vld [vmem:[%s1 + $0x9bc] sm:$0xf]
  %v711 = vld [vmem:[%s1 + $0x9c0] sm:$0xf]
  %v712 = vld [vmem:[%s1 + $0x9c4] sm:$0xf]
  %v713 = vld [vmem:[%s1 + $0x9c8] sm:$0xf]
  %v714 = vld [vmem:[%s1 + $0x9cc] sm:$0xf]
  %v715 = vld [vmem:[%s1 + $0x9d0] sm:$0xf]
  %v716 = vld [vmem:[%s1 + $0x9d4] sm:$0xf]
  %v717 = vld [vmem:[%s1 + $0x9d8] sm:$0xf]
  %v718 = vld [vmem:[%s1 + $0x9dc] sm:$0xf]
  %v719 = vld [vmem:[%s1 + $0x9e0] sm:$0xf]
  %v720 = vld [vmem:[%s1 + $0x9e4] sm:$0xf]
  %v721 = vld [vmem:[%s1 + $0x9e8] sm:$0xf]
  %v722 = vld [vmem:[%s1 + $0x9ec] sm:$0xf]
  %v723 = vld [vmem:[%s1 + $0x9f0] sm:$0xf]
  %v724 = vld [vmem:[%s1 + $0x9f4] sm:$0xf]
  %v725 = vld [vmem:[%s1 + $0x9f8] sm:$0xf]
  %v726 = vld [vmem:[%s1 + $0x9fc] sm:$0xf]
  %v727 = vld [vmem:[%s1 + $0xa00] sm:$0xf]
  %v728 = vld [vmem:[%s1 + $0xa04] sm:$0xf]
  %v729 = vld [vmem:[%s1 + $0xa08] sm:$0xf]
  %v730 = vld [vmem:[%s1 + $0xa0c] sm:$0xf]
  %v731 = vld [vmem:[%s1 + $0xa10] sm:$0xf]
  %v732 = vld [vmem:[%s1 + $0xa14] sm:$0xf]
  %v733 = vld [vmem:[%s1 + $0xa18] sm:$0xf]
  %v734 = vld [vmem:[%s1 + $0xa1c] sm:$0xf]
  %v735 = vld [vmem:[%s1 + $0xa20] sm:$0xf]
  %v736 = vld [vmem:[%s1 + $0xa24] sm:$0xf]
  %v737 = vld [vmem:[%s1 + $0xa28] sm:$0xf]
  %v738 = vld [vmem:[%s1 + $0xa2c] sm:$0xf]
  %v739 = vld [vmem:[%s1 + $0xa30] sm:$0xf]
  %v740 = vld [vmem:[%s1 + $0xa34] sm:$0xf]
  %v741 = vld [vmem:[%s1 + $0xa38] sm:$0xf]
  %v742 = vld [vmem:[%s1 + $0xa3c] sm:$0xf]
  %v743 = vld [vmem:[%s1 + $0xa40] sm:$0xf]
  %v744 = vld [vmem:[%s1 + $0xa44] sm:$0xf]
  %v745 = vld [vmem:[%s1 + $0xa48] sm:$0xf]
  %v746 = vld [vmem:[%s1 + $0xa4c] sm:$0xf]
  %v747 = vld [vmem:[%s1 + $0xa50] sm:$0xf]
  %v748 = vld [vmem:[%s1 + $0xa54] sm:$0xf]
  %v749 = vld [vmem:[%s1 + $0xa58] sm:$0xf]
  %v750 = vld [vmem:[%s1 + $0xa5c] sm:$0xf]
  %v751 = vld [vmem:[%s1 + $0xa60] sm:$0xf]
  %v752 = vld [vmem:[%s1 + $0xa64] sm:$0xf]
  %v753 = vld [vmem:[%s1 + $0xa68] sm:$0xf]
  %v754 = vld [vmem:[%s1 + $0xa6c] sm:$0xf]
  %v755 = vld [vmem:[%s1 + $0xa70] sm:$0xf]
  %v756 = vld [vmem:[%s1 + $0xa74] sm:$0xf]
  %v757 = vld [vmem:[%s1 + $0xa78] sm:$0xf]
  %v758 = vld [vmem:[%s1 + $0xa7c] sm:$0xf]
  %v759 = vld [vmem:[%s1 + $0xa80] sm:$0xf]
  %v760 = vld [vmem:[%s1 + $0xa84] sm:$0xf]
  %v761 = vld [vmem:[%s1 + $0xa88] sm:$0xf]
  %v762 = vld [vmem:[%s1 + $0xa8c] sm:$0xf]
  %v763 = vld [vmem:[%s1 + $0xa90] sm:$0xf]
  %v764 = vld [vmem:[%s1 + $0xa94] sm:$0xf]
  %v765 = vld [vmem:[%s1 + $0xa98] sm:$0xf]
  %v766 = vld [vmem:[%s1 + $0xa9c] sm:$0xf]
  %v767 = vld [vmem:[%s1 + $0xaa0] sm:$0xf]
  %v768 = vld [vmem:[%s1 + $0xaa4] sm:$0xf]
  %v769 = vld [vmem:[%s1 + $0xaa8] sm:$0xf]
  %v770 = vld [vmem:[%s1 + $0xaac] sm:$0xf]
  %v771 = vld [vmem:[%s1 + $0xab0] sm:$0xf]
  %v772 = vld [vmem:[%s1 + $0xab4] sm:$0xf]
  %v773 = vld [vmem:[%s1 + $0xab8] sm:$0xf]
  %v774 = vld [vmem:[%s1 + $0xabc] sm:$0xf]
  %v775 = vld [vmem:[%s1 + $0xac0] sm:$0xf]
  %v776 = vld [vmem:[%s1 + $0xac4] sm:$0xf]
  %v777 = vld [vmem:[%s1 + $0xac8] sm:$0xf]
  %v778 = vld [vmem:[%s1 + $0xacc] sm:$0xf]
  %v779 = vld [vmem:[%s1 + $0xad0] sm:$0xf]
  %v780 = vld [vmem:[%s1 + $0xad4] sm:$0xf]
  %v781 = vld [vmem:[%s1 + $0xad8] sm:$0xf]
  %v782 = vld [vmem:[%s1 + $0xadc] sm:$0xf]
  %v783 = vld [vmem:[%s1 + $0xae0] sm:$0xf]
  %v784 = vld [vmem:[%s1 + $0xae4] sm:$0xf]
  %v785 = vld [vmem:[%s1 + $0xae8] sm:$0xf]
  %v786 = vld [vmem:[%s1 + $0xaec] sm:$0xf]
  %v787 = vld [vmem:[%s1 + $0xaf0] sm:$0xf]
  %v788 = vld [vmem:[%s1 + $0xaf4] sm:$0xf]
  %v789 = vld [vmem:[%s1 + $0xaf8] sm:$0xf]
  %v790 = vld [vmem:[%s1 + $0xafc] sm:$0xf]
  %v791 = vld [vmem:[%s1 + $0xb00] sm:$0xf]
  %v792 = vld [vmem:[%s1 + $0xb04] sm:$0xf]
  %v793 = vld [vmem:[%s1 + $0xb08] sm:$0xf]
  %v794 = vld [vmem:[%s1 + $0xb0c] sm:$0xf]
  %v795 = vld [vmem:[%s1 + $0xb10] sm:$0xf]
  %v796 = vld [vmem:[%s1 + $0xb14] sm:$0xf]
  %v797 = vld [vmem:[%s1 + $0xb18] sm:$0xf]
  %v798 = vld [vmem:[%s1 + $0xb1c] sm:$0xf]
  %v799 = vld [vmem:[%s1 + $0xb20] sm:$0xf]
  %v800 = vld [vmem:[%s1 + $0xb24] sm:$0xf]
  %v801 = vld [vmem:[%s1 + $0xb28] sm:$0xf]
  %v802 = vld [vmem:[%s1 + $0xb2c] sm:$0xf]
  %v803 = vld [vmem:[%s1 + $0xb30] sm:$0xf]
  %v804 = vld [vmem:[%s1 + $0xb34] sm:$0xf]
  %v805 = vld [vmem:[%s1 + $0xb38] sm:$0xf]
  %v806 = vld [vmem:[%s1 + $0xb3c] sm:$0xf]
  %v807 = vld [vmem:[%s1 + $0xb40] sm:$0xf]
  %v808 = vld [vmem:[%s1 + $0xb44] sm:$0xf]
  %v809 = vld [vmem:[%s1 + $0xb48] sm:$0xf]
  %v810 = vld [vmem:[%s1 + $0xb4c] sm:$0xf]
  %v811 = vld [vmem:[%s1 + $0xb50] sm:$0xf]
  %v812 = vld [vmem:[%s1 + $0xb54] sm:$0xf]
  %v813 = vld [vmem:[%s1 + $0xb58] sm:$0xf]
  %v814 = vld [vmem:[%s1 + $0xb5c] sm:$0xf]
  %v815 = vld [vmem:[%s1 + $0xb60] sm:$0xf]
  %v816 = vld [vmem:[%s1 + $0xb64] sm:$0xf]
  %v817 = vld [vmem:[%s1 + $0xb68] sm:$0xf]
  %v818 = vld [vmem:[%s1 + $0xb6c] sm:$0xf]
  %v819 = vld [vmem:[%s1 + $0xb70] sm:$0xf]
  %v820 = vld [vmem:[%s1 + $0xb74] sm:$0xf]
  %v821 = vld [vmem:[%s1 + $0xb78] sm:$0xf]
  %v822 = vld [vmem:[%s1 + $0xb7c] sm:$0xf]
  %v823 = vld [vmem:[%s1 + $0xb80] sm:$0xf]
  %v824 = vld [vmem:[%s1 + $0xb84] sm:$0xf]
  %v825 = vld [vmem:[%s1 + $0xb88] sm:$0xf]
  %v826 = vld [vmem:[%s1 + $0xb8c] sm:$0xf]
  %v827 = vld [vmem:[%s1 + $0xb90] sm:$0xf]
  %v828 = vld [vmem:[%s1 + $0xb94] sm:$0xf]
  %v829 = vld [vmem:[%s1 + $0xb98] sm:$0xf]
  %v830 = vld [vmem:[%s1 + $0xb9c] sm:$0xf]
  %v831 = vld [vmem:[%s1 + $0xba0] sm:$0xf]
  %v832 = vld [vmem:[%s1 + $0xba4] sm:$0xf]
  %v833 = vld [vmem:[%s1 + $0xba8] sm:$0xf]
  %v834 = vld [vmem:[%s1 + $0xbac] sm:$0xf]
  %v835 = vld [vmem:[%s1 + $0xbb0] sm:$0xf]
  %v836 = vld [vmem:[%s1 + $0xbb4] sm:$0xf]
  %v837 = vld [vmem:[%s1 + $0xbb8] sm:$0xf]
  %v838 = vld [vmem:[%s1 + $0xbbc] sm:$0xf]
  %v839 = vld [vmem:[%s1 + $0xbc0] sm:$0xf]
  %v840 = vld [vmem:[%s1 + $0xbc4] sm:$0xf]
  %v841 = vld [vmem:[%s1 + $0xbc8] sm:$0xf]
  %v842 = vld [vmem:[%s1 + $0xbcc] sm:$0xf]
  %v843 = vld [vmem:[%s1 + $0xbd0] sm:$0xf]
  %v844 = vld [vmem:[%s1 + $0xbd4] sm:$0xf]
  %v845 = vld [vmem:[%s1 + $0xbd8] sm:$0xf]
  %v846 = vld [vmem:[%s1 + $0xbdc] sm:$0xf]
  %v847 = vld [vmem:[%s1 + $0xbe0] sm:$0xf]
  %v848 = vld [vmem:[%s1 + $0xbe4] sm:$0xf]
  %v849 = vld [vmem:[%s1 + $0xbe8] sm:$0xf]
  %v850 = vld [vmem:[%s1 + $0xbec] sm:$0xf]
  %v851 = vld [vmem:[%s1 + $0xbf0] sm:$0xf]
  %v852 = vld [vmem:[%s1 + $0xbf4] sm:$0xf]
  %v853 = vld [vmem:[%s1 + $0xbf8] sm:$0xf]
  %v854 = vld [vmem:[%s1 + $0xbfc] sm:$0xf]
  %v855 = vld [vmem:[%s1 + $0xc00] sm:$0xf]
  %v856 = vld [vmem:[%s1 + $0xc04] sm:$0xf]
  %v857 = vld [vmem:[%s1 + $0xc08] sm:$0xf]
  %v858 = vld [vmem:[%s1 + $0xc0c] sm:$0xf]
  %v859 = vld [vmem:[%s1 + $0xc10] sm:$0xf]
  %v860 = vld [vmem:[%s1 + $0xc14] sm:$0xf]
  %v861 = vld [vmem:[%s1 + $0xc18] sm:$0xf]
  %v862 = vld [vmem:[%s1 + $0xc1c] sm:$0xf]
  %v863 = vld [vmem:[%s1 + $0xc20] sm:$0xf]
  %v864 = vld [vmem:[%s1 + $0xc24] sm:$0xf]
  %v865 = vld [vmem:[%s1 + $0xc28] sm:$0xf]
  %v866 = vld [vmem:[%s1 + $0xc2c] sm:$0xf]
  %v867 = vld [vmem:[%s1 + $0xc30] sm:$0xf]
  %v868 = vld [vmem:[%s1 + $0xc34] sm:$0xf]
  %v869 = vld [vmem:[%s1 + $0xc38] sm:$0xf]
  %v870 = vld [vmem:[%s1 + $0xc3c] sm:$0xf]
  %v871 = vld [vmem:[%s1 + $0xc40] sm:$0xf]
  %v872 = vld [vmem:[%s1 + $0xc44] sm:$0xf]
  %v873 = vld [vmem:[%s1 + $0xc48] sm:$0xf]
  %v874 = vld [vmem:[%s1 + $0xc4c] sm:$0xf]
  %v875 = vld [vmem:[%s1 + $0xc50] sm:$0xf]
  %v876 = vld [vmem:[%s1 + $0xc54] sm:$0xf]
  %v877 = vld [vmem:[%s1 + $0xc58] sm:$0xf]
  %v878 = vld [vmem:[%s1 + $0xc5c] sm:$0xf]
  %v879 = vld [vmem:[%s1 + $0xc60] sm:$0xf]
  %v880 = vld [vmem:[%s1 + $0xc64] sm:$0xf]
  %v881 = vld [vmem:[%s1 + $0xc68] sm:$0xf]
  %v882 = vld [vmem:[%s1 + $0xc6c] sm:$0xf]
  %v883 = vld [vmem:[%s1 + $0xc70] sm:$0xf]
  %v884 = vld [vmem:[%s1 + $0xc74] sm:$0xf]
  %v885 = vld [vmem:[%s1 + $0xc78] sm:$0xf]
  %v886 = vld [vmem:[%s1 + $0xc7c] sm:$0xf]
  %v887 = vld [vmem:[%s1 + $0xc80] sm:$0xf]
  %v888 = vld [vmem:[%s1 + $0xc84] sm:$0xf]
  %v889 = vld [vmem:[%s1 + $0xc88] sm:$0xf]
  %v890 = vld [vmem:[%s1 + $0xc8c] sm:$0xf]
  %v891 = vld [vmem:[%s1 + $0xc90] sm:$0xf]
  %v892 = vld [vmem:[%s1 + $0xc94] sm:$0xf]
  %v893 = vld [vmem:[%s1 + $0xc98] sm:$0xf]
  %v894 = vld [vmem:[%s1 + $0xc9c] sm:$0xf]
  %v895 = vld [vmem:[%s1 + $0xca0] sm:$0xf]
  %v896 = vld [vmem:[%s1 + $0xca4] sm:$0xf]
  %v897 = vld [vmem:[%s1 + $0xca8] sm:$0xf]
  %v898 = vld [vmem:[%s1 + $0xcac] sm:$0xf]
  %v899 = vld [vmem:[%s1 + $0xcb0] sm:$0xf]
  %v900 = vld [vmem:[%s1 + $0xcb4] sm:$0xf]
  %v901 = vld [vmem:[%s1 + $0xcb8] sm:$0xf]
  %v902 = vld [vmem:[%s1 + $0xcbc] sm:$0xf]
  %v903 = vld [vmem:[%s1 + $0xcc0] sm:$0xf]
  %v904 = vld [vmem:[%s1 + $0xcc4] sm:$0xf]
  %v905 = vld [vmem:[%s1 + $0xcc8] sm:$0xf]
  %v906 = vld [vmem:[%s1 + $0xccc] sm:$0xf]
  %v907 = vld [vmem:[%s1 + $0xcd0] sm:$0xf]
  %v908 = vld [vmem:[%s1 + $0xcd4] sm:$0xf]
  %v909 = vld [vmem:[%s1 + $0xcd8] sm:$0xf]
  %v910 = vld [vmem:[%s1 + $0xcdc] sm:$0xf]
  %v911 = vld [vmem:[%s1 + $0xce0] sm:$0xf]
  %v912 = vld [vmem:[%s1 + $0xce4] sm:$0xf]
  %v913 = vld [vmem:[%s1 + $0xce8] sm:$0xf]
  %v914 = vld [vmem:[%s1 + $0xcec] sm:$0xf]
  %v915 = vld [vmem:[%s1 + $0xcf0] sm:$0xf]
  %v916 = vld [vmem:[%s1 + $0xcf4] sm:$0xf]
  %v917 = vld [vmem:[%s1 + $0xcf8] sm:$0xf]
  %v918 = vld [vmem:[%s1 + $0xcfc] sm:$0xf]
  %v919 = vld [vmem:[%s1 + $0xd00] sm:$0xf]
  %v920 = vld [vmem:[%s1 + $0xd04] sm:$0xf]
  %v921 = vld [vmem:[%s1 + $0xd08] sm:$0xf]
  %v922 = vld [vmem:[%s1 + $0xd0c] sm:$0xf]
  %v923 = vld [vmem:[%s1 + $0xd10] sm:$0xf]
  %v924 = vld [vmem:[%s1 + $0xd14] sm:$0xf]
  %v925 = vld [vmem:[%s1 + $0xd18] sm:$0xf]
  %v926 = vld [vmem:[%s1 + $0xd1c] sm:$0xf]
  %v927 = vld [vmem:[%s1 + $0xd20] sm:$0xf]
  %v928 = vld [vmem:[%s1 + $0xd24] sm:$0xf]
  %v929 = vld [vmem:[%s1 + $0xd28] sm:$0xf]
  %v930 = vld [vmem:[%s1 + $0xd2c] sm:$0xf]
  %v931 = vld [vmem:[%s1 + $0xd30] sm:$0xf]
  %v932 = vld [vmem:[%s1 + $0xd34] sm:$0xf]
  %v933 = vld [vmem:[%s1 + $0xd38] sm:$0xf]
  %v934 = vld [vmem:[%s1 + $0xd3c] sm:$0xf]
  %v935 = vld [vmem:[%s1 + $0xd40] sm:$0xf]
  %v936 = vld [vmem:[%s1 + $0xd44] sm:$0xf]
  %v937 = vld [vmem:[%s1 + $0xd48] sm:$0xf]
  %v938 = vld [vmem:[%s1 + $0xd4c] sm:$0xf]
  %v939 = vld [vmem:[%s1 + $0xd50] sm:$0xf]
  %v940 = vld [vmem:[%s1 + $0xd54] sm:$0xf]
  %v941 = vld [vmem:[%s1 + $0xd58] sm:$0xf]
  %v942 = vld [vmem:[%s1 + $0xd5c] sm:$0xf]
  %v943 = vld [vmem:[%s1 + $0xd60] sm:$0xf]
  %v944 = vld [vmem:[%s1 + $0xd64] sm:$0xf]
  %v945 = vld [vmem:[%s1 + $0xd68] sm:$0xf]
  %v946 = vld [vmem:[%s1 + $0xd6c] sm:$0xf]
  %v947 = vld [vmem:[%s1 + $0xd70] sm:$0xf]
  %v948 = vld [vmem:[%s1 + $0xd74] sm:$0xf]
  %v949 = vld [vmem:[%s1 + $0xd78] sm:$0xf]
  %v950 = vld [vmem:[%s1 + $0xd7c] sm:$0xf]
  %v951 = vld [vmem:[%s1 + $0xd80] sm:$0xf]
  %v952 = vld [vmem:[%s1 + $0xd84] sm:$0xf]
  %v953 = vld [vmem:[%s1 + $0xd88] sm:$0xf]
  %v954 = vld [vmem:[%s1 + $0xd8c] sm:$0xf]
  %v955 = vld [vmem:[%s1 + $0xd90] sm:$0xf]
  %v956 = vld [vmem:[%s1 + $0xd94] sm:$0xf]
  %v957 = vld [vmem:[%s1 + $0xd98] sm:$0xf]
  %v958 = vld [vmem:[%s1 + $0xd9c] sm:$0xf]
  %v959 = vld [vmem:[%s1 + $0xda0] sm:$0xf]
  %v960 = vld [vmem:[%s1 + $0xda4] sm:$0xf]
  %v961 = vld [vmem:[%s1 + $0xda8] sm:$0xf]
  %v962 = vld [vmem:[%s1 + $0xdac] sm:$0xf]
  %v963 = vld [vmem:[%s1 + $0xdb0] sm:$0xf]
  %v964 = vld [vmem:[%s1 + $0xdb4] sm:$0xf]
  %v965 = vld [vmem:[%s1 + $0xdb8] sm:$0xf]
  %v966 = vld [vmem:[%s1 + $0xdbc] sm:$0xf]
  %v967 = vld [vmem:[%s1 + $0xdc0] sm:$0xf]
  %v968 = vld [vmem:[%s1 + $0xdc4] sm:$0xf]
  %v969 = vld [vmem:[%s1 + $0xdc8] sm:$0xf]
  %v970 = vld [vmem:[%s1 + $0xdcc] sm:$0xf]
  %v971 = vld [vmem:[%s1 + $0xdd0] sm:$0xf]
  %v972 = vld [vmem:[%s1 + $0xdd4] sm:$0xf]
  %v973 = vld [vmem:[%s1 + $0xdd8] sm:$0xf]
  %v974 = vld [vmem:[%s1 + $0xddc] sm:$0xf]
  %v975 = vld [vmem:[%s1 + $0xde0] sm:$0xf]
  %v976 = vld [vmem:[%s1 + $0xde4] sm:$0xf]
  %v977 = vld [vmem:[%s1 + $0xde8] sm:$0xf]
  %v978 = vld [vmem:[%s1 + $0xdec] sm:$0xf]
  %v979 = vld [vmem:[%s1 + $0xdf0] sm:$0xf]
  %v980 = vld [vmem:[%s1 + $0xdf4] sm:$0xf]
  %v981 = vld [vmem:[%s1 + $0xdf8] sm:$0xf]
  %v982 = vld [vmem:[%s1 + $0xdfc] sm:$0xf]
  %v983 = vld [vmem:[%s1 + $0xe00] sm:$0xf]
  %v984 = vld [vmem:[%s1 + $0xe04] sm:$0xf]
  %v985 = vld [vmem:[%s1 + $0xe08] sm:$0xf]
  %v986 = vld [vmem:[%s1 + $0xe0c] sm:$0xf]
  %v987 = vld [vmem:[%s1 + $0xe10] sm:$0xf]
  %v988 = vld [vmem:[%s1 + $0xe14] sm:$0xf]
  %v989 = vld [vmem:[%s1 + $0xe18] sm:$0xf]
  %v990 = vld [vmem:[%s1 + $0xe1c] sm:$0xf]
  %v991 = vld [vmem:[%s1 + $0xe20] sm:$0xf]
  %v992 = vld [vmem:[%s1 + $0xe24] sm:$0xf]
  %v993 = vld [vmem:[%s1 + $0xe28] sm:$0xf]
  %v994 = vld [vmem:[%s1 + $0xe2c] sm:$0xf]
  %v995 = vld [vmem:[%s1 + $0xe30] sm:$0xf]
  %v996 = vld [vmem:[%s1 + $0xe34] sm:$0xf]
  %v997 = vld [vmem:[%s1 + $0xe38] sm:$0xf]
  %v998 = vld [vmem:[%s1 + $0xe3c] sm:$0xf]
  %v999 = vld [vmem:[%s1 + $0xe40] sm:$0xf]
  %v1000 = vld [vmem:[%s1 + $0xe44] sm:$0xf]
  %v1001 = vld [vmem:[%s1 + $0xe48] sm:$0xf]
  %v1002 = vld [vmem:[%s1 + $0xe4c] sm:$0xf]
  %v1003 = vld [vmem:[%s1 + $0xe50] sm:$0xf]
  %v1004 = vld [vmem:[%s1 + $0xe54] sm:$0xf]
  %v1005 = vld [vmem:[%s1 + $0xe58] sm:$0xf]
  %v1006 = vld [vmem:[%s1 + $0xe5c] sm:$0xf]
  %v1007 = vld [vmem:[%s1 + $0xe60] sm:$0xf]
  %v1008 = vld [vmem:[%s1 + $0xe64] sm:$0xf]
  %v1009 = vld [vmem:[%s1 + $0xe68] sm:$0xf]
  %v1010 = vld [vmem:[%s1 + $0xe6c] sm:$0xf]
  %v1011 = vld [vmem:[%s1 + $0xe70] sm:$0xf]
  %v1012 = vld [vmem:[%s1 + $0xe74] sm:$0xf]
  %v1013 = vld [vmem:[%s1 + $0xe78] sm:$0xf]
  %v1014 = vld [vmem:[%s1 + $0xe7c] sm:$0xf]
  %v1015 = vld [vmem:[%s1 + $0xe80] sm:$0xf]
  %v1016 = vld [vmem:[%s1 + $0xe84] sm:$0xf]
  %v1017 = vld [vmem:[%s1 + $0xe88] sm:$0xf]
  %v1018 = vld [vmem:[%s1 + $0xe8c] sm:$0xf]
  %v1019 = vld [vmem:[%s1 + $0xe90] sm:$0xf]
  %v1020 = vld [vmem:[%s1 + $0xe94] sm:$0xf]
  %v1021 = vld [vmem:[%s1 + $0xe98] sm:$0xf]
  %v1022 = vld [vmem:[%s1 + $0xe9c] sm:$0xf]
  %v1023 = vld [vmem:[%s1 + $0xea0] sm:$0xf]
  %v1024 = vld [vmem:[%s1 + $0xea4] sm:$0xf]
  %v1025 = vld [vmem:[%s1 + $0xea8] sm:$0xf]
  %v1026 = vld [vmem:[%s1 + $0xeac] sm:$0xf]
  %v1027 = vld [vmem:[%s1 + $0xeb0] sm:$0xf]
  %v1028 = vld [vmem:[%s1 + $0xeb4] sm:$0xf]
  %v1029 = vld [vmem:[%s1 + $0xeb8] sm:$0xf]
  %v1030 = vld [vmem:[%s1 + $0xebc] sm:$0xf]
  %v1031 = vld [vmem:[%s1 + $0xec0] sm:$0xf]
  %v1032 = vld [vmem:[%s1 + $0xec4] sm:$0xf]
  %v1033 = vld [vmem:[%s1 + $0xec8] sm:$0xf]
  %v1034 = vld [vmem:[%s1 + $0xecc] sm:$0xf]
  %v1035 = vld [vmem:[%s1 + $0xed0] sm:$0xf]
  %v1036 = vld [vmem:[%s1 + $0xed4] sm:$0xf]
  %v1037 = vld [vmem:[%s1 + $0xed8] sm:$0xf]
  %v1038 = vld [vmem:[%s1 + $0xedc] sm:$0xf]
  %v1039 = vld [vmem:[%s1 + $0xee0] sm:$0xf]
  %v1040 = vld [vmem:[%s1 + $0xee4] sm:$0xf]
  %v1041 = vld [vmem:[%s1 + $0xee8] sm:$0xf]
  %v1042 = vld [vmem:[%s1 + $0xeec] sm:$0xf]
  %v1043 = vld [vmem:[%s1 + $0xef0] sm:$0xf]
  %v1044 = vld [vmem:[%s1 + $0xef4] sm:$0xf]
  %v1045 = vld [vmem:[%s1 + $0xef8] sm:$0xf]
  %v1046 = vld [vmem:[%s1 + $0xefc] sm:$0xf]
  %v1047 = vld [vmem:[%s1 + $0xf00] sm:$0xf]
  %v1048 = vld [vmem:[%s1 + $0xf04] sm:$0xf]
  %v1049 = vld [vmem:[%s1 + $0xf08] sm:$0xf]
  %v1050 = vld [vmem:[%s1 + $0xf0c] sm:$0xf]
  %v1051 = vld [vmem:[%s1 + $0xf10] sm:$0xf]
  %v1052 = vld [vmem:[%s1 + $0xf14] sm:$0xf]
  %v1053 = vld [vmem:[%s1 + $0xf18] sm:$0xf]
  %v1054 = vld [vmem:[%s1 + $0xf1c] sm:$0xf]
  %v1055 = vld [vmem:[%s1 + $0xf20] sm:$0xf]
  %v1056 = vld [vmem:[%s1 + $0xf24] sm:$0xf]
  %v1057 = vld [vmem:[%s1 + $0xf28] sm:$0xf]
  %v1058 = vld [vmem:[%s1 + $0xf2c] sm:$0xf]
  %v1059 = vld [vmem:[%s1 + $0xf30] sm:$0xf]
  %v1060 = vld [vmem:[%s1 + $0xf34] sm:$0xf]
  %v1061 = vld [vmem:[%s1 + $0xf38] sm:$0xf]
  %v1062 = vld [vmem:[%s1 + $0xf3c] sm:$0xf]
  %v1063 = vld [vmem:[%s1 + $0xf40] sm:$0xf]
  %v1064 = vld [vmem:[%s1 + $0xf44] sm:$0xf]
  %v1065 = vld [vmem:[%s1 + $0xf48] sm:$0xf]
  %v1066 = vld [vmem:[%s1 + $0xf4c] sm:$0xf]
  %v1067 = vld [vmem:[%s1 + $0xf50] sm:$0xf]
  %v1068 = vld [vmem:[%s1 + $0xf54] sm:$0xf]
  %v1069 = vld [vmem:[%s1 + $0xf58] sm:$0xf]
  %v1070 = vld [vmem:[%s1 + $0xf5c] sm:$0xf]
  %v1071 = vld [vmem:[%s1 + $0xf60] sm:$0xf]
  %v1072 = vld [vmem:[%s1 + $0xf64] sm:$0xf]
  %v1073 = vld [vmem:[%s1 + $0xf68] sm:$0xf]
  %v1074 = vld [vmem:[%s1 + $0xf6c] sm:$0xf]
  %v1075 = vld [vmem:[%s1 + $0xf70] sm:$0xf]
  %v1076 = vld [vmem:[%s1 + $0xf74] sm:$0xf]
  %v1077 = vld [vmem:[%s1 + $0xf78] sm:$0xf]
  %v1078 = vld [vmem:[%s1 + $0xf7c] sm:$0xf]
  %v1079 = vld [vmem:[%s1 + $0xf80] sm:$0xf]
  %v1080 = vld [vmem:[%s1 + $0xf84] sm:$0xf]
  %v1081 = vld [vmem:[%s1 + $0xf88] sm:$0xf]
  %v1082 = vld [vmem:[%s1 + $0xf8c] sm:$0xf]
  %v1083 = vld [vmem:[%s1 + $0xf90] sm:$0xf]
  %v1084 = vld [vmem:[%s1 + $0xf94] sm:$0xf]
  %v1085 = vld [vmem:[%s1 + $0xf98] sm:$0xf]
  %v1086 = vld [vmem:[%s1 + $0xf9c] sm:$0xf]
  %v1087 = vld [vmem:[%s1 + $0xfa0] sm:$0xf]
  %v1088 = vld [vmem:[%s1 + $0xfa4] sm:$0xf]
  %v1089 = vld [vmem:[%s1 + $0xfa8] sm:$0xf]
  %v1090 = vld [vmem:[%s1 + $0xfac] sm:$0xf]
  %v1091 = vld [vmem:[%s1 + $0xfb0] sm:$0xf]
  %v1092 = vld [vmem:[%s1 + $0xfb4] sm:$0xf]
  %v1093 = vld [vmem:[%s1 + $0xfb8] sm:$0xf]
  %v1094 = vld [vmem:[%s1 + $0xfbc] sm:$0xf]
  %v1095 = vld [vmem:[%s1 + $0xfc0] sm:$0xf]
  %v1096 = vld [vmem:[%s1 + $0xfc4] sm:$0xf]
  %v1097 = vld [vmem:[%s1 + $0xfc8] sm:$0xf]
  %v1098 = vld [vmem:[%s1 + $0xfcc] sm:$0xf]
  %v1099 = vld [vmem:[%s1 + $0xfd0] sm:$0xf]
  %v1100 = vld [vmem:[%s1 + $0xfd4] sm:$0xf]
  %v1101 = vld [vmem:[%s1 + $0xfd8] sm:$0xf]
  %v1102 = vld [vmem:[%s1 + $0xfdc] sm:$0xf]
  %v1103 = vld [vmem:[%s1 + $0xfe0] sm:$0xf]
  %v1104 = vld [vmem:[%s1 + $0xfe4] sm:$0xf]
  %v1105 = vld [vmem:[%s1 + $0xfe8] sm:$0xf]
  %v1106 = vld [vmem:[%s1 + $0xfec] sm:$0xf]
  %v1107 = vld [vmem:[%s1 + $0xff0] sm:$0xf]
  %v1108 = vld [vmem:[%s1 + $0xff4] sm:$0xf]
  %v1109 = vld [vmem:[%s1 + $0xff8] sm:$0xf]
  %v1110 = vld [vmem:[%s1 + $0xffc] sm:$0xf]
  %v1111 = vld [vmem:[%s1 + $0x1000] sm:$0xf]
  %v1112 = vld [vmem:[%s1 + $0x1004] sm:$0xf]
  %v1113 = vld [vmem:[%s1 + $0x1008] sm:$0xf]
  %v1114 = vld [vmem:[%s1 + $0x100c] sm:$0xf]
  %v1115 = vld [vmem:[%s1 + $0x1010] sm:$0xf]
  %v1116 = vld [vmem:[%s1 + $0x1014] sm:$0xf]
  %v1117 = vld [vmem:[%s1 + $0x1018] sm:$0xf]
  %v1118 = vld [vmem:[%s1 + $0x101c] sm:$0xf]
  %v1119 = vld [vmem:[%s1 + $0x1020] sm:$0xf]
  %v1120 = vld [vmem:[%s1 + $0x1024] sm:$0xf]
  %v1121 = vld [vmem:[%s1 + $0x1028] sm:$0xf]
  %v1122 = vld [vmem:[%s1 + $0x102c] sm:$0xf]
  %v1123 = vld [vmem:[%s1 + $0x1030] sm:$0xf]
  %v1124 = vld [vmem:[%s1 + $0x1034] sm:$0xf]
  %v1125 = vld [vmem:[%s1 + $0x1038] sm:$0xf]
  %v1126 = vld [vmem:[%s1 + $0x103c] sm:$0xf]
  %v1127 = vld [vmem:[%s1 + $0x1040] sm:$0xf]
  %v1128 = vld [vmem:[%s1 + $0x1044] sm:$0xf]
  %v1129 = vld [vmem:[%s1 + $0x1048] sm:$0xf]
  %v1130 = vld [vmem:[%s1 + $0x104c] sm:$0xf]
  %v1131 = vld [vmem:[%s1 + $0x1050] sm:$0xf]
  %v1132 = vld [vmem:[%s1 + $0x1054] sm:$0xf]
  %v1133 = vld [vmem:[%s1 + $0x1058] sm:$0xf]
  %v1134 = vld [vmem:[%s1 + $0x105c] sm:$0xf]
  %v1135 = vld [vmem:[%s1 + $0x1060] sm:$0xf]
  %v1136 = vld [vmem:[%s1 + $0x1064] sm:$0xf]
  %v1137 = vld [vmem:[%s1 + $0x1068] sm:$0xf]
  %v1138 = vld [vmem:[%s1 + $0x106c] sm:$0xf]
  %v1139 = vld [vmem:[%s1 + $0x1070] sm:$0xf]
  %v1140 = vld [vmem:[%s1 + $0x1074] sm:$0xf]
  %v1141 = vld [vmem:[%s1 + $0x1078] sm:$0xf]
  %v1142 = vld [vmem:[%s1 + $0x107c] sm:$0xf]
  %v1143 = vld [vmem:[%s1 + $0x1080] sm:$0xf]
  %v1144 = vld [vmem:[%s1 + $0x1084] sm:$0xf]
  %v1145 = vld [vmem:[%s1 + $0x1088] sm:$0xf]
  %v1146 = vld [vmem:[%s1 + $0x108c] sm:$0xf]
  %v1147 = vld [vmem:[%s1 + $0x1090] sm:$0xf]
  %v1148 = vld [vmem:[%s1 + $0x1094] sm:$0xf]
  %v1149 = vld [vmem:[%s1 + $0x1098] sm:$0xf]
  %v1150 = vld [vmem:[%s1 + $0x109c] sm:$0xf]
  %v1151 = vld [vmem:[%s1 + $0x10a0] sm:$0xf]
  %v1152 = vld [vmem:[%s1 + $0x10a4] sm:$0xf]
  %v1153 = vld [vmem:[%s1 + $0x10a8] sm:$0xf]
  %v1154 = vld [vmem:[%s1 + $0x10ac] sm:$0xf]
  %v1155 = vld [vmem:[%s1 + $0x10b0] sm:$0xf]
  %v1156 = vld [vmem:[%s1 + $0x10b4] sm:$0xf]
  %v1157 = vld [vmem:[%s1 + $0x10b8] sm:$0xf]
  %v1158 = vld [vmem:[%s1 + $0x10bc] sm:$0xf]
  %v1159 = vld [vmem:[%s1 + $0x10c0] sm:$0xf]
  %v1160 = vld [vmem:[%s1 + $0x10c4] sm:$0xf]
  %v1161 = vld [vmem:[%s1 + $0x10c8] sm:$0xf]
  %v1162 = vld [vmem:[%s1 + $0x10cc] sm:$0xf]
  %v1163 = vld [vmem:[%s1 + $0x10d0] sm:$0xf]
  %v1164 = vld [vmem:[%s1 + $0x10d4] sm:$0xf]
  %v1165 = vld [vmem:[%s1 + $0x10d8] sm:$0xf]
  %v1166 = vld [vmem:[%s1 + $0x10dc] sm:$0xf]
  %v1167 = vld [vmem:[%s1 + $0x10e0] sm:$0xf]
  %v1168 = vld [vmem:[%s1 + $0x10e4] sm:$0xf]
  %v1169 = vld [vmem:[%s1 + $0x10e8] sm:$0xf]
  %v1170 = vld [vmem:[%s1 + $0x10ec] sm:$0xf]
  %v1171 = vld [vmem:[%s1 + $0x10f0] sm:$0xf]
  %v1172 = vld [vmem:[%s1 + $0x10f4] sm:$0xf]
  %v1173 = vld [vmem:[%s1 + $0x10f8] sm:$0xf]
  %v1174 = vld [vmem:[%s1 + $0x10fc] sm:$0xf]
  %v1175 = vld [vmem:[%s1 + $0x1100] sm:$0xf]
  %v1176 = vld [vmem:[%s1 + $0x1104] sm:$0xf]
  %v1177 = vld [vmem:[%s1 + $0x1108] sm:$0xf]
  %v1178 = vld [vmem:[%s1 + $0x110c] sm:$0xf]
  %v1179 = vld [vmem:[%s1 + $0x1110] sm:$0xf]
  %v1180 = vld [vmem:[%s1 + $0x1114] sm:$0xf]
  %v1181 = vld [vmem:[%s1 + $0x1118] sm:$0xf]
  %v1182 = vld [vmem:[%s1 + $0x111c] sm:$0xf]
  %v1183 = vld [vmem:[%s1 + $0x1120] sm:$0xf]
  %v1184 = vld [vmem:[%s1 + $0x1124] sm:$0xf]
  %v1185 = vld [vmem:[%s1 + $0x1128] sm:$0xf]
  %v1186 = vld [vmem:[%s1 + $0x112c] sm:$0xf]
  %v1187 = vld [vmem:[%s1 + $0x1130] sm:$0xf]
  %v1188 = vld [vmem:[%s1 + $0x1134] sm:$0xf]
  %v1189 = vld [vmem:[%s1 + $0x1138] sm:$0xf]
  %v1190 = vld [vmem:[%s1 + $0x113c] sm:$0xf]
  %v1191 = vld [vmem:[%s1 + $0x1140] sm:$0xf]
  %v1192 = vld [vmem:[%s1 + $0x1144] sm:$0xf]
  %v1193 = vld [vmem:[%s1 + $0x1148] sm:$0xf]
  %v1194 = vld [vmem:[%s1 + $0x114c] sm:$0xf]
  %v1195 = vld [vmem:[%s1 + $0x1150] sm:$0xf]
  %v1196 = vld [vmem:[%s1 + $0x1154] sm:$0xf]
  %v1197 = vld [vmem:[%s1 + $0x1158] sm:$0xf]
  %v1198 = vld [vmem:[%s1 + $0x115c] sm:$0xf]
  %v1199 = vld [vmem:[%s1 + $0x1160] sm:$0xf]
  %v1200 = vld [vmem:[%s1 + $0x1164] sm:$0xf]
  %v1201 = vld [vmem:[%s1 + $0x1168] sm:$0xf]
  %v1202 = vld [vmem:[%s1 + $0x116c] sm:$0xf]
  %v1203 = vld [vmem:[%s1 + $0x1170] sm:$0xf]
  %v1204 = vld [vmem:[%s1 + $0x1174] sm:$0xf]
  %v1205 = vld [vmem:[%s1 + $0x1178] sm:$0xf]
  %v1206 = vld [vmem:[%s1 + $0x117c] sm:$0xf]
  %v1207 = vld [vmem:[%s1 + $0x1180] sm:$0xf]
  %v1208 = vld [vmem:[%s1 + $0x1184] sm:$0xf]
  %v1209 = vld [vmem:[%s1 + $0x1188] sm:$0xf]
  %v1210 = vld [vmem:[%s1 + $0x118c] sm:$0xf]
  %v1211 = vld [vmem:[%s1 + $0x1190] sm:$0xf]
  %v1212 = vld [vmem:[%s1 + $0x1194] sm:$0xf]
  %v1213 = vld [vmem:[%s1 + $0x1198] sm:$0xf]
  %v1214 = vld [vmem:[%s1 + $0x119c] sm:$0xf]
  %v1215 = vld [vmem:[%s1 + $0x11a0] sm:$0xf]
  %v1216 = vld [vmem:[%s1 + $0x11a4] sm:$0xf]
  %v1217 = vld [vmem:[%s1 + $0x11a8] sm:$0xf]
  %v1218 = vld [vmem:[%s1 + $0x11ac] sm:$0xf]
  %v1219 = vld [vmem:[%s1 + $0x11b0] sm:$0xf]
  %v1220 = vld [vmem:[%s1 + $0x11b4] sm:$0xf]
  %v1221 = vld [vmem:[%s1 + $0x11b8] sm:$0xf]
  %v1222 = vld [vmem:[%s1 + $0x11bc] sm:$0xf]
  %v1223 = vld [vmem:[%s1 + $0x11c0] sm:$0xf]
  %v1224 = vld [vmem:[%s1 + $0x11c4] sm:$0xf]
  %v1225 = vld [vmem:[%s1 + $0x11c8] sm:$0xf]
  %v1226 = vld [vmem:[%s1 + $0x11cc] sm:$0xf]
  %v1227 = vld [vmem:[%s1 + $0x11d0] sm:$0xf]
  %v1228 = vld [vmem:[%s1 + $0x11d4] sm:$0xf]
  %v1229 = vld [vmem:[%s1 + $0x11d8] sm:$0xf]
  %v1230 = vld [vmem:[%s1 + $0x11dc] sm:$0xf]
  %v1231 = vld [vmem:[%s1 + $0x11e0] sm:$0xf]
  %v1232 = vld [vmem:[%s1 + $0x11e4] sm:$0xf]
  %v1233 = vld [vmem:[%s1 + $0x11e8] sm:$0xf]
  %v1234 = vld [vmem:[%s1 + $0x11ec] sm:$0xf]
  %v1235 = vld [vmem:[%s1 + $0x11f0] sm:$0xf]
  %v1236 = vld [vmem:[%s1 + $0x11f4] sm:$0xf]
  %v1237 = vld [vmem:[%s1 + $0x11f8] sm:$0xf]
  %v1238 = vld [vmem:[%s1 + $0x11fc] sm:$0xf]
  %v1239 = vld [vmem:[%s1 + $0x1200] sm:$0xf]
  %v1240 = vld [vmem:[%s1 + $0x1204] sm:$0xf]
  %v1241 = vld [vmem:[%s1 + $0x1208] sm:$0xf]
  %v1242 = vld [vmem:[%s1 + $0x120c] sm:$0xf]
  %v1243 = vld [vmem:[%s1 + $0x1210] sm:$0xf]
  %v1244 = vld [vmem:[%s1 + $0x1214] sm:$0xf]
  %v1245 = vld [vmem:[%s1 + $0x1218] sm:$0xf]
  %v1246 = vld [vmem:[%s1 + $0x121c] sm:$0xf]
  %v1247 = vld [vmem:[%s1 + $0x1220] sm:$0xf]
  %v1248 = vld [vmem:[%s1 + $0x1224] sm:$0xf]
  %v1249 = vld [vmem:[%s1 + $0x1228] sm:$0xf]
  %v1250 = vld [vmem:[%s1 + $0x122c] sm:$0xf]
  %v1251 = vld [vmem:[%s1 + $0x1230] sm:$0xf]
  %v1252 = vld [vmem:[%s1 + $0x1234] sm:$0xf]
  %v1253 = vld [vmem:[%s1 + $0x1238] sm:$0xf]
  %v1254 = vld [vmem:[%s1 + $0x123c] sm:$0xf]
  %v1255 = vld [vmem:[%s1 + $0x1240] sm:$0xf]
  %v1256 = vld [vmem:[%s1 + $0x1244] sm:$0xf]
  %v1257 = vld [vmem:[%s1 + $0x1248] sm:$0xf]
  %v1258 = vld [vmem:[%s1 + $0x124c] sm:$0xf]
  %v1259 = vld [vmem:[%s1 + $0x1250] sm:$0xf]
  %v1260 = vld [vmem:[%s1 + $0x1254] sm:$0xf]
  %v1261 = vld [vmem:[%s1 + $0x1258] sm:$0xf]
  %v1262 = vld [vmem:[%s1 + $0x125c] sm:$0xf]
  %v1263 = vld [vmem:[%s1 + $0x1260] sm:$0xf]
  %v1264 = vld [vmem:[%s1 + $0x1264] sm:$0xf]
  %v1265 = vld [vmem:[%s1 + $0x1268] sm:$0xf]
  %v1266 = vld [vmem:[%s1 + $0x126c] sm:$0xf]
  %v1267 = vld [vmem:[%s1 + $0x1270] sm:$0xf]
  %v1268 = vld [vmem:[%s1 + $0x1274] sm:$0xf]
  %v1269 = vld [vmem:[%s1 + $0x1278] sm:$0xf]
  %v1270 = vld [vmem:[%s1 + $0x127c] sm:$0xf]
  %v1271 = vld [vmem:[%s1 + $0x1280] sm:$0xf]
  %v1272 = vld [vmem:[%s1 + $0x1284] sm:$0xf]
  %v1273 = vld [vmem:[%s1 + $0x1288] sm:$0xf]
  %v1274 = vld [vmem:[%s1 + $0x128c] sm:$0xf]
  %v1275 = vld [vmem:[%s1 + $0x1290] sm:$0xf]
  %v1276 = vld [vmem:[%s1 + $0x1294] sm:$0xf]
  %v1277 = vld [vmem:[%s1 + $0x1298] sm:$0xf]
  %v1278 = vld [vmem:[%s1 + $0x129c] sm:$0xf]
  %v1279 = vld [vmem:[%s1 + $0x12a0] sm:$0xf]
  %v1280 = vld [vmem:[%s1 + $0x12a4] sm:$0xf]
  %v1281 = vld [vmem:[%s1 + $0x12a8] sm:$0xf]
  %v1282 = vld [vmem:[%s1 + $0x12ac] sm:$0xf]
  %v1283 = vld [vmem:[%s1 + $0x12b0] sm:$0xf]
  %v1284 = vld [vmem:[%s1 + $0x12b4] sm:$0xf]
  %v1285 = vld [vmem:[%s1 + $0x12b8] sm:$0xf]
  %v1286 = vld [vmem:[%s1 + $0x12bc] sm:$0xf]
  %v1287 = vld [vmem:[%s1 + $0x12c0] sm:$0xf]
  %v1288 = vld [vmem:[%s1 + $0x12c4] sm:$0xf]
  %v1289 = vld [vmem:[%s1 + $0x12c8] sm:$0xf]
  %v1290 = vld [vmem:[%s1 + $0x12cc] sm:$0xf]
  %v1291 = vld [vmem:[%s1 + $0x12d0] sm:$0xf]
  %v1292 = vld [vmem:[%s1 + $0x12d4] sm:$0xf]
  %v1293 = vld [vmem:[%s1 + $0x12d8] sm:$0xf]
  %v1294 = vld [vmem:[%s1 + $0x12dc] sm:$0xf]
  %v1295 = vld [vmem:[%s1 + $0x12e0] sm:$0xf]
  %v1296 = vld [vmem:[%s1 + $0x12e4] sm:$0xf]
  %v1297 = vld [vmem:[%s1 + $0x12e8] sm:$0xf]
  %v1298 = vld [vmem:[%s1 + $0x12ec] sm:$0xf]
  %v1299 = vld [vmem:[%s1 + $0x12f0] sm:$0xf]
  %v1300 = vld [vmem:[%s1 + $0x12f4] sm:$0xf]
  %v1301 = vld [vmem:[%s1 + $0x12f8] sm:$0xf]
  %v1302 = vld [vmem:[%s1 + $0x12fc] sm:$0xf]
  %v1303 = vld [vmem:[%s1 + $0x1300] sm:$0xf]
  %v1304 = vld [vmem:[%s1 + $0x1304] sm:$0xf]
  %v1305 = vld [vmem:[%s1 + $0x1308] sm:$0xf]
  %v1306 = vld [vmem:[%s1 + $0x130c] sm:$0xf]
  %v1307 = vld [vmem:[%s1 + $0x1310] sm:$0xf]
  %v1308 = vld [vmem:[%s1 + $0x1314] sm:$0xf]
  %v1309 = vld [vmem:[%s1 + $0x1318] sm:$0xf]
  %v1310 = vld [vmem:[%s1 + $0x131c] sm:$0xf]
  %v1311 = vld [vmem:[%s1 + $0x1320] sm:$0xf]
  %v1312 = vld [vmem:[%s1 + $0x1324] sm:$0xf]
  %v1313 = vld [vmem:[%s1 + $0x1328] sm:$0xf]
  %v1314 = vld [vmem:[%s1 + $0x132c] sm:$0xf]
  %v1315 = vld [vmem:[%s1 + $0x1330] sm:$0xf]
  %v1316 = vld [vmem:[%s1 + $0x1334] sm:$0xf]
  %v1317 = vld [vmem:[%s1 + $0x1338] sm:$0xf]
  %v1318 = vld [vmem:[%s1 + $0x133c] sm:$0xf]
  %v1319 = vld [vmem:[%s1 + $0x1340] sm:$0xf]
  %v1320 = vld [vmem:[%s1 + $0x1344] sm:$0xf]
  %v1321 = vld [vmem:[%s1 + $0x1348] sm:$0xf]
  %v1322 = vld [vmem:[%s1 + $0x134c] sm:$0xf]
  %v1323 = vld [vmem:[%s1 + $0x1350] sm:$0xf]
  %v1324 = vld [vmem:[%s1 + $0x1354] sm:$0xf]
  %v1325 = vld [vmem:[%s1 + $0x1358] sm:$0xf]
  %v1326 = vld [vmem:[%s1 + $0x135c] sm:$0xf]
  %v1327 = vld [vmem:[%s1 + $0x1360] sm:$0xf]
  %v1328 = vld [vmem:[%s1 + $0x1364] sm:$0xf]
  %v1329 = vld [vmem:[%s1 + $0x1368] sm:$0xf]
  %v1330 = vld [vmem:[%s1 + $0x136c] sm:$0xf]
  %v1331 = vld [vmem:[%s1 + $0x1370] sm:$0xf]
  %v1332 = vld [vmem:[%s1 + $0x1374] sm:$0xf]
  %v1333 = vld [vmem:[%s1 + $0x1378] sm:$0xf]
  %v1334 = vld [vmem:[%s1 + $0x137c] sm:$0xf]
  %v1335 = vld [vmem:[%s1 + $0x1380] sm:$0xf]
  %v1336 = vld [vmem:[%s1 + $0x1384] sm:$0xf]
  %v1337 = vld [vmem:[%s1 + $0x1388] sm:$0xf]
  %v1338 = vld [vmem:[%s1 + $0x138c] sm:$0xf]
  %v1339 = vld [vmem:[%s1 + $0x1390] sm:$0xf]
  %v1340 = vld [vmem:[%s1 + $0x1394] sm:$0xf]
  %v1341 = vld [vmem:[%s1 + $0x1398] sm:$0xf]
  %v1342 = vld [vmem:[%s1 + $0x139c] sm:$0xf]
  %v1343 = vld [vmem:[%s1 + $0x13a0] sm:$0xf]
  %v1344 = vld [vmem:[%s1 + $0x13a4] sm:$0xf]
  %v1345 = vld [vmem:[%s1 + $0x13a8] sm:$0xf]
  %v1346 = vld [vmem:[%s1 + $0x13ac] sm:$0xf]
  %v1347 = vld [vmem:[%s1 + $0x13b0] sm:$0xf]
  %v1348 = vld [vmem:[%s1 + $0x13b4] sm:$0xf]
  %v1349 = vld [vmem:[%s1 + $0x13b8] sm:$0xf]
  %v1350 = vld [vmem:[%s1 + $0x13bc] sm:$0xf]
  %v1351 = vld [vmem:[%s1 + $0x13c0] sm:$0xf]
  %v1352 = vld [vmem:[%s1 + $0x13c4] sm:$0xf]
  %v1353 = vld [vmem:[%s1 + $0x13c8] sm:$0xf]
  %v1354 = vld [vmem:[%s1 + $0x13cc] sm:$0xf]
  %v1355 = vld [vmem:[%s1 + $0x13d0] sm:$0xf]
  %v1356 = vld [vmem:[%s1 + $0x13d4] sm:$0xf]
  %v1357 = vld [vmem:[%s1 + $0x13d8] sm:$0xf]
  %v1358 = vld [vmem:[%s1 + $0x13dc] sm:$0xf]
  %v1359 = vld [vmem:[%s1 + $0x13e0] sm:$0xf]
  %v1360 = vld [vmem:[%s1 + $0x13e4] sm:$0xf]
  %v1361 = vld [vmem:[%s1 + $0x13e8] sm:$0xf]
  %v1362 = vld [vmem:[%s1 + $0x13ec] sm:$0xf]
  %v1363 = vld [vmem:[%s1 + $0x13f0] sm:$0xf]
  %v1364 = vld [vmem:[%s1 + $0x13f4] sm:$0xf]
  %v1365 = vld [vmem:[%s1 + $0x13f8] sm:$0xf]
  %v1366 = vld [vmem:[%s1 + $0x13fc] sm:$0xf]
  %v1367 = vld [vmem:[%s1 + $0x1400] sm:$0xf]
  %v1368 = vld [vmem:[%s1 + $0x1404] sm:$0xf]
  %v1369 = vld [vmem:[%s1 + $0x1408] sm:$0xf]
  %v1370 = vld [vmem:[%s1 + $0x140c] sm:$0xf]
  %v1371 = vld [vmem:[%s1 + $0x1410] sm:$0xf]
  %v1372 = vld [vmem:[%s1 + $0x1414] sm:$0xf]
  %v1373 = vld [vmem:[%s1 + $0x1418] sm:$0xf]
  %v1374 = vld [vmem:[%s1 + $0x141c] sm:$0xf]
  %v1375 = vld [vmem:[%s1 + $0x1420] sm:$0xf]
  %v1376 = vld [vmem:[%s1 + $0x1424] sm:$0xf]
  %v1377 = vld [vmem:[%s1 + $0x1428] sm:$0xf]
  %v1378 = vld [vmem:[%s1 + $0x142c] sm:$0xf]
  %v1379 = vld [vmem:[%s1 + $0x1430] sm:$0xf]
  %v1380 = vld [vmem:[%s1 + $0x1434] sm:$0xf]
  %v1381 = vld [vmem:[%s1 + $0x1438] sm:$0xf]
  %v1382 = vld [vmem:[%s1 + $0x143c] sm:$0xf]
  %v1383 = vld [vmem:[%s1 + $0x1440] sm:$0xf]
  %v1384 = vld [vmem:[%s1 + $0x1444] sm:$0xf]
  %v1385 = vld [vmem:[%s1 + $0x1448] sm:$0xf]
  %v1386 = vld [vmem:[%s1 + $0x144c] sm:$0xf]
  %v1387 = vld [vmem:[%s1 + $0x1450] sm:$0xf]
  %v1388 = vld [vmem:[%s1 + $0x1454] sm:$0xf]
  %v1389 = vld [vmem:[%s1 + $0x1458] sm:$0xf]
  %v1390 = vld [vmem:[%s1 + $0x145c] sm:$0xf]
  %v1391 = vld [vmem:[%s1 + $0x1460] sm:$0xf]
  %v1392 = vld [vmem:[%s1 + $0x1464] sm:$0xf]
  %v1393 = vld [vmem:[%s1 + $0x1468] sm:$0xf]
  %v1394 = vld [vmem:[%s1 + $0x146c] sm:$0xf]
  %v1395 = vld [vmem:[%s1 + $0x1470] sm:$0xf]
  %v1396 = vld [vmem:[%s1 + $0x1474] sm:$0xf]
  %v1397 = vld [vmem:[%s1 + $0x1478] sm:$0xf]
  %v1398 = vld [vmem:[%s1 + $0x147c] sm:$0xf]
  %v1399 = vld [vmem:[%s1 + $0x1480] sm:$0xf]
  %v1400 = vld [vmem:[%s1 + $0x1484] sm:$0xf]
  %v1401 = vld [vmem:[%s1 + $0x1488] sm:$0xf]
  %v1402 = vld [vmem:[%s1 + $0x148c] sm:$0xf]
  %v1403 = vld [vmem:[%s1 + $0x1490] sm:$0xf]
  %v1404 = vld [vmem:[%s1 + $0x1494] sm:$0xf]
  %v1405 = vld [vmem:[%s1 + $0x1498] sm:$0xf]
  %v1406 = vld [vmem:[%s1 + $0x149c] sm:$0xf]
  %v1407 = vld [vmem:[%s1 + $0x14a0] sm:$0xf]
  %v1408 = vld [vmem:[%s1 + $0x14a4] sm:$0xf]
  %v1409 = vld [vmem:[%s1 + $0x14a8] sm:$0xf]
  %v1410 = vld [vmem:[%s1 + $0x14ac] sm:$0xf]
  %v1411 = vld [vmem:[%s1 + $0x14b0] sm:$0xf]
  %v1412 = vld [vmem:[%s1 + $0x14b4] sm:$0xf]
  %v1413 = vld [vmem:[%s1 + $0x14b8] sm:$0xf]
  %v1414 = vld [vmem:[%s1 + $0x14bc] sm:$0xf]
  %v1415 = vld [vmem:[%s1 + $0x14c0] sm:$0xf]
  %v1416 = vld [vmem:[%s1 + $0x14c4] sm:$0xf]
  %v1417 = vld [vmem:[%s1 + $0x14c8] sm:$0xf]
  %v1418 = vld [vmem:[%s1 + $0x14cc] sm:$0xf]
  %v1419 = vld [vmem:[%s1 + $0x14d0] sm:$0xf]
  %v1420 = vld [vmem:[%s1 + $0x14d4] sm:$0xf]
  %v1421 = vld [vmem:[%s1 + $0x14d8] sm:$0xf]
  %v1422 = vld [vmem:[%s1 + $0x14dc] sm:$0xf]
  %v1423 = vld [vmem:[%s1 + $0x14e0] sm:$0xf]
  %v1424 = vld [vmem:[%s1 + $0x14e4] sm:$0xf]
  %v1425 = vld [vmem:[%s1 + $0x14e8] sm:$0xf]
  %v1426 = vld [vmem:[%s1 + $0x14ec] sm:$0xf]
  %v1427 = vld [vmem:[%s1 + $0x14f0] sm:$0xf]
  %v1428 = vld [vmem:[%s1 + $0x14f4] sm:$0xf]
  %v1429 = vld [vmem:[%s1 + $0x14f8] sm:$0xf]
  %v1430 = vld [vmem:[%s1 + $0x14fc] sm:$0xf]
  %v1431 = vld [vmem:[%s1 + $0x1500] sm:$0xf]
  %v1432 = vld [vmem:[%s1 + $0x1504] sm:$0xf]
  %v1433 = vld [vmem:[%s1 + $0x1508] sm:$0xf]
  %v1434 = vld [vmem:[%s1 + $0x150c] sm:$0xf]
  %v1435 = vld [vmem:[%s1 + $0x1510] sm:$0xf]
  %v1436 = vld [vmem:[%s1 + $0x1514] sm:$0xf]
  %v1437 = vld [vmem:[%s1 + $0x1518] sm:$0xf]
  %v1438 = vld [vmem:[%s1 + $0x151c] sm:$0xf]
  %v1439 = vld [vmem:[%s1 + $0x1520] sm:$0xf]
  %v1440 = vld [vmem:[%s1 + $0x1524] sm:$0xf]
  %v1441 = vld [vmem:[%s1 + $0x1528] sm:$0xf]
  %v1442 = vld [vmem:[%s1 + $0x152c] sm:$0xf]
  %v1443 = vld [vmem:[%s1 + $0x1530] sm:$0xf]
  %v1444 = vld [vmem:[%s1 + $0x1534] sm:$0xf]
  %v1445 = vld [vmem:[%s1 + $0x1538] sm:$0xf]
  %v1446 = vld [vmem:[%s1 + $0x153c] sm:$0xf]
  %v1447 = vld [vmem:[%s1 + $0x1540] sm:$0xf]
  %v1448 = vld [vmem:[%s1 + $0x1544] sm:$0xf]
  %v1449 = vld [vmem:[%s1 + $0x1548] sm:$0xf]
  %v1450 = vld [vmem:[%s1 + $0x154c] sm:$0xf]
  %v1451 = vld [vmem:[%s1 + $0x1550] sm:$0xf]
  %v1452 = vld [vmem:[%s1 + $0x1554] sm:$0xf]
  %v1453 = vld [vmem:[%s1 + $0x1558] sm:$0xf]
  %v1454 = vld [vmem:[%s1 + $0x155c] sm:$0xf]
  %v1455 = vld [vmem:[%s1 + $0x1560] sm:$0xf]
  %v1456 = vld [vmem:[%s1 + $0x1564] sm:$0xf]
  %v1457 = vld [vmem:[%s1 + $0x1568] sm:$0xf]
  %v1458 = vld [vmem:[%s1 + $0x156c] sm:$0xf]
  %v1459 = vld [vmem:[%s1 + $0x1570] sm:$0xf]
  %v1460 = vld [vmem:[%s1 + $0x1574] sm:$0xf]
  %v1461 = vld [vmem:[%s1 + $0x1578] sm:$0xf]
  %v1462 = vld [vmem:[%s1 + $0x157c] sm:$0xf]
  %v1463 = vld [vmem:[%s1 + $0x1580] sm:$0xf]
  %v1464 = vld [vmem:[%s1 + $0x1584] sm:$0xf]
  %v1465 = vld [vmem:[%s1 + $0x1588] sm:$0xf]
  %v1466 = vld [vmem:[%s1 + $0x158c] sm:$0xf]
  %v1467 = vld [vmem:[%s1 + $0x1590] sm:$0xf]
  %v1468 = vld [vmem:[%s1 + $0x1594] sm:$0xf]
  %v1469 = vld [vmem:[%s1 + $0x1598] sm:$0xf]
  %v1470 = vld [vmem:[%s1 + $0x159c] sm:$0xf]
  %v1471 = vld [vmem:[%s1 + $0x15a0] sm:$0xf]
  %v1472 = vld [vmem:[%s1 + $0x15a4] sm:$0xf]
  %v1473 = vld [vmem:[%s1 + $0x15a8] sm:$0xf]
  %v1474 = vld [vmem:[%s1 + $0x15ac] sm:$0xf]
  %v1475 = vld [vmem:[%s1 + $0x15b0] sm:$0xf]
  %v1476 = vld [vmem:[%s1 + $0x15b4] sm:$0xf]
  %v1477 = vld [vmem:[%s1 + $0x15b8] sm:$0xf]
  %v1478 = vld [vmem:[%s1 + $0x15bc] sm:$0xf]
  %v1479 = vld [vmem:[%s1 + $0x15c0] sm:$0xf]
  %v1480 = vld [vmem:[%s1 + $0x15c4] sm:$0xf]
  %v1481 = vld [vmem:[%s1 + $0x15c8] sm:$0xf]
  %v1482 = vld [vmem:[%s1 + $0x15cc] sm:$0xf]
  %v1483 = vld [vmem:[%s1 + $0x15d0] sm:$0xf]
  %v1484 = vld [vmem:[%s1 + $0x15d4] sm:$0xf]
  %v1485 = vld [vmem:[%s1 + $0x15d8] sm:$0xf]
  %v1486 = vld [vmem:[%s1 + $0x15dc] sm:$0xf]
  %v1487 = vld [vmem:[%s1 + $0x15e0] sm:$0xf]
  %v1488 = vld [vmem:[%s1 + $0x15e4] sm:$0xf]
  %v1489 = vld [vmem:[%s1 + $0x15e8] sm:$0xf]
  %v1490 = vld [vmem:[%s1 + $0x15ec] sm:$0xf]
  %v1491 = vld [vmem:[%s1 + $0x15f0] sm:$0xf]
  %v1492 = vld [vmem:[%s1 + $0x15f4] sm:$0xf]
  %v1493 = vld [vmem:[%s1 + $0x15f8] sm:$0xf]
  %v1494 = vld [vmem:[%s1 + $0x15fc] sm:$0xf]
  %v1495 = vld [vmem:[%s1 + $0x1600] sm:$0xf]
  %v1496 = vld [vmem:[%s1 + $0x1604] sm:$0xf]
  %v1497 = vld [vmem:[%s1 + $0x1608] sm:$0xf]
  %v1498 = vld [vmem:[%s1 + $0x160c] sm:$0xf]
  %v1499 = vld [vmem:[%s1 + $0x1610] sm:$0xf]
  %v1500 = vld [vmem:[%s1 + $0x1614] sm:$0xf]
  %v1501 = vld [vmem:[%s1 + $0x1618] sm:$0xf]
  %v1502 = vld [vmem:[%s1 + $0x161c] sm:$0xf]
  %v1503 = vld [vmem:[%s1 + $0x1620] sm:$0xf]
  %v1504 = vld [vmem:[%s1 + $0x1624] sm:$0xf]
  %v1505 = vld [vmem:[%s1 + $0x1628] sm:$0xf]
  %v1506 = vld [vmem:[%s1 + $0x162c] sm:$0xf]
  %v1507 = vld [vmem:[%s1 + $0x1630] sm:$0xf]
  %v1508 = vld [vmem:[%s1 + $0x1634] sm:$0xf]
  %v1509 = vld [vmem:[%s1 + $0x1638] sm:$0xf]
  %v1510 = vld [vmem:[%s1 + $0x163c] sm:$0xf]
  %v1511 = vld [vmem:[%s1 + $0x1640] sm:$0xf]
  %v1512 = vld [vmem:[%s1 + $0x1644] sm:$0xf]
  %v1513 = vld [vmem:[%s1 + $0x1648] sm:$0xf]
  %v1514 = vld [vmem:[%s1 + $0x164c] sm:$0xf]
  %v1515 = vld [vmem:[%s1 + $0x1650] sm:$0xf]
  %v1516 = vld [vmem:[%s1 + $0x1654] sm:$0xf]
  %v1517 = vld [vmem:[%s1 + $0x1658] sm:$0xf]
  %v1518 = vld [vmem:[%s1 + $0x165c] sm:$0xf]
  %v1519 = vld [vmem:[%s1 + $0x1660] sm:$0xf]
  %v1520 = vld [vmem:[%s1 + $0x1664] sm:$0xf]
  %v1521 = vld [vmem:[%s1 + $0x1668] sm:$0xf]
  %v1522 = vld [vmem:[%s1 + $0x166c] sm:$0xf]
  %v1523 = vld [vmem:[%s1 + $0x1670] sm:$0xf]
  %v1524 = vld [vmem:[%s1 + $0x1674] sm:$0xf]
  %v1525 = vld [vmem:[%s1 + $0x1678] sm:$0xf]
  %v1526 = vld [vmem:[%s1 + $0x167c] sm:$0xf]
  %v1527 = vld [vmem:[%s1 + $0x1680] sm:$0xf]
  %v1528 = vld [vmem:[%s1 + $0x1684] sm:$0xf]
  %v1529 = vld [vmem:[%s1 + $0x1688] sm:$0xf]
  %v1530 = vld [vmem:[%s1 + $0x168c] sm:$0xf]
  %v1531 = vld [vmem:[%s1 + $0x1690] sm:$0xf]
  %v1532 = vld [vmem:[%s1 + $0x1694] sm:$0xf]
  %v1533 = vld [vmem:[%s1 + $0x1698] sm:$0xf]
  %v1534 = vld [vmem:[%s1 + $0x169c] sm:$0xf]
  %v1535 = vld [vmem:[%s1 + $0x16a0] sm:$0xf]
  %v1536 = vld [vmem:[%s1 + $0x16a4] sm:$0xf]
  %v1537 = vld [vmem:[%s1 + $0x16a8] sm:$0xf]
  %v1538 = vld [vmem:[%s1 + $0x16ac] sm:$0xf]
  %v1539 = vld [vmem:[%s1 + $0x16b0] sm:$0xf]
  %v1540 = vld [vmem:[%s1 + $0x16b4] sm:$0xf]
  %v1541 = vld [vmem:[%s1 + $0x16b8] sm:$0xf]
  %v1542 = vld [vmem:[%s1 + $0x16bc] sm:$0xf]
  %v1543 = vld [vmem:[%s1 + $0x16c0] sm:$0xf]
  %v1544 = vld [vmem:[%s1 + $0x16c4] sm:$0xf]
  %v1545 = vld [vmem:[%s1 + $0x16c8] sm:$0xf]
  %v1546 = vld [vmem:[%s1 + $0x16cc] sm:$0xf]
  %v1547 = vld [vmem:[%s1 + $0x16d0] sm:$0xf]
  %v1548 = vld [vmem:[%s1 + $0x16d4] sm:$0xf]
  %v1549 = vld [vmem:[%s1 + $0x16d8] sm:$0xf]
  %v1550 = vld [vmem:[%s1 + $0x16dc] sm:$0xf]
  %v1551 = vld [vmem:[%s1 + $0x16e0] sm:$0xf]
  %v1552 = vld [vmem:[%s1 + $0x16e4] sm:$0xf]
  %v1553 = vld [vmem:[%s1 + $0x16e8] sm:$0xf]
  %v1554 = vld [vmem:[%s1 + $0x16ec] sm:$0xf]
  %v1555 = vld [vmem:[%s1 + $0x16f0] sm:$0xf]
  %v1556 = vld [vmem:[%s1 + $0x16f4] sm:$0xf]
  %v1557 = vld [vmem:[%s1 + $0x16f8] sm:$0xf]
  %v1558 = vld [vmem:[%s1 + $0x16fc] sm:$0xf]
  %v1559 = vld [vmem:[%s1 + $0x1700] sm:$0xf]
  %v1560 = vld [vmem:[%s1 + $0x1704] sm:$0xf]
  %v1561 = vld [vmem:[%s1 + $0x1708] sm:$0xf]
  %v1562 = vld [vmem:[%s1 + $0x170c] sm:$0xf]
  %v1563 = vld [vmem:[%s1 + $0x1710] sm:$0xf]
  %v1564 = vld [vmem:[%s1 + $0x1714] sm:$0xf]
  %v1565 = vld [vmem:[%s1 + $0x1718] sm:$0xf]
  %v1566 = vld [vmem:[%s1 + $0x171c] sm:$0xf]
  %v1567 = vld [vmem:[%s1 + $0x1720] sm:$0xf]
  %v1568 = vld [vmem:[%s1 + $0x1724] sm:$0xf]
  %v1569 = vld [vmem:[%s1 + $0x1728] sm:$0xf]
  %v1570 = vld [vmem:[%s1 + $0x172c] sm:$0xf]
  %v1571 = vld [vmem:[%s1 + $0x1730] sm:$0xf]
  %v1572 = vld [vmem:[%s1 + $0x1734] sm:$0xf]
  %v1573 = vld [vmem:[%s1 + $0x1738] sm:$0xf]
  %v1574 = vld [vmem:[%s1 + $0x173c] sm:$0xf]
  %v1575 = vld [vmem:[%s1 + $0x1740] sm:$0xf]
  %v1576 = vld [vmem:[%s1 + $0x1744] sm:$0xf]
  %v1577 = vld [vmem:[%s1 + $0x1748] sm:$0xf]
  %v1578 = vld [vmem:[%s1 + $0x174c] sm:$0xf]
  %v1579 = vld [vmem:[%s1 + $0x1750] sm:$0xf]
  %v1580 = vld [vmem:[%s1 + $0x1754] sm:$0xf]
  %v1581 = vld [vmem:[%s1 + $0x1758] sm:$0xf]
  %v1582 = vld [vmem:[%s1 + $0x175c] sm:$0xf]
  %v1583 = vld [vmem:[%s1 + $0x1760] sm:$0xf]
  %v1584 = vld [vmem:[%s1 + $0x1764] sm:$0xf]
  %v1585 = vld [vmem:[%s1 + $0x1768] sm:$0xf]
  %v1586 = vld [vmem:[%s1 + $0x176c] sm:$0xf]
  %v1587 = vld [vmem:[%s1 + $0x1770] sm:$0xf]
  %v1588 = vld [vmem:[%s1 + $0x1774] sm:$0xf]
  %v1589 = vld [vmem:[%s1 + $0x1778] sm:$0xf]
  %v1590 = vld [vmem:[%s1 + $0x177c] sm:$0xf]
  %v1591 = vld [vmem:[%s1 + $0x1780] sm:$0xf]
  %v1592 = vld [vmem:[%s1 + $0x1784] sm:$0xf]
  %v1593 = vld [vmem:[%s1 + $0x1788] sm:$0xf]
  %v1594 = vld [vmem:[%s1 + $0x178c] sm:$0xf]
  %v1595 = vld [vmem:[%s1 + $0x1790] sm:$0xf]
  %v1596 = vld [vmem:[%s1 + $0x1794] sm:$0xf]
  %v1597 = vld [vmem:[%s1 + $0x1798] sm:$0xf]
  %v1598 = vld [vmem:[%s1 + $0x179c] sm:$0xf]
  %v1599 = vld [vmem:[%s1 + $0x17a0] sm:$0xf]
  %v1600 = vld [vmem:[%s1 + $0x17a4] sm:$0xf]
  %v1601 = vld [vmem:[%s1 + $0x17a8] sm:$0xf]
  %v1602 = vld [vmem:[%s1 + $0x17ac] sm:$0xf]
  %v1603 = vld [vmem:[%s1 + $0x17b0] sm:$0xf]
  %v1604 = vld [vmem:[%s1 + $0x17b4] sm:$0xf]
  %v1605 = vld [vmem:[%s1 + $0x17b8] sm:$0xf]
  %v1606 = vld [vmem:[%s1 + $0x17bc] sm:$0xf]
  %v1607 = vld [vmem:[%s1 + $0x17c0] sm:$0xf]
  %v1608 = vld [vmem:[%s1 + $0x17c4] sm:$0xf]
  %v1609 = vld [vmem:[%s1 + $0x17c8] sm:$0xf]
  %v1610 = vld [vmem:[%s1 + $0x17cc] sm:$0xf]
  %v1611 = vld [vmem:[%s1 + $0x17d0] sm:$0xf]
  %v1612 = vld [vmem:[%s1 + $0x17d4] sm:$0xf]
  %v1613 = vld [vmem:[%s1 + $0x17d8] sm:$0xf]
  %v1614 = vld [vmem:[%s1 + $0x17dc] sm:$0xf]
  %v1615 = vld [vmem:[%s1 + $0x17e0] sm:$0xf]
  %v1616 = vld [vmem:[%s1 + $0x17e4] sm:$0xf]
  %v1617 = vld [vmem:[%s1 + $0x17e8] sm:$0xf]
  %v1618 = vld [vmem:[%s1 + $0x17ec] sm:$0xf]
  %v1619 = vld [vmem:[%s1 + $0x17f0] sm:$0xf]
  %v1620 = vld [vmem:[%s1 + $0x17f4] sm:$0xf]
  %v1621 = vld [vmem:[%s1 + $0x17f8] sm:$0xf]
  %v1622 = vld [vmem:[%s1 + $0x17fc] sm:$0xf]
  %v1623 = vld [vmem:[%s1 + $0x1800] sm:$0xf]
  %v1624 = vld [vmem:[%s1 + $0x1804] sm:$0xf]
  %v1625 = vld [vmem:[%s1 + $0x1808] sm:$0xf]
  %v1626 = vld [vmem:[%s1 + $0x180c] sm:$0xf]
  %v1627 = vld [vmem:[%s1 + $0x1810] sm:$0xf]
  %v1628 = vld [vmem:[%s1 + $0x1814] sm:$0xf]
  %v1629 = vld [vmem:[%s1 + $0x1818] sm:$0xf]
  %v1630 = vld [vmem:[%s1 + $0x181c] sm:$0xf]
  %v1631 = vld [vmem:[%s1 + $0x1820] sm:$0xf]
  %v1632 = vld [vmem:[%s1 + $0x1824] sm:$0xf]
  %v1633 = vld [vmem:[%s1 + $0x1828] sm:$0xf]
  %v1634 = vld [vmem:[%s1 + $0x182c] sm:$0xf]
  %v1635 = vld [vmem:[%s1 + $0x1830] sm:$0xf]
  %v1636 = vld [vmem:[%s1 + $0x1834] sm:$0xf]
  %v1637 = vld [vmem:[%s1 + $0x1838] sm:$0xf]
  %v1638 = vld [vmem:[%s1 + $0x183c] sm:$0xf]
  %v1639 = vld [vmem:[%s1 + $0x1840] sm:$0xf]
  %v1640 = vld [vmem:[%s1 + $0x1844] sm:$0xf]
  %v1641 = vld [vmem:[%s1 + $0x1848] sm:$0xf]
  %v1642 = vld [vmem:[%s1 + $0x184c] sm:$0xf]
  %v1643 = vld [vmem:[%s1 + $0x1850] sm:$0xf]
  %v1644 = vld [vmem:[%s1 + $0x1854] sm:$0xf]
  %v1645 = vld [vmem:[%s1 + $0x1858] sm:$0xf]
  %v1646 = vld [vmem:[%s1 + $0x185c] sm:$0xf]
  %v1647 = vld [vmem:[%s1 + $0x1860] sm:$0xf]
  %v1648 = vld [vmem:[%s1 + $0x1864] sm:$0xf]
  %v1649 = vld [vmem:[%s1 + $0x1868] sm:$0xf]
  %v1650 = vld [vmem:[%s1 + $0x186c] sm:$0xf]
  %v1651 = vld [vmem:[%s1 + $0x1870] sm:$0xf]
  %v1652 = vld [vmem:[%s1 + $0x1874] sm:$0xf]
  %v1653 = vld [vmem:[%s1 + $0x1878] sm:$0xf]
  %v1654 = vld [vmem:[%s1 + $0x187c] sm:$0xf]
  %v1655 = vld [vmem:[%s1 + $0x1880] sm:$0xf]
  %v1656 = vld [vmem:[%s1 + $0x1884] sm:$0xf]
  %v1657 = vld [vmem:[%s1 + $0x1888] sm:$0xf]
  %v1658 = vld [vmem:[%s1 + $0x188c] sm:$0xf]
  %v1659 = vld [vmem:[%s1 + $0x1890] sm:$0xf]
  %v1660 = vld [vmem:[%s1 + $0x1894] sm:$0xf]
  %v1661 = vld [vmem:[%s1 + $0x1898] sm:$0xf]
  %v1662 = vld [vmem:[%s1 + $0x189c] sm:$0xf]
  %v1663 = vld [vmem:[%s1 + $0x18a0] sm:$0xf]
  %v1664 = vld [vmem:[%s1 + $0x18a4] sm:$0xf]
  %v1665 = vld [vmem:[%s1 + $0x18a8] sm:$0xf]
  %v1666 = vld [vmem:[%s1 + $0x18ac] sm:$0xf]
  %v1667 = vld [vmem:[%s1 + $0x18b0] sm:$0xf]
  %v1668 = vld [vmem:[%s1 + $0x18b4] sm:$0xf]
  %v1669 = vld [vmem:[%s1 + $0x18b8] sm:$0xf]
  %v1670 = vld [vmem:[%s1 + $0x18bc] sm:$0xf]
  %v1671 = vld [vmem:[%s1 + $0x18c0] sm:$0xf]
  %v1672 = vld [vmem:[%s1 + $0x18c4] sm:$0xf]
  %v1673 = vld [vmem:[%s1 + $0x18c8] sm:$0xf]
  %v1674 = vld [vmem:[%s1 + $0x18cc] sm:$0xf]
  %v1675 = vld [vmem:[%s1 + $0x18d0] sm:$0xf]
  %v1676 = vld [vmem:[%s1 + $0x18d4] sm:$0xf]
  %v1677 = vld [vmem:[%s1 + $0x18d8] sm:$0xf]
  %v1678 = vld [vmem:[%s1 + $0x18dc] sm:$0xf]
  %v1679 = vld [vmem:[%s1 + $0x18e0] sm:$0xf]
  %v1680 = vld [vmem:[%s1 + $0x18e4] sm:$0xf]
  %v1681 = vld [vmem:[%s1 + $0x18e8] sm:$0xf]
  %v1682 = vld [vmem:[%s1 + $0x18ec] sm:$0xf]
  %v1683 = vld [vmem:[%s1 + $0x18f0] sm:$0xf]
  %v1684 = vld [vmem:[%s1 + $0x18f4] sm:$0xf]
  %v1685 = vld [vmem:[%s1 + $0x18f8] sm:$0xf]
  %v1686 = vld [vmem:[%s1 + $0x18fc] sm:$0xf]
  %v1687 = vld [vmem:[%s1 + $0x1900] sm:$0xf]
  %v1688 = vld [vmem:[%s1 + $0x1904] sm:$0xf]
  %v1689 = vld [vmem:[%s1 + $0x1908] sm:$0xf]
  %v1690 = vld [vmem:[%s1 + $0x190c] sm:$0xf]
  %v1691 = vld [vmem:[%s1 + $0x1910] sm:$0xf]
  %v1692 = vld [vmem:[%s1 + $0x1914] sm:$0xf]
  %v1693 = vld [vmem:[%s1 + $0x1918] sm:$0xf]
  %v1694 = vld [vmem:[%s1 + $0x191c] sm:$0xf]
  %v1695 = vld [vmem:[%s1 + $0x1920] sm:$0xf]
  %v1696 = vld [vmem:[%s1 + $0x1924] sm:$0xf]
  %v1697 = vld [vmem:[%s1 + $0x1928] sm:$0xf]
  %v1698 = vld [vmem:[%s1 + $0x192c] sm:$0xf]
  %v1699 = vld [vmem:[%s1 + $0x1930] sm:$0xf]
  %v1700 = vld [vmem:[%s1 + $0x1934] sm:$0xf]
  %v1701 = vld [vmem:[%s1 + $0x1938] sm:$0xf]
  %v1702 = vld [vmem:[%s1 + $0x193c] sm:$0xf]
  %v1703 = vld [vmem:[%s1 + $0x1940] sm:$0xf]
  %v1704 = vld [vmem:[%s1 + $0x1944] sm:$0xf]
  %v1705 = vld [vmem:[%s1 + $0x1948] sm:$0xf]
  %v1706 = vld [vmem:[%s1 + $0x194c] sm:$0xf]
  %v1707 = vld [vmem:[%s1 + $0x1950] sm:$0xf]
  %v1708 = vld [vmem:[%s1 + $0x1954] sm:$0xf]
  %v1709 = vld [vmem:[%s1 + $0x1958] sm:$0xf]
  %v1710 = vld [vmem:[%s1 + $0x195c] sm:$0xf]
  %v1711 = vld [vmem:[%s1 + $0x1960] sm:$0xf]
  %v1712 = vld [vmem:[%s1 + $0x1964] sm:$0xf]
  %v1713 = vld [vmem:[%s1 + $0x1968] sm:$0xf]
  %v1714 = vld [vmem:[%s1 + $0x196c] sm:$0xf]
  %v1715 = vld [vmem:[%s1 + $0x1970] sm:$0xf]
  %v1716 = vld [vmem:[%s1 + $0x1974] sm:$0xf]
  %v1717 = vld [vmem:[%s1 + $0x1978] sm:$0xf]
  %v1718 = vld [vmem:[%s1 + $0x197c] sm:$0xf]
  %v1719 = vld [vmem:[%s1 + $0x1980] sm:$0xf]
  %v1720 = vld [vmem:[%s1 + $0x1984] sm:$0xf]
  %v1721 = vld [vmem:[%s1 + $0x1988] sm:$0xf]
  %v1722 = vld [vmem:[%s1 + $0x198c] sm:$0xf]
  %v1723 = vld [vmem:[%s1 + $0x1990] sm:$0xf]
  %v1724 = vld [vmem:[%s1 + $0x1994] sm:$0xf]
  %v1725 = vld [vmem:[%s1 + $0x1998] sm:$0xf]
  %v1726 = vld [vmem:[%s1 + $0x199c] sm:$0xf]
  %v1727 = vld [vmem:[%s1 + $0x19a0] sm:$0xf]
  %v1728 = vld [vmem:[%s1 + $0x19a4] sm:$0xf]
  %v1729 = vld [vmem:[%s1 + $0x19a8] sm:$0xf]
  %v1730 = vld [vmem:[%s1 + $0x19ac] sm:$0xf]
  %v1731 = vld [vmem:[%s1 + $0x19b0] sm:$0xf]
  %v1732 = vld [vmem:[%s1 + $0x19b4] sm:$0xf]
  %v1733 = vld [vmem:[%s1 + $0x19b8] sm:$0xf]
  %v1734 = vld [vmem:[%s1 + $0x19bc] sm:$0xf]
  %v1735 = vld [vmem:[%s1 + $0x19c0] sm:$0xf]
  %v1736 = vld [vmem:[%s1 + $0x19c4] sm:$0xf]
  %v1737 = vld [vmem:[%s1 + $0x19c8] sm:$0xf]
  %v1738 = vld [vmem:[%s1 + $0x19cc] sm:$0xf]
  %v1739 = vld [vmem:[%s1 + $0x19d0] sm:$0xf]
  %v1740 = vld [vmem:[%s1 + $0x19d4] sm:$0xf]
  %v1741 = vld [vmem:[%s1 + $0x19d8] sm:$0xf]
  %v1742 = vld [vmem:[%s1 + $0x19dc] sm:$0xf]
  %v1743 = vld [vmem:[%s1 + $0x19e0] sm:$0xf]
  %v1744 = vld [vmem:[%s1 + $0x19e4] sm:$0xf]
  %v1745 = vld [vmem:[%s1 + $0x19e8] sm:$0xf]
  %v1746 = vld [vmem:[%s1 + $0x19ec] sm:$0xf]
  %v1747 = vld [vmem:[%s1 + $0x19f0] sm:$0xf]
  %v1748 = vld [vmem:[%s1 + $0x19f4] sm:$0xf]
  %v1749 = vld [vmem:[%s1 + $0x19f8] sm:$0xf]
  %v1750 = vld [vmem:[%s1 + $0x19fc] sm:$0xf]
  %v1751 = vld [vmem:[%s1 + $0x1a00] sm:$0xf]
  %v1752 = vld [vmem:[%s1 + $0x1a04] sm:$0xf]
  %v1753 = vld [vmem:[%s1 + $0x1a08] sm:$0xf]
  %v1754 = vld [vmem:[%s1 + $0x1a0c] sm:$0xf]
  %v1755 = vld [vmem:[%s1 + $0x1a10] sm:$0xf]
  %v1756 = vld [vmem:[%s1 + $0x1a14] sm:$0xf]
  %v1757 = vld [vmem:[%s1 + $0x1a18] sm:$0xf]
  %v1758 = vld [vmem:[%s1 + $0x1a1c] sm:$0xf]
  %v1759 = vld [vmem:[%s1 + $0x1a20] sm:$0xf]
  %v1760 = vld [vmem:[%s1 + $0x1a24] sm:$0xf]
  %v1761 = vld [vmem:[%s1 + $0x1a28] sm:$0xf]
  %v1762 = vld [vmem:[%s1 + $0x1a2c] sm:$0xf]
  %v1763 = vld [vmem:[%s1 + $0x1a30] sm:$0xf]
  %v1764 = vld [vmem:[%s1 + $0x1a34] sm:$0xf]
  %v1765 = vld [vmem:[%s1 + $0x1a38] sm:$0xf]
  %v1766 = vld [vmem:[%s1 + $0x1a3c] sm:$0xf]
  %v1767 = vld [vmem:[%s1 + $0x1a40] sm:$0xf]
  %v1768 = vld [vmem:[%s1 + $0x1a44] sm:$0xf]
  %v1769 = vld [vmem:[%s1 + $0x1a48] sm:$0xf]
  %v1770 = vld [vmem:[%s1 + $0x1a4c] sm:$0xf]
  %v1771 = vld [vmem:[%s1 + $0x1a50] sm:$0xf]
  %v1772 = vld [vmem:[%s1 + $0x1a54] sm:$0xf]
  %v1773 = vld [vmem:[%s1 + $0x1a58] sm:$0xf]
  %v1774 = vld [vmem:[%s1 + $0x1a5c] sm:$0xf]
  %v1775 = vld [vmem:[%s1 + $0x1a60] sm:$0xf]
  %v1776 = vld [vmem:[%s1 + $0x1a64] sm:$0xf]
  %v1777 = vld [vmem:[%s1 + $0x1a68] sm:$0xf]
  %v1778 = vld [vmem:[%s1 + $0x1a6c] sm:$0xf]
  %v1779 = vld [vmem:[%s1 + $0x1a70] sm:$0xf]
  %v1780 = vld [vmem:[%s1 + $0x1a74] sm:$0xf]
  %v1781 = vld [vmem:[%s1 + $0x1a78] sm:$0xf]
  %v1782 = vld [vmem:[%s1 + $0x1a7c] sm:$0xf]
  %v1783 = vld [vmem:[%s1 + $0x1a80] sm:$0xf]
  %v1784 = vld [vmem:[%s1 + $0x1a84] sm:$0xf]
  %v1785 = vld [vmem:[%s1 + $0x1a88] sm:$0xf]
  %v1786 = vld [vmem:[%s1 + $0x1a8c] sm:$0xf]
  %v1787 = vld [vmem:[%s1 + $0x1a90] sm:$0xf]
  %v1788 = vld [vmem:[%s1 + $0x1a94] sm:$0xf]
  %v1789 = vld [vmem:[%s1 + $0x1a98] sm:$0xf]
  %v1790 = vld [vmem:[%s1 + $0x1a9c] sm:$0xf]
  %v1791 = vld [vmem:[%s1 + $0x1aa0] sm:$0xf]
  %v1792 = vld [vmem:[%s1 + $0x1aa4] sm:$0xf]
  %v1793 = vld [vmem:[%s1 + $0x1aa8] sm:$0xf]
  %v1794 = vld [vmem:[%s1 + $0x1aac] sm:$0xf]
  %v1795 = vld [vmem:[%s1 + $0x1ab0] sm:$0xf]
  %v1796 = vld [vmem:[%s1 + $0x1ab4] sm:$0xf]
  %v1797 = vld [vmem:[%s1 + $0x1ab8] sm:$0xf]
  %v1798 = vld [vmem:[%s1 + $0x1abc] sm:$0xf]
  %v1799 = vld [vmem:[%s1 + $0x1ac0] sm:$0xf]
  %v1800 = vld [vmem:[%s1 + $0x1ac4] sm:$0xf]
  %v1801 = vld [vmem:[%s1 + $0x1ac8] sm:$0xf]
  %v1802 = vld [vmem:[%s1 + $0x1acc] sm:$0xf]
  %v1803 = vld [vmem:[%s1 + $0x1ad0] sm:$0xf]
  %v1804 = vld [vmem:[%s1 + $0x1ad4] sm:$0xf]
  %v1805 = vld [vmem:[%s1 + $0x1ad8] sm:$0xf]
  %v1806 = vld [vmem:[%s1 + $0x1adc] sm:$0xf]
  %v1807 = vld [vmem:[%s1 + $0x1ae0] sm:$0xf]
  %v1808 = vld [vmem:[%s1 + $0x1ae4] sm:$0xf]
  %v1809 = vld [vmem:[%s1 + $0x1ae8] sm:$0xf]
  %v1810 = vld [vmem:[%s1 + $0x1aec] sm:$0xf]
  %v1811 = vld [vmem:[%s1 + $0x1af0] sm:$0xf]
  %v1812 = vld [vmem:[%s1 + $0x1af4] sm:$0xf]
  %v1813 = vld [vmem:[%s1 + $0x1af8] sm:$0xf]
  %v1814 = vld [vmem:[%s1 + $0x1afc] sm:$0xf]
  %v1815 = vld [vmem:[%s1 + $0x1b00] sm:$0xf]
  %v1816 = vld [vmem:[%s1 + $0x1b04] sm:$0xf]
  %v1817 = vld [vmem:[%s1 + $0x1b08] sm:$0xf]
  %v1818 = vld [vmem:[%s1 + $0x1b0c] sm:$0xf]
  %v1819 = vld [vmem:[%s1 + $0x1b10] sm:$0xf]
  %v1820 = vld [vmem:[%s1 + $0x1b14] sm:$0xf]
  %v1821 = vld [vmem:[%s1 + $0x1b18] sm:$0xf]
  %v1822 = vld [vmem:[%s1 + $0x1b1c] sm:$0xf]
  %v1823 = vld [vmem:[%s1 + $0x1b20] sm:$0xf]
  %v1824 = vld [vmem:[%s1 + $0x1b24] sm:$0xf]
  %v1825 = vld [vmem:[%s1 + $0x1b28] sm:$0xf]
  %v1826 = vld [vmem:[%s1 + $0x1b2c] sm:$0xf]
  %v1827 = vld [vmem:[%s1 + $0x1b30] sm:$0xf]
  %v1828 = vld [vmem:[%s1 + $0x1b34] sm:$0xf]
  %v1829 = vld [vmem:[%s1 + $0x1b38] sm:$0xf]
  %v1830 = vld [vmem:[%s1 + $0x1b3c] sm:$0xf]
  %v1831 = vld [vmem:[%s1 + $0x1b40] sm:$0xf]
  %v1832 = vld [vmem:[%s1 + $0x1b44] sm:$0xf]
  %v1833 = vld [vmem:[%s1 + $0x1b48] sm:$0xf]
  %v1834 = vld [vmem:[%s1 + $0x1b4c] sm:$0xf]
  %v1835 = vld [vmem:[%s1 + $0x1b50] sm:$0xf]
  %v1836 = vld [vmem:[%s1 + $0x1b54] sm:$0xf]
  %v1837 = vld [vmem:[%s1 + $0x1b58] sm:$0xf]
  %v1838 = vld [vmem:[%s1 + $0x1b5c] sm:$0xf]
  %v1839 = vld [vmem:[%s1 + $0x1b60] sm:$0xf]
  %v1840 = vld [vmem:[%s1 + $0x1b64] sm:$0xf]
  %v1841 = vld [vmem:[%s1 + $0x1b68] sm:$0xf]
  %v1842 = vld [vmem:[%s1 + $0x1b6c] sm:$0xf]
  %v1843 = vld [vmem:[%s1 + $0x1b70] sm:$0xf]
  %v1844 = vld [vmem:[%s1 + $0x1b74] sm:$0xf]
  %v1845 = vld [vmem:[%s1 + $0x1b78] sm:$0xf]
  %v1846 = vld [vmem:[%s1 + $0x1b7c] sm:$0xf]
  %v1847 = vld [vmem:[%s1 + $0x1b80] sm:$0xf]
  %v1848 = vld [vmem:[%s1 + $0x1b84] sm:$0xf]
  %v1849 = vld [vmem:[%s1 + $0x1b88] sm:$0xf]
  %v1850 = vld [vmem:[%s1 + $0x1b8c] sm:$0xf]
  %v1851 = vld [vmem:[%s1 + $0x1b90] sm:$0xf]
  %v1852 = vld [vmem:[%s1 + $0x1b94] sm:$0xf]
  %v1853 = vld [vmem:[%s1 + $0x1b98] sm:$0xf]
  %v1854 = vld [vmem:[%s1 + $0x1b9c] sm:$0xf]
  %v1855 = vld [vmem:[%s1 + $0x1ba0] sm:$0xf]
  %v1856 = vld [vmem:[%s1 + $0x1ba4] sm:$0xf]
  %v1857 = vld [vmem:[%s1 + $0x1ba8] sm:$0xf]
  %v1858 = vld [vmem:[%s1 + $0x1bac] sm:$0xf]
  %v1859 = vld [vmem:[%s1 + $0x1bb0] sm:$0xf]
  %v1860 = vld [vmem:[%s1 + $0x1bb4] sm:$0xf]
  %v1861 = vld [vmem:[%s1 + $0x1bb8] sm:$0xf]
  %v1862 = vld [vmem:[%s1 + $0x1bbc] sm:$0xf]
  %v1863 = vld [vmem:[%s1 + $0x1bc0] sm:$0xf]
  %v1864 = vld [vmem:[%s1 + $0x1bc4] sm:$0xf]
  %v1865 = vld [vmem:[%s1 + $0x1bc8] sm:$0xf]
  %v1866 = vld [vmem:[%s1 + $0x1bcc] sm:$0xf]
  %v1867 = vld [vmem:[%s1 + $0x1bd0] sm:$0xf]
  %v1868 = vld [vmem:[%s1 + $0x1bd4] sm:$0xf]
  %v1869 = vld [vmem:[%s1 + $0x1bd8] sm:$0xf]
  %v1870 = vld [vmem:[%s1 + $0x1bdc] sm:$0xf]
  %v1871 = vld [vmem:[%s1 + $0x1be0] sm:$0xf]
  %v1872 = vld [vmem:[%s1 + $0x1be4] sm:$0xf]
  %v1873 = vld [vmem:[%s1 + $0x1be8] sm:$0xf]
  %v1874 = vld [vmem:[%s1 + $0x1bec] sm:$0xf]
  %v1875 = vld [vmem:[%s1 + $0x1bf0] sm:$0xf]
  %v1876 = vld [vmem:[%s1 + $0x1bf4] sm:$0xf]
  %v1877 = vld [vmem:[%s1 + $0x1bf8] sm:$0xf]
  %v1878 = vld [vmem:[%s1 + $0x1bfc] sm:$0xf]
  %v1879 = vld [vmem:[%s1 + $0x1c00] sm:$0xf]
  %v1880 = vld [vmem:[%s1 + $0x1c04] sm:$0xf]
  %v1881 = vld [vmem:[%s1 + $0x1c08] sm:$0xf]
  %v1882 = vld [vmem:[%s1 + $0x1c0c] sm:$0xf]
  %v1883 = vld [vmem:[%s1 + $0x1c10] sm:$0xf]
  %v1884 = vld [vmem:[%s1 + $0x1c14] sm:$0xf]
  %v1885 = vld [vmem:[%s1 + $0x1c18] sm:$0xf]
  %v1886 = vld [vmem:[%s1 + $0x1c1c] sm:$0xf]
  %v1887 = vld [vmem:[%s1 + $0x1c20] sm:$0xf]
  %v1888 = vld [vmem:[%s1 + $0x1c24] sm:$0xf]
  %v1889 = vld [vmem:[%s1 + $0x1c28] sm:$0xf]
  %v1890 = vld [vmem:[%s1 + $0x1c2c] sm:$0xf]
  %v1891 = vld [vmem:[%s1 + $0x1c30] sm:$0xf]
  %v1892 = vld [vmem:[%s1 + $0x1c34] sm:$0xf]
  %v1893 = vld [vmem:[%s1 + $0x1c38] sm:$0xf]
  %v1894 = vld [vmem:[%s1 + $0x1c3c] sm:$0xf]
  %v1895 = vld [vmem:[%s1 + $0x1c40] sm:$0xf]
  %v1896 = vld [vmem:[%s1 + $0x1c44] sm:$0xf]
  %v1897 = vld [vmem:[%s1 + $0x1c48] sm:$0xf]
  %v1898 = vld [vmem:[%s1 + $0x1c4c] sm:$0xf]
  %v1899 = vld [vmem:[%s1 + $0x1c50] sm:$0xf]
  %v1900 = vld [vmem:[%s1 + $0x1c54] sm:$0xf]
  %v1901 = vld [vmem:[%s1 + $0x1c58] sm:$0xf]
  %v1902 = vld [vmem:[%s1 + $0x1c5c] sm:$0xf]
  %v1903 = vld [vmem:[%s1 + $0x1c60] sm:$0xf]
  %v1904 = vld [vmem:[%s1 + $0x1c64] sm:$0xf]
  %v1905 = vld [vmem:[%s1 + $0x1c68] sm:$0xf]
  %v1906 = vld [vmem:[%s1 + $0x1c6c] sm:$0xf]
  %v1907 = vld [vmem:[%s1 + $0x1c70] sm:$0xf]
  %v1908 = vld [vmem:[%s1 + $0x1c74] sm:$0xf]
  %v1909 = vld [vmem:[%s1 + $0x1c78] sm:$0xf]
  %v1910 = vld [vmem:[%s1 + $0x1c7c] sm:$0xf]
  %v1911 = vld [vmem:[%s1 + $0x1c80] sm:$0xf]
  %v1912 = vld [vmem:[%s1 + $0x1c84] sm:$0xf]
  %v1913 = vld [vmem:[%s1 + $0x1c88] sm:$0xf]
  %v1914 = vld [vmem:[%s1 + $0x1c8c] sm:$0xf]
  %v1915 = vld [vmem:[%s1 + $0x1c90] sm:$0xf]
  %v1916 = vld [vmem:[%s1 + $0x1c94] sm:$0xf]
  %v1917 = vld [vmem:[%s1 + $0x1c98] sm:$0xf]
  %v1918 = vld [vmem:[%s1 + $0x1c9c] sm:$0xf]
  %v1919 = vld [vmem:[%s1 + $0x1ca0] sm:$0xf]
  %v1920 = vld [vmem:[%s1 + $0x1ca4] sm:$0xf]
  %v1921 = vld [vmem:[%s1 + $0x1ca8] sm:$0xf]
  %v1922 = vld [vmem:[%s1 + $0x1cac] sm:$0xf]
  %v1923 = vld [vmem:[%s1 + $0x1cb0] sm:$0xf]
  %v1924 = vld [vmem:[%s1 + $0x1cb4] sm:$0xf]
  %v1925 = vld [vmem:[%s1 + $0x1cb8] sm:$0xf]
  %v1926 = vld [vmem:[%s1 + $0x1cbc] sm:$0xf]
  %v1927 = vld [vmem:[%s1 + $0x1cc0] sm:$0xf]
  %v1928 = vld [vmem:[%s1 + $0x1cc4] sm:$0xf]
  %v1929 = vld [vmem:[%s1 + $0x1cc8] sm:$0xf]
  %v1930 = vld [vmem:[%s1 + $0x1ccc] sm:$0xf]
  %v1931 = vld [vmem:[%s1 + $0x1cd0] sm:$0xf]
  %v1932 = vld [vmem:[%s1 + $0x1cd4] sm:$0xf]
  %v1933 = vld [vmem:[%s1 + $0x1cd8] sm:$0xf]
  %v1934 = vld [vmem:[%s1 + $0x1cdc] sm:$0xf]
  %v1935 = vld [vmem:[%s1 + $0x1ce0] sm:$0xf]
  %v1936 = vld [vmem:[%s1 + $0x1ce4] sm:$0xf]
  %v1937 = vld [vmem:[%s1 + $0x1ce8] sm:$0xf]
  %v1938 = vld [vmem:[%s1 + $0x1cec] sm:$0xf]
  %v1939 = vld [vmem:[%s1 + $0x1cf0] sm:$0xf]
  %v1940 = vld [vmem:[%s1 + $0x1cf4] sm:$0xf]
  %v1941 = vld [vmem:[%s1 + $0x1cf8] sm:$0xf]
  %v1942 = vld [vmem:[%s1 + $0x1cfc] sm:$0xf]
  %v1943 = vld [vmem:[%s1 + $0x1d00] sm:$0xf]
  %v1944 = vld [vmem:[%s1 + $0x1d04] sm:$0xf]
  %v1945 = vld [vmem:[%s1 + $0x1d08] sm:$0xf]
  %v1946 = vld [vmem:[%s1 + $0x1d0c] sm:$0xf]
  %v1947 = vld [vmem:[%s1 + $0x1d10] sm:$0xf]
  %v1948 = vld [vmem:[%s1 + $0x1d14] sm:$0xf]
  %v1949 = vld [vmem:[%s1 + $0x1d18] sm:$0xf]
  %v1950 = vld [vmem:[%s1 + $0x1d1c] sm:$0xf]
  %v1951 = vld [vmem:[%s1 + $0x1d20] sm:$0xf]
  %v1952 = vld [vmem:[%s1 + $0x1d24] sm:$0xf]
  %v1953 = vld [vmem:[%s1 + $0x1d28] sm:$0xf]
  %v1954 = vld [vmem:[%s1 + $0x1d2c] sm:$0xf]
  %v1955 = vld [vmem:[%s1 + $0x1d30] sm:$0xf]
  %v1956 = vld [vmem:[%s1 + $0x1d34] sm:$0xf]
  %v1957 = vld [vmem:[%s1 + $0x1d38] sm:$0xf]
  %v1958 = vld [vmem:[%s1 + $0x1d3c] sm:$0xf]
  %v1959 = vld [vmem:[%s1 + $0x1d40] sm:$0xf]
  %v1960 = vld [vmem:[%s1 + $0x1d44] sm:$0xf]
  %v1961 = vld [vmem:[%s1 + $0x1d48] sm:$0xf]
  %v1962 = vld [vmem:[%s1 + $0x1d4c] sm:$0xf]
  %v1963 = vld [vmem:[%s1 + $0x1d50] sm:$0xf]
  %v1964 = vld [vmem:[%s1 + $0x1d54] sm:$0xf]
  %v1965 = vld [vmem:[%s1 + $0x1d58] sm:$0xf]
  %v1966 = vld [vmem:[%s1 + $0x1d5c] sm:$0xf]
  %v1967 = vld [vmem:[%s1 + $0x1d60] sm:$0xf]
  %v1968 = vld [vmem:[%s1 + $0x1d64] sm:$0xf]
  %v1969 = vld [vmem:[%s1 + $0x1d68] sm:$0xf]
  %v1970 = vld [vmem:[%s1 + $0x1d6c] sm:$0xf]
  %v1971 = vld [vmem:[%s1 + $0x1d70] sm:$0xf]
  %v1972 = vld [vmem:[%s1 + $0x1d74] sm:$0xf]
  %v1973 = vld [vmem:[%s1 + $0x1d78] sm:$0xf]
  %v1974 = vld [vmem:[%s1 + $0x1d7c] sm:$0xf]
  %v1975 = vld [vmem:[%s1 + $0x1d80] sm:$0xf]
  %v1976 = vld [vmem:[%s1 + $0x1d84] sm:$0xf]
  %v1977 = vld [vmem:[%s1 + $0x1d88] sm:$0xf]
  %v1978 = vld [vmem:[%s1 + $0x1d8c] sm:$0xf]
  %v1979 = vld [vmem:[%s1 + $0x1d90] sm:$0xf]
  %v1980 = vld [vmem:[%s1 + $0x1d94] sm:$0xf]
  %v1981 = vld [vmem:[%s1 + $0x1d98] sm:$0xf]
  %v1982 = vld [vmem:[%s1 + $0x1d9c] sm:$0xf]
  %v1983 = vld [vmem:[%s1 + $0x1da0] sm:$0xf]
  %v1984 = vld [vmem:[%s1 + $0x1da4] sm:$0xf]
  %v1985 = vld [vmem:[%s1 + $0x1da8] sm:$0xf]
  %v1986 = vld [vmem:[%s1 + $0x1dac] sm:$0xf]
  %v1987 = vld [vmem:[%s1 + $0x1db0] sm:$0xf]
  %v1988 = vld [vmem:[%s1 + $0x1db4] sm:$0xf]
  %v1989 = vld [vmem:[%s1 + $0x1db8] sm:$0xf]
  %v1990 = vld [vmem:[%s1 + $0x1dbc] sm:$0xf]
  %v1991 = vld [vmem:[%s1 + $0x1dc0] sm:$0xf]
  %v1992 = vld [vmem:[%s1 + $0x1dc4] sm:$0xf]
  %v1993 = vld [vmem:[%s1 + $0x1dc8] sm:$0xf]
  %v1994 = vld [vmem:[%s1 + $0x1dcc] sm:$0xf]
  %v1995 = vld [vmem:[%s1 + $0x1dd0] sm:$0xf]
  %v1996 = vld [vmem:[%s1 + $0x1dd4] sm:$0xf]
  %v1997 = vld [vmem:[%s1 + $0x1dd8] sm:$0xf]
  %v1998 = vld [vmem:[%s1 + $0x1ddc] sm:$0xf]
  %v1999 = vld [vmem:[%s1 + $0x1de0] sm:$0xf]
  %v2000 = vld [vmem:[%s1 + $0x1de4] sm:$0xf]
  %v2001 = vld [vmem:[%s1 + $0x1de8] sm:$0xf]
  %v2002 = vld [vmem:[%s1 + $0x1dec] sm:$0xf]
  %v2003 = vld [vmem:[%s1 + $0x1df0] sm:$0xf]
  %v2004 = vld [vmem:[%s1 + $0x1df4] sm:$0xf]
  %v2005 = vld [vmem:[%s1 + $0x1df8] sm:$0xf]
  %v2006 = vld [vmem:[%s1 + $0x1dfc] sm:$0xf]
  %v2007 = vld [vmem:[%s1 + $0x1e00] sm:$0xf]
  %v2008 = vld [vmem:[%s1 + $0x1e04] sm:$0xf]
  %v2009 = vld [vmem:[%s1 + $0x1e08] sm:$0xf]
  %v2010 = vld [vmem:[%s1 + $0x1e0c] sm:$0xf]
  %v2011 = vld [vmem:[%s1 + $0x1e10] sm:$0xf]
  %v2012 = vld [vmem:[%s1 + $0x1e14] sm:$0xf]
  %v2013 = vld [vmem:[%s1 + $0x1e18] sm:$0xf]
  %v2014 = vld [vmem:[%s1 + $0x1e1c] sm:$0xf]
  %v2015 = vld [vmem:[%s1 + $0x1e20] sm:$0xf]
  %v2016 = vld [vmem:[%s1 + $0x1e24] sm:$0xf]
  %v2017 = vld [vmem:[%s1 + $0x1e28] sm:$0xf]
  %v2018 = vld [vmem:[%s1 + $0x1e2c] sm:$0xf]
  %v2019 = vld [vmem:[%s1 + $0x1e30] sm:$0xf]
  %v2020 = vld [vmem:[%s1 + $0x1e34] sm:$0xf]
  %v2021 = vld [vmem:[%s1 + $0x1e38] sm:$0xf]
  %v2022 = vld [vmem:[%s1 + $0x1e3c] sm:$0xf]
  %v2023 = vld [vmem:[%s1 + $0x1e40] sm:$0xf]
  %v2024 = vld [vmem:[%s1 + $0x1e44] sm:$0xf]
  %v2025 = vld [vmem:[%s1 + $0x1e48] sm:$0xf]
  %v2026 = vld [vmem:[%s1 + $0x1e4c] sm:$0xf]
  %v2027 = vld [vmem:[%s1 + $0x1e50] sm:$0xf]
  %v2028 = vld [vmem:[%s1 + $0x1e54] sm:$0xf]
  %v2029 = vld [vmem:[%s1 + $0x1e58] sm:$0xf]
  %v2030 = vld [vmem:[%s1 + $0x1e5c] sm:$0xf]
  %v2031 = vld [vmem:[%s1 + $0x1e60] sm:$0xf]
  %v2032 = vld [vmem:[%s1 + $0x1e64] sm:$0xf]
  %v2033 = vld [vmem:[%s1 + $0x1e68] sm:$0xf]
  %v2034 = vld [vmem:[%s1 + $0x1e6c] sm:$0xf]
  %v2035 = vld [vmem:[%s1 + $0x1e70] sm:$0xf]
  %v2036 = vld [vmem:[%s1 + $0x1e74] sm:$0xf]
  %v2037 = vld [vmem:[%s1 + $0x1e78] sm:$0xf]
  %v2038 = vld [vmem:[%s1 + $0x1e7c] sm:$0xf]
  %v2039 = vld [vmem:[%s1 + $0x1e80] sm:$0xf]
  %v2040 = vld [vmem:[%s1 + $0x1e84] sm:$0xf]
  %v2041 = vld [vmem:[%s1 + $0x1e88] sm:$0xf]
  %v2042 = vld [vmem:[%s1 + $0x1e8c] sm:$0xf]
  %v2043 = vld [vmem:[%s1 + $0x1e90] sm:$0xf]
  %v2044 = vld [vmem:[%s1 + $0x1e94] sm:$0xf]
  %v2045 = vld [vmem:[%s1 + $0x1e98] sm:$0xf]
  %v2046 = vld [vmem:[%s1 + $0x1e9c] sm:$0xf]
  %v2047 = vld [vmem:[%s1 + $0x1ea0] sm:$0xf]
  %v2048 = vld [vmem:[%s1 + $0x1ea4] sm:$0xf]
  %v2049 = vld [vmem:[%s1 + $0x1ea8] sm:$0xf]
  %v2050 = vld [vmem:[%s1 + $0x1eac] sm:$0xf]
  %v2051 = vld [vmem:[%s1 + $0x1eb0] sm:$0xf]
  %v2052 = vld [vmem:[%s1 + $0x1eb4] sm:$0xf]
  %v2053 = vld [vmem:[%s1 + $0x1eb8] sm:$0xf]
  %v2054 = vld [vmem:[%s1 + $0x1ebc] sm:$0xf]
  %v2055 = vld [vmem:[%s1 + $0x1ec0] sm:$0xf]
  %v2056 = vld [vmem:[%s1 + $0x1ec4] sm:$0xf]
  %v2057 = vld [vmem:[%s1 + $0x1ec8] sm:$0xf]
  %v2058 = vld [vmem:[%s1 + $0x1ecc] sm:$0xf]
  %v2059 = vld [vmem:[%s1 + $0x1ed0] sm:$0xf]
  %v2060 = vld [vmem:[%s1 + $0x1ed4] sm:$0xf]
  %v2061 = vld [vmem:[%s1 + $0x1ed8] sm:$0xf]
  %v2062 = vld [vmem:[%s1 + $0x1edc] sm:$0xf]
  %v2063 = vld [vmem:[%s1 + $0x1ee0] sm:$0xf]
  %v2064 = vld [vmem:[%s1 + $0x1ee4] sm:$0xf]
  %v2065 = vld [vmem:[%s1 + $0x1ee8] sm:$0xf]
  %v2066 = vld [vmem:[%s1 + $0x1eec] sm:$0xf]
  %v2067 = vld [vmem:[%s1 + $0x1ef0] sm:$0xf]
  %v2068 = vld [vmem:[%s1 + $0x1ef4] sm:$0xf]
  %v2069 = vld [vmem:[%s1 + $0x1ef8] sm:$0xf]
  %v2070 = vld [vmem:[%s1 + $0x1efc] sm:$0xf]
  %v2071 = vld [vmem:[%s1 + $0x1f00] sm:$0xf]
  %v2072 = vld [vmem:[%s1 + $0x1f04] sm:$0xf]
  %v2073 = vld [vmem:[%s1 + $0x1f08] sm:$0xf]
  %v2074 = vld [vmem:[%s1 + $0x1f0c] sm:$0xf]
  %v2075 = vld [vmem:[%s1 + $0x1f10] sm:$0xf]
  %v2076 = vld [vmem:[%s1 + $0x1f14] sm:$0xf]
  %v2077 = vld [vmem:[%s1 + $0x1f18] sm:$0xf]
  %v2078 = vld [vmem:[%s1 + $0x1f1c] sm:$0xf]
  %v2079 = vld [vmem:[%s1 + $0x1f20] sm:$0xf]
  %v2080 = vld [vmem:[%s1 + $0x1f24] sm:$0xf]
  %v2081 = vld [vmem:[%s1 + $0x1f28] sm:$0xf]
  %v2082 = vld [vmem:[%s1 + $0x1f2c] sm:$0xf]
  %v2083 = vld [vmem:[%s1 + $0x1f30] sm:$0xf]
  %v2084 = vld [vmem:[%s1 + $0x1f34] sm:$0xf]
  %v2085 = vld [vmem:[%s1 + $0x1f38] sm:$0xf]
  %v2086 = vld [vmem:[%s1 + $0x1f3c] sm:$0xf]
  %v2087 = vld [vmem:[%s1 + $0x1f40] sm:$0xf]
  %v2088 = vld [vmem:[%s1 + $0x1f44] sm:$0xf]
  %v2089 = vld [vmem:[%s1 + $0x1f48] sm:$0xf]
  %v2090 = vld [vmem:[%s1 + $0x1f4c] sm:$0xf]
  %v2091 = vld [vmem:[%s1 + $0x1f50] sm:$0xf]
  %v2092 = vld [vmem:[%s1 + $0x1f54] sm:$0xf]
  %v2093 = vld [vmem:[%s1 + $0x1f58] sm:$0xf]
  %v2094 = vld [vmem:[%s1 + $0x1f5c] sm:$0xf]
  %v2095 = vld [vmem:[%s1 + $0x1f60] sm:$0xf]
  %v2096 = vld [vmem:[%s1 + $0x1f64] sm:$0xf]
  %v2097 = vld [vmem:[%s1 + $0x1f68] sm:$0xf]
  %v2098 = vld [vmem:[%s1 + $0x1f6c] sm:$0xf]
  %v2099 = vld [vmem:[%s1 + $0x1f70] sm:$0xf]
  %v2100 = vld [vmem:[%s1 + $0x1f74] sm:$0xf]
  %v2101 = vld [vmem:[%s1 + $0x1f78] sm:$0xf]
  %v2102 = vld [vmem:[%s1 + $0x1f7c] sm:$0xf]
  %v2103 = vld [vmem:[%s1 + $0x1f80] sm:$0xf]
  %v2104 = vld [vmem:[%s1 + $0x1f84] sm:$0xf]
  %v2105 = vld [vmem:[%s1 + $0x1f88] sm:$0xf]
  %v2106 = vld [vmem:[%s1 + $0x1f8c] sm:$0xf]
  %v2107 = vld [vmem:[%s1 + $0x1f90] sm:$0xf]
  %v2108 = vld [vmem:[%s1 + $0x1f94] sm:$0xf]
  %v2109 = vld [vmem:[%s1 + $0x1f98] sm:$0xf]
  %v2110 = vld [vmem:[%s1 + $0x1f9c] sm:$0xf]
  %v2111 = vld [vmem:[%s1 + $0x1fa0] sm:$0xf]
  %v2112 = vld [vmem:[%s1 + $0x1fa4] sm:$0xf]
  %v2113 = vld [vmem:[%s1 + $0x1fa8] sm:$0xf]
  %v2114 = vld [vmem:[%s1 + $0x1fac] sm:$0xf]
  %v2115 = vld [vmem:[%s1 + $0x1fb0] sm:$0xf]
  %v2116 = vld [vmem:[%s1 + $0x1fb4] sm:$0xf]
  %v2117 = vld [vmem:[%s1 + $0x1fb8] sm:$0xf]
  %v2118 = vld [vmem:[%s1 + $0x1fbc] sm:$0xf]
  %v2119 = vld [vmem:[%s1 + $0x1fc0] sm:$0xf]
  %v2120 = vld [vmem:[%s1 + $0x1fc4] sm:$0xf]
  %v2121 = vld [vmem:[%s1 + $0x1fc8] sm:$0xf]
  %v2122 = vld [vmem:[%s1 + $0x1fcc] sm:$0xf]
  %v2123 = vld [vmem:[%s1 + $0x1fd0] sm:$0xf]
  %v2124 = vld [vmem:[%s1 + $0x1fd4] sm:$0xf]
  %v2125 = vld [vmem:[%s1 + $0x1fd8] sm:$0xf]
  %v2126 = vld [vmem:[%s1 + $0x1fdc] sm:$0xf]
  %v2127 = vld [vmem:[%s1 + $0x1fe0] sm:$0xf]
  %v2128 = vld [vmem:[%s1 + $0x1fe4] sm:$0xf]
  %v2129 = vld [vmem:[%s1 + $0x1fe8] sm:$0xf]
  %v2130 = vld [vmem:[%s1 + $0x1fec] sm:$0xf]
  %v2131 = vld [vmem:[%s1 + $0x1ff0] sm:$0xf]
  %v2132 = vld [vmem:[%s1 + $0x1ff4] sm:$0xf]
  %v2133 = vld [vmem:[%s1 + $0x1ff8] sm:$0xf]
  %v2134 = vld [vmem:[%s1 + $0x1ffc] sm:$0xf]
  %v2135 = vld [vmem:[%s2] sm:$0x1]
  %v2137 = vperm.slane %v2135, 0
  %v2203 = vunpack.c.l.b16 %v23
  %v2204 = vunpack.c.h.b16 %v23
  %v2205 = vunpack.c.l.b16 %v24
  %v2206 = vunpack.c.h.b16 %v24
  %v2207 = vunpack.c.l.b16 %v25
  %v2208 = vunpack.c.h.b16 %v25
  %v2209 = vunpack.c.l.b16 %v26
  %v2210 = vunpack.c.h.b16 %v26
  %v2211 = vunpack.c.l.b16 %v27
  %v2212 = vunpack.c.h.b16 %v27
  %v2213 = vunpack.c.l.b16 %v28
  %v2214 = vunpack.c.h.b16 %v28
  %v2215 = vunpack.c.l.b16 %v29
  %v2216 = vunpack.c.h.b16 %v29
  %v2217 = vunpack.c.l.b16 %v30
  %v2218 = vunpack.c.h.b16 %v30
  %v2219 = vunpack.c.l.b16 %v31
  %v2220 = vunpack.c.h.b16 %v31
  %v2221 = vunpack.c.l.b16 %v32
  %v2222 = vunpack.c.h.b16 %v32
  %v2223 = vunpack.c.l.b16 %v33
  %v2224 = vunpack.c.h.b16 %v33
  %v2225 = vunpack.c.l.b16 %v34
  %v2226 = vunpack.c.h.b16 %v34
  %v2227 = vunpack.c.l.b16 %v35
  %v2228 = vunpack.c.h.b16 %v35
  %v2229 = vunpack.c.l.b16 %v36
  %v2230 = vunpack.c.h.b16 %v36
  %v2231 = vunpack.c.l.b16 %v37
  %v2232 = vunpack.c.h.b16 %v37
  %v2233 = vunpack.c.l.b16 %v38
  %v2234 = vunpack.c.h.b16 %v38
  %v2235 = vunpack.c.l.b16 %v39
  %v2236 = vunpack.c.h.b16 %v39
  %v2237 = vunpack.c.l.b16 %v40
  %v2238 = vunpack.c.h.b16 %v40
  %v2239 = vunpack.c.l.b16 %v41
  %v2240 = vunpack.c.h.b16 %v41
  %v2241 = vunpack.c.l.b16 %v42
  %v2242 = vunpack.c.h.b16 %v42
  %v2243 = vunpack.c.l.b16 %v43
  %v2244 = vunpack.c.h.b16 %v43
  %v2245 = vunpack.c.l.b16 %v44
  %v2246 = vunpack.c.h.b16 %v44
  %v2247 = vunpack.c.l.b16 %v45
  %v2248 = vunpack.c.h.b16 %v45
  %v2249 = vunpack.c.l.b16 %v46
  %v2250 = vunpack.c.h.b16 %v46
  %v2251 = vunpack.c.l.b16 %v47
  %v2252 = vunpack.c.h.b16 %v47
  %v2253 = vunpack.c.l.b16 %v48
  %v2254 = vunpack.c.h.b16 %v48
  %v2255 = vunpack.c.l.b16 %v49
  %v2256 = vunpack.c.h.b16 %v49
  %v2257 = vunpack.c.l.b16 %v50
  %v2258 = vunpack.c.h.b16 %v50
  %v2259 = vunpack.c.l.b16 %v51
  %v2260 = vunpack.c.h.b16 %v51
  %v2261 = vunpack.c.l.b16 %v52
  %v2262 = vunpack.c.h.b16 %v52
  %v2263 = vunpack.c.l.b16 %v53
  %v2264 = vunpack.c.h.b16 %v53
  %v2265 = vunpack.c.l.b16 %v54
  %v2266 = vunpack.c.h.b16 %v54
  %v2267 = vunpack.c.l.b16 %v55
  %v2268 = vunpack.c.h.b16 %v55
  %v2269 = vunpack.c.l.b16 %v56
  %v2270 = vunpack.c.h.b16 %v56
  %v2271 = vunpack.c.l.b16 %v57
  %v2272 = vunpack.c.h.b16 %v57
  %v2273 = vunpack.c.l.b16 %v58
  %v2274 = vunpack.c.h.b16 %v58
  %v2275 = vunpack.c.l.b16 %v59
  %v2276 = vunpack.c.h.b16 %v59
  %v2277 = vunpack.c.l.b16 %v60
  %v2278 = vunpack.c.h.b16 %v60
  %v2279 = vunpack.c.l.b16 %v61
  %v2280 = vunpack.c.h.b16 %v61
  %v2281 = vunpack.c.l.b16 %v62
  %v2282 = vunpack.c.h.b16 %v62
  %v2283 = vunpack.c.l.b16 %v63
  %v2284 = vunpack.c.h.b16 %v63
  %v2285 = vunpack.c.l.b16 %v64
  %v2286 = vunpack.c.h.b16 %v64
  %v2287 = vunpack.c.l.b16 %v65
  %v2288 = vunpack.c.h.b16 %v65
  %v2289 = vunpack.c.l.b16 %v66
  %v2290 = vunpack.c.h.b16 %v66
  %v2291 = vunpack.c.l.b16 %v67
  %v2292 = vunpack.c.h.b16 %v67
  %v2293 = vunpack.c.l.b16 %v68
  %v2294 = vunpack.c.h.b16 %v68
  %v2295 = vunpack.c.l.b16 %v69
  %v2296 = vunpack.c.h.b16 %v69
  %v2297 = vunpack.c.l.b16 %v70
  %v2298 = vunpack.c.h.b16 %v70
  %v2299 = vunpack.c.l.b16 %v71
  %v2300 = vunpack.c.h.b16 %v71
  %v2301 = vunpack.c.l.b16 %v72
  %v2302 = vunpack.c.h.b16 %v72
  %v2303 = vunpack.c.l.b16 %v73
  %v2304 = vunpack.c.h.b16 %v73
  %v2305 = vunpack.c.l.b16 %v74
  %v2306 = vunpack.c.h.b16 %v74
  %v2307 = vunpack.c.l.b16 %v75
  %v2308 = vunpack.c.h.b16 %v75
  %v2309 = vunpack.c.l.b16 %v76
  %v2310 = vunpack.c.h.b16 %v76
  %v2311 = vunpack.c.l.b16 %v77
  %v2312 = vunpack.c.h.b16 %v77
  %v2313 = vunpack.c.l.b16 %v78
  %v2314 = vunpack.c.h.b16 %v78
  %v2315 = vunpack.c.l.b16 %v79
  %v2316 = vunpack.c.h.b16 %v79
  %v2317 = vunpack.c.l.b16 %v80
  %v2318 = vunpack.c.h.b16 %v80
  %v2319 = vunpack.c.l.b16 %v81
  %v2320 = vunpack.c.h.b16 %v81
  %v2321 = vunpack.c.l.b16 %v82
  %v2322 = vunpack.c.h.b16 %v82
  %v2323 = vunpack.c.l.b16 %v83
  %v2324 = vunpack.c.h.b16 %v83
  %v2325 = vunpack.c.l.b16 %v84
  %v2326 = vunpack.c.h.b16 %v84
  %v2327 = vunpack.c.l.b16 %v85
  %v2328 = vunpack.c.h.b16 %v85
  %v2329 = vunpack.c.l.b16 %v86
  %v2330 = vunpack.c.h.b16 %v86
  %v2331 = vpack.c.b16 %v2203, %v2203
  %v2332 = vpack.c.b16 %v2204, %v2204
  %v2333 = vpack.c.b16 %v2205, %v2205
  %v2334 = vpack.c.b16 %v2206, %v2206
  %v2335 = vpack.c.b16 %v2207, %v2207
  %v2336 = vpack.c.b16 %v2208, %v2208
  %v2337 = vpack.c.b16 %v2209, %v2209
  %v2338 = vpack.c.b16 %v2210, %v2210
  %v2339 = vpack.c.b16 %v2211, %v2211
  %v2340 = vpack.c.b16 %v2212, %v2212
  %v2341 = vpack.c.b16 %v2213, %v2213
  %v2342 = vpack.c.b16 %v2214, %v2214
  %v2343 = vpack.c.b16 %v2215, %v2215
  %v2344 = vpack.c.b16 %v2216, %v2216
  %v2345 = vpack.c.b16 %v2217, %v2217
  %v2346 = vpack.c.b16 %v2218, %v2218
  %v2347 = vpack.c.b16 %v2219, %v2219
  %v2348 = vpack.c.b16 %v2220, %v2220
  %v2349 = vpack.c.b16 %v2221, %v2221
  %v2350 = vpack.c.b16 %v2222, %v2222
  %v2351 = vpack.c.b16 %v2223, %v2223
  %v2352 = vpack.c.b16 %v2224, %v2224
  %v2353 = vpack.c.b16 %v2225, %v2225
  %v2354 = vpack.c.b16 %v2226, %v2226
  %v2355 = vpack.c.b16 %v2227, %v2227
  %v2356 = vpack.c.b16 %v2228, %v2228
  %v2357 = vpack.c.b16 %v2229, %v2229
  %v2358 = vpack.c.b16 %v2230, %v2230
  %v2359 = vpack.c.b16 %v2231, %v2231
  %v2360 = vpack.c.b16 %v2232, %v2232
  %v2361 = vpack.c.b16 %v2233, %v2233
  %v2362 = vpack.c.b16 %v2234, %v2234
  %v2363 = vpack.c.b16 %v2235, %v2235
  %v2364 = vpack.c.b16 %v2236, %v2236
  %v2365 = vpack.c.b16 %v2237, %v2237
  %v2366 = vpack.c.b16 %v2238, %v2238
  %v2367 = vpack.c.b16 %v2239, %v2239
  %v2368 = vpack.c.b16 %v2240, %v2240
  %v2369 = vpack.c.b16 %v2241, %v2241
  %v2370 = vpack.c.b16 %v2242, %v2242
  %v2371 = vpack.c.b16 %v2243, %v2243
  %v2372 = vpack.c.b16 %v2244, %v2244
  %v2373 = vpack.c.b16 %v2245, %v2245
  %v2374 = vpack.c.b16 %v2246, %v2246
  %v2375 = vpack.c.b16 %v2247, %v2247
  %v2376 = vpack.c.b16 %v2248, %v2248
  %v2377 = vpack.c.b16 %v2249, %v2249
  %v2378 = vpack.c.b16 %v2250, %v2250
  %v2379 = vpack.c.b16 %v2251, %v2251
  %v2380 = vpack.c.b16 %v2252, %v2252
  %v2381 = vpack.c.b16 %v2253, %v2253
  %v2382 = vpack.c.b16 %v2254, %v2254
  %v2383 = vpack.c.b16 %v2255, %v2255
  %v2384 = vpack.c.b16 %v2256, %v2256
  %v2385 = vpack.c.b16 %v2257, %v2257
  %v2386 = vpack.c.b16 %v2258, %v2258
  %v2387 = vpack.c.b16 %v2259, %v2259
  %v2388 = vpack.c.b16 %v2260, %v2260
  %v2389 = vpack.c.b16 %v2261, %v2261
  %v2390 = vpack.c.b16 %v2262, %v2262
  %v2391 = vpack.c.b16 %v2263, %v2263
  %v2392 = vpack.c.b16 %v2264, %v2264
  %v2393 = vpack.c.b16 %v2265, %v2265
  %v2394 = vpack.c.b16 %v2266, %v2266
  %v2395 = vpack.c.b16 %v2267, %v2267
  %v2396 = vpack.c.b16 %v2268, %v2268
  %v2397 = vpack.c.b16 %v2269, %v2269
  %v2398 = vpack.c.b16 %v2270, %v2270
  %v2399 = vpack.c.b16 %v2271, %v2271
  %v2400 = vpack.c.b16 %v2272, %v2272
  %v2401 = vpack.c.b16 %v2273, %v2273
  %v2402 = vpack.c.b16 %v2274, %v2274
  %v2403 = vpack.c.b16 %v2275, %v2275
  %v2404 = vpack.c.b16 %v2276, %v2276
  %v2405 = vpack.c.b16 %v2277, %v2277
  %v2406 = vpack.c.b16 %v2278, %v2278
  %v2407 = vpack.c.b16 %v2279, %v2279
  %v2408 = vpack.c.b16 %v2280, %v2280
  %v2409 = vpack.c.b16 %v2281, %v2281
  %v2410 = vpack.c.b16 %v2282, %v2282
  %v2411 = vpack.c.b16 %v2283, %v2283
  %v2412 = vpack.c.b16 %v2284, %v2284
  %v2413 = vpack.c.b16 %v2285, %v2285
  %v2414 = vpack.c.b16 %v2286, %v2286
  %v2415 = vpack.c.b16 %v2287, %v2287
  %v2416 = vpack.c.b16 %v2288, %v2288
  %v2417 = vpack.c.b16 %v2289, %v2289
  %v2418 = vpack.c.b16 %v2290, %v2290
  %v2419 = vpack.c.b16 %v2291, %v2291
  %v2420 = vpack.c.b16 %v2292, %v2292
  %v2421 = vpack.c.b16 %v2293, %v2293
  %v2422 = vpack.c.b16 %v2294, %v2294
  %v2423 = vpack.c.b16 %v2295, %v2295
  %v2424 = vpack.c.b16 %v2296, %v2296
  %v2425 = vpack.c.b16 %v2297, %v2297
  %v2426 = vpack.c.b16 %v2298, %v2298
  %v2427 = vpack.c.b16 %v2299, %v2299
  %v2428 = vpack.c.b16 %v2300, %v2300
  %v2429 = vpack.c.b16 %v2301, %v2301
  %v2430 = vpack.c.b16 %v2302, %v2302
  %v2431 = vpack.c.b16 %v2303, %v2303
  %v2432 = vpack.c.b16 %v2304, %v2304
  %v2433 = vpack.c.b16 %v2305, %v2305
  %v2434 = vpack.c.b16 %v2306, %v2306
  %v2435 = vpack.c.b16 %v2307, %v2307
  %v2436 = vpack.c.b16 %v2308, %v2308
  %v2437 = vpack.c.b16 %v2309, %v2309
  %v2438 = vpack.c.b16 %v2310, %v2310
  %v2439 = vpack.c.b16 %v2311, %v2311
  %v2440 = vpack.c.b16 %v2312, %v2312
  %v2441 = vpack.c.b16 %v2313, %v2313
  %v2442 = vpack.c.b16 %v2314, %v2314
  %v2443 = vpack.c.b16 %v2315, %v2315
  %v2444 = vpack.c.b16 %v2316, %v2316
  %v2445 = vpack.c.b16 %v2317, %v2317
  %v2446 = vpack.c.b16 %v2318, %v2318
  %v2447 = vpack.c.b16 %v2319, %v2319
  %v2448 = vpack.c.b16 %v2320, %v2320
  %v2449 = vpack.c.b16 %v2321, %v2321
  %v2450 = vpack.c.b16 %v2322, %v2322
  %v2451 = vpack.c.b16 %v2323, %v2323
  %v2452 = vpack.c.b16 %v2324, %v2324
  %v2453 = vpack.c.b16 %v2325, %v2325
  %v2454 = vpack.c.b16 %v2326, %v2326
  %v2455 = vpack.c.b16 %v2327, %v2327
  %v2456 = vpack.c.b16 %v2328, %v2328
  %v2457 = vpack.c.b16 %v2329, %v2329
  %v2458 = vpack.c.b16 %v2330, %v2330
  %v4635 = vunpack.c.l.b16 %v87
  %v4636 = vunpack.c.l.b16 %v88
  %v4637 = vunpack.c.l.b16 %v89
  %v4638 = vunpack.c.l.b16 %v90
  %v4639 = vunpack.c.l.b16 %v91
  %v4640 = vunpack.c.l.b16 %v92
  %v4641 = vunpack.c.l.b16 %v93
  %v4642 = vunpack.c.l.b16 %v94
  %v4643 = vunpack.c.l.b16 %v95
  %v4644 = vunpack.c.l.b16 %v96
  %v4645 = vunpack.c.l.b16 %v97
  %v4646 = vunpack.c.l.b16 %v98
  %v4647 = vunpack.c.l.b16 %v99
  %v4648 = vunpack.c.l.b16 %v100
  %v4649 = vunpack.c.l.b16 %v101
  %v4650 = vunpack.c.l.b16 %v102
  %v4651 = vunpack.c.l.b16 %v103
  %v4652 = vunpack.c.l.b16 %v104
  %v4653 = vunpack.c.l.b16 %v105
  %v4654 = vunpack.c.l.b16 %v106
  %v4655 = vunpack.c.l.b16 %v107
  %v4656 = vunpack.c.l.b16 %v108
  %v4657 = vunpack.c.l.b16 %v109
  %v4658 = vunpack.c.l.b16 %v110
  %v4659 = vunpack.c.l.b16 %v111
  %v4660 = vunpack.c.l.b16 %v112
  %v4661 = vunpack.c.l.b16 %v113
  %v4662 = vunpack.c.l.b16 %v114
  %v4663 = vunpack.c.l.b16 %v115
  %v4664 = vunpack.c.l.b16 %v116
  %v4665 = vunpack.c.l.b16 %v117
  %v4666 = vunpack.c.l.b16 %v118
  %v4667 = vunpack.c.l.b16 %v119
  %v4668 = vunpack.c.l.b16 %v120
  %v4669 = vunpack.c.l.b16 %v121
  %v4670 = vunpack.c.l.b16 %v122
  %v4671 = vunpack.c.l.b16 %v123
  %v4672 = vunpack.c.l.b16 %v124
  %v4673 = vunpack.c.l.b16 %v125
  %v4674 = vunpack.c.l.b16 %v126
  %v4675 = vunpack.c.l.b16 %v127
  %v4676 = vunpack.c.l.b16 %v128
  %v4677 = vunpack.c.l.b16 %v129
  %v4678 = vunpack.c.l.b16 %v130
  %v4679 = vunpack.c.l.b16 %v131
  %v4680 = vunpack.c.l.b16 %v132
  %v4681 = vunpack.c.l.b16 %v133
  %v4682 = vunpack.c.l.b16 %v134
  %v4683 = vunpack.c.l.b16 %v135
  %v4684 = vunpack.c.l.b16 %v136
  %v4685 = vunpack.c.l.b16 %v137
  %v4686 = vunpack.c.l.b16 %v138
  %v4687 = vunpack.c.l.b16 %v139
  %v4688 = vunpack.c.l.b16 %v140
  %v4689 = vunpack.c.l.b16 %v141
  %v4690 = vunpack.c.l.b16 %v142
  %v4691 = vunpack.c.l.b16 %v143
  %v4692 = vunpack.c.l.b16 %v144
  %v4693 = vunpack.c.l.b16 %v145
  %v4694 = vunpack.c.l.b16 %v146
  %v4695 = vunpack.c.l.b16 %v147
  %v4696 = vunpack.c.l.b16 %v148
  %v4697 = vunpack.c.l.b16 %v149
  %v4698 = vunpack.c.l.b16 %v150
  %v4699 = vunpack.c.l.b16 %v151
  %v4700 = vunpack.c.l.b16 %v152
  %v4701 = vunpack.c.l.b16 %v153
  %v4702 = vunpack.c.l.b16 %v154
  %v4703 = vunpack.c.l.b16 %v155
  %v4704 = vunpack.c.l.b16 %v156
  %v4705 = vunpack.c.l.b16 %v157
  %v4706 = vunpack.c.l.b16 %v158
  %v4707 = vunpack.c.l.b16 %v159
  %v4708 = vunpack.c.l.b16 %v160
  %v4709 = vunpack.c.l.b16 %v161
  %v4710 = vunpack.c.l.b16 %v162
  %v4711 = vunpack.c.l.b16 %v163
  %v4712 = vunpack.c.l.b16 %v164
  %v4713 = vunpack.c.l.b16 %v165
  %v4714 = vunpack.c.l.b16 %v166
  %v4715 = vunpack.c.l.b16 %v167
  %v4716 = vunpack.c.l.b16 %v168
  %v4717 = vunpack.c.l.b16 %v169
  %v4718 = vunpack.c.l.b16 %v170
  %v4719 = vunpack.c.l.b16 %v171
  %v4720 = vunpack.c.l.b16 %v172
  %v4721 = vunpack.c.l.b16 %v173
  %v4722 = vunpack.c.l.b16 %v174
  %v4723 = vunpack.c.l.b16 %v175
  %v4724 = vunpack.c.l.b16 %v176
  %v4725 = vunpack.c.l.b16 %v177
  %v4726 = vunpack.c.l.b16 %v178
  %v4727 = vunpack.c.l.b16 %v179
  %v4728 = vunpack.c.l.b16 %v180
  %v4729 = vunpack.c.l.b16 %v181
  %v4730 = vunpack.c.l.b16 %v182
  %v4731 = vunpack.c.l.b16 %v183
  %v4732 = vunpack.c.l.b16 %v184
  %v4733 = vunpack.c.l.b16 %v185
  %v4734 = vunpack.c.l.b16 %v186
  %v4735 = vunpack.c.l.b16 %v187
  %v4736 = vunpack.c.l.b16 %v188
  %v4737 = vunpack.c.l.b16 %v189
  %v4738 = vunpack.c.l.b16 %v190
  %v4739 = vunpack.c.l.b16 %v191
  %v4740 = vunpack.c.l.b16 %v192
  %v4741 = vunpack.c.l.b16 %v193
  %v4742 = vunpack.c.l.b16 %v194
  %v4743 = vunpack.c.l.b16 %v195
  %v4744 = vunpack.c.l.b16 %v196
  %v4745 = vunpack.c.l.b16 %v197
  %v4746 = vunpack.c.l.b16 %v198
  %v4747 = vunpack.c.l.b16 %v199
  %v4748 = vunpack.c.l.b16 %v200
  %v4749 = vunpack.c.l.b16 %v201
  %v4750 = vunpack.c.l.b16 %v202
  %v4751 = vunpack.c.l.b16 %v203
  %v4752 = vunpack.c.l.b16 %v204
  %v4753 = vunpack.c.l.b16 %v205
  %v4754 = vunpack.c.l.b16 %v206
  %v4755 = vunpack.c.l.b16 %v207
  %v4756 = vunpack.c.l.b16 %v208
  %v4757 = vunpack.c.l.b16 %v209
  %v4758 = vunpack.c.l.b16 %v210
  %v4759 = vunpack.c.l.b16 %v211
  %v4760 = vunpack.c.l.b16 %v212
  %v4761 = vunpack.c.l.b16 %v213
  %v4762 = vunpack.c.l.b16 %v214
  %v4763 = vunpack.c.l.b16 %v215
  %v4764 = vunpack.c.l.b16 %v216
  %v4765 = vunpack.c.l.b16 %v217
  %v4766 = vunpack.c.l.b16 %v218
  %v4767 = vunpack.c.l.b16 %v219
  %v4768 = vunpack.c.l.b16 %v220
  %v4769 = vunpack.c.l.b16 %v221
  %v4770 = vunpack.c.l.b16 %v222
  %v4771 = vunpack.c.l.b16 %v223
  %v4772 = vunpack.c.l.b16 %v224
  %v4773 = vunpack.c.l.b16 %v225
  %v4774 = vunpack.c.l.b16 %v226
  %v4775 = vunpack.c.l.b16 %v227
  %v4776 = vunpack.c.l.b16 %v228
  %v4777 = vunpack.c.l.b16 %v229
  %v4778 = vunpack.c.l.b16 %v230
  %v4779 = vunpack.c.l.b16 %v231
  %v4780 = vunpack.c.l.b16 %v232
  %v4781 = vunpack.c.l.b16 %v233
  %v4782 = vunpack.c.l.b16 %v234
  %v4783 = vunpack.c.l.b16 %v235
  %v4784 = vunpack.c.l.b16 %v236
  %v4785 = vunpack.c.l.b16 %v237
  %v4786 = vunpack.c.l.b16 %v238
  %v4787 = vunpack.c.l.b16 %v239
  %v4788 = vunpack.c.l.b16 %v240
  %v4789 = vunpack.c.l.b16 %v241
  %v4790 = vunpack.c.l.b16 %v242
  %v4791 = vunpack.c.l.b16 %v243
  %v4792 = vunpack.c.l.b16 %v244
  %v4793 = vunpack.c.l.b16 %v245
  %v4794 = vunpack.c.l.b16 %v246
  %v4795 = vunpack.c.l.b16 %v247
  %v4796 = vunpack.c.l.b16 %v248
  %v4797 = vunpack.c.l.b16 %v249
  %v4798 = vunpack.c.l.b16 %v250
  %v4799 = vunpack.c.l.b16 %v251
  %v4800 = vunpack.c.l.b16 %v252
  %v4801 = vunpack.c.l.b16 %v253
  %v4802 = vunpack.c.l.b16 %v254
  %v4803 = vunpack.c.l.b16 %v255
  %v4804 = vunpack.c.l.b16 %v256
  %v4805 = vunpack.c.l.b16 %v257
  %v4806 = vunpack.c.l.b16 %v258
  %v4807 = vunpack.c.l.b16 %v259
  %v4808 = vunpack.c.l.b16 %v260
  %v4809 = vunpack.c.l.b16 %v261
  %v4810 = vunpack.c.l.b16 %v262
  %v4811 = vunpack.c.l.b16 %v263
  %v4812 = vunpack.c.l.b16 %v264
  %v4813 = vunpack.c.l.b16 %v265
  %v4814 = vunpack.c.l.b16 %v266
  %v4815 = vunpack.c.l.b16 %v267
  %v4816 = vunpack.c.l.b16 %v268
  %v4817 = vunpack.c.l.b16 %v269
  %v4818 = vunpack.c.l.b16 %v270
  %v4819 = vunpack.c.l.b16 %v271
  %v4820 = vunpack.c.l.b16 %v272
  %v4821 = vunpack.c.l.b16 %v273
  %v4822 = vunpack.c.l.b16 %v274
  %v4823 = vunpack.c.l.b16 %v275
  %v4824 = vunpack.c.l.b16 %v276
  %v4825 = vunpack.c.l.b16 %v277
  %v4826 = vunpack.c.l.b16 %v278
  %v4827 = vunpack.c.l.b16 %v279
  %v4828 = vunpack.c.l.b16 %v280
  %v4829 = vunpack.c.l.b16 %v281
  %v4830 = vunpack.c.l.b16 %v282
  %v4831 = vunpack.c.l.b16 %v283
  %v4832 = vunpack.c.l.b16 %v284
  %v4833 = vunpack.c.l.b16 %v285
  %v4834 = vunpack.c.l.b16 %v286
  %v4835 = vunpack.c.l.b16 %v287
  %v4836 = vunpack.c.l.b16 %v288
  %v4837 = vunpack.c.l.b16 %v289
  %v4838 = vunpack.c.l.b16 %v290
  %v4839 = vunpack.c.l.b16 %v291
  %v4840 = vunpack.c.l.b16 %v292
  %v4841 = vunpack.c.l.b16 %v293
  %v4842 = vunpack.c.l.b16 %v294
  %v4843 = vunpack.c.l.b16 %v295
  %v4844 = vunpack.c.l.b16 %v296
  %v4845 = vunpack.c.l.b16 %v297
  %v4846 = vunpack.c.l.b16 %v298
  %v4847 = vunpack.c.l.b16 %v299
  %v4848 = vunpack.c.l.b16 %v300
  %v4849 = vunpack.c.l.b16 %v301
  %v4850 = vunpack.c.l.b16 %v302
  %v4851 = vunpack.c.l.b16 %v303
  %v4852 = vunpack.c.l.b16 %v304
  %v4853 = vunpack.c.l.b16 %v305
  %v4854 = vunpack.c.l.b16 %v306
  %v4855 = vunpack.c.l.b16 %v307
  %v4856 = vunpack.c.l.b16 %v308
  %v4857 = vunpack.c.l.b16 %v309
  %v4858 = vunpack.c.l.b16 %v310
  %v4859 = vunpack.c.l.b16 %v311
  %v4860 = vunpack.c.l.b16 %v312
  %v4861 = vunpack.c.l.b16 %v313
  %v4862 = vunpack.c.l.b16 %v314
  %v4863 = vunpack.c.l.b16 %v315
  %v4864 = vunpack.c.l.b16 %v316
  %v4865 = vunpack.c.l.b16 %v317
  %v4866 = vunpack.c.l.b16 %v318
  %v4867 = vunpack.c.l.b16 %v319
  %v4868 = vunpack.c.l.b16 %v320
  %v4869 = vunpack.c.l.b16 %v321
  %v4870 = vunpack.c.l.b16 %v322
  %v4871 = vunpack.c.l.b16 %v323
  %v4872 = vunpack.c.l.b16 %v324
  %v4873 = vunpack.c.l.b16 %v325
  %v4874 = vunpack.c.l.b16 %v326
  %v4875 = vunpack.c.l.b16 %v327
  %v4876 = vunpack.c.l.b16 %v328
  %v4877 = vunpack.c.l.b16 %v329
  %v4878 = vunpack.c.l.b16 %v330
  %v4879 = vunpack.c.l.b16 %v331
  %v4880 = vunpack.c.l.b16 %v332
  %v4881 = vunpack.c.l.b16 %v333
  %v4882 = vunpack.c.l.b16 %v334
  %v4883 = vunpack.c.l.b16 %v335
  %v4884 = vunpack.c.l.b16 %v336
  %v4885 = vunpack.c.l.b16 %v337
  %v4886 = vunpack.c.l.b16 %v338
  %v4887 = vunpack.c.l.b16 %v339
  %v4888 = vunpack.c.l.b16 %v340
  %v4889 = vunpack.c.l.b16 %v341
  %v4890 = vunpack.c.l.b16 %v342
  %v4891 = vunpack.c.l.b16 %v343
  %v4892 = vunpack.c.l.b16 %v344
  %v4893 = vunpack.c.l.b16 %v345
  %v4894 = vunpack.c.l.b16 %v346
  %v4895 = vunpack.c.l.b16 %v347
  %v4896 = vunpack.c.l.b16 %v348
  %v4897 = vunpack.c.l.b16 %v349
  %v4898 = vunpack.c.l.b16 %v350
  %v4899 = vunpack.c.l.b16 %v351
  %v4900 = vunpack.c.l.b16 %v352
  %v4901 = vunpack.c.l.b16 %v353
  %v4902 = vunpack.c.l.b16 %v354
  %v4903 = vunpack.c.l.b16 %v355
  %v4904 = vunpack.c.l.b16 %v356
  %v4905 = vunpack.c.l.b16 %v357
  %v4906 = vunpack.c.l.b16 %v358
  %v4907 = vunpack.c.l.b16 %v359
  %v4908 = vunpack.c.l.b16 %v360
  %v4909 = vunpack.c.l.b16 %v361
  %v4910 = vunpack.c.l.b16 %v362
  %v4911 = vunpack.c.l.b16 %v363
  %v4912 = vunpack.c.l.b16 %v364
  %v4913 = vunpack.c.l.b16 %v365
  %v4914 = vunpack.c.l.b16 %v366
  %v4915 = vunpack.c.l.b16 %v367
  %v4916 = vunpack.c.l.b16 %v368
  %v4917 = vunpack.c.l.b16 %v369
  %v4918 = vunpack.c.l.b16 %v370
  %v4919 = vunpack.c.l.b16 %v371
  %v4920 = vunpack.c.l.b16 %v372
  %v4921 = vunpack.c.l.b16 %v373
  %v4922 = vunpack.c.l.b16 %v374
  %v4923 = vunpack.c.l.b16 %v375
  %v4924 = vunpack.c.l.b16 %v376
  %v4925 = vunpack.c.l.b16 %v377
  %v4926 = vunpack.c.l.b16 %v378
  %v4927 = vunpack.c.l.b16 %v379
  %v4928 = vunpack.c.l.b16 %v380
  %v4929 = vunpack.c.l.b16 %v381
  %v4930 = vunpack.c.l.b16 %v382
  %v4931 = vunpack.c.l.b16 %v383
  %v4932 = vunpack.c.l.b16 %v384
  %v4933 = vunpack.c.l.b16 %v385
  %v4934 = vunpack.c.l.b16 %v386
  %v4935 = vunpack.c.l.b16 %v387
  %v4936 = vunpack.c.l.b16 %v388
  %v4937 = vunpack.c.l.b16 %v389
  %v4938 = vunpack.c.l.b16 %v390
  %v4939 = vunpack.c.l.b16 %v391
  %v4940 = vunpack.c.l.b16 %v392
  %v4941 = vunpack.c.l.b16 %v393
  %v4942 = vunpack.c.l.b16 %v394
  %v4943 = vunpack.c.l.b16 %v395
  %v4944 = vunpack.c.l.b16 %v396
  %v4945 = vunpack.c.l.b16 %v397
  %v4946 = vunpack.c.l.b16 %v398
  %v4947 = vunpack.c.l.b16 %v399
  %v4948 = vunpack.c.l.b16 %v400
  %v4949 = vunpack.c.l.b16 %v401
  %v4950 = vunpack.c.l.b16 %v402
  %v4951 = vunpack.c.l.b16 %v403
  %v4952 = vunpack.c.l.b16 %v404
  %v4953 = vunpack.c.l.b16 %v405
  %v4954 = vunpack.c.l.b16 %v406
  %v4955 = vunpack.c.l.b16 %v407
  %v4956 = vunpack.c.l.b16 %v408
  %v4957 = vunpack.c.l.b16 %v409
  %v4958 = vunpack.c.l.b16 %v410
  %v4959 = vunpack.c.l.b16 %v411
  %v4960 = vunpack.c.l.b16 %v412
  %v4961 = vunpack.c.l.b16 %v413
  %v4962 = vunpack.c.l.b16 %v414
  %v4963 = vunpack.c.l.b16 %v415
  %v4964 = vunpack.c.l.b16 %v416
  %v4965 = vunpack.c.l.b16 %v417
  %v4966 = vunpack.c.l.b16 %v418
  %v4967 = vunpack.c.l.b16 %v419
  %v4968 = vunpack.c.l.b16 %v420
  %v4969 = vunpack.c.l.b16 %v421
  %v4970 = vunpack.c.l.b16 %v422
  %v4971 = vunpack.c.l.b16 %v423
  %v4972 = vunpack.c.l.b16 %v424
  %v4973 = vunpack.c.l.b16 %v425
  %v4974 = vunpack.c.l.b16 %v426
  %v4975 = vunpack.c.l.b16 %v427
  %v4976 = vunpack.c.l.b16 %v428
  %v4977 = vunpack.c.l.b16 %v429
  %v4978 = vunpack.c.l.b16 %v430
  %v4979 = vunpack.c.l.b16 %v431
  %v4980 = vunpack.c.l.b16 %v432
  %v4981 = vunpack.c.l.b16 %v433
  %v4982 = vunpack.c.l.b16 %v434
  %v4983 = vunpack.c.l.b16 %v435
  %v4984 = vunpack.c.l.b16 %v436
  %v4985 = vunpack.c.l.b16 %v437
  %v4986 = vunpack.c.l.b16 %v438
  %v4987 = vunpack.c.l.b16 %v439
  %v4988 = vunpack.c.l.b16 %v440
  %v4989 = vunpack.c.l.b16 %v441
  %v4990 = vunpack.c.l.b16 %v442
  %v4991 = vunpack.c.l.b16 %v443
  %v4992 = vunpack.c.l.b16 %v444
  %v4993 = vunpack.c.l.b16 %v445
  %v4994 = vunpack.c.l.b16 %v446
  %v4995 = vunpack.c.l.b16 %v447
  %v4996 = vunpack.c.l.b16 %v448
  %v4997 = vunpack.c.l.b16 %v449
  %v4998 = vunpack.c.l.b16 %v450
  %v4999 = vunpack.c.l.b16 %v451
  %v5000 = vunpack.c.l.b16 %v452
  %v5001 = vunpack.c.l.b16 %v453
  %v5002 = vunpack.c.l.b16 %v454
  %v5003 = vunpack.c.l.b16 %v455
  %v5004 = vunpack.c.l.b16 %v456
  %v5005 = vunpack.c.l.b16 %v457
  %v5006 = vunpack.c.l.b16 %v458
  %v5007 = vunpack.c.l.b16 %v459
  %v5008 = vunpack.c.l.b16 %v460
  %v5009 = vunpack.c.l.b16 %v461
  %v5010 = vunpack.c.l.b16 %v462
  %v5011 = vunpack.c.l.b16 %v463
  %v5012 = vunpack.c.l.b16 %v464
  %v5013 = vunpack.c.l.b16 %v465
  %v5014 = vunpack.c.l.b16 %v466
  %v5015 = vunpack.c.l.b16 %v467
  %v5016 = vunpack.c.l.b16 %v468
  %v5017 = vunpack.c.l.b16 %v469
  %v5018 = vunpack.c.l.b16 %v470
  %v5019 = vunpack.c.l.b16 %v471
  %v5020 = vunpack.c.l.b16 %v472
  %v5021 = vunpack.c.l.b16 %v473
  %v5022 = vunpack.c.l.b16 %v474
  %v5023 = vunpack.c.l.b16 %v475
  %v5024 = vunpack.c.l.b16 %v476
  %v5025 = vunpack.c.l.b16 %v477
  %v5026 = vunpack.c.l.b16 %v478
  %v5027 = vunpack.c.l.b16 %v479
  %v5028 = vunpack.c.l.b16 %v480
  %v5029 = vunpack.c.l.b16 %v481
  %v5030 = vunpack.c.l.b16 %v482
  %v5031 = vunpack.c.l.b16 %v483
  %v5032 = vunpack.c.l.b16 %v484
  %v5033 = vunpack.c.l.b16 %v485
  %v5034 = vunpack.c.l.b16 %v486
  %v5035 = vunpack.c.l.b16 %v487
  %v5036 = vunpack.c.l.b16 %v488
  %v5037 = vunpack.c.l.b16 %v489
  %v5038 = vunpack.c.l.b16 %v490
  %v5039 = vunpack.c.l.b16 %v491
  %v5040 = vunpack.c.l.b16 %v492
  %v5041 = vunpack.c.l.b16 %v493
  %v5042 = vunpack.c.l.b16 %v494
  %v5043 = vunpack.c.l.b16 %v495
  %v5044 = vunpack.c.l.b16 %v496
  %v5045 = vunpack.c.l.b16 %v497
  %v5046 = vunpack.c.l.b16 %v498
  %v5047 = vunpack.c.l.b16 %v499
  %v5048 = vunpack.c.l.b16 %v500
  %v5049 = vunpack.c.l.b16 %v501
  %v5050 = vunpack.c.l.b16 %v502
  %v5051 = vunpack.c.l.b16 %v503
  %v5052 = vunpack.c.l.b16 %v504
  %v5053 = vunpack.c.l.b16 %v505
  %v5054 = vunpack.c.l.b16 %v506
  %v5055 = vunpack.c.l.b16 %v507
  %v5056 = vunpack.c.l.b16 %v508
  %v5057 = vunpack.c.l.b16 %v509
  %v5058 = vunpack.c.l.b16 %v510
  %v5059 = vunpack.c.l.b16 %v511
  %v5060 = vunpack.c.l.b16 %v512
  %v5061 = vunpack.c.l.b16 %v513
  %v5062 = vunpack.c.l.b16 %v514
  %v5063 = vunpack.c.l.b16 %v515
  %v5064 = vunpack.c.l.b16 %v516
  %v5065 = vunpack.c.l.b16 %v517
  %v5066 = vunpack.c.l.b16 %v518
  %v5067 = vunpack.c.l.b16 %v519
  %v5068 = vunpack.c.l.b16 %v520
  %v5069 = vunpack.c.l.b16 %v521
  %v5070 = vunpack.c.l.b16 %v522
  %v5071 = vunpack.c.l.b16 %v523
  %v5072 = vunpack.c.l.b16 %v524
  %v5073 = vunpack.c.l.b16 %v525
  %v5074 = vunpack.c.l.b16 %v526
  %v5075 = vunpack.c.l.b16 %v527
  %v5076 = vunpack.c.l.b16 %v528
  %v5077 = vunpack.c.l.b16 %v529
  %v5078 = vunpack.c.l.b16 %v530
  %v5079 = vunpack.c.l.b16 %v531
  %v5080 = vunpack.c.l.b16 %v532
  %v5081 = vunpack.c.l.b16 %v533
  %v5082 = vunpack.c.l.b16 %v534
  %v5083 = vunpack.c.l.b16 %v535
  %v5084 = vunpack.c.l.b16 %v536
  %v5085 = vunpack.c.l.b16 %v537
  %v5086 = vunpack.c.l.b16 %v538
  %v5087 = vunpack.c.l.b16 %v539
  %v5088 = vunpack.c.l.b16 %v540
  %v5089 = vunpack.c.l.b16 %v541
  %v5090 = vunpack.c.l.b16 %v542
  %v5091 = vunpack.c.l.b16 %v543
  %v5092 = vunpack.c.l.b16 %v544
  %v5093 = vunpack.c.l.b16 %v545
  %v5094 = vunpack.c.l.b16 %v546
  %v5095 = vunpack.c.l.b16 %v547
  %v5096 = vunpack.c.l.b16 %v548
  %v5097 = vunpack.c.l.b16 %v549
  %v5098 = vunpack.c.l.b16 %v550
  %v5099 = vunpack.c.l.b16 %v551
  %v5100 = vunpack.c.l.b16 %v552
  %v5101 = vunpack.c.l.b16 %v553
  %v5102 = vunpack.c.l.b16 %v554
  %v5103 = vunpack.c.l.b16 %v555
  %v5104 = vunpack.c.l.b16 %v556
  %v5105 = vunpack.c.l.b16 %v557
  %v5106 = vunpack.c.l.b16 %v558
  %v5107 = vunpack.c.l.b16 %v559
  %v5108 = vunpack.c.l.b16 %v560
  %v5109 = vunpack.c.l.b16 %v561
  %v5110 = vunpack.c.l.b16 %v562
  %v5111 = vunpack.c.l.b16 %v563
  %v5112 = vunpack.c.l.b16 %v564
  %v5113 = vunpack.c.l.b16 %v565
  %v5114 = vunpack.c.l.b16 %v566
  %v5115 = vunpack.c.l.b16 %v567
  %v5116 = vunpack.c.l.b16 %v568
  %v5117 = vunpack.c.l.b16 %v569
  %v5118 = vunpack.c.l.b16 %v570
  %v5119 = vunpack.c.l.b16 %v571
  %v5120 = vunpack.c.l.b16 %v572
  %v5121 = vunpack.c.l.b16 %v573
  %v5122 = vunpack.c.l.b16 %v574
  %v5123 = vunpack.c.l.b16 %v575
  %v5124 = vunpack.c.l.b16 %v576
  %v5125 = vunpack.c.l.b16 %v577
  %v5126 = vunpack.c.l.b16 %v578
  %v5127 = vunpack.c.l.b16 %v579
  %v5128 = vunpack.c.l.b16 %v580
  %v5129 = vunpack.c.l.b16 %v581
  %v5130 = vunpack.c.l.b16 %v582
  %v5131 = vunpack.c.l.b16 %v583
  %v5132 = vunpack.c.l.b16 %v584
  %v5133 = vunpack.c.l.b16 %v585
  %v5134 = vunpack.c.l.b16 %v586
  %v5135 = vunpack.c.l.b16 %v587
  %v5136 = vunpack.c.l.b16 %v588
  %v5137 = vunpack.c.l.b16 %v589
  %v5138 = vunpack.c.l.b16 %v590
  %v5139 = vunpack.c.l.b16 %v591
  %v5140 = vunpack.c.l.b16 %v592
  %v5141 = vunpack.c.l.b16 %v593
  %v5142 = vunpack.c.l.b16 %v594
  %v5143 = vunpack.c.l.b16 %v595
  %v5144 = vunpack.c.l.b16 %v596
  %v5145 = vunpack.c.l.b16 %v597
  %v5146 = vunpack.c.l.b16 %v598
  %v5147 = vunpack.c.l.b16 %v599
  %v5148 = vunpack.c.l.b16 %v600
  %v5149 = vunpack.c.l.b16 %v601
  %v5150 = vunpack.c.l.b16 %v602
  %v5151 = vunpack.c.l.b16 %v603
  %v5152 = vunpack.c.l.b16 %v604
  %v5153 = vunpack.c.l.b16 %v605
  %v5154 = vunpack.c.l.b16 %v606
  %v5155 = vunpack.c.l.b16 %v607
  %v5156 = vunpack.c.l.b16 %v608
  %v5157 = vunpack.c.l.b16 %v609
  %v5158 = vunpack.c.l.b16 %v610
  %v5159 = vunpack.c.l.b16 %v611
  %v5160 = vunpack.c.l.b16 %v612
  %v5161 = vunpack.c.l.b16 %v613
  %v5162 = vunpack.c.l.b16 %v614
  %v5163 = vunpack.c.l.b16 %v615
  %v5164 = vunpack.c.l.b16 %v616
  %v5165 = vunpack.c.l.b16 %v617
  %v5166 = vunpack.c.l.b16 %v618
  %v5167 = vunpack.c.l.b16 %v619
  %v5168 = vunpack.c.l.b16 %v620
  %v5169 = vunpack.c.l.b16 %v621
  %v5170 = vunpack.c.l.b16 %v622
  %v5171 = vunpack.c.l.b16 %v623
  %v5172 = vunpack.c.l.b16 %v624
  %v5173 = vunpack.c.l.b16 %v625
  %v5174 = vunpack.c.l.b16 %v626
  %v5175 = vunpack.c.l.b16 %v627
  %v5176 = vunpack.c.l.b16 %v628
  %v5177 = vunpack.c.l.b16 %v629
  %v5178 = vunpack.c.l.b16 %v630
  %v5179 = vunpack.c.l.b16 %v631
  %v5180 = vunpack.c.l.b16 %v632
  %v5181 = vunpack.c.l.b16 %v633
  %v5182 = vunpack.c.l.b16 %v634
  %v5183 = vunpack.c.l.b16 %v635
  %v5184 = vunpack.c.l.b16 %v636
  %v5185 = vunpack.c.l.b16 %v637
  %v5186 = vunpack.c.l.b16 %v638
  %v5187 = vunpack.c.l.b16 %v639
  %v5188 = vunpack.c.l.b16 %v640
  %v5189 = vunpack.c.l.b16 %v641
  %v5190 = vunpack.c.l.b16 %v642
  %v5191 = vunpack.c.l.b16 %v643
  %v5192 = vunpack.c.l.b16 %v644
  %v5193 = vunpack.c.l.b16 %v645
  %v5194 = vunpack.c.l.b16 %v646
  %v5195 = vunpack.c.l.b16 %v647
  %v5196 = vunpack.c.l.b16 %v648
  %v5197 = vunpack.c.l.b16 %v649
  %v5198 = vunpack.c.l.b16 %v650
  %v5199 = vunpack.c.l.b16 %v651
  %v5200 = vunpack.c.l.b16 %v652
  %v5201 = vunpack.c.l.b16 %v653
  %v5202 = vunpack.c.l.b16 %v654
  %v5203 = vunpack.c.l.b16 %v655
  %v5204 = vunpack.c.l.b16 %v656
  %v5205 = vunpack.c.l.b16 %v657
  %v5206 = vunpack.c.l.b16 %v658
  %v5207 = vunpack.c.l.b16 %v659
  %v5208 = vunpack.c.l.b16 %v660
  %v5209 = vunpack.c.l.b16 %v661
  %v5210 = vunpack.c.l.b16 %v662
  %v5211 = vunpack.c.l.b16 %v663
  %v5212 = vunpack.c.l.b16 %v664
  %v5213 = vunpack.c.l.b16 %v665
  %v5214 = vunpack.c.l.b16 %v666
  %v5215 = vunpack.c.l.b16 %v667
  %v5216 = vunpack.c.l.b16 %v668
  %v5217 = vunpack.c.l.b16 %v669
  %v5218 = vunpack.c.l.b16 %v670
  %v5219 = vunpack.c.l.b16 %v671
  %v5220 = vunpack.c.l.b16 %v672
  %v5221 = vunpack.c.l.b16 %v673
  %v5222 = vunpack.c.l.b16 %v674
  %v5223 = vunpack.c.l.b16 %v675
  %v5224 = vunpack.c.l.b16 %v676
  %v5225 = vunpack.c.l.b16 %v677
  %v5226 = vunpack.c.l.b16 %v678
  %v5227 = vunpack.c.l.b16 %v679
  %v5228 = vunpack.c.l.b16 %v680
  %v5229 = vunpack.c.l.b16 %v681
  %v5230 = vunpack.c.l.b16 %v682
  %v5231 = vunpack.c.l.b16 %v683
  %v5232 = vunpack.c.l.b16 %v684
  %v5233 = vunpack.c.l.b16 %v685
  %v5234 = vunpack.c.l.b16 %v686
  %v5235 = vunpack.c.l.b16 %v687
  %v5236 = vunpack.c.l.b16 %v688
  %v5237 = vunpack.c.l.b16 %v689
  %v5238 = vunpack.c.l.b16 %v690
  %v5239 = vunpack.c.l.b16 %v691
  %v5240 = vunpack.c.l.b16 %v692
  %v5241 = vunpack.c.l.b16 %v693
  %v5242 = vunpack.c.l.b16 %v694
  %v5243 = vunpack.c.l.b16 %v695
  %v5244 = vunpack.c.l.b16 %v696
  %v5245 = vunpack.c.l.b16 %v697
  %v5246 = vunpack.c.l.b16 %v698
  %v5247 = vunpack.c.l.b16 %v699
  %v5248 = vunpack.c.l.b16 %v700
  %v5249 = vunpack.c.l.b16 %v701
  %v5250 = vunpack.c.l.b16 %v702
  %v5251 = vunpack.c.l.b16 %v703
  %v5252 = vunpack.c.l.b16 %v704
  %v5253 = vunpack.c.l.b16 %v705
  %v5254 = vunpack.c.l.b16 %v706
  %v5255 = vunpack.c.l.b16 %v707
  %v5256 = vunpack.c.l.b16 %v708
  %v5257 = vunpack.c.l.b16 %v709
  %v5258 = vunpack.c.l.b16 %v710
  %v5259 = vunpack.c.l.b16 %v711
  %v5260 = vunpack.c.l.b16 %v712
  %v5261 = vunpack.c.l.b16 %v713
  %v5262 = vunpack.c.l.b16 %v714
  %v5263 = vunpack.c.l.b16 %v715
  %v5264 = vunpack.c.l.b16 %v716
  %v5265 = vunpack.c.l.b16 %v717
  %v5266 = vunpack.c.l.b16 %v718
  %v5267 = vunpack.c.l.b16 %v719
  %v5268 = vunpack.c.l.b16 %v720
  %v5269 = vunpack.c.l.b16 %v721
  %v5270 = vunpack.c.l.b16 %v722
  %v5271 = vunpack.c.l.b16 %v723
  %v5272 = vunpack.c.l.b16 %v724
  %v5273 = vunpack.c.l.b16 %v725
  %v5274 = vunpack.c.l.b16 %v726
  %v5275 = vunpack.c.l.b16 %v727
  %v5276 = vunpack.c.l.b16 %v728
  %v5277 = vunpack.c.l.b16 %v729
  %v5278 = vunpack.c.l.b16 %v730
  %v5279 = vunpack.c.l.b16 %v731
  %v5280 = vunpack.c.l.b16 %v732
  %v5281 = vunpack.c.l.b16 %v733
  %v5282 = vunpack.c.l.b16 %v734
  %v5283 = vunpack.c.l.b16 %v735
  %v5284 = vunpack.c.l.b16 %v736
  %v5285 = vunpack.c.l.b16 %v737
  %v5286 = vunpack.c.l.b16 %v738
  %v5287 = vunpack.c.l.b16 %v739
  %v5288 = vunpack.c.l.b16 %v740
  %v5289 = vunpack.c.l.b16 %v741
  %v5290 = vunpack.c.l.b16 %v742
  %v5291 = vunpack.c.l.b16 %v743
  %v5292 = vunpack.c.l.b16 %v744
  %v5293 = vunpack.c.l.b16 %v745
  %v5294 = vunpack.c.l.b16 %v746
  %v5295 = vunpack.c.l.b16 %v747
  %v5296 = vunpack.c.l.b16 %v748
  %v5297 = vunpack.c.l.b16 %v749
  %v5298 = vunpack.c.l.b16 %v750
  %v5299 = vunpack.c.l.b16 %v751
  %v5300 = vunpack.c.l.b16 %v752
  %v5301 = vunpack.c.l.b16 %v753
  %v5302 = vunpack.c.l.b16 %v754
  %v5303 = vunpack.c.l.b16 %v755
  %v5304 = vunpack.c.l.b16 %v756
  %v5305 = vunpack.c.l.b16 %v757
  %v5306 = vunpack.c.l.b16 %v758
  %v5307 = vunpack.c.l.b16 %v759
  %v5308 = vunpack.c.l.b16 %v760
  %v5309 = vunpack.c.l.b16 %v761
  %v5310 = vunpack.c.l.b16 %v762
  %v5311 = vunpack.c.l.b16 %v763
  %v5312 = vunpack.c.l.b16 %v764
  %v5313 = vunpack.c.l.b16 %v765
  %v5314 = vunpack.c.l.b16 %v766
  %v5315 = vunpack.c.l.b16 %v767
  %v5316 = vunpack.c.l.b16 %v768
  %v5317 = vunpack.c.l.b16 %v769
  %v5318 = vunpack.c.l.b16 %v770
  %v5319 = vunpack.c.l.b16 %v771
  %v5320 = vunpack.c.l.b16 %v772
  %v5321 = vunpack.c.l.b16 %v773
  %v5322 = vunpack.c.l.b16 %v774
  %v5323 = vunpack.c.l.b16 %v775
  %v5324 = vunpack.c.l.b16 %v776
  %v5325 = vunpack.c.l.b16 %v777
  %v5326 = vunpack.c.l.b16 %v778
  %v5327 = vunpack.c.l.b16 %v779
  %v5328 = vunpack.c.l.b16 %v780
  %v5329 = vunpack.c.l.b16 %v781
  %v5330 = vunpack.c.l.b16 %v782
  %v5331 = vunpack.c.l.b16 %v783
  %v5332 = vunpack.c.l.b16 %v784
  %v5333 = vunpack.c.l.b16 %v785
  %v5334 = vunpack.c.l.b16 %v786
  %v5335 = vunpack.c.l.b16 %v787
  %v5336 = vunpack.c.l.b16 %v788
  %v5337 = vunpack.c.l.b16 %v789
  %v5338 = vunpack.c.l.b16 %v790
  %v5339 = vunpack.c.l.b16 %v791
  %v5340 = vunpack.c.l.b16 %v792
  %v5341 = vunpack.c.l.b16 %v793
  %v5342 = vunpack.c.l.b16 %v794
  %v5343 = vunpack.c.l.b16 %v795
  %v5344 = vunpack.c.l.b16 %v796
  %v5345 = vunpack.c.l.b16 %v797
  %v5346 = vunpack.c.l.b16 %v798
  %v5347 = vunpack.c.l.b16 %v799
  %v5348 = vunpack.c.l.b16 %v800
  %v5349 = vunpack.c.l.b16 %v801
  %v5350 = vunpack.c.l.b16 %v802
  %v5351 = vunpack.c.l.b16 %v803
  %v5352 = vunpack.c.l.b16 %v804
  %v5353 = vunpack.c.l.b16 %v805
  %v5354 = vunpack.c.l.b16 %v806
  %v5355 = vunpack.c.l.b16 %v807
  %v5356 = vunpack.c.l.b16 %v808
  %v5357 = vunpack.c.l.b16 %v809
  %v5358 = vunpack.c.l.b16 %v810
  %v5359 = vunpack.c.l.b16 %v811
  %v5360 = vunpack.c.l.b16 %v812
  %v5361 = vunpack.c.l.b16 %v813
  %v5362 = vunpack.c.l.b16 %v814
  %v5363 = vunpack.c.l.b16 %v815
  %v5364 = vunpack.c.l.b16 %v816
  %v5365 = vunpack.c.l.b16 %v817
  %v5366 = vunpack.c.l.b16 %v818
  %v5367 = vunpack.c.l.b16 %v819
  %v5368 = vunpack.c.l.b16 %v820
  %v5369 = vunpack.c.l.b16 %v821
  %v5370 = vunpack.c.l.b16 %v822
  %v5371 = vunpack.c.l.b16 %v823
  %v5372 = vunpack.c.l.b16 %v824
  %v5373 = vunpack.c.l.b16 %v825
  %v5374 = vunpack.c.l.b16 %v826
  %v5375 = vunpack.c.l.b16 %v827
  %v5376 = vunpack.c.l.b16 %v828
  %v5377 = vunpack.c.l.b16 %v829
  %v5378 = vunpack.c.l.b16 %v830
  %v5379 = vunpack.c.l.b16 %v831
  %v5380 = vunpack.c.l.b16 %v832
  %v5381 = vunpack.c.l.b16 %v833
  %v5382 = vunpack.c.l.b16 %v834
  %v5383 = vunpack.c.l.b16 %v835
  %v5384 = vunpack.c.l.b16 %v836
  %v5385 = vunpack.c.l.b16 %v837
  %v5386 = vunpack.c.l.b16 %v838
  %v5387 = vunpack.c.l.b16 %v839
  %v5388 = vunpack.c.l.b16 %v840
  %v5389 = vunpack.c.l.b16 %v841
  %v5390 = vunpack.c.l.b16 %v842
  %v5391 = vunpack.c.l.b16 %v843
  %v5392 = vunpack.c.l.b16 %v844
  %v5393 = vunpack.c.l.b16 %v845
  %v5394 = vunpack.c.l.b16 %v846
  %v5395 = vunpack.c.l.b16 %v847
  %v5396 = vunpack.c.l.b16 %v848
  %v5397 = vunpack.c.l.b16 %v849
  %v5398 = vunpack.c.l.b16 %v850
  %v5399 = vunpack.c.l.b16 %v851
  %v5400 = vunpack.c.l.b16 %v852
  %v5401 = vunpack.c.l.b16 %v853
  %v5402 = vunpack.c.l.b16 %v854
  %v5403 = vunpack.c.l.b16 %v855
  %v5404 = vunpack.c.l.b16 %v856
  %v5405 = vunpack.c.l.b16 %v857
  %v5406 = vunpack.c.l.b16 %v858
  %v5407 = vunpack.c.l.b16 %v859
  %v5408 = vunpack.c.l.b16 %v860
  %v5409 = vunpack.c.l.b16 %v861
  %v5410 = vunpack.c.l.b16 %v862
  %v5411 = vunpack.c.l.b16 %v863
  %v5412 = vunpack.c.l.b16 %v864
  %v5413 = vunpack.c.l.b16 %v865
  %v5414 = vunpack.c.l.b16 %v866
  %v5415 = vunpack.c.l.b16 %v867
  %v5416 = vunpack.c.l.b16 %v868
  %v5417 = vunpack.c.l.b16 %v869
  %v5418 = vunpack.c.l.b16 %v870
  %v5419 = vunpack.c.l.b16 %v871
  %v5420 = vunpack.c.l.b16 %v872
  %v5421 = vunpack.c.l.b16 %v873
  %v5422 = vunpack.c.l.b16 %v874
  %v5423 = vunpack.c.l.b16 %v875
  %v5424 = vunpack.c.l.b16 %v876
  %v5425 = vunpack.c.l.b16 %v877
  %v5426 = vunpack.c.l.b16 %v878
  %v5427 = vunpack.c.l.b16 %v879
  %v5428 = vunpack.c.l.b16 %v880
  %v5429 = vunpack.c.l.b16 %v881
  %v5430 = vunpack.c.l.b16 %v882
  %v5431 = vunpack.c.l.b16 %v883
  %v5432 = vunpack.c.l.b16 %v884
  %v5433 = vunpack.c.l.b16 %v885
  %v5434 = vunpack.c.l.b16 %v886
  %v5435 = vunpack.c.l.b16 %v887
  %v5436 = vunpack.c.l.b16 %v888
  %v5437 = vunpack.c.l.b16 %v889
  %v5438 = vunpack.c.l.b16 %v890
  %v5439 = vunpack.c.l.b16 %v891
  %v5440 = vunpack.c.l.b16 %v892
  %v5441 = vunpack.c.l.b16 %v893
  %v5442 = vunpack.c.l.b16 %v894
  %v5443 = vunpack.c.l.b16 %v895
  %v5444 = vunpack.c.l.b16 %v896
  %v5445 = vunpack.c.l.b16 %v897
  %v5446 = vunpack.c.l.b16 %v898
  %v5447 = vunpack.c.l.b16 %v899
  %v5448 = vunpack.c.l.b16 %v900
  %v5449 = vunpack.c.l.b16 %v901
  %v5450 = vunpack.c.l.b16 %v902
  %v5451 = vunpack.c.l.b16 %v903
  %v5452 = vunpack.c.l.b16 %v904
  %v5453 = vunpack.c.l.b16 %v905
  %v5454 = vunpack.c.l.b16 %v906
  %v5455 = vunpack.c.l.b16 %v907
  %v5456 = vunpack.c.l.b16 %v908
  %v5457 = vunpack.c.l.b16 %v909
  %v5458 = vunpack.c.l.b16 %v910
  %v5459 = vunpack.c.l.b16 %v911
  %v5460 = vunpack.c.l.b16 %v912
  %v5461 = vunpack.c.l.b16 %v913
  %v5462 = vunpack.c.l.b16 %v914
  %v5463 = vunpack.c.l.b16 %v915
  %v5464 = vunpack.c.l.b16 %v916
  %v5465 = vunpack.c.l.b16 %v917
  %v5466 = vunpack.c.l.b16 %v918
  %v5467 = vunpack.c.l.b16 %v919
  %v5468 = vunpack.c.l.b16 %v920
  %v5469 = vunpack.c.l.b16 %v921
  %v5470 = vunpack.c.l.b16 %v922
  %v5471 = vunpack.c.l.b16 %v923
  %v5472 = vunpack.c.l.b16 %v924
  %v5473 = vunpack.c.l.b16 %v925
  %v5474 = vunpack.c.l.b16 %v926
  %v5475 = vunpack.c.l.b16 %v927
  %v5476 = vunpack.c.l.b16 %v928
  %v5477 = vunpack.c.l.b16 %v929
  %v5478 = vunpack.c.l.b16 %v930
  %v5479 = vunpack.c.l.b16 %v931
  %v5480 = vunpack.c.l.b16 %v932
  %v5481 = vunpack.c.l.b16 %v933
  %v5482 = vunpack.c.l.b16 %v934
  %v5483 = vunpack.c.l.b16 %v935
  %v5484 = vunpack.c.l.b16 %v936
  %v5485 = vunpack.c.l.b16 %v937
  %v5486 = vunpack.c.l.b16 %v938
  %v5487 = vunpack.c.l.b16 %v939
  %v5488 = vunpack.c.l.b16 %v940
  %v5489 = vunpack.c.l.b16 %v941
  %v5490 = vunpack.c.l.b16 %v942
  %v5491 = vunpack.c.l.b16 %v943
  %v5492 = vunpack.c.l.b16 %v944
  %v5493 = vunpack.c.l.b16 %v945
  %v5494 = vunpack.c.l.b16 %v946
  %v5495 = vunpack.c.l.b16 %v947
  %v5496 = vunpack.c.l.b16 %v948
  %v5497 = vunpack.c.l.b16 %v949
  %v5498 = vunpack.c.l.b16 %v950
  %v5499 = vunpack.c.l.b16 %v951
  %v5500 = vunpack.c.l.b16 %v952
  %v5501 = vunpack.c.l.b16 %v953
  %v5502 = vunpack.c.l.b16 %v954
  %v5503 = vunpack.c.l.b16 %v955
  %v5504 = vunpack.c.l.b16 %v956
  %v5505 = vunpack.c.l.b16 %v957
  %v5506 = vunpack.c.l.b16 %v958
  %v5507 = vunpack.c.l.b16 %v959
  %v5508 = vunpack.c.l.b16 %v960
  %v5509 = vunpack.c.l.b16 %v961
  %v5510 = vunpack.c.l.b16 %v962
  %v5511 = vunpack.c.l.b16 %v963
  %v5512 = vunpack.c.l.b16 %v964
  %v5513 = vunpack.c.l.b16 %v965
  %v5514 = vunpack.c.l.b16 %v966
  %v5515 = vunpack.c.l.b16 %v967
  %v5516 = vunpack.c.l.b16 %v968
  %v5517 = vunpack.c.l.b16 %v969
  %v5518 = vunpack.c.l.b16 %v970
  %v5519 = vunpack.c.l.b16 %v971
  %v5520 = vunpack.c.l.b16 %v972
  %v5521 = vunpack.c.l.b16 %v973
  %v5522 = vunpack.c.l.b16 %v974
  %v5523 = vunpack.c.l.b16 %v975
  %v5524 = vunpack.c.l.b16 %v976
  %v5525 = vunpack.c.l.b16 %v977
  %v5526 = vunpack.c.l.b16 %v978
  %v5527 = vunpack.c.l.b16 %v979
  %v5528 = vunpack.c.l.b16 %v980
  %v5529 = vunpack.c.l.b16 %v981
  %v5530 = vunpack.c.l.b16 %v982
  %v5531 = vunpack.c.l.b16 %v983
  %v5532 = vunpack.c.l.b16 %v984
  %v5533 = vunpack.c.l.b16 %v985
  %v5534 = vunpack.c.l.b16 %v986
  %v5535 = vunpack.c.l.b16 %v987
  %v5536 = vunpack.c.l.b16 %v988
  %v5537 = vunpack.c.l.b16 %v989
  %v5538 = vunpack.c.l.b16 %v990
  %v5539 = vunpack.c.l.b16 %v991
  %v5540 = vunpack.c.l.b16 %v992
  %v5541 = vunpack.c.l.b16 %v993
  %v5542 = vunpack.c.l.b16 %v994
  %v5543 = vunpack.c.l.b16 %v995
  %v5544 = vunpack.c.l.b16 %v996
  %v5545 = vunpack.c.l.b16 %v997
  %v5546 = vunpack.c.l.b16 %v998
  %v5547 = vunpack.c.l.b16 %v999
  %v5548 = vunpack.c.l.b16 %v1000
  %v5549 = vunpack.c.l.b16 %v1001
  %v5550 = vunpack.c.l.b16 %v1002
  %v5551 = vunpack.c.l.b16 %v1003
  %v5552 = vunpack.c.l.b16 %v1004
  %v5553 = vunpack.c.l.b16 %v1005
  %v5554 = vunpack.c.l.b16 %v1006
  %v5555 = vunpack.c.l.b16 %v1007
  %v5556 = vunpack.c.l.b16 %v1008
  %v5557 = vunpack.c.l.b16 %v1009
  %v5558 = vunpack.c.l.b16 %v1010
  %v5559 = vunpack.c.l.b16 %v1011
  %v5560 = vunpack.c.l.b16 %v1012
  %v5561 = vunpack.c.l.b16 %v1013
  %v5562 = vunpack.c.l.b16 %v1014
  %v5563 = vunpack.c.l.b16 %v1015
  %v5564 = vunpack.c.l.b16 %v1016
  %v5565 = vunpack.c.l.b16 %v1017
  %v5566 = vunpack.c.l.b16 %v1018
  %v5567 = vunpack.c.l.b16 %v1019
  %v5568 = vunpack.c.l.b16 %v1020
  %v5569 = vunpack.c.l.b16 %v1021
  %v5570 = vunpack.c.l.b16 %v1022
  %v5571 = vunpack.c.l.b16 %v1023
  %v5572 = vunpack.c.l.b16 %v1024
  %v5573 = vunpack.c.l.b16 %v1025
  %v5574 = vunpack.c.l.b16 %v1026
  %v5575 = vunpack.c.l.b16 %v1027
  %v5576 = vunpack.c.l.b16 %v1028
  %v5577 = vunpack.c.l.b16 %v1029
  %v5578 = vunpack.c.l.b16 %v1030
  %v5579 = vunpack.c.l.b16 %v1031
  %v5580 = vunpack.c.l.b16 %v1032
  %v5581 = vunpack.c.l.b16 %v1033
  %v5582 = vunpack.c.l.b16 %v1034
  %v5583 = vunpack.c.l.b16 %v1035
  %v5584 = vunpack.c.l.b16 %v1036
  %v5585 = vunpack.c.l.b16 %v1037
  %v5586 = vunpack.c.l.b16 %v1038
  %v5587 = vunpack.c.l.b16 %v1039
  %v5588 = vunpack.c.l.b16 %v1040
  %v5589 = vunpack.c.l.b16 %v1041
  %v5590 = vunpack.c.l.b16 %v1042
  %v5591 = vunpack.c.l.b16 %v1043
  %v5592 = vunpack.c.l.b16 %v1044
  %v5593 = vunpack.c.l.b16 %v1045
  %v5594 = vunpack.c.l.b16 %v1046
  %v5595 = vunpack.c.l.b16 %v1047
  %v5596 = vunpack.c.l.b16 %v1048
  %v5597 = vunpack.c.l.b16 %v1049
  %v5598 = vunpack.c.l.b16 %v1050
  %v5599 = vunpack.c.l.b16 %v1051
  %v5600 = vunpack.c.l.b16 %v1052
  %v5601 = vunpack.c.l.b16 %v1053
  %v5602 = vunpack.c.l.b16 %v1054
  %v5603 = vunpack.c.l.b16 %v1055
  %v5604 = vunpack.c.l.b16 %v1056
  %v5605 = vunpack.c.l.b16 %v1057
  %v5606 = vunpack.c.l.b16 %v1058
  %v5607 = vunpack.c.l.b16 %v1059
  %v5608 = vunpack.c.l.b16 %v1060
  %v5609 = vunpack.c.l.b16 %v1061
  %v5610 = vunpack.c.l.b16 %v1062
  %v5611 = vunpack.c.l.b16 %v1063
  %v5612 = vunpack.c.l.b16 %v1064
  %v5613 = vunpack.c.l.b16 %v1065
  %v5614 = vunpack.c.l.b16 %v1066
  %v5615 = vunpack.c.l.b16 %v1067
  %v5616 = vunpack.c.l.b16 %v1068
  %v5617 = vunpack.c.l.b16 %v1069
  %v5618 = vunpack.c.l.b16 %v1070
  %v5619 = vunpack.c.l.b16 %v1071
  %v5620 = vunpack.c.l.b16 %v1072
  %v5621 = vunpack.c.l.b16 %v1073
  %v5622 = vunpack.c.l.b16 %v1074
  %v5623 = vunpack.c.l.b16 %v1075
  %v5624 = vunpack.c.l.b16 %v1076
  %v5625 = vunpack.c.l.b16 %v1077
  %v5626 = vunpack.c.l.b16 %v1078
  %v5627 = vunpack.c.l.b16 %v1079
  %v5628 = vunpack.c.l.b16 %v1080
  %v5629 = vunpack.c.l.b16 %v1081
  %v5630 = vunpack.c.l.b16 %v1082
  %v5631 = vunpack.c.l.b16 %v1083
  %v5632 = vunpack.c.l.b16 %v1084
  %v5633 = vunpack.c.l.b16 %v1085
  %v5634 = vunpack.c.l.b16 %v1086
  %v5635 = vunpack.c.l.b16 %v1087
  %v5636 = vunpack.c.l.b16 %v1088
  %v5637 = vunpack.c.l.b16 %v1089
  %v5638 = vunpack.c.l.b16 %v1090
  %v5639 = vunpack.c.l.b16 %v1091
  %v5640 = vunpack.c.l.b16 %v1092
  %v5641 = vunpack.c.l.b16 %v1093
  %v5642 = vunpack.c.l.b16 %v1094
  %v5643 = vunpack.c.l.b16 %v1095
  %v5644 = vunpack.c.l.b16 %v1096
  %v5645 = vunpack.c.l.b16 %v1097
  %v5646 = vunpack.c.l.b16 %v1098
  %v5647 = vunpack.c.l.b16 %v1099
  %v5648 = vunpack.c.l.b16 %v1100
  %v5649 = vunpack.c.l.b16 %v1101
  %v5650 = vunpack.c.l.b16 %v1102
  %v5651 = vunpack.c.l.b16 %v1103
  %v5652 = vunpack.c.l.b16 %v1104
  %v5653 = vunpack.c.l.b16 %v1105
  %v5654 = vunpack.c.l.b16 %v1106
  %v5655 = vunpack.c.l.b16 %v1107
  %v5656 = vunpack.c.l.b16 %v1108
  %v5657 = vunpack.c.l.b16 %v1109
  %v5658 = vunpack.c.l.b16 %v1110
  %v5659 = vunpack.c.l.b16 %v1111
  %v5660 = vunpack.c.l.b16 %v1112
  %v5661 = vunpack.c.l.b16 %v1113
  %v5662 = vunpack.c.l.b16 %v1114
  %v5663 = vunpack.c.l.b16 %v1115
  %v5664 = vunpack.c.l.b16 %v1116
  %v5665 = vunpack.c.l.b16 %v1117
  %v5666 = vunpack.c.l.b16 %v1118
  %v5667 = vunpack.c.l.b16 %v1119
  %v5668 = vunpack.c.l.b16 %v1120
  %v5669 = vunpack.c.l.b16 %v1121
  %v5670 = vunpack.c.l.b16 %v1122
  %v5671 = vunpack.c.l.b16 %v1123
  %v5672 = vunpack.c.l.b16 %v1124
  %v5673 = vunpack.c.l.b16 %v1125
  %v5674 = vunpack.c.l.b16 %v1126
  %v5675 = vunpack.c.l.b16 %v1127
  %v5676 = vunpack.c.l.b16 %v1128
  %v5677 = vunpack.c.l.b16 %v1129
  %v5678 = vunpack.c.l.b16 %v1130
  %v5679 = vunpack.c.l.b16 %v1131
  %v5680 = vunpack.c.l.b16 %v1132
  %v5681 = vunpack.c.l.b16 %v1133
  %v5682 = vunpack.c.l.b16 %v1134
  %v5683 = vunpack.c.l.b16 %v1135
  %v5684 = vunpack.c.l.b16 %v1136
  %v5685 = vunpack.c.l.b16 %v1137
  %v5686 = vunpack.c.l.b16 %v1138
  %v5687 = vunpack.c.l.b16 %v1139
  %v5688 = vunpack.c.l.b16 %v1140
  %v5689 = vunpack.c.l.b16 %v1141
  %v5690 = vunpack.c.l.b16 %v1142
  %v5691 = vunpack.c.l.b16 %v1143
  %v5692 = vunpack.c.l.b16 %v1144
  %v5693 = vunpack.c.l.b16 %v1145
  %v5694 = vunpack.c.l.b16 %v1146
  %v5695 = vunpack.c.l.b16 %v1147
  %v5696 = vunpack.c.l.b16 %v1148
  %v5697 = vunpack.c.l.b16 %v1149
  %v5698 = vunpack.c.l.b16 %v1150
  %v5699 = vunpack.c.l.b16 %v1151
  %v5700 = vunpack.c.l.b16 %v1152
  %v5701 = vunpack.c.l.b16 %v1153
  %v5702 = vunpack.c.l.b16 %v1154
  %v5703 = vunpack.c.l.b16 %v1155
  %v5704 = vunpack.c.l.b16 %v1156
  %v5705 = vunpack.c.l.b16 %v1157
  %v5706 = vunpack.c.l.b16 %v1158
  %v5707 = vunpack.c.l.b16 %v1159
  %v5708 = vunpack.c.l.b16 %v1160
  %v5709 = vunpack.c.l.b16 %v1161
  %v5710 = vunpack.c.l.b16 %v1162
  %v5711 = vunpack.c.l.b16 %v1163
  %v5712 = vunpack.c.l.b16 %v1164
  %v5713 = vunpack.c.l.b16 %v1165
  %v5714 = vunpack.c.l.b16 %v1166
  %v5715 = vunpack.c.l.b16 %v1167
  %v5716 = vunpack.c.l.b16 %v1168
  %v5717 = vunpack.c.l.b16 %v1169
  %v5718 = vunpack.c.l.b16 %v1170
  %v5719 = vunpack.c.l.b16 %v1171
  %v5720 = vunpack.c.l.b16 %v1172
  %v5721 = vunpack.c.l.b16 %v1173
  %v5722 = vunpack.c.l.b16 %v1174
  %v5723 = vunpack.c.l.b16 %v1175
  %v5724 = vunpack.c.l.b16 %v1176
  %v5725 = vunpack.c.l.b16 %v1177
  %v5726 = vunpack.c.l.b16 %v1178
  %v5727 = vunpack.c.l.b16 %v1179
  %v5728 = vunpack.c.l.b16 %v1180
  %v5729 = vunpack.c.l.b16 %v1181
  %v5730 = vunpack.c.l.b16 %v1182
  %v5731 = vunpack.c.l.b16 %v1183
  %v5732 = vunpack.c.l.b16 %v1184
  %v5733 = vunpack.c.l.b16 %v1185
  %v5734 = vunpack.c.l.b16 %v1186
  %v5735 = vunpack.c.l.b16 %v1187
  %v5736 = vunpack.c.l.b16 %v1188
  %v5737 = vunpack.c.l.b16 %v1189
  %v5738 = vunpack.c.l.b16 %v1190
  %v5739 = vunpack.c.l.b16 %v1191
  %v5740 = vunpack.c.l.b16 %v1192
  %v5741 = vunpack.c.l.b16 %v1193
  %v5742 = vunpack.c.l.b16 %v1194
  %v5743 = vunpack.c.l.b16 %v1195
  %v5744 = vunpack.c.l.b16 %v1196
  %v5745 = vunpack.c.l.b16 %v1197
  %v5746 = vunpack.c.l.b16 %v1198
  %v5747 = vunpack.c.l.b16 %v1199
  %v5748 = vunpack.c.l.b16 %v1200
  %v5749 = vunpack.c.l.b16 %v1201
  %v5750 = vunpack.c.l.b16 %v1202
  %v5751 = vunpack.c.l.b16 %v1203
  %v5752 = vunpack.c.l.b16 %v1204
  %v5753 = vunpack.c.l.b16 %v1205
  %v5754 = vunpack.c.l.b16 %v1206
  %v5755 = vunpack.c.l.b16 %v1207
  %v5756 = vunpack.c.l.b16 %v1208
  %v5757 = vunpack.c.l.b16 %v1209
  %v5758 = vunpack.c.l.b16 %v1210
  %v5759 = vunpack.c.l.b16 %v1211
  %v5760 = vunpack.c.l.b16 %v1212
  %v5761 = vunpack.c.l.b16 %v1213
  %v5762 = vunpack.c.l.b16 %v1214
  %v5763 = vunpack.c.l.b16 %v1215
  %v5764 = vunpack.c.l.b16 %v1216
  %v5765 = vunpack.c.l.b16 %v1217
  %v5766 = vunpack.c.l.b16 %v1218
  %v5767 = vunpack.c.l.b16 %v1219
  %v5768 = vunpack.c.l.b16 %v1220
  %v5769 = vunpack.c.l.b16 %v1221
  %v5770 = vunpack.c.l.b16 %v1222
  %v5771 = vunpack.c.l.b16 %v1223
  %v5772 = vunpack.c.l.b16 %v1224
  %v5773 = vunpack.c.l.b16 %v1225
  %v5774 = vunpack.c.l.b16 %v1226
  %v5775 = vunpack.c.l.b16 %v1227
  %v5776 = vunpack.c.l.b16 %v1228
  %v5777 = vunpack.c.l.b16 %v1229
  %v5778 = vunpack.c.l.b16 %v1230
  %v5779 = vunpack.c.l.b16 %v1231
  %v5780 = vunpack.c.l.b16 %v1232
  %v5781 = vunpack.c.l.b16 %v1233
  %v5782 = vunpack.c.l.b16 %v1234
  %v5783 = vunpack.c.l.b16 %v1235
  %v5784 = vunpack.c.l.b16 %v1236
  %v5785 = vunpack.c.l.b16 %v1237
  %v5786 = vunpack.c.l.b16 %v1238
  %v5787 = vunpack.c.l.b16 %v1239
  %v5788 = vunpack.c.l.b16 %v1240
  %v5789 = vunpack.c.l.b16 %v1241
  %v5790 = vunpack.c.l.b16 %v1242
  %v5791 = vunpack.c.l.b16 %v1243
  %v5792 = vunpack.c.l.b16 %v1244
  %v5793 = vunpack.c.l.b16 %v1245
  %v5794 = vunpack.c.l.b16 %v1246
  %v5795 = vunpack.c.l.b16 %v1247
  %v5796 = vunpack.c.l.b16 %v1248
  %v5797 = vunpack.c.l.b16 %v1249
  %v5798 = vunpack.c.l.b16 %v1250
  %v5799 = vunpack.c.l.b16 %v1251
  %v5800 = vunpack.c.l.b16 %v1252
  %v5801 = vunpack.c.l.b16 %v1253
  %v5802 = vunpack.c.l.b16 %v1254
  %v5803 = vunpack.c.l.b16 %v1255
  %v5804 = vunpack.c.l.b16 %v1256
  %v5805 = vunpack.c.l.b16 %v1257
  %v5806 = vunpack.c.l.b16 %v1258
  %v5807 = vunpack.c.l.b16 %v1259
  %v5808 = vunpack.c.l.b16 %v1260
  %v5809 = vunpack.c.l.b16 %v1261
  %v5810 = vunpack.c.l.b16 %v1262
  %v5811 = vunpack.c.l.b16 %v1263
  %v5812 = vunpack.c.l.b16 %v1264
  %v5813 = vunpack.c.l.b16 %v1265
  %v5814 = vunpack.c.l.b16 %v1266
  %v5815 = vunpack.c.l.b16 %v1267
  %v5816 = vunpack.c.l.b16 %v1268
  %v5817 = vunpack.c.l.b16 %v1269
  %v5818 = vunpack.c.l.b16 %v1270
  %v5819 = vunpack.c.l.b16 %v1271
  %v5820 = vunpack.c.l.b16 %v1272
  %v5821 = vunpack.c.l.b16 %v1273
  %v5822 = vunpack.c.l.b16 %v1274
  %v5823 = vunpack.c.l.b16 %v1275
  %v5824 = vunpack.c.l.b16 %v1276
  %v5825 = vunpack.c.l.b16 %v1277
  %v5826 = vunpack.c.l.b16 %v1278
  %v5827 = vunpack.c.l.b16 %v1279
  %v5828 = vunpack.c.l.b16 %v1280
  %v5829 = vunpack.c.l.b16 %v1281
  %v5830 = vunpack.c.l.b16 %v1282
  %v5831 = vunpack.c.l.b16 %v1283
  %v5832 = vunpack.c.l.b16 %v1284
  %v5833 = vunpack.c.l.b16 %v1285
  %v5834 = vunpack.c.l.b16 %v1286
  %v5835 = vunpack.c.l.b16 %v1287
  %v5836 = vunpack.c.l.b16 %v1288
  %v5837 = vunpack.c.l.b16 %v1289
  %v5838 = vunpack.c.l.b16 %v1290
  %v5839 = vunpack.c.l.b16 %v1291
  %v5840 = vunpack.c.l.b16 %v1292
  %v5841 = vunpack.c.l.b16 %v1293
  %v5842 = vunpack.c.l.b16 %v1294
  %v5843 = vunpack.c.l.b16 %v1295
  %v5844 = vunpack.c.l.b16 %v1296
  %v5845 = vunpack.c.l.b16 %v1297
  %v5846 = vunpack.c.l.b16 %v1298
  %v5847 = vunpack.c.l.b16 %v1299
  %v5848 = vunpack.c.l.b16 %v1300
  %v5849 = vunpack.c.l.b16 %v1301
  %v5850 = vunpack.c.l.b16 %v1302
  %v5851 = vunpack.c.l.b16 %v1303
  %v5852 = vunpack.c.l.b16 %v1304
  %v5853 = vunpack.c.l.b16 %v1305
  %v5854 = vunpack.c.l.b16 %v1306
  %v5855 = vunpack.c.l.b16 %v1307
  %v5856 = vunpack.c.l.b16 %v1308
  %v5857 = vunpack.c.l.b16 %v1309
  %v5858 = vunpack.c.l.b16 %v1310
  %v5859 = vunpack.c.l.b16 %v1311
  %v5860 = vunpack.c.l.b16 %v1312
  %v5861 = vunpack.c.l.b16 %v1313
  %v5862 = vunpack.c.l.b16 %v1314
  %v5863 = vunpack.c.l.b16 %v1315
  %v5864 = vunpack.c.l.b16 %v1316
  %v5865 = vunpack.c.l.b16 %v1317
  %v5866 = vunpack.c.l.b16 %v1318
  %v5867 = vunpack.c.l.b16 %v1319
  %v5868 = vunpack.c.l.b16 %v1320
  %v5869 = vunpack.c.l.b16 %v1321
  %v5870 = vunpack.c.l.b16 %v1322
  %v5871 = vunpack.c.l.b16 %v1323
  %v5872 = vunpack.c.l.b16 %v1324
  %v5873 = vunpack.c.l.b16 %v1325
  %v5874 = vunpack.c.l.b16 %v1326
  %v5875 = vunpack.c.l.b16 %v1327
  %v5876 = vunpack.c.l.b16 %v1328
  %v5877 = vunpack.c.l.b16 %v1329
  %v5878 = vunpack.c.l.b16 %v1330
  %v5879 = vunpack.c.l.b16 %v1331
  %v5880 = vunpack.c.l.b16 %v1332
  %v5881 = vunpack.c.l.b16 %v1333
  %v5882 = vunpack.c.l.b16 %v1334
  %v5883 = vunpack.c.l.b16 %v1335
  %v5884 = vunpack.c.l.b16 %v1336
  %v5885 = vunpack.c.l.b16 %v1337
  %v5886 = vunpack.c.l.b16 %v1338
  %v5887 = vunpack.c.l.b16 %v1339
  %v5888 = vunpack.c.l.b16 %v1340
  %v5889 = vunpack.c.l.b16 %v1341
  %v5890 = vunpack.c.l.b16 %v1342
  %v5891 = vunpack.c.l.b16 %v1343
  %v5892 = vunpack.c.l.b16 %v1344
  %v5893 = vunpack.c.l.b16 %v1345
  %v5894 = vunpack.c.l.b16 %v1346
  %v5895 = vunpack.c.l.b16 %v1347
  %v5896 = vunpack.c.l.b16 %v1348
  %v5897 = vunpack.c.l.b16 %v1349
  %v5898 = vunpack.c.l.b16 %v1350
  %v5899 = vunpack.c.l.b16 %v1351
  %v5900 = vunpack.c.l.b16 %v1352
  %v5901 = vunpack.c.l.b16 %v1353
  %v5902 = vunpack.c.l.b16 %v1354
  %v5903 = vunpack.c.l.b16 %v1355
  %v5904 = vunpack.c.l.b16 %v1356
  %v5905 = vunpack.c.l.b16 %v1357
  %v5906 = vunpack.c.l.b16 %v1358
  %v5907 = vunpack.c.l.b16 %v1359
  %v5908 = vunpack.c.l.b16 %v1360
  %v5909 = vunpack.c.l.b16 %v1361
  %v5910 = vunpack.c.l.b16 %v1362
  %v5911 = vunpack.c.l.b16 %v1363
  %v5912 = vunpack.c.l.b16 %v1364
  %v5913 = vunpack.c.l.b16 %v1365
  %v5914 = vunpack.c.l.b16 %v1366
  %v5915 = vunpack.c.l.b16 %v1367
  %v5916 = vunpack.c.l.b16 %v1368
  %v5917 = vunpack.c.l.b16 %v1369
  %v5918 = vunpack.c.l.b16 %v1370
  %v5919 = vunpack.c.l.b16 %v1371
  %v5920 = vunpack.c.l.b16 %v1372
  %v5921 = vunpack.c.l.b16 %v1373
  %v5922 = vunpack.c.l.b16 %v1374
  %v5923 = vunpack.c.l.b16 %v1375
  %v5924 = vunpack.c.l.b16 %v1376
  %v5925 = vunpack.c.l.b16 %v1377
  %v5926 = vunpack.c.l.b16 %v1378
  %v5927 = vunpack.c.l.b16 %v1379
  %v5928 = vunpack.c.l.b16 %v1380
  %v5929 = vunpack.c.l.b16 %v1381
  %v5930 = vunpack.c.l.b16 %v1382
  %v5931 = vunpack.c.l.b16 %v1383
  %v5932 = vunpack.c.l.b16 %v1384
  %v5933 = vunpack.c.l.b16 %v1385
  %v5934 = vunpack.c.l.b16 %v1386
  %v5935 = vunpack.c.l.b16 %v1387
  %v5936 = vunpack.c.l.b16 %v1388
  %v5937 = vunpack.c.l.b16 %v1389
  %v5938 = vunpack.c.l.b16 %v1390
  %v5939 = vunpack.c.l.b16 %v1391
  %v5940 = vunpack.c.l.b16 %v1392
  %v5941 = vunpack.c.l.b16 %v1393
  %v5942 = vunpack.c.l.b16 %v1394
  %v5943 = vunpack.c.l.b16 %v1395
  %v5944 = vunpack.c.l.b16 %v1396
  %v5945 = vunpack.c.l.b16 %v1397
  %v5946 = vunpack.c.l.b16 %v1398
  %v5947 = vunpack.c.l.b16 %v1399
  %v5948 = vunpack.c.l.b16 %v1400
  %v5949 = vunpack.c.l.b16 %v1401
  %v5950 = vunpack.c.l.b16 %v1402
  %v5951 = vunpack.c.l.b16 %v1403
  %v5952 = vunpack.c.l.b16 %v1404
  %v5953 = vunpack.c.l.b16 %v1405
  %v5954 = vunpack.c.l.b16 %v1406
  %v5955 = vunpack.c.l.b16 %v1407
  %v5956 = vunpack.c.l.b16 %v1408
  %v5957 = vunpack.c.l.b16 %v1409
  %v5958 = vunpack.c.l.b16 %v1410
  %v5959 = vunpack.c.l.b16 %v1411
  %v5960 = vunpack.c.l.b16 %v1412
  %v5961 = vunpack.c.l.b16 %v1413
  %v5962 = vunpack.c.l.b16 %v1414
  %v5963 = vunpack.c.l.b16 %v1415
  %v5964 = vunpack.c.l.b16 %v1416
  %v5965 = vunpack.c.l.b16 %v1417
  %v5966 = vunpack.c.l.b16 %v1418
  %v5967 = vunpack.c.l.b16 %v1419
  %v5968 = vunpack.c.l.b16 %v1420
  %v5969 = vunpack.c.l.b16 %v1421
  %v5970 = vunpack.c.l.b16 %v1422
  %v5971 = vunpack.c.l.b16 %v1423
  %v5972 = vunpack.c.l.b16 %v1424
  %v5973 = vunpack.c.l.b16 %v1425
  %v5974 = vunpack.c.l.b16 %v1426
  %v5975 = vunpack.c.l.b16 %v1427
  %v5976 = vunpack.c.l.b16 %v1428
  %v5977 = vunpack.c.l.b16 %v1429
  %v5978 = vunpack.c.l.b16 %v1430
  %v5979 = vunpack.c.l.b16 %v1431
  %v5980 = vunpack.c.l.b16 %v1432
  %v5981 = vunpack.c.l.b16 %v1433
  %v5982 = vunpack.c.l.b16 %v1434
  %v5983 = vunpack.c.l.b16 %v1435
  %v5984 = vunpack.c.l.b16 %v1436
  %v5985 = vunpack.c.l.b16 %v1437
  %v5986 = vunpack.c.l.b16 %v1438
  %v5987 = vunpack.c.l.b16 %v1439
  %v5988 = vunpack.c.l.b16 %v1440
  %v5989 = vunpack.c.l.b16 %v1441
  %v5990 = vunpack.c.l.b16 %v1442
  %v5991 = vunpack.c.l.b16 %v1443
  %v5992 = vunpack.c.l.b16 %v1444
  %v5993 = vunpack.c.l.b16 %v1445
  %v5994 = vunpack.c.l.b16 %v1446
  %v5995 = vunpack.c.l.b16 %v1447
  %v5996 = vunpack.c.l.b16 %v1448
  %v5997 = vunpack.c.l.b16 %v1449
  %v5998 = vunpack.c.l.b16 %v1450
  %v5999 = vunpack.c.l.b16 %v1451
  %v6000 = vunpack.c.l.b16 %v1452
  %v6001 = vunpack.c.l.b16 %v1453
  %v6002 = vunpack.c.l.b16 %v1454
  %v6003 = vunpack.c.l.b16 %v1455
  %v6004 = vunpack.c.l.b16 %v1456
  %v6005 = vunpack.c.l.b16 %v1457
  %v6006 = vunpack.c.l.b16 %v1458
  %v6007 = vunpack.c.l.b16 %v1459
  %v6008 = vunpack.c.l.b16 %v1460
  %v6009 = vunpack.c.l.b16 %v1461
  %v6010 = vunpack.c.l.b16 %v1462
  %v6011 = vunpack.c.l.b16 %v1463
  %v6012 = vunpack.c.l.b16 %v1464
  %v6013 = vunpack.c.l.b16 %v1465
  %v6014 = vunpack.c.l.b16 %v1466
  %v6015 = vunpack.c.l.b16 %v1467
  %v6016 = vunpack.c.l.b16 %v1468
  %v6017 = vunpack.c.l.b16 %v1469
  %v6018 = vunpack.c.l.b16 %v1470
  %v6019 = vunpack.c.l.b16 %v1471
  %v6020 = vunpack.c.l.b16 %v1472
  %v6021 = vunpack.c.l.b16 %v1473
  %v6022 = vunpack.c.l.b16 %v1474
  %v6023 = vunpack.c.l.b16 %v1475
  %v6024 = vunpack.c.l.b16 %v1476
  %v6025 = vunpack.c.l.b16 %v1477
  %v6026 = vunpack.c.l.b16 %v1478
  %v6027 = vunpack.c.l.b16 %v1479
  %v6028 = vunpack.c.l.b16 %v1480
  %v6029 = vunpack.c.l.b16 %v1481
  %v6030 = vunpack.c.l.b16 %v1482
  %v6031 = vunpack.c.l.b16 %v1483
  %v6032 = vunpack.c.l.b16 %v1484
  %v6033 = vunpack.c.l.b16 %v1485
  %v6034 = vunpack.c.l.b16 %v1486
  %v6035 = vunpack.c.l.b16 %v1487
  %v6036 = vunpack.c.l.b16 %v1488
  %v6037 = vunpack.c.l.b16 %v1489
  %v6038 = vunpack.c.l.b16 %v1490
  %v6039 = vunpack.c.l.b16 %v1491
  %v6040 = vunpack.c.l.b16 %v1492
  %v6041 = vunpack.c.l.b16 %v1493
  %v6042 = vunpack.c.l.b16 %v1494
  %v6043 = vunpack.c.l.b16 %v1495
  %v6044 = vunpack.c.l.b16 %v1496
  %v6045 = vunpack.c.l.b16 %v1497
  %v6046 = vunpack.c.l.b16 %v1498
  %v6047 = vunpack.c.l.b16 %v1499
  %v6048 = vunpack.c.l.b16 %v1500
  %v6049 = vunpack.c.l.b16 %v1501
  %v6050 = vunpack.c.l.b16 %v1502
  %v6051 = vunpack.c.l.b16 %v1503
  %v6052 = vunpack.c.l.b16 %v1504
  %v6053 = vunpack.c.l.b16 %v1505
  %v6054 = vunpack.c.l.b16 %v1506
  %v6055 = vunpack.c.l.b16 %v1507
  %v6056 = vunpack.c.l.b16 %v1508
  %v6057 = vunpack.c.l.b16 %v1509
  %v6058 = vunpack.c.l.b16 %v1510
  %v6059 = vunpack.c.l.b16 %v1511
  %v6060 = vunpack.c.l.b16 %v1512
  %v6061 = vunpack.c.l.b16 %v1513
  %v6062 = vunpack.c.l.b16 %v1514
  %v6063 = vunpack.c.l.b16 %v1515
  %v6064 = vunpack.c.l.b16 %v1516
  %v6065 = vunpack.c.l.b16 %v1517
  %v6066 = vunpack.c.l.b16 %v1518
  %v6067 = vunpack.c.l.b16 %v1519
  %v6068 = vunpack.c.l.b16 %v1520
  %v6069 = vunpack.c.l.b16 %v1521
  %v6070 = vunpack.c.l.b16 %v1522
  %v6071 = vunpack.c.l.b16 %v1523
  %v6072 = vunpack.c.l.b16 %v1524
  %v6073 = vunpack.c.l.b16 %v1525
  %v6074 = vunpack.c.l.b16 %v1526
  %v6075 = vunpack.c.l.b16 %v1527
  %v6076 = vunpack.c.l.b16 %v1528
  %v6077 = vunpack.c.l.b16 %v1529
  %v6078 = vunpack.c.l.b16 %v1530
  %v6079 = vunpack.c.l.b16 %v1531
  %v6080 = vunpack.c.l.b16 %v1532
  %v6081 = vunpack.c.l.b16 %v1533
  %v6082 = vunpack.c.l.b16 %v1534
  %v6083 = vunpack.c.l.b16 %v1535
  %v6084 = vunpack.c.l.b16 %v1536
  %v6085 = vunpack.c.l.b16 %v1537
  %v6086 = vunpack.c.l.b16 %v1538
  %v6087 = vunpack.c.l.b16 %v1539
  %v6088 = vunpack.c.l.b16 %v1540
  %v6089 = vunpack.c.l.b16 %v1541
  %v6090 = vunpack.c.l.b16 %v1542
  %v6091 = vunpack.c.l.b16 %v1543
  %v6092 = vunpack.c.l.b16 %v1544
  %v6093 = vunpack.c.l.b16 %v1545
  %v6094 = vunpack.c.l.b16 %v1546
  %v6095 = vunpack.c.l.b16 %v1547
  %v6096 = vunpack.c.l.b16 %v1548
  %v6097 = vunpack.c.l.b16 %v1549
  %v6098 = vunpack.c.l.b16 %v1550
  %v6099 = vunpack.c.l.b16 %v1551
  %v6100 = vunpack.c.l.b16 %v1552
  %v6101 = vunpack.c.l.b16 %v1553
  %v6102 = vunpack.c.l.b16 %v1554
  %v6103 = vunpack.c.l.b16 %v1555
  %v6104 = vunpack.c.l.b16 %v1556
  %v6105 = vunpack.c.l.b16 %v1557
  %v6106 = vunpack.c.l.b16 %v1558
  %v6107 = vunpack.c.l.b16 %v1559
  %v6108 = vunpack.c.l.b16 %v1560
  %v6109 = vunpack.c.l.b16 %v1561
  %v6110 = vunpack.c.l.b16 %v1562
  %v6111 = vunpack.c.l.b16 %v1563
  %v6112 = vunpack.c.l.b16 %v1564
  %v6113 = vunpack.c.l.b16 %v1565
  %v6114 = vunpack.c.l.b16 %v1566
  %v6115 = vunpack.c.l.b16 %v1567
  %v6116 = vunpack.c.l.b16 %v1568
  %v6117 = vunpack.c.l.b16 %v1569
  %v6118 = vunpack.c.l.b16 %v1570
  %v6119 = vunpack.c.l.b16 %v1571
  %v6120 = vunpack.c.l.b16 %v1572
  %v6121 = vunpack.c.l.b16 %v1573
  %v6122 = vunpack.c.l.b16 %v1574
  %v6123 = vunpack.c.l.b16 %v1575
  %v6124 = vunpack.c.l.b16 %v1576
  %v6125 = vunpack.c.l.b16 %v1577
  %v6126 = vunpack.c.l.b16 %v1578
  %v6127 = vunpack.c.l.b16 %v1579
  %v6128 = vunpack.c.l.b16 %v1580
  %v6129 = vunpack.c.l.b16 %v1581
  %v6130 = vunpack.c.l.b16 %v1582
  %v6131 = vunpack.c.l.b16 %v1583
  %v6132 = vunpack.c.l.b16 %v1584
  %v6133 = vunpack.c.l.b16 %v1585
  %v6134 = vunpack.c.l.b16 %v1586
  %v6135 = vunpack.c.l.b16 %v1587
  %v6136 = vunpack.c.l.b16 %v1588
  %v6137 = vunpack.c.l.b16 %v1589
  %v6138 = vunpack.c.l.b16 %v1590
  %v6139 = vunpack.c.l.b16 %v1591
  %v6140 = vunpack.c.l.b16 %v1592
  %v6141 = vunpack.c.l.b16 %v1593
  %v6142 = vunpack.c.l.b16 %v1594
  %v6143 = vunpack.c.l.b16 %v1595
  %v6144 = vunpack.c.l.b16 %v1596
  %v6145 = vunpack.c.l.b16 %v1597
  %v6146 = vunpack.c.l.b16 %v1598
  %v6147 = vunpack.c.l.b16 %v1599
  %v6148 = vunpack.c.l.b16 %v1600
  %v6149 = vunpack.c.l.b16 %v1601
  %v6150 = vunpack.c.l.b16 %v1602
  %v6151 = vunpack.c.l.b16 %v1603
  %v6152 = vunpack.c.l.b16 %v1604
  %v6153 = vunpack.c.l.b16 %v1605
  %v6154 = vunpack.c.l.b16 %v1606
  %v6155 = vunpack.c.l.b16 %v1607
  %v6156 = vunpack.c.l.b16 %v1608
  %v6157 = vunpack.c.l.b16 %v1609
  %v6158 = vunpack.c.l.b16 %v1610
  %v6159 = vunpack.c.l.b16 %v1611
  %v6160 = vunpack.c.l.b16 %v1612
  %v6161 = vunpack.c.l.b16 %v1613
  %v6162 = vunpack.c.l.b16 %v1614
  %v6163 = vunpack.c.l.b16 %v1615
  %v6164 = vunpack.c.l.b16 %v1616
  %v6165 = vunpack.c.l.b16 %v1617
  %v6166 = vunpack.c.l.b16 %v1618
  %v6167 = vunpack.c.l.b16 %v1619
  %v6168 = vunpack.c.l.b16 %v1620
  %v6169 = vunpack.c.l.b16 %v1621
  %v6170 = vunpack.c.l.b16 %v1622
  %v6171 = vunpack.c.l.b16 %v1623
  %v6172 = vunpack.c.l.b16 %v1624
  %v6173 = vunpack.c.l.b16 %v1625
  %v6174 = vunpack.c.l.b16 %v1626
  %v6175 = vunpack.c.l.b16 %v1627
  %v6176 = vunpack.c.l.b16 %v1628
  %v6177 = vunpack.c.l.b16 %v1629
  %v6178 = vunpack.c.l.b16 %v1630
  %v6179 = vunpack.c.l.b16 %v1631
  %v6180 = vunpack.c.l.b16 %v1632
  %v6181 = vunpack.c.l.b16 %v1633
  %v6182 = vunpack.c.l.b16 %v1634
  %v6183 = vunpack.c.l.b16 %v1635
  %v6184 = vunpack.c.l.b16 %v1636
  %v6185 = vunpack.c.l.b16 %v1637
  %v6186 = vunpack.c.l.b16 %v1638
  %v6187 = vunpack.c.l.b16 %v1639
  %v6188 = vunpack.c.l.b16 %v1640
  %v6189 = vunpack.c.l.b16 %v1641
  %v6190 = vunpack.c.l.b16 %v1642
  %v6191 = vunpack.c.l.b16 %v1643
  %v6192 = vunpack.c.l.b16 %v1644
  %v6193 = vunpack.c.l.b16 %v1645
  %v6194 = vunpack.c.l.b16 %v1646
  %v6195 = vunpack.c.l.b16 %v1647
  %v6196 = vunpack.c.l.b16 %v1648
  %v6197 = vunpack.c.l.b16 %v1649
  %v6198 = vunpack.c.l.b16 %v1650
  %v6199 = vunpack.c.l.b16 %v1651
  %v6200 = vunpack.c.l.b16 %v1652
  %v6201 = vunpack.c.l.b16 %v1653
  %v6202 = vunpack.c.l.b16 %v1654
  %v6203 = vunpack.c.l.b16 %v1655
  %v6204 = vunpack.c.l.b16 %v1656
  %v6205 = vunpack.c.l.b16 %v1657
  %v6206 = vunpack.c.l.b16 %v1658
  %v6207 = vunpack.c.l.b16 %v1659
  %v6208 = vunpack.c.l.b16 %v1660
  %v6209 = vunpack.c.l.b16 %v1661
  %v6210 = vunpack.c.l.b16 %v1662
  %v6211 = vunpack.c.l.b16 %v1663
  %v6212 = vunpack.c.l.b16 %v1664
  %v6213 = vunpack.c.l.b16 %v1665
  %v6214 = vunpack.c.l.b16 %v1666
  %v6215 = vunpack.c.l.b16 %v1667
  %v6216 = vunpack.c.l.b16 %v1668
  %v6217 = vunpack.c.l.b16 %v1669
  %v6218 = vunpack.c.l.b16 %v1670
  %v6219 = vunpack.c.l.b16 %v1671
  %v6220 = vunpack.c.l.b16 %v1672
  %v6221 = vunpack.c.l.b16 %v1673
  %v6222 = vunpack.c.l.b16 %v1674
  %v6223 = vunpack.c.l.b16 %v1675
  %v6224 = vunpack.c.l.b16 %v1676
  %v6225 = vunpack.c.l.b16 %v1677
  %v6226 = vunpack.c.l.b16 %v1678
  %v6227 = vunpack.c.l.b16 %v1679
  %v6228 = vunpack.c.l.b16 %v1680
  %v6229 = vunpack.c.l.b16 %v1681
  %v6230 = vunpack.c.l.b16 %v1682
  %v6231 = vunpack.c.l.b16 %v1683
  %v6232 = vunpack.c.l.b16 %v1684
  %v6233 = vunpack.c.l.b16 %v1685
  %v6234 = vunpack.c.l.b16 %v1686
  %v6235 = vunpack.c.l.b16 %v1687
  %v6236 = vunpack.c.l.b16 %v1688
  %v6237 = vunpack.c.l.b16 %v1689
  %v6238 = vunpack.c.l.b16 %v1690
  %v6239 = vunpack.c.l.b16 %v1691
  %v6240 = vunpack.c.l.b16 %v1692
  %v6241 = vunpack.c.l.b16 %v1693
  %v6242 = vunpack.c.l.b16 %v1694
  %v6243 = vunpack.c.l.b16 %v1695
  %v6244 = vunpack.c.l.b16 %v1696
  %v6245 = vunpack.c.l.b16 %v1697
  %v6246 = vunpack.c.l.b16 %v1698
  %v6247 = vunpack.c.l.b16 %v1699
  %v6248 = vunpack.c.l.b16 %v1700
  %v6249 = vunpack.c.l.b16 %v1701
  %v6250 = vunpack.c.l.b16 %v1702
  %v6251 = vunpack.c.l.b16 %v1703
  %v6252 = vunpack.c.l.b16 %v1704
  %v6253 = vunpack.c.l.b16 %v1705
  %v6254 = vunpack.c.l.b16 %v1706
  %v6255 = vunpack.c.l.b16 %v1707
  %v6256 = vunpack.c.l.b16 %v1708
  %v6257 = vunpack.c.l.b16 %v1709
  %v6258 = vunpack.c.l.b16 %v1710
  %v6259 = vunpack.c.l.b16 %v1711
  %v6260 = vunpack.c.l.b16 %v1712
  %v6261 = vunpack.c.l.b16 %v1713
  %v6262 = vunpack.c.l.b16 %v1714
  %v6263 = vunpack.c.l.b16 %v1715
  %v6264 = vunpack.c.l.b16 %v1716
  %v6265 = vunpack.c.l.b16 %v1717
  %v6266 = vunpack.c.l.b16 %v1718
  %v6267 = vunpack.c.l.b16 %v1719
  %v6268 = vunpack.c.l.b16 %v1720
  %v6269 = vunpack.c.l.b16 %v1721
  %v6270 = vunpack.c.l.b16 %v1722
  %v6271 = vunpack.c.l.b16 %v1723
  %v6272 = vunpack.c.l.b16 %v1724
  %v6273 = vunpack.c.l.b16 %v1725
  %v6274 = vunpack.c.l.b16 %v1726
  %v6275 = vunpack.c.l.b16 %v1727
  %v6276 = vunpack.c.l.b16 %v1728
  %v6277 = vunpack.c.l.b16 %v1729
  %v6278 = vunpack.c.l.b16 %v1730
  %v6279 = vunpack.c.l.b16 %v1731
  %v6280 = vunpack.c.l.b16 %v1732
  %v6281 = vunpack.c.l.b16 %v1733
  %v6282 = vunpack.c.l.b16 %v1734
  %v6283 = vunpack.c.l.b16 %v1735
  %v6284 = vunpack.c.l.b16 %v1736
  %v6285 = vunpack.c.l.b16 %v1737
  %v6286 = vunpack.c.l.b16 %v1738
  %v6287 = vunpack.c.l.b16 %v1739
  %v6288 = vunpack.c.l.b16 %v1740
  %v6289 = vunpack.c.l.b16 %v1741
  %v6290 = vunpack.c.l.b16 %v1742
  %v6291 = vunpack.c.l.b16 %v1743
  %v6292 = vunpack.c.l.b16 %v1744
  %v6293 = vunpack.c.l.b16 %v1745
  %v6294 = vunpack.c.l.b16 %v1746
  %v6295 = vunpack.c.l.b16 %v1747
  %v6296 = vunpack.c.l.b16 %v1748
  %v6297 = vunpack.c.l.b16 %v1749
  %v6298 = vunpack.c.l.b16 %v1750
  %v6299 = vunpack.c.l.b16 %v1751
  %v6300 = vunpack.c.l.b16 %v1752
  %v6301 = vunpack.c.l.b16 %v1753
  %v6302 = vunpack.c.l.b16 %v1754
  %v6303 = vunpack.c.l.b16 %v1755
  %v6304 = vunpack.c.l.b16 %v1756
  %v6305 = vunpack.c.l.b16 %v1757
  %v6306 = vunpack.c.l.b16 %v1758
  %v6307 = vunpack.c.l.b16 %v1759
  %v6308 = vunpack.c.l.b16 %v1760
  %v6309 = vunpack.c.l.b16 %v1761
  %v6310 = vunpack.c.l.b16 %v1762
  %v6311 = vunpack.c.l.b16 %v1763
  %v6312 = vunpack.c.l.b16 %v1764
  %v6313 = vunpack.c.l.b16 %v1765
  %v6314 = vunpack.c.l.b16 %v1766
  %v6315 = vunpack.c.l.b16 %v1767
  %v6316 = vunpack.c.l.b16 %v1768
  %v6317 = vunpack.c.l.b16 %v1769
  %v6318 = vunpack.c.l.b16 %v1770
  %v6319 = vunpack.c.l.b16 %v1771
  %v6320 = vunpack.c.l.b16 %v1772
  %v6321 = vunpack.c.l.b16 %v1773
  %v6322 = vunpack.c.l.b16 %v1774
  %v6323 = vunpack.c.l.b16 %v1775
  %v6324 = vunpack.c.l.b16 %v1776
  %v6325 = vunpack.c.l.b16 %v1777
  %v6326 = vunpack.c.l.b16 %v1778
  %v6327 = vunpack.c.l.b16 %v1779
  %v6328 = vunpack.c.l.b16 %v1780
  %v6329 = vunpack.c.l.b16 %v1781
  %v6330 = vunpack.c.l.b16 %v1782
  %v6331 = vunpack.c.l.b16 %v1783
  %v6332 = vunpack.c.l.b16 %v1784
  %v6333 = vunpack.c.l.b16 %v1785
  %v6334 = vunpack.c.l.b16 %v1786
  %v6335 = vunpack.c.l.b16 %v1787
  %v6336 = vunpack.c.l.b16 %v1788
  %v6337 = vunpack.c.l.b16 %v1789
  %v6338 = vunpack.c.l.b16 %v1790
  %v6339 = vunpack.c.l.b16 %v1791
  %v6340 = vunpack.c.l.b16 %v1792
  %v6341 = vunpack.c.l.b16 %v1793
  %v6342 = vunpack.c.l.b16 %v1794
  %v6343 = vunpack.c.l.b16 %v1795
  %v6344 = vunpack.c.l.b16 %v1796
  %v6345 = vunpack.c.l.b16 %v1797
  %v6346 = vunpack.c.l.b16 %v1798
  %v6347 = vunpack.c.l.b16 %v1799
  %v6348 = vunpack.c.l.b16 %v1800
  %v6349 = vunpack.c.l.b16 %v1801
  %v6350 = vunpack.c.l.b16 %v1802
  %v6351 = vunpack.c.l.b16 %v1803
  %v6352 = vunpack.c.l.b16 %v1804
  %v6353 = vunpack.c.l.b16 %v1805
  %v6354 = vunpack.c.l.b16 %v1806
  %v6355 = vunpack.c.l.b16 %v1807
  %v6356 = vunpack.c.l.b16 %v1808
  %v6357 = vunpack.c.l.b16 %v1809
  %v6358 = vunpack.c.l.b16 %v1810
  %v6359 = vunpack.c.l.b16 %v1811
  %v6360 = vunpack.c.l.b16 %v1812
  %v6361 = vunpack.c.l.b16 %v1813
  %v6362 = vunpack.c.l.b16 %v1814
  %v6363 = vunpack.c.l.b16 %v1815
  %v6364 = vunpack.c.l.b16 %v1816
  %v6365 = vunpack.c.l.b16 %v1817
  %v6366 = vunpack.c.l.b16 %v1818
  %v6367 = vunpack.c.l.b16 %v1819
  %v6368 = vunpack.c.l.b16 %v1820
  %v6369 = vunpack.c.l.b16 %v1821
  %v6370 = vunpack.c.l.b16 %v1822
  %v6371 = vunpack.c.l.b16 %v1823
  %v6372 = vunpack.c.l.b16 %v1824
  %v6373 = vunpack.c.l.b16 %v1825
  %v6374 = vunpack.c.l.b16 %v1826
  %v6375 = vunpack.c.l.b16 %v1827
  %v6376 = vunpack.c.l.b16 %v1828
  %v6377 = vunpack.c.l.b16 %v1829
  %v6378 = vunpack.c.l.b16 %v1830
  %v6379 = vunpack.c.l.b16 %v1831
  %v6380 = vunpack.c.l.b16 %v1832
  %v6381 = vunpack.c.l.b16 %v1833
  %v6382 = vunpack.c.l.b16 %v1834
  %v6383 = vunpack.c.l.b16 %v1835
  %v6384 = vunpack.c.l.b16 %v1836
  %v6385 = vunpack.c.l.b16 %v1837
  %v6386 = vunpack.c.l.b16 %v1838
  %v6387 = vunpack.c.l.b16 %v1839
  %v6388 = vunpack.c.l.b16 %v1840
  %v6389 = vunpack.c.l.b16 %v1841
  %v6390 = vunpack.c.l.b16 %v1842
  %v6391 = vunpack.c.l.b16 %v1843
  %v6392 = vunpack.c.l.b16 %v1844
  %v6393 = vunpack.c.l.b16 %v1845
  %v6394 = vunpack.c.l.b16 %v1846
  %v6395 = vunpack.c.l.b16 %v1847
  %v6396 = vunpack.c.l.b16 %v1848
  %v6397 = vunpack.c.l.b16 %v1849
  %v6398 = vunpack.c.l.b16 %v1850
  %v6399 = vunpack.c.l.b16 %v1851
  %v6400 = vunpack.c.l.b16 %v1852
  %v6401 = vunpack.c.l.b16 %v1853
  %v6402 = vunpack.c.l.b16 %v1854
  %v6403 = vunpack.c.l.b16 %v1855
  %v6404 = vunpack.c.l.b16 %v1856
  %v6405 = vunpack.c.l.b16 %v1857
  %v6406 = vunpack.c.l.b16 %v1858
  %v6407 = vunpack.c.l.b16 %v1859
  %v6408 = vunpack.c.l.b16 %v1860
  %v6409 = vunpack.c.l.b16 %v1861
  %v6410 = vunpack.c.l.b16 %v1862
  %v6411 = vunpack.c.l.b16 %v1863
  %v6412 = vunpack.c.l.b16 %v1864
  %v6413 = vunpack.c.l.b16 %v1865
  %v6414 = vunpack.c.l.b16 %v1866
  %v6415 = vunpack.c.l.b16 %v1867
  %v6416 = vunpack.c.l.b16 %v1868
  %v6417 = vunpack.c.l.b16 %v1869
  %v6418 = vunpack.c.l.b16 %v1870
  %v6419 = vunpack.c.l.b16 %v1871
  %v6420 = vunpack.c.l.b16 %v1872
  %v6421 = vunpack.c.l.b16 %v1873
  %v6422 = vunpack.c.l.b16 %v1874
  %v6423 = vunpack.c.l.b16 %v1875
  %v6424 = vunpack.c.l.b16 %v1876
  %v6425 = vunpack.c.l.b16 %v1877
  %v6426 = vunpack.c.l.b16 %v1878
  %v6427 = vunpack.c.l.b16 %v1879
  %v6428 = vunpack.c.l.b16 %v1880
  %v6429 = vunpack.c.l.b16 %v1881
  %v6430 = vunpack.c.l.b16 %v1882
  %v6431 = vunpack.c.l.b16 %v1883
  %v6432 = vunpack.c.l.b16 %v1884
  %v6433 = vunpack.c.l.b16 %v1885
  %v6434 = vunpack.c.l.b16 %v1886
  %v6435 = vunpack.c.l.b16 %v1887
  %v6436 = vunpack.c.l.b16 %v1888
  %v6437 = vunpack.c.l.b16 %v1889
  %v6438 = vunpack.c.l.b16 %v1890
  %v6439 = vunpack.c.l.b16 %v1891
  %v6440 = vunpack.c.l.b16 %v1892
  %v6441 = vunpack.c.l.b16 %v1893
  %v6442 = vunpack.c.l.b16 %v1894
  %v6443 = vunpack.c.l.b16 %v1895
  %v6444 = vunpack.c.l.b16 %v1896
  %v6445 = vunpack.c.l.b16 %v1897
  %v6446 = vunpack.c.l.b16 %v1898
  %v6447 = vunpack.c.l.b16 %v1899
  %v6448 = vunpack.c.l.b16 %v1900
  %v6449 = vunpack.c.l.b16 %v1901
  %v6450 = vunpack.c.l.b16 %v1902
  %v6451 = vunpack.c.l.b16 %v1903
  %v6452 = vunpack.c.l.b16 %v1904
  %v6453 = vunpack.c.l.b16 %v1905
  %v6454 = vunpack.c.l.b16 %v1906
  %v6455 = vunpack.c.l.b16 %v1907
  %v6456 = vunpack.c.l.b16 %v1908
  %v6457 = vunpack.c.l.b16 %v1909
  %v6458 = vunpack.c.l.b16 %v1910
  %v6459 = vunpack.c.l.b16 %v1911
  %v6460 = vunpack.c.l.b16 %v1912
  %v6461 = vunpack.c.l.b16 %v1913
  %v6462 = vunpack.c.l.b16 %v1914
  %v6463 = vunpack.c.l.b16 %v1915
  %v6464 = vunpack.c.l.b16 %v1916
  %v6465 = vunpack.c.l.b16 %v1917
  %v6466 = vunpack.c.l.b16 %v1918
  %v6467 = vunpack.c.l.b16 %v1919
  %v6468 = vunpack.c.l.b16 %v1920
  %v6469 = vunpack.c.l.b16 %v1921
  %v6470 = vunpack.c.l.b16 %v1922
  %v6471 = vunpack.c.l.b16 %v1923
  %v6472 = vunpack.c.l.b16 %v1924
  %v6473 = vunpack.c.l.b16 %v1925
  %v6474 = vunpack.c.l.b16 %v1926
  %v6475 = vunpack.c.l.b16 %v1927
  %v6476 = vunpack.c.l.b16 %v1928
  %v6477 = vunpack.c.l.b16 %v1929
  %v6478 = vunpack.c.l.b16 %v1930
  %v6479 = vunpack.c.l.b16 %v1931
  %v6480 = vunpack.c.l.b16 %v1932
  %v6481 = vunpack.c.l.b16 %v1933
  %v6482 = vunpack.c.l.b16 %v1934
  %v6483 = vunpack.c.l.b16 %v1935
  %v6484 = vunpack.c.l.b16 %v1936
  %v6485 = vunpack.c.l.b16 %v1937
  %v6486 = vunpack.c.l.b16 %v1938
  %v6487 = vunpack.c.l.b16 %v1939
  %v6488 = vunpack.c.l.b16 %v1940
  %v6489 = vunpack.c.l.b16 %v1941
  %v6490 = vunpack.c.l.b16 %v1942
  %v6491 = vunpack.c.l.b16 %v1943
  %v6492 = vunpack.c.l.b16 %v1944
  %v6493 = vunpack.c.l.b16 %v1945
  %v6494 = vunpack.c.l.b16 %v1946
  %v6495 = vunpack.c.l.b16 %v1947
  %v6496 = vunpack.c.l.b16 %v1948
  %v6497 = vunpack.c.l.b16 %v1949
  %v6498 = vunpack.c.l.b16 %v1950
  %v6499 = vunpack.c.l.b16 %v1951
  %v6500 = vunpack.c.l.b16 %v1952
  %v6501 = vunpack.c.l.b16 %v1953
  %v6502 = vunpack.c.l.b16 %v1954
  %v6503 = vunpack.c.l.b16 %v1955
  %v6504 = vunpack.c.l.b16 %v1956
  %v6505 = vunpack.c.l.b16 %v1957
  %v6506 = vunpack.c.l.b16 %v1958
  %v6507 = vunpack.c.l.b16 %v1959
  %v6508 = vunpack.c.l.b16 %v1960
  %v6509 = vunpack.c.l.b16 %v1961
  %v6510 = vunpack.c.l.b16 %v1962
  %v6511 = vunpack.c.l.b16 %v1963
  %v6512 = vunpack.c.l.b16 %v1964
  %v6513 = vunpack.c.l.b16 %v1965
  %v6514 = vunpack.c.l.b16 %v1966
  %v6515 = vunpack.c.l.b16 %v1967
  %v6516 = vunpack.c.l.b16 %v1968
  %v6517 = vunpack.c.l.b16 %v1969
  %v6518 = vunpack.c.l.b16 %v1970
  %v6519 = vunpack.c.l.b16 %v1971
  %v6520 = vunpack.c.l.b16 %v1972
  %v6521 = vunpack.c.l.b16 %v1973
  %v6522 = vunpack.c.l.b16 %v1974
  %v6523 = vunpack.c.l.b16 %v1975
  %v6524 = vunpack.c.l.b16 %v1976
  %v6525 = vunpack.c.l.b16 %v1977
  %v6526 = vunpack.c.l.b16 %v1978
  %v6527 = vunpack.c.l.b16 %v1979
  %v6528 = vunpack.c.l.b16 %v1980
  %v6529 = vunpack.c.l.b16 %v1981
  %v6530 = vunpack.c.l.b16 %v1982
  %v6531 = vunpack.c.l.b16 %v1983
  %v6532 = vunpack.c.l.b16 %v1984
  %v6533 = vunpack.c.l.b16 %v1985
  %v6534 = vunpack.c.l.b16 %v1986
  %v6535 = vunpack.c.l.b16 %v1987
  %v6536 = vunpack.c.l.b16 %v1988
  %v6537 = vunpack.c.l.b16 %v1989
  %v6538 = vunpack.c.l.b16 %v1990
  %v6539 = vunpack.c.l.b16 %v1991
  %v6540 = vunpack.c.l.b16 %v1992
  %v6541 = vunpack.c.l.b16 %v1993
  %v6542 = vunpack.c.l.b16 %v1994
  %v6543 = vunpack.c.l.b16 %v1995
  %v6544 = vunpack.c.l.b16 %v1996
  %v6545 = vunpack.c.l.b16 %v1997
  %v6546 = vunpack.c.l.b16 %v1998
  %v6547 = vunpack.c.l.b16 %v1999
  %v6548 = vunpack.c.l.b16 %v2000
  %v6549 = vunpack.c.l.b16 %v2001
  %v6550 = vunpack.c.l.b16 %v2002
  %v6551 = vunpack.c.l.b16 %v2003
  %v6552 = vunpack.c.l.b16 %v2004
  %v6553 = vunpack.c.l.b16 %v2005
  %v6554 = vunpack.c.l.b16 %v2006
  %v6555 = vunpack.c.l.b16 %v2007
  %v6556 = vunpack.c.l.b16 %v2008
  %v6557 = vunpack.c.l.b16 %v2009
  %v6558 = vunpack.c.l.b16 %v2010
  %v6559 = vunpack.c.l.b16 %v2011
  %v6560 = vunpack.c.l.b16 %v2012
  %v6561 = vunpack.c.l.b16 %v2013
  %v6562 = vunpack.c.l.b16 %v2014
  %v6563 = vunpack.c.l.b16 %v2015
  %v6564 = vunpack.c.l.b16 %v2016
  %v6565 = vunpack.c.l.b16 %v2017
  %v6566 = vunpack.c.l.b16 %v2018
  %v6567 = vunpack.c.l.b16 %v2019
  %v6568 = vunpack.c.l.b16 %v2020
  %v6569 = vunpack.c.l.b16 %v2021
  %v6570 = vunpack.c.l.b16 %v2022
  %v6571 = vunpack.c.l.b16 %v2023
  %v6572 = vunpack.c.l.b16 %v2024
  %v6573 = vunpack.c.l.b16 %v2025
  %v6574 = vunpack.c.l.b16 %v2026
  %v6575 = vunpack.c.l.b16 %v2027
  %v6576 = vunpack.c.l.b16 %v2028
  %v6577 = vunpack.c.l.b16 %v2029
  %v6578 = vunpack.c.l.b16 %v2030
  %v6579 = vunpack.c.l.b16 %v2031
  %v6580 = vunpack.c.l.b16 %v2032
  %v6581 = vunpack.c.l.b16 %v2033
  %v6582 = vunpack.c.l.b16 %v2034
  %v6583 = vunpack.c.l.b16 %v2035
  %v6584 = vunpack.c.l.b16 %v2036
  %v6585 = vunpack.c.l.b16 %v2037
  %v6586 = vunpack.c.l.b16 %v2038
  %v6587 = vunpack.c.l.b16 %v2039
  %v6588 = vunpack.c.l.b16 %v2040
  %v6589 = vunpack.c.l.b16 %v2041
  %v6590 = vunpack.c.l.b16 %v2042
  %v6591 = vunpack.c.l.b16 %v2043
  %v6592 = vunpack.c.l.b16 %v2044
  %v6593 = vunpack.c.l.b16 %v2045
  %v6594 = vunpack.c.l.b16 %v2046
  %v6595 = vunpack.c.l.b16 %v2047
  %v6596 = vunpack.c.l.b16 %v2048
  %v6597 = vunpack.c.l.b16 %v2049
  %v6598 = vunpack.c.l.b16 %v2050
  %v6599 = vunpack.c.l.b16 %v2051
  %v6600 = vunpack.c.l.b16 %v2052
  %v6601 = vunpack.c.l.b16 %v2053
  %v6602 = vunpack.c.l.b16 %v2054
  %v6603 = vunpack.c.l.b16 %v2055
  %v6604 = vunpack.c.l.b16 %v2056
  %v6605 = vunpack.c.l.b16 %v2057
  %v6606 = vunpack.c.l.b16 %v2058
  %v6607 = vunpack.c.l.b16 %v2059
  %v6608 = vunpack.c.l.b16 %v2060
  %v6609 = vunpack.c.l.b16 %v2061
  %v6610 = vunpack.c.l.b16 %v2062
  %v6611 = vunpack.c.l.b16 %v2063
  %v6612 = vunpack.c.l.b16 %v2064
  %v6613 = vunpack.c.l.b16 %v2065
  %v6614 = vunpack.c.l.b16 %v2066
  %v6615 = vunpack.c.l.b16 %v2067
  %v6616 = vunpack.c.l.b16 %v2068
  %v6617 = vunpack.c.l.b16 %v2069
  %v6618 = vunpack.c.l.b16 %v2070
  %v6619 = vunpack.c.l.b16 %v2071
  %v6620 = vunpack.c.l.b16 %v2072
  %v6621 = vunpack.c.l.b16 %v2073
  %v6622 = vunpack.c.l.b16 %v2074
  %v6623 = vunpack.c.l.b16 %v2075
  %v6624 = vunpack.c.l.b16 %v2076
  %v6625 = vunpack.c.l.b16 %v2077
  %v6626 = vunpack.c.l.b16 %v2078
  %v6627 = vunpack.c.l.b16 %v2079
  %v6628 = vunpack.c.l.b16 %v2080
  %v6629 = vunpack.c.l.b16 %v2081
  %v6630 = vunpack.c.l.b16 %v2082
  %v6631 = vunpack.c.l.b16 %v2083
  %v6632 = vunpack.c.l.b16 %v2084
  %v6633 = vunpack.c.l.b16 %v2085
  %v6634 = vunpack.c.l.b16 %v2086
  %v6635 = vunpack.c.l.b16 %v2087
  %v6636 = vunpack.c.l.b16 %v2088
  %v6637 = vunpack.c.l.b16 %v2089
  %v6638 = vunpack.c.l.b16 %v2090
  %v6639 = vunpack.c.l.b16 %v2091
  %v6640 = vunpack.c.l.b16 %v2092
  %v6641 = vunpack.c.l.b16 %v2093
  %v6642 = vunpack.c.l.b16 %v2094
  %v6643 = vunpack.c.l.b16 %v2095
  %v6644 = vunpack.c.l.b16 %v2096
  %v6645 = vunpack.c.l.b16 %v2097
  %v6646 = vunpack.c.l.b16 %v2098
  %v6647 = vunpack.c.l.b16 %v2099
  %v6648 = vunpack.c.l.b16 %v2100
  %v6649 = vunpack.c.l.b16 %v2101
  %v6650 = vunpack.c.l.b16 %v2102
  %v6651 = vunpack.c.l.b16 %v2103
  %v6652 = vunpack.c.l.b16 %v2104
  %v6653 = vunpack.c.l.b16 %v2105
  %v6654 = vunpack.c.l.b16 %v2106
  %v6655 = vunpack.c.l.b16 %v2107
  %v6656 = vunpack.c.l.b16 %v2108
  %v6657 = vunpack.c.l.b16 %v2109
  %v6658 = vunpack.c.l.b16 %v2110
  %v6659 = vunpack.c.l.b16 %v2111
  %v6660 = vunpack.c.l.b16 %v2112
  %v6661 = vunpack.c.l.b16 %v2113
  %v6662 = vunpack.c.l.b16 %v2114
  %v6663 = vunpack.c.l.b16 %v2115
  %v6664 = vunpack.c.l.b16 %v2116
  %v6665 = vunpack.c.l.b16 %v2117
  %v6666 = vunpack.c.l.b16 %v2118
  %v6667 = vunpack.c.l.b16 %v2119
  %v6668 = vunpack.c.l.b16 %v2120
  %v6669 = vunpack.c.l.b16 %v2121
  %v6670 = vunpack.c.l.b16 %v2122
  %v6671 = vunpack.c.l.b16 %v2123
  %v6672 = vunpack.c.l.b16 %v2124
  %v6673 = vunpack.c.l.b16 %v2125
  %v6674 = vunpack.c.l.b16 %v2126
  %v6675 = vunpack.c.l.b16 %v2127
  %v6676 = vunpack.c.l.b16 %v2128
  %v6677 = vunpack.c.l.b16 %v2129
  %v6678 = vunpack.c.l.b16 %v2130
  %v6679 = vunpack.c.l.b16 %v2131
  %v6680 = vunpack.c.l.b16 %v2132
  %v6681 = vunpack.c.l.b16 %v2133
  %v6682 = vunpack.c.l.b16 %v2134
  %v6683 = vpack.c.b16 %v4636, %v4635
  %v6684 = vpack.c.b16 %v4638, %v4637
  %v6685 = vpack.c.b16 %v4640, %v4639
  %v6686 = vpack.c.b16 %v4642, %v4641
  %v6687 = vpack.c.b16 %v4644, %v4643
  %v6688 = vpack.c.b16 %v4646, %v4645
  %v6689 = vpack.c.b16 %v4648, %v4647
  %v6690 = vpack.c.b16 %v4650, %v4649
  %v6691 = vpack.c.b16 %v4652, %v4651
  %v6692 = vpack.c.b16 %v4654, %v4653
  %v6693 = vpack.c.b16 %v4656, %v4655
  %v6694 = vpack.c.b16 %v4658, %v4657
  %v6695 = vpack.c.b16 %v4660, %v4659
  %v6696 = vpack.c.b16 %v4662, %v4661
  %v6697 = vpack.c.b16 %v4664, %v4663
  %v6698 = vpack.c.b16 %v4666, %v4665
  %v6699 = vpack.c.b16 %v4668, %v4667
  %v6700 = vpack.c.b16 %v4670, %v4669
  %v6701 = vpack.c.b16 %v4672, %v4671
  %v6702 = vpack.c.b16 %v4674, %v4673
  %v6703 = vpack.c.b16 %v4676, %v4675
  %v6704 = vpack.c.b16 %v4678, %v4677
  %v6705 = vpack.c.b16 %v4680, %v4679
  %v6706 = vpack.c.b16 %v4682, %v4681
  %v6707 = vpack.c.b16 %v4684, %v4683
  %v6708 = vpack.c.b16 %v4686, %v4685
  %v6709 = vpack.c.b16 %v4688, %v4687
  %v6710 = vpack.c.b16 %v4690, %v4689
  %v6711 = vpack.c.b16 %v4692, %v4691
  %v6712 = vpack.c.b16 %v4694, %v4693
  %v6713 = vpack.c.b16 %v4696, %v4695
  %v6714 = vpack.c.b16 %v4698, %v4697
  %v6715 = vpack.c.b16 %v4700, %v4699
  %v6716 = vpack.c.b16 %v4702, %v4701
  %v6717 = vpack.c.b16 %v4704, %v4703
  %v6718 = vpack.c.b16 %v4706, %v4705
  %v6719 = vpack.c.b16 %v4708, %v4707
  %v6720 = vpack.c.b16 %v4710, %v4709
  %v6721 = vpack.c.b16 %v4712, %v4711
  %v6722 = vpack.c.b16 %v4714, %v4713
  %v6723 = vpack.c.b16 %v4716, %v4715
  %v6724 = vpack.c.b16 %v4718, %v4717
  %v6725 = vpack.c.b16 %v4720, %v4719
  %v6726 = vpack.c.b16 %v4722, %v4721
  %v6727 = vpack.c.b16 %v4724, %v4723
  %v6728 = vpack.c.b16 %v4726, %v4725
  %v6729 = vpack.c.b16 %v4728, %v4727
  %v6730 = vpack.c.b16 %v4730, %v4729
  %v6731 = vpack.c.b16 %v4732, %v4731
  %v6732 = vpack.c.b16 %v4734, %v4733
  %v6733 = vpack.c.b16 %v4736, %v4735
  %v6734 = vpack.c.b16 %v4738, %v4737
  %v6735 = vpack.c.b16 %v4740, %v4739
  %v6736 = vpack.c.b16 %v4742, %v4741
  %v6737 = vpack.c.b16 %v4744, %v4743
  %v6738 = vpack.c.b16 %v4746, %v4745
  %v6739 = vpack.c.b16 %v4748, %v4747
  %v6740 = vpack.c.b16 %v4750, %v4749
  %v6741 = vpack.c.b16 %v4752, %v4751
  %v6742 = vpack.c.b16 %v4754, %v4753
  %v6743 = vpack.c.b16 %v4756, %v4755
  %v6744 = vpack.c.b16 %v4758, %v4757
  %v6745 = vpack.c.b16 %v4760, %v4759
  %v6746 = vpack.c.b16 %v4762, %v4761
  %v6747 = vpack.c.b16 %v4764, %v4763
  %v6748 = vpack.c.b16 %v4766, %v4765
  %v6749 = vpack.c.b16 %v4768, %v4767
  %v6750 = vpack.c.b16 %v4770, %v4769
  %v6751 = vpack.c.b16 %v4772, %v4771
  %v6752 = vpack.c.b16 %v4774, %v4773
  %v6753 = vpack.c.b16 %v4776, %v4775
  %v6754 = vpack.c.b16 %v4778, %v4777
  %v6755 = vpack.c.b16 %v4780, %v4779
  %v6756 = vpack.c.b16 %v4782, %v4781
  %v6757 = vpack.c.b16 %v4784, %v4783
  %v6758 = vpack.c.b16 %v4786, %v4785
  %v6759 = vpack.c.b16 %v4788, %v4787
  %v6760 = vpack.c.b16 %v4790, %v4789
  %v6761 = vpack.c.b16 %v4792, %v4791
  %v6762 = vpack.c.b16 %v4794, %v4793
  %v6763 = vpack.c.b16 %v4796, %v4795
  %v6764 = vpack.c.b16 %v4798, %v4797
  %v6765 = vpack.c.b16 %v4800, %v4799
  %v6766 = vpack.c.b16 %v4802, %v4801
  %v6767 = vpack.c.b16 %v4804, %v4803
  %v6768 = vpack.c.b16 %v4806, %v4805
  %v6769 = vpack.c.b16 %v4808, %v4807
  %v6770 = vpack.c.b16 %v4810, %v4809
  %v6771 = vpack.c.b16 %v4812, %v4811
  %v6772 = vpack.c.b16 %v4814, %v4813
  %v6773 = vpack.c.b16 %v4816, %v4815
  %v6774 = vpack.c.b16 %v4818, %v4817
  %v6775 = vpack.c.b16 %v4820, %v4819
  %v6776 = vpack.c.b16 %v4822, %v4821
  %v6777 = vpack.c.b16 %v4824, %v4823
  %v6778 = vpack.c.b16 %v4826, %v4825
  %v6779 = vpack.c.b16 %v4828, %v4827
  %v6780 = vpack.c.b16 %v4830, %v4829
  %v6781 = vpack.c.b16 %v4832, %v4831
  %v6782 = vpack.c.b16 %v4834, %v4833
  %v6783 = vpack.c.b16 %v4836, %v4835
  %v6784 = vpack.c.b16 %v4838, %v4837
  %v6785 = vpack.c.b16 %v4840, %v4839
  %v6786 = vpack.c.b16 %v4842, %v4841
  %v6787 = vpack.c.b16 %v4844, %v4843
  %v6788 = vpack.c.b16 %v4846, %v4845
  %v6789 = vpack.c.b16 %v4848, %v4847
  %v6790 = vpack.c.b16 %v4850, %v4849
  %v6791 = vpack.c.b16 %v4852, %v4851
  %v6792 = vpack.c.b16 %v4854, %v4853
  %v6793 = vpack.c.b16 %v4856, %v4855
  %v6794 = vpack.c.b16 %v4858, %v4857
  %v6795 = vpack.c.b16 %v4860, %v4859
  %v6796 = vpack.c.b16 %v4862, %v4861
  %v6797 = vpack.c.b16 %v4864, %v4863
  %v6798 = vpack.c.b16 %v4866, %v4865
  %v6799 = vpack.c.b16 %v4868, %v4867
  %v6800 = vpack.c.b16 %v4870, %v4869
  %v6801 = vpack.c.b16 %v4872, %v4871
  %v6802 = vpack.c.b16 %v4874, %v4873
  %v6803 = vpack.c.b16 %v4876, %v4875
  %v6804 = vpack.c.b16 %v4878, %v4877
  %v6805 = vpack.c.b16 %v4880, %v4879
  %v6806 = vpack.c.b16 %v4882, %v4881
  %v6807 = vpack.c.b16 %v4884, %v4883
  %v6808 = vpack.c.b16 %v4886, %v4885
  %v6809 = vpack.c.b16 %v4888, %v4887
  %v6810 = vpack.c.b16 %v4890, %v4889
  %v6811 = vpack.c.b16 %v4892, %v4891
  %v6812 = vpack.c.b16 %v4894, %v4893
  %v6813 = vpack.c.b16 %v4896, %v4895
  %v6814 = vpack.c.b16 %v4898, %v4897
  %v6815 = vpack.c.b16 %v4900, %v4899
  %v6816 = vpack.c.b16 %v4902, %v4901
  %v6817 = vpack.c.b16 %v4904, %v4903
  %v6818 = vpack.c.b16 %v4906, %v4905
  %v6819 = vpack.c.b16 %v4908, %v4907
  %v6820 = vpack.c.b16 %v4910, %v4909
  %v6821 = vpack.c.b16 %v4912, %v4911
  %v6822 = vpack.c.b16 %v4914, %v4913
  %v6823 = vpack.c.b16 %v4916, %v4915
  %v6824 = vpack.c.b16 %v4918, %v4917
  %v6825 = vpack.c.b16 %v4920, %v4919
  %v6826 = vpack.c.b16 %v4922, %v4921
  %v6827 = vpack.c.b16 %v4924, %v4923
  %v6828 = vpack.c.b16 %v4926, %v4925
  %v6829 = vpack.c.b16 %v4928, %v4927
  %v6830 = vpack.c.b16 %v4930, %v4929
  %v6831 = vpack.c.b16 %v4932, %v4931
  %v6832 = vpack.c.b16 %v4934, %v4933
  %v6833 = vpack.c.b16 %v4936, %v4935
  %v6834 = vpack.c.b16 %v4938, %v4937
  %v6835 = vpack.c.b16 %v4940, %v4939
  %v6836 = vpack.c.b16 %v4942, %v4941
  %v6837 = vpack.c.b16 %v4944, %v4943
  %v6838 = vpack.c.b16 %v4946, %v4945
  %v6839 = vpack.c.b16 %v4948, %v4947
  %v6840 = vpack.c.b16 %v4950, %v4949
  %v6841 = vpack.c.b16 %v4952, %v4951
  %v6842 = vpack.c.b16 %v4954, %v4953
  %v6843 = vpack.c.b16 %v4956, %v4955
  %v6844 = vpack.c.b16 %v4958, %v4957
  %v6845 = vpack.c.b16 %v4960, %v4959
  %v6846 = vpack.c.b16 %v4962, %v4961
  %v6847 = vpack.c.b16 %v4964, %v4963
  %v6848 = vpack.c.b16 %v4966, %v4965
  %v6849 = vpack.c.b16 %v4968, %v4967
  %v6850 = vpack.c.b16 %v4970, %v4969
  %v6851 = vpack.c.b16 %v4972, %v4971
  %v6852 = vpack.c.b16 %v4974, %v4973
  %v6853 = vpack.c.b16 %v4976, %v4975
  %v6854 = vpack.c.b16 %v4978, %v4977
  %v6855 = vpack.c.b16 %v4980, %v4979
  %v6856 = vpack.c.b16 %v4982, %v4981
  %v6857 = vpack.c.b16 %v4984, %v4983
  %v6858 = vpack.c.b16 %v4986, %v4985
  %v6859 = vpack.c.b16 %v4988, %v4987
  %v6860 = vpack.c.b16 %v4990, %v4989
  %v6861 = vpack.c.b16 %v4992, %v4991
  %v6862 = vpack.c.b16 %v4994, %v4993
  %v6863 = vpack.c.b16 %v4996, %v4995
  %v6864 = vpack.c.b16 %v4998, %v4997
  %v6865 = vpack.c.b16 %v5000, %v4999
  %v6866 = vpack.c.b16 %v5002, %v5001
  %v6867 = vpack.c.b16 %v5004, %v5003
  %v6868 = vpack.c.b16 %v5006, %v5005
  %v6869 = vpack.c.b16 %v5008, %v5007
  %v6870 = vpack.c.b16 %v5010, %v5009
  %v6871 = vpack.c.b16 %v5012, %v5011
  %v6872 = vpack.c.b16 %v5014, %v5013
  %v6873 = vpack.c.b16 %v5016, %v5015
  %v6874 = vpack.c.b16 %v5018, %v5017
  %v6875 = vpack.c.b16 %v5020, %v5019
  %v6876 = vpack.c.b16 %v5022, %v5021
  %v6877 = vpack.c.b16 %v5024, %v5023
  %v6878 = vpack.c.b16 %v5026, %v5025
  %v6879 = vpack.c.b16 %v5028, %v5027
  %v6880 = vpack.c.b16 %v5030, %v5029
  %v6881 = vpack.c.b16 %v5032, %v5031
  %v6882 = vpack.c.b16 %v5034, %v5033
  %v6883 = vpack.c.b16 %v5036, %v5035
  %v6884 = vpack.c.b16 %v5038, %v5037
  %v6885 = vpack.c.b16 %v5040, %v5039
  %v6886 = vpack.c.b16 %v5042, %v5041
  %v6887 = vpack.c.b16 %v5044, %v5043
  %v6888 = vpack.c.b16 %v5046, %v5045
  %v6889 = vpack.c.b16 %v5048, %v5047
  %v6890 = vpack.c.b16 %v5050, %v5049
  %v6891 = vpack.c.b16 %v5052, %v5051
  %v6892 = vpack.c.b16 %v5054, %v5053
  %v6893 = vpack.c.b16 %v5056, %v5055
  %v6894 = vpack.c.b16 %v5058, %v5057
  %v6895 = vpack.c.b16 %v5060, %v5059
  %v6896 = vpack.c.b16 %v5062, %v5061
  %v6897 = vpack.c.b16 %v5064, %v5063
  %v6898 = vpack.c.b16 %v5066, %v5065
  %v6899 = vpack.c.b16 %v5068, %v5067
  %v6900 = vpack.c.b16 %v5070, %v5069
  %v6901 = vpack.c.b16 %v5072, %v5071
  %v6902 = vpack.c.b16 %v5074, %v5073
  %v6903 = vpack.c.b16 %v5076, %v5075
  %v6904 = vpack.c.b16 %v5078, %v5077
  %v6905 = vpack.c.b16 %v5080, %v5079
  %v6906 = vpack.c.b16 %v5082, %v5081
  %v6907 = vpack.c.b16 %v5084, %v5083
  %v6908 = vpack.c.b16 %v5086, %v5085
  %v6909 = vpack.c.b16 %v5088, %v5087
  %v6910 = vpack.c.b16 %v5090, %v5089
  %v6911 = vpack.c.b16 %v5092, %v5091
  %v6912 = vpack.c.b16 %v5094, %v5093
  %v6913 = vpack.c.b16 %v5096, %v5095
  %v6914 = vpack.c.b16 %v5098, %v5097
  %v6915 = vpack.c.b16 %v5100, %v5099
  %v6916 = vpack.c.b16 %v5102, %v5101
  %v6917 = vpack.c.b16 %v5104, %v5103
  %v6918 = vpack.c.b16 %v5106, %v5105
  %v6919 = vpack.c.b16 %v5108, %v5107
  %v6920 = vpack.c.b16 %v5110, %v5109
  %v6921 = vpack.c.b16 %v5112, %v5111
  %v6922 = vpack.c.b16 %v5114, %v5113
  %v6923 = vpack.c.b16 %v5116, %v5115
  %v6924 = vpack.c.b16 %v5118, %v5117
  %v6925 = vpack.c.b16 %v5120, %v5119
  %v6926 = vpack.c.b16 %v5122, %v5121
  %v6927 = vpack.c.b16 %v5124, %v5123
  %v6928 = vpack.c.b16 %v5126, %v5125
  %v6929 = vpack.c.b16 %v5128, %v5127
  %v6930 = vpack.c.b16 %v5130, %v5129
  %v6931 = vpack.c.b16 %v5132, %v5131
  %v6932 = vpack.c.b16 %v5134, %v5133
  %v6933 = vpack.c.b16 %v5136, %v5135
  %v6934 = vpack.c.b16 %v5138, %v5137
  %v6935 = vpack.c.b16 %v5140, %v5139
  %v6936 = vpack.c.b16 %v5142, %v5141
  %v6937 = vpack.c.b16 %v5144, %v5143
  %v6938 = vpack.c.b16 %v5146, %v5145
  %v6939 = vpack.c.b16 %v5148, %v5147
  %v6940 = vpack.c.b16 %v5150, %v5149
  %v6941 = vpack.c.b16 %v5152, %v5151
  %v6942 = vpack.c.b16 %v5154, %v5153
  %v6943 = vpack.c.b16 %v5156, %v5155
  %v6944 = vpack.c.b16 %v5158, %v5157
  %v6945 = vpack.c.b16 %v5160, %v5159
  %v6946 = vpack.c.b16 %v5162, %v5161
  %v6947 = vpack.c.b16 %v5164, %v5163
  %v6948 = vpack.c.b16 %v5166, %v5165
  %v6949 = vpack.c.b16 %v5168, %v5167
  %v6950 = vpack.c.b16 %v5170, %v5169
  %v6951 = vpack.c.b16 %v5172, %v5171
  %v6952 = vpack.c.b16 %v5174, %v5173
  %v6953 = vpack.c.b16 %v5176, %v5175
  %v6954 = vpack.c.b16 %v5178, %v5177
  %v6955 = vpack.c.b16 %v5180, %v5179
  %v6956 = vpack.c.b16 %v5182, %v5181
  %v6957 = vpack.c.b16 %v5184, %v5183
  %v6958 = vpack.c.b16 %v5186, %v5185
  %v6959 = vpack.c.b16 %v5188, %v5187
  %v6960 = vpack.c.b16 %v5190, %v5189
  %v6961 = vpack.c.b16 %v5192, %v5191
  %v6962 = vpack.c.b16 %v5194, %v5193
  %v6963 = vpack.c.b16 %v5196, %v5195
  %v6964 = vpack.c.b16 %v5198, %v5197
  %v6965 = vpack.c.b16 %v5200, %v5199
  %v6966 = vpack.c.b16 %v5202, %v5201
  %v6967 = vpack.c.b16 %v5204, %v5203
  %v6968 = vpack.c.b16 %v5206, %v5205
  %v6969 = vpack.c.b16 %v5208, %v5207
  %v6970 = vpack.c.b16 %v5210, %v5209
  %v6971 = vpack.c.b16 %v5212, %v5211
  %v6972 = vpack.c.b16 %v5214, %v5213
  %v6973 = vpack.c.b16 %v5216, %v5215
  %v6974 = vpack.c.b16 %v5218, %v5217
  %v6975 = vpack.c.b16 %v5220, %v5219
  %v6976 = vpack.c.b16 %v5222, %v5221
  %v6977 = vpack.c.b16 %v5224, %v5223
  %v6978 = vpack.c.b16 %v5226, %v5225
  %v6979 = vpack.c.b16 %v5228, %v5227
  %v6980 = vpack.c.b16 %v5230, %v5229
  %v6981 = vpack.c.b16 %v5232, %v5231
  %v6982 = vpack.c.b16 %v5234, %v5233
  %v6983 = vpack.c.b16 %v5236, %v5235
  %v6984 = vpack.c.b16 %v5238, %v5237
  %v6985 = vpack.c.b16 %v5240, %v5239
  %v6986 = vpack.c.b16 %v5242, %v5241
  %v6987 = vpack.c.b16 %v5244, %v5243
  %v6988 = vpack.c.b16 %v5246, %v5245
  %v6989 = vpack.c.b16 %v5248, %v5247
  %v6990 = vpack.c.b16 %v5250, %v5249
  %v6991 = vpack.c.b16 %v5252, %v5251
  %v6992 = vpack.c.b16 %v5254, %v5253
  %v6993 = vpack.c.b16 %v5256, %v5255
  %v6994 = vpack.c.b16 %v5258, %v5257
  %v6995 = vpack.c.b16 %v5260, %v5259
  %v6996 = vpack.c.b16 %v5262, %v5261
  %v6997 = vpack.c.b16 %v5264, %v5263
  %v6998 = vpack.c.b16 %v5266, %v5265
  %v6999 = vpack.c.b16 %v5268, %v5267
  %v7000 = vpack.c.b16 %v5270, %v5269
  %v7001 = vpack.c.b16 %v5272, %v5271
  %v7002 = vpack.c.b16 %v5274, %v5273
  %v7003 = vpack.c.b16 %v5276, %v5275
  %v7004 = vpack.c.b16 %v5278, %v5277
  %v7005 = vpack.c.b16 %v5280, %v5279
  %v7006 = vpack.c.b16 %v5282, %v5281
  %v7007 = vpack.c.b16 %v5284, %v5283
  %v7008 = vpack.c.b16 %v5286, %v5285
  %v7009 = vpack.c.b16 %v5288, %v5287
  %v7010 = vpack.c.b16 %v5290, %v5289
  %v7011 = vpack.c.b16 %v5292, %v5291
  %v7012 = vpack.c.b16 %v5294, %v5293
  %v7013 = vpack.c.b16 %v5296, %v5295
  %v7014 = vpack.c.b16 %v5298, %v5297
  %v7015 = vpack.c.b16 %v5300, %v5299
  %v7016 = vpack.c.b16 %v5302, %v5301
  %v7017 = vpack.c.b16 %v5304, %v5303
  %v7018 = vpack.c.b16 %v5306, %v5305
  %v7019 = vpack.c.b16 %v5308, %v5307
  %v7020 = vpack.c.b16 %v5310, %v5309
  %v7021 = vpack.c.b16 %v5312, %v5311
  %v7022 = vpack.c.b16 %v5314, %v5313
  %v7023 = vpack.c.b16 %v5316, %v5315
  %v7024 = vpack.c.b16 %v5318, %v5317
  %v7025 = vpack.c.b16 %v5320, %v5319
  %v7026 = vpack.c.b16 %v5322, %v5321
  %v7027 = vpack.c.b16 %v5324, %v5323
  %v7028 = vpack.c.b16 %v5326, %v5325
  %v7029 = vpack.c.b16 %v5328, %v5327
  %v7030 = vpack.c.b16 %v5330, %v5329
  %v7031 = vpack.c.b16 %v5332, %v5331
  %v7032 = vpack.c.b16 %v5334, %v5333
  %v7033 = vpack.c.b16 %v5336, %v5335
  %v7034 = vpack.c.b16 %v5338, %v5337
  %v7035 = vpack.c.b16 %v5340, %v5339
  %v7036 = vpack.c.b16 %v5342, %v5341
  %v7037 = vpack.c.b16 %v5344, %v5343
  %v7038 = vpack.c.b16 %v5346, %v5345
  %v7039 = vpack.c.b16 %v5348, %v5347
  %v7040 = vpack.c.b16 %v5350, %v5349
  %v7041 = vpack.c.b16 %v5352, %v5351
  %v7042 = vpack.c.b16 %v5354, %v5353
  %v7043 = vpack.c.b16 %v5356, %v5355
  %v7044 = vpack.c.b16 %v5358, %v5357
  %v7045 = vpack.c.b16 %v5360, %v5359
  %v7046 = vpack.c.b16 %v5362, %v5361
  %v7047 = vpack.c.b16 %v5364, %v5363
  %v7048 = vpack.c.b16 %v5366, %v5365
  %v7049 = vpack.c.b16 %v5368, %v5367
  %v7050 = vpack.c.b16 %v5370, %v5369
  %v7051 = vpack.c.b16 %v5372, %v5371
  %v7052 = vpack.c.b16 %v5374, %v5373
  %v7053 = vpack.c.b16 %v5376, %v5375
  %v7054 = vpack.c.b16 %v5378, %v5377
  %v7055 = vpack.c.b16 %v5380, %v5379
  %v7056 = vpack.c.b16 %v5382, %v5381
  %v7057 = vpack.c.b16 %v5384, %v5383
  %v7058 = vpack.c.b16 %v5386, %v5385
  %v7059 = vpack.c.b16 %v5388, %v5387
  %v7060 = vpack.c.b16 %v5390, %v5389
  %v7061 = vpack.c.b16 %v5392, %v5391
  %v7062 = vpack.c.b16 %v5394, %v5393
  %v7063 = vpack.c.b16 %v5396, %v5395
  %v7064 = vpack.c.b16 %v5398, %v5397
  %v7065 = vpack.c.b16 %v5400, %v5399
  %v7066 = vpack.c.b16 %v5402, %v5401
  %v7067 = vpack.c.b16 %v5404, %v5403
  %v7068 = vpack.c.b16 %v5406, %v5405
  %v7069 = vpack.c.b16 %v5408, %v5407
  %v7070 = vpack.c.b16 %v5410, %v5409
  %v7071 = vpack.c.b16 %v5412, %v5411
  %v7072 = vpack.c.b16 %v5414, %v5413
  %v7073 = vpack.c.b16 %v5416, %v5415
  %v7074 = vpack.c.b16 %v5418, %v5417
  %v7075 = vpack.c.b16 %v5420, %v5419
  %v7076 = vpack.c.b16 %v5422, %v5421
  %v7077 = vpack.c.b16 %v5424, %v5423
  %v7078 = vpack.c.b16 %v5426, %v5425
  %v7079 = vpack.c.b16 %v5428, %v5427
  %v7080 = vpack.c.b16 %v5430, %v5429
  %v7081 = vpack.c.b16 %v5432, %v5431
  %v7082 = vpack.c.b16 %v5434, %v5433
  %v7083 = vpack.c.b16 %v5436, %v5435
  %v7084 = vpack.c.b16 %v5438, %v5437
  %v7085 = vpack.c.b16 %v5440, %v5439
  %v7086 = vpack.c.b16 %v5442, %v5441
  %v7087 = vpack.c.b16 %v5444, %v5443
  %v7088 = vpack.c.b16 %v5446, %v5445
  %v7089 = vpack.c.b16 %v5448, %v5447
  %v7090 = vpack.c.b16 %v5450, %v5449
  %v7091 = vpack.c.b16 %v5452, %v5451
  %v7092 = vpack.c.b16 %v5454, %v5453
  %v7093 = vpack.c.b16 %v5456, %v5455
  %v7094 = vpack.c.b16 %v5458, %v5457
  %v7095 = vpack.c.b16 %v5460, %v5459
  %v7096 = vpack.c.b16 %v5462, %v5461
  %v7097 = vpack.c.b16 %v5464, %v5463
  %v7098 = vpack.c.b16 %v5466, %v5465
  %v7099 = vpack.c.b16 %v5468, %v5467
  %v7100 = vpack.c.b16 %v5470, %v5469
  %v7101 = vpack.c.b16 %v5472, %v5471
  %v7102 = vpack.c.b16 %v5474, %v5473
  %v7103 = vpack.c.b16 %v5476, %v5475
  %v7104 = vpack.c.b16 %v5478, %v5477
  %v7105 = vpack.c.b16 %v5480, %v5479
  %v7106 = vpack.c.b16 %v5482, %v5481
  %v7107 = vpack.c.b16 %v5484, %v5483
  %v7108 = vpack.c.b16 %v5486, %v5485
  %v7109 = vpack.c.b16 %v5488, %v5487
  %v7110 = vpack.c.b16 %v5490, %v5489
  %v7111 = vpack.c.b16 %v5492, %v5491
  %v7112 = vpack.c.b16 %v5494, %v5493
  %v7113 = vpack.c.b16 %v5496, %v5495
  %v7114 = vpack.c.b16 %v5498, %v5497
  %v7115 = vpack.c.b16 %v5500, %v5499
  %v7116 = vpack.c.b16 %v5502, %v5501
  %v7117 = vpack.c.b16 %v5504, %v5503
  %v7118 = vpack.c.b16 %v5506, %v5505
  %v7119 = vpack.c.b16 %v5508, %v5507
  %v7120 = vpack.c.b16 %v5510, %v5509
  %v7121 = vpack.c.b16 %v5512, %v5511
  %v7122 = vpack.c.b16 %v5514, %v5513
  %v7123 = vpack.c.b16 %v5516, %v5515
  %v7124 = vpack.c.b16 %v5518, %v5517
  %v7125 = vpack.c.b16 %v5520, %v5519
  %v7126 = vpack.c.b16 %v5522, %v5521
  %v7127 = vpack.c.b16 %v5524, %v5523
  %v7128 = vpack.c.b16 %v5526, %v5525
  %v7129 = vpack.c.b16 %v5528, %v5527
  %v7130 = vpack.c.b16 %v5530, %v5529
  %v7131 = vpack.c.b16 %v5532, %v5531
  %v7132 = vpack.c.b16 %v5534, %v5533
  %v7133 = vpack.c.b16 %v5536, %v5535
  %v7134 = vpack.c.b16 %v5538, %v5537
  %v7135 = vpack.c.b16 %v5540, %v5539
  %v7136 = vpack.c.b16 %v5542, %v5541
  %v7137 = vpack.c.b16 %v5544, %v5543
  %v7138 = vpack.c.b16 %v5546, %v5545
  %v7139 = vpack.c.b16 %v5548, %v5547
  %v7140 = vpack.c.b16 %v5550, %v5549
  %v7141 = vpack.c.b16 %v5552, %v5551
  %v7142 = vpack.c.b16 %v5554, %v5553
  %v7143 = vpack.c.b16 %v5556, %v5555
  %v7144 = vpack.c.b16 %v5558, %v5557
  %v7145 = vpack.c.b16 %v5560, %v5559
  %v7146 = vpack.c.b16 %v5562, %v5561
  %v7147 = vpack.c.b16 %v5564, %v5563
  %v7148 = vpack.c.b16 %v5566, %v5565
  %v7149 = vpack.c.b16 %v5568, %v5567
  %v7150 = vpack.c.b16 %v5570, %v5569
  %v7151 = vpack.c.b16 %v5572, %v5571
  %v7152 = vpack.c.b16 %v5574, %v5573
  %v7153 = vpack.c.b16 %v5576, %v5575
  %v7154 = vpack.c.b16 %v5578, %v5577
  %v7155 = vpack.c.b16 %v5580, %v5579
  %v7156 = vpack.c.b16 %v5582, %v5581
  %v7157 = vpack.c.b16 %v5584, %v5583
  %v7158 = vpack.c.b16 %v5586, %v5585
  %v7159 = vpack.c.b16 %v5588, %v5587
  %v7160 = vpack.c.b16 %v5590, %v5589
  %v7161 = vpack.c.b16 %v5592, %v5591
  %v7162 = vpack.c.b16 %v5594, %v5593
  %v7163 = vpack.c.b16 %v5596, %v5595
  %v7164 = vpack.c.b16 %v5598, %v5597
  %v7165 = vpack.c.b16 %v5600, %v5599
  %v7166 = vpack.c.b16 %v5602, %v5601
  %v7167 = vpack.c.b16 %v5604, %v5603
  %v7168 = vpack.c.b16 %v5606, %v5605
  %v7169 = vpack.c.b16 %v5608, %v5607
  %v7170 = vpack.c.b16 %v5610, %v5609
  %v7171 = vpack.c.b16 %v5612, %v5611
  %v7172 = vpack.c.b16 %v5614, %v5613
  %v7173 = vpack.c.b16 %v5616, %v5615
  %v7174 = vpack.c.b16 %v5618, %v5617
  %v7175 = vpack.c.b16 %v5620, %v5619
  %v7176 = vpack.c.b16 %v5622, %v5621
  %v7177 = vpack.c.b16 %v5624, %v5623
  %v7178 = vpack.c.b16 %v5626, %v5625
  %v7179 = vpack.c.b16 %v5628, %v5627
  %v7180 = vpack.c.b16 %v5630, %v5629
  %v7181 = vpack.c.b16 %v5632, %v5631
  %v7182 = vpack.c.b16 %v5634, %v5633
  %v7183 = vpack.c.b16 %v5636, %v5635
  %v7184 = vpack.c.b16 %v5638, %v5637
  %v7185 = vpack.c.b16 %v5640, %v5639
  %v7186 = vpack.c.b16 %v5642, %v5641
  %v7187 = vpack.c.b16 %v5644, %v5643
  %v7188 = vpack.c.b16 %v5646, %v5645
  %v7189 = vpack.c.b16 %v5648, %v5647
  %v7190 = vpack.c.b16 %v5650, %v5649
  %v7191 = vpack.c.b16 %v5652, %v5651
  %v7192 = vpack.c.b16 %v5654, %v5653
  %v7193 = vpack.c.b16 %v5656, %v5655
  %v7194 = vpack.c.b16 %v5658, %v5657
  %v7195 = vpack.c.b16 %v5660, %v5659
  %v7196 = vpack.c.b16 %v5662, %v5661
  %v7197 = vpack.c.b16 %v5664, %v5663
  %v7198 = vpack.c.b16 %v5666, %v5665
  %v7199 = vpack.c.b16 %v5668, %v5667
  %v7200 = vpack.c.b16 %v5670, %v5669
  %v7201 = vpack.c.b16 %v5672, %v5671
  %v7202 = vpack.c.b16 %v5674, %v5673
  %v7203 = vpack.c.b16 %v5676, %v5675
  %v7204 = vpack.c.b16 %v5678, %v5677
  %v7205 = vpack.c.b16 %v5680, %v5679
  %v7206 = vpack.c.b16 %v5682, %v5681
  %v7207 = vpack.c.b16 %v5684, %v5683
  %v7208 = vpack.c.b16 %v5686, %v5685
  %v7209 = vpack.c.b16 %v5688, %v5687
  %v7210 = vpack.c.b16 %v5690, %v5689
  %v7211 = vpack.c.b16 %v5692, %v5691
  %v7212 = vpack.c.b16 %v5694, %v5693
  %v7213 = vpack.c.b16 %v5696, %v5695
  %v7214 = vpack.c.b16 %v5698, %v5697
  %v7215 = vpack.c.b16 %v5700, %v5699
  %v7216 = vpack.c.b16 %v5702, %v5701
  %v7217 = vpack.c.b16 %v5704, %v5703
  %v7218 = vpack.c.b16 %v5706, %v5705
  %v7219 = vpack.c.b16 %v5708, %v5707
  %v7220 = vpack.c.b16 %v5710, %v5709
  %v7221 = vpack.c.b16 %v5712, %v5711
  %v7222 = vpack.c.b16 %v5714, %v5713
  %v7223 = vpack.c.b16 %v5716, %v5715
  %v7224 = vpack.c.b16 %v5718, %v5717
  %v7225 = vpack.c.b16 %v5720, %v5719
  %v7226 = vpack.c.b16 %v5722, %v5721
  %v7227 = vpack.c.b16 %v5724, %v5723
  %v7228 = vpack.c.b16 %v5726, %v5725
  %v7229 = vpack.c.b16 %v5728, %v5727
  %v7230 = vpack.c.b16 %v5730, %v5729
  %v7231 = vpack.c.b16 %v5732, %v5731
  %v7232 = vpack.c.b16 %v5734, %v5733
  %v7233 = vpack.c.b16 %v5736, %v5735
  %v7234 = vpack.c.b16 %v5738, %v5737
  %v7235 = vpack.c.b16 %v5740, %v5739
  %v7236 = vpack.c.b16 %v5742, %v5741
  %v7237 = vpack.c.b16 %v5744, %v5743
  %v7238 = vpack.c.b16 %v5746, %v5745
  %v7239 = vpack.c.b16 %v5748, %v5747
  %v7240 = vpack.c.b16 %v5750, %v5749
  %v7241 = vpack.c.b16 %v5752, %v5751
  %v7242 = vpack.c.b16 %v5754, %v5753
  %v7243 = vpack.c.b16 %v5756, %v5755
  %v7244 = vpack.c.b16 %v5758, %v5757
  %v7245 = vpack.c.b16 %v5760, %v5759
  %v7246 = vpack.c.b16 %v5762, %v5761
  %v7247 = vpack.c.b16 %v5764, %v5763
  %v7248 = vpack.c.b16 %v5766, %v5765
  %v7249 = vpack.c.b16 %v5768, %v5767
  %v7250 = vpack.c.b16 %v5770, %v5769
  %v7251 = vpack.c.b16 %v5772, %v5771
  %v7252 = vpack.c.b16 %v5774, %v5773
  %v7253 = vpack.c.b16 %v5776, %v5775
  %v7254 = vpack.c.b16 %v5778, %v5777
  %v7255 = vpack.c.b16 %v5780, %v5779
  %v7256 = vpack.c.b16 %v5782, %v5781
  %v7257 = vpack.c.b16 %v5784, %v5783
  %v7258 = vpack.c.b16 %v5786, %v5785
  %v7259 = vpack.c.b16 %v5788, %v5787
  %v7260 = vpack.c.b16 %v5790, %v5789
  %v7261 = vpack.c.b16 %v5792, %v5791
  %v7262 = vpack.c.b16 %v5794, %v5793
  %v7263 = vpack.c.b16 %v5796, %v5795
  %v7264 = vpack.c.b16 %v5798, %v5797
  %v7265 = vpack.c.b16 %v5800, %v5799
  %v7266 = vpack.c.b16 %v5802, %v5801
  %v7267 = vpack.c.b16 %v5804, %v5803
  %v7268 = vpack.c.b16 %v5806, %v5805
  %v7269 = vpack.c.b16 %v5808, %v5807
  %v7270 = vpack.c.b16 %v5810, %v5809
  %v7271 = vpack.c.b16 %v5812, %v5811
  %v7272 = vpack.c.b16 %v5814, %v5813
  %v7273 = vpack.c.b16 %v5816, %v5815
  %v7274 = vpack.c.b16 %v5818, %v5817
  %v7275 = vpack.c.b16 %v5820, %v5819
  %v7276 = vpack.c.b16 %v5822, %v5821
  %v7277 = vpack.c.b16 %v5824, %v5823
  %v7278 = vpack.c.b16 %v5826, %v5825
  %v7279 = vpack.c.b16 %v5828, %v5827
  %v7280 = vpack.c.b16 %v5830, %v5829
  %v7281 = vpack.c.b16 %v5832, %v5831
  %v7282 = vpack.c.b16 %v5834, %v5833
  %v7283 = vpack.c.b16 %v5836, %v5835
  %v7284 = vpack.c.b16 %v5838, %v5837
  %v7285 = vpack.c.b16 %v5840, %v5839
  %v7286 = vpack.c.b16 %v5842, %v5841
  %v7287 = vpack.c.b16 %v5844, %v5843
  %v7288 = vpack.c.b16 %v5846, %v5845
  %v7289 = vpack.c.b16 %v5848, %v5847
  %v7290 = vpack.c.b16 %v5850, %v5849
  %v7291 = vpack.c.b16 %v5852, %v5851
  %v7292 = vpack.c.b16 %v5854, %v5853
  %v7293 = vpack.c.b16 %v5856, %v5855
  %v7294 = vpack.c.b16 %v5858, %v5857
  %v7295 = vpack.c.b16 %v5860, %v5859
  %v7296 = vpack.c.b16 %v5862, %v5861
  %v7297 = vpack.c.b16 %v5864, %v5863
  %v7298 = vpack.c.b16 %v5866, %v5865
  %v7299 = vpack.c.b16 %v5868, %v5867
  %v7300 = vpack.c.b16 %v5870, %v5869
  %v7301 = vpack.c.b16 %v5872, %v5871
  %v7302 = vpack.c.b16 %v5874, %v5873
  %v7303 = vpack.c.b16 %v5876, %v5875
  %v7304 = vpack.c.b16 %v5878, %v5877
  %v7305 = vpack.c.b16 %v5880, %v5879
  %v7306 = vpack.c.b16 %v5882, %v5881
  %v7307 = vpack.c.b16 %v5884, %v5883
  %v7308 = vpack.c.b16 %v5886, %v5885
  %v7309 = vpack.c.b16 %v5888, %v5887
  %v7310 = vpack.c.b16 %v5890, %v5889
  %v7311 = vpack.c.b16 %v5892, %v5891
  %v7312 = vpack.c.b16 %v5894, %v5893
  %v7313 = vpack.c.b16 %v5896, %v5895
  %v7314 = vpack.c.b16 %v5898, %v5897
  %v7315 = vpack.c.b16 %v5900, %v5899
  %v7316 = vpack.c.b16 %v5902, %v5901
  %v7317 = vpack.c.b16 %v5904, %v5903
  %v7318 = vpack.c.b16 %v5906, %v5905
  %v7319 = vpack.c.b16 %v5908, %v5907
  %v7320 = vpack.c.b16 %v5910, %v5909
  %v7321 = vpack.c.b16 %v5912, %v5911
  %v7322 = vpack.c.b16 %v5914, %v5913
  %v7323 = vpack.c.b16 %v5916, %v5915
  %v7324 = vpack.c.b16 %v5918, %v5917
  %v7325 = vpack.c.b16 %v5920, %v5919
  %v7326 = vpack.c.b16 %v5922, %v5921
  %v7327 = vpack.c.b16 %v5924, %v5923
  %v7328 = vpack.c.b16 %v5926, %v5925
  %v7329 = vpack.c.b16 %v5928, %v5927
  %v7330 = vpack.c.b16 %v5930, %v5929
  %v7331 = vpack.c.b16 %v5932, %v5931
  %v7332 = vpack.c.b16 %v5934, %v5933
  %v7333 = vpack.c.b16 %v5936, %v5935
  %v7334 = vpack.c.b16 %v5938, %v5937
  %v7335 = vpack.c.b16 %v5940, %v5939
  %v7336 = vpack.c.b16 %v5942, %v5941
  %v7337 = vpack.c.b16 %v5944, %v5943
  %v7338 = vpack.c.b16 %v5946, %v5945
  %v7339 = vpack.c.b16 %v5948, %v5947
  %v7340 = vpack.c.b16 %v5950, %v5949
  %v7341 = vpack.c.b16 %v5952, %v5951
  %v7342 = vpack.c.b16 %v5954, %v5953
  %v7343 = vpack.c.b16 %v5956, %v5955
  %v7344 = vpack.c.b16 %v5958, %v5957
  %v7345 = vpack.c.b16 %v5960, %v5959
  %v7346 = vpack.c.b16 %v5962, %v5961
  %v7347 = vpack.c.b16 %v5964, %v5963
  %v7348 = vpack.c.b16 %v5966, %v5965
  %v7349 = vpack.c.b16 %v5968, %v5967
  %v7350 = vpack.c.b16 %v5970, %v5969
  %v7351 = vpack.c.b16 %v5972, %v5971
  %v7352 = vpack.c.b16 %v5974, %v5973
  %v7353 = vpack.c.b16 %v5976, %v5975
  %v7354 = vpack.c.b16 %v5978, %v5977
  %v7355 = vpack.c.b16 %v5980, %v5979
  %v7356 = vpack.c.b16 %v5982, %v5981
  %v7357 = vpack.c.b16 %v5984, %v5983
  %v7358 = vpack.c.b16 %v5986, %v5985
  %v7359 = vpack.c.b16 %v5988, %v5987
  %v7360 = vpack.c.b16 %v5990, %v5989
  %v7361 = vpack.c.b16 %v5992, %v5991
  %v7362 = vpack.c.b16 %v5994, %v5993
  %v7363 = vpack.c.b16 %v5996, %v5995
  %v7364 = vpack.c.b16 %v5998, %v5997
  %v7365 = vpack.c.b16 %v6000, %v5999
  %v7366 = vpack.c.b16 %v6002, %v6001
  %v7367 = vpack.c.b16 %v6004, %v6003
  %v7368 = vpack.c.b16 %v6006, %v6005
  %v7369 = vpack.c.b16 %v6008, %v6007
  %v7370 = vpack.c.b16 %v6010, %v6009
  %v7371 = vpack.c.b16 %v6012, %v6011
  %v7372 = vpack.c.b16 %v6014, %v6013
  %v7373 = vpack.c.b16 %v6016, %v6015
  %v7374 = vpack.c.b16 %v6018, %v6017
  %v7375 = vpack.c.b16 %v6020, %v6019
  %v7376 = vpack.c.b16 %v6022, %v6021
  %v7377 = vpack.c.b16 %v6024, %v6023
  %v7378 = vpack.c.b16 %v6026, %v6025
  %v7379 = vpack.c.b16 %v6028, %v6027
  %v7380 = vpack.c.b16 %v6030, %v6029
  %v7381 = vpack.c.b16 %v6032, %v6031
  %v7382 = vpack.c.b16 %v6034, %v6033
  %v7383 = vpack.c.b16 %v6036, %v6035
  %v7384 = vpack.c.b16 %v6038, %v6037
  %v7385 = vpack.c.b16 %v6040, %v6039
  %v7386 = vpack.c.b16 %v6042, %v6041
  %v7387 = vpack.c.b16 %v6044, %v6043
  %v7388 = vpack.c.b16 %v6046, %v6045
  %v7389 = vpack.c.b16 %v6048, %v6047
  %v7390 = vpack.c.b16 %v6050, %v6049
  %v7391 = vpack.c.b16 %v6052, %v6051
  %v7392 = vpack.c.b16 %v6054, %v6053
  %v7393 = vpack.c.b16 %v6056, %v6055
  %v7394 = vpack.c.b16 %v6058, %v6057
  %v7395 = vpack.c.b16 %v6060, %v6059
  %v7396 = vpack.c.b16 %v6062, %v6061
  %v7397 = vpack.c.b16 %v6064, %v6063
  %v7398 = vpack.c.b16 %v6066, %v6065
  %v7399 = vpack.c.b16 %v6068, %v6067
  %v7400 = vpack.c.b16 %v6070, %v6069
  %v7401 = vpack.c.b16 %v6072, %v6071
  %v7402 = vpack.c.b16 %v6074, %v6073
  %v7403 = vpack.c.b16 %v6076, %v6075
  %v7404 = vpack.c.b16 %v6078, %v6077
  %v7405 = vpack.c.b16 %v6080, %v6079
  %v7406 = vpack.c.b16 %v6082, %v6081
  %v7407 = vpack.c.b16 %v6084, %v6083
  %v7408 = vpack.c.b16 %v6086, %v6085
  %v7409 = vpack.c.b16 %v6088, %v6087
  %v7410 = vpack.c.b16 %v6090, %v6089
  %v7411 = vpack.c.b16 %v6092, %v6091
  %v7412 = vpack.c.b16 %v6094, %v6093
  %v7413 = vpack.c.b16 %v6096, %v6095
  %v7414 = vpack.c.b16 %v6098, %v6097
  %v7415 = vpack.c.b16 %v6100, %v6099
  %v7416 = vpack.c.b16 %v6102, %v6101
  %v7417 = vpack.c.b16 %v6104, %v6103
  %v7418 = vpack.c.b16 %v6106, %v6105
  %v7419 = vpack.c.b16 %v6108, %v6107
  %v7420 = vpack.c.b16 %v6110, %v6109
  %v7421 = vpack.c.b16 %v6112, %v6111
  %v7422 = vpack.c.b16 %v6114, %v6113
  %v7423 = vpack.c.b16 %v6116, %v6115
  %v7424 = vpack.c.b16 %v6118, %v6117
  %v7425 = vpack.c.b16 %v6120, %v6119
  %v7426 = vpack.c.b16 %v6122, %v6121
  %v7427 = vpack.c.b16 %v6124, %v6123
  %v7428 = vpack.c.b16 %v6126, %v6125
  %v7429 = vpack.c.b16 %v6128, %v6127
  %v7430 = vpack.c.b16 %v6130, %v6129
  %v7431 = vpack.c.b16 %v6132, %v6131
  %v7432 = vpack.c.b16 %v6134, %v6133
  %v7433 = vpack.c.b16 %v6136, %v6135
  %v7434 = vpack.c.b16 %v6138, %v6137
  %v7435 = vpack.c.b16 %v6140, %v6139
  %v7436 = vpack.c.b16 %v6142, %v6141
  %v7437 = vpack.c.b16 %v6144, %v6143
  %v7438 = vpack.c.b16 %v6146, %v6145
  %v7439 = vpack.c.b16 %v6148, %v6147
  %v7440 = vpack.c.b16 %v6150, %v6149
  %v7441 = vpack.c.b16 %v6152, %v6151
  %v7442 = vpack.c.b16 %v6154, %v6153
  %v7443 = vpack.c.b16 %v6156, %v6155
  %v7444 = vpack.c.b16 %v6158, %v6157
  %v7445 = vpack.c.b16 %v6160, %v6159
  %v7446 = vpack.c.b16 %v6162, %v6161
  %v7447 = vpack.c.b16 %v6164, %v6163
  %v7448 = vpack.c.b16 %v6166, %v6165
  %v7449 = vpack.c.b16 %v6168, %v6167
  %v7450 = vpack.c.b16 %v6170, %v6169
  %v7451 = vpack.c.b16 %v6172, %v6171
  %v7452 = vpack.c.b16 %v6174, %v6173
  %v7453 = vpack.c.b16 %v6176, %v6175
  %v7454 = vpack.c.b16 %v6178, %v6177
  %v7455 = vpack.c.b16 %v6180, %v6179
  %v7456 = vpack.c.b16 %v6182, %v6181
  %v7457 = vpack.c.b16 %v6184, %v6183
  %v7458 = vpack.c.b16 %v6186, %v6185
  %v7459 = vpack.c.b16 %v6188, %v6187
  %v7460 = vpack.c.b16 %v6190, %v6189
  %v7461 = vpack.c.b16 %v6192, %v6191
  %v7462 = vpack.c.b16 %v6194, %v6193
  %v7463 = vpack.c.b16 %v6196, %v6195
  %v7464 = vpack.c.b16 %v6198, %v6197
  %v7465 = vpack.c.b16 %v6200, %v6199
  %v7466 = vpack.c.b16 %v6202, %v6201
  %v7467 = vpack.c.b16 %v6204, %v6203
  %v7468 = vpack.c.b16 %v6206, %v6205
  %v7469 = vpack.c.b16 %v6208, %v6207
  %v7470 = vpack.c.b16 %v6210, %v6209
  %v7471 = vpack.c.b16 %v6212, %v6211
  %v7472 = vpack.c.b16 %v6214, %v6213
  %v7473 = vpack.c.b16 %v6216, %v6215
  %v7474 = vpack.c.b16 %v6218, %v6217
  %v7475 = vpack.c.b16 %v6220, %v6219
  %v7476 = vpack.c.b16 %v6222, %v6221
  %v7477 = vpack.c.b16 %v6224, %v6223
  %v7478 = vpack.c.b16 %v6226, %v6225
  %v7479 = vpack.c.b16 %v6228, %v6227
  %v7480 = vpack.c.b16 %v6230, %v6229
  %v7481 = vpack.c.b16 %v6232, %v6231
  %v7482 = vpack.c.b16 %v6234, %v6233
  %v7483 = vpack.c.b16 %v6236, %v6235
  %v7484 = vpack.c.b16 %v6238, %v6237
  %v7485 = vpack.c.b16 %v6240, %v6239
  %v7486 = vpack.c.b16 %v6242, %v6241
  %v7487 = vpack.c.b16 %v6244, %v6243
  %v7488 = vpack.c.b16 %v6246, %v6245
  %v7489 = vpack.c.b16 %v6248, %v6247
  %v7490 = vpack.c.b16 %v6250, %v6249
  %v7491 = vpack.c.b16 %v6252, %v6251
  %v7492 = vpack.c.b16 %v6254, %v6253
  %v7493 = vpack.c.b16 %v6256, %v6255
  %v7494 = vpack.c.b16 %v6258, %v6257
  %v7495 = vpack.c.b16 %v6260, %v6259
  %v7496 = vpack.c.b16 %v6262, %v6261
  %v7497 = vpack.c.b16 %v6264, %v6263
  %v7498 = vpack.c.b16 %v6266, %v6265
  %v7499 = vpack.c.b16 %v6268, %v6267
  %v7500 = vpack.c.b16 %v6270, %v6269
  %v7501 = vpack.c.b16 %v6272, %v6271
  %v7502 = vpack.c.b16 %v6274, %v6273
  %v7503 = vpack.c.b16 %v6276, %v6275
  %v7504 = vpack.c.b16 %v6278, %v6277
  %v7505 = vpack.c.b16 %v6280, %v6279
  %v7506 = vpack.c.b16 %v6282, %v6281
  %v7507 = vpack.c.b16 %v6284, %v6283
  %v7508 = vpack.c.b16 %v6286, %v6285
  %v7509 = vpack.c.b16 %v6288, %v6287
  %v7510 = vpack.c.b16 %v6290, %v6289
  %v7511 = vpack.c.b16 %v6292, %v6291
  %v7512 = vpack.c.b16 %v6294, %v6293
  %v7513 = vpack.c.b16 %v6296, %v6295
  %v7514 = vpack.c.b16 %v6298, %v6297
  %v7515 = vpack.c.b16 %v6300, %v6299
  %v7516 = vpack.c.b16 %v6302, %v6301
  %v7517 = vpack.c.b16 %v6304, %v6303
  %v7518 = vpack.c.b16 %v6306, %v6305
  %v7519 = vpack.c.b16 %v6308, %v6307
  %v7520 = vpack.c.b16 %v6310, %v6309
  %v7521 = vpack.c.b16 %v6312, %v6311
  %v7522 = vpack.c.b16 %v6314, %v6313
  %v7523 = vpack.c.b16 %v6316, %v6315
  %v7524 = vpack.c.b16 %v6318, %v6317
  %v7525 = vpack.c.b16 %v6320, %v6319
  %v7526 = vpack.c.b16 %v6322, %v6321
  %v7527 = vpack.c.b16 %v6324, %v6323
  %v7528 = vpack.c.b16 %v6326, %v6325
  %v7529 = vpack.c.b16 %v6328, %v6327
  %v7530 = vpack.c.b16 %v6330, %v6329
  %v7531 = vpack.c.b16 %v6332, %v6331
  %v7532 = vpack.c.b16 %v6334, %v6333
  %v7533 = vpack.c.b16 %v6336, %v6335
  %v7534 = vpack.c.b16 %v6338, %v6337
  %v7535 = vpack.c.b16 %v6340, %v6339
  %v7536 = vpack.c.b16 %v6342, %v6341
  %v7537 = vpack.c.b16 %v6344, %v6343
  %v7538 = vpack.c.b16 %v6346, %v6345
  %v7539 = vpack.c.b16 %v6348, %v6347
  %v7540 = vpack.c.b16 %v6350, %v6349
  %v7541 = vpack.c.b16 %v6352, %v6351
  %v7542 = vpack.c.b16 %v6354, %v6353
  %v7543 = vpack.c.b16 %v6356, %v6355
  %v7544 = vpack.c.b16 %v6358, %v6357
  %v7545 = vpack.c.b16 %v6360, %v6359
  %v7546 = vpack.c.b16 %v6362, %v6361
  %v7547 = vpack.c.b16 %v6364, %v6363
  %v7548 = vpack.c.b16 %v6366, %v6365
  %v7549 = vpack.c.b16 %v6368, %v6367
  %v7550 = vpack.c.b16 %v6370, %v6369
  %v7551 = vpack.c.b16 %v6372, %v6371
  %v7552 = vpack.c.b16 %v6374, %v6373
  %v7553 = vpack.c.b16 %v6376, %v6375
  %v7554 = vpack.c.b16 %v6378, %v6377
  %v7555 = vpack.c.b16 %v6380, %v6379
  %v7556 = vpack.c.b16 %v6382, %v6381
  %v7557 = vpack.c.b16 %v6384, %v6383
  %v7558 = vpack.c.b16 %v6386, %v6385
  %v7559 = vpack.c.b16 %v6388, %v6387
  %v7560 = vpack.c.b16 %v6390, %v6389
  %v7561 = vpack.c.b16 %v6392, %v6391
  %v7562 = vpack.c.b16 %v6394, %v6393
  %v7563 = vpack.c.b16 %v6396, %v6395
  %v7564 = vpack.c.b16 %v6398, %v6397
  %v7565 = vpack.c.b16 %v6400, %v6399
  %v7566 = vpack.c.b16 %v6402, %v6401
  %v7567 = vpack.c.b16 %v6404, %v6403
  %v7568 = vpack.c.b16 %v6406, %v6405
  %v7569 = vpack.c.b16 %v6408, %v6407
  %v7570 = vpack.c.b16 %v6410, %v6409
  %v7571 = vpack.c.b16 %v6412, %v6411
  %v7572 = vpack.c.b16 %v6414, %v6413
  %v7573 = vpack.c.b16 %v6416, %v6415
  %v7574 = vpack.c.b16 %v6418, %v6417
  %v7575 = vpack.c.b16 %v6420, %v6419
  %v7576 = vpack.c.b16 %v6422, %v6421
  %v7577 = vpack.c.b16 %v6424, %v6423
  %v7578 = vpack.c.b16 %v6426, %v6425
  %v7579 = vpack.c.b16 %v6428, %v6427
  %v7580 = vpack.c.b16 %v6430, %v6429
  %v7581 = vpack.c.b16 %v6432, %v6431
  %v7582 = vpack.c.b16 %v6434, %v6433
  %v7583 = vpack.c.b16 %v6436, %v6435
  %v7584 = vpack.c.b16 %v6438, %v6437
  %v7585 = vpack.c.b16 %v6440, %v6439
  %v7586 = vpack.c.b16 %v6442, %v6441
  %v7587 = vpack.c.b16 %v6444, %v6443
  %v7588 = vpack.c.b16 %v6446, %v6445
  %v7589 = vpack.c.b16 %v6448, %v6447
  %v7590 = vpack.c.b16 %v6450, %v6449
  %v7591 = vpack.c.b16 %v6452, %v6451
  %v7592 = vpack.c.b16 %v6454, %v6453
  %v7593 = vpack.c.b16 %v6456, %v6455
  %v7594 = vpack.c.b16 %v6458, %v6457
  %v7595 = vpack.c.b16 %v6460, %v6459
  %v7596 = vpack.c.b16 %v6462, %v6461
  %v7597 = vpack.c.b16 %v6464, %v6463
  %v7598 = vpack.c.b16 %v6466, %v6465
  %v7599 = vpack.c.b16 %v6468, %v6467
  %v7600 = vpack.c.b16 %v6470, %v6469
  %v7601 = vpack.c.b16 %v6472, %v6471
  %v7602 = vpack.c.b16 %v6474, %v6473
  %v7603 = vpack.c.b16 %v6476, %v6475
  %v7604 = vpack.c.b16 %v6478, %v6477
  %v7605 = vpack.c.b16 %v6480, %v6479
  %v7606 = vpack.c.b16 %v6482, %v6481
  %v7607 = vpack.c.b16 %v6484, %v6483
  %v7608 = vpack.c.b16 %v6486, %v6485
  %v7609 = vpack.c.b16 %v6488, %v6487
  %v7610 = vpack.c.b16 %v6490, %v6489
  %v7611 = vpack.c.b16 %v6492, %v6491
  %v7612 = vpack.c.b16 %v6494, %v6493
  %v7613 = vpack.c.b16 %v6496, %v6495
  %v7614 = vpack.c.b16 %v6498, %v6497
  %v7615 = vpack.c.b16 %v6500, %v6499
  %v7616 = vpack.c.b16 %v6502, %v6501
  %v7617 = vpack.c.b16 %v6504, %v6503
  %v7618 = vpack.c.b16 %v6506, %v6505
  %v7619 = vpack.c.b16 %v6508, %v6507
  %v7620 = vpack.c.b16 %v6510, %v6509
  %v7621 = vpack.c.b16 %v6512, %v6511
  %v7622 = vpack.c.b16 %v6514, %v6513
  %v7623 = vpack.c.b16 %v6516, %v6515
  %v7624 = vpack.c.b16 %v6518, %v6517
  %v7625 = vpack.c.b16 %v6520, %v6519
  %v7626 = vpack.c.b16 %v6522, %v6521
  %v7627 = vpack.c.b16 %v6524, %v6523
  %v7628 = vpack.c.b16 %v6526, %v6525
  %v7629 = vpack.c.b16 %v6528, %v6527
  %v7630 = vpack.c.b16 %v6530, %v6529
  %v7631 = vpack.c.b16 %v6532, %v6531
  %v7632 = vpack.c.b16 %v6534, %v6533
  %v7633 = vpack.c.b16 %v6536, %v6535
  %v7634 = vpack.c.b16 %v6538, %v6537
  %v7635 = vpack.c.b16 %v6540, %v6539
  %v7636 = vpack.c.b16 %v6542, %v6541
  %v7637 = vpack.c.b16 %v6544, %v6543
  %v7638 = vpack.c.b16 %v6546, %v6545
  %v7639 = vpack.c.b16 %v6548, %v6547
  %v7640 = vpack.c.b16 %v6550, %v6549
  %v7641 = vpack.c.b16 %v6552, %v6551
  %v7642 = vpack.c.b16 %v6554, %v6553
  %v7643 = vpack.c.b16 %v6556, %v6555
  %v7644 = vpack.c.b16 %v6558, %v6557
  %v7645 = vpack.c.b16 %v6560, %v6559
  %v7646 = vpack.c.b16 %v6562, %v6561
  %v7647 = vpack.c.b16 %v6564, %v6563
  %v7648 = vpack.c.b16 %v6566, %v6565
  %v7649 = vpack.c.b16 %v6568, %v6567
  %v7650 = vpack.c.b16 %v6570, %v6569
  %v7651 = vpack.c.b16 %v6572, %v6571
  %v7652 = vpack.c.b16 %v6574, %v6573
  %v7653 = vpack.c.b16 %v6576, %v6575
  %v7654 = vpack.c.b16 %v6578, %v6577
  %v7655 = vpack.c.b16 %v6580, %v6579
  %v7656 = vpack.c.b16 %v6582, %v6581
  %v7657 = vpack.c.b16 %v6584, %v6583
  %v7658 = vpack.c.b16 %v6586, %v6585
  %v7659 = vpack.c.b16 %v6588, %v6587
  %v7660 = vpack.c.b16 %v6590, %v6589
  %v7661 = vpack.c.b16 %v6592, %v6591
  %v7662 = vpack.c.b16 %v6594, %v6593
  %v7663 = vpack.c.b16 %v6596, %v6595
  %v7664 = vpack.c.b16 %v6598, %v6597
  %v7665 = vpack.c.b16 %v6600, %v6599
  %v7666 = vpack.c.b16 %v6602, %v6601
  %v7667 = vpack.c.b16 %v6604, %v6603
  %v7668 = vpack.c.b16 %v6606, %v6605
  %v7669 = vpack.c.b16 %v6608, %v6607
  %v7670 = vpack.c.b16 %v6610, %v6609
  %v7671 = vpack.c.b16 %v6612, %v6611
  %v7672 = vpack.c.b16 %v6614, %v6613
  %v7673 = vpack.c.b16 %v6616, %v6615
  %v7674 = vpack.c.b16 %v6618, %v6617
  %v7675 = vpack.c.b16 %v6620, %v6619
  %v7676 = vpack.c.b16 %v6622, %v6621
  %v7677 = vpack.c.b16 %v6624, %v6623
  %v7678 = vpack.c.b16 %v6626, %v6625
  %v7679 = vpack.c.b16 %v6628, %v6627
  %v7680 = vpack.c.b16 %v6630, %v6629
  %v7681 = vpack.c.b16 %v6632, %v6631
  %v7682 = vpack.c.b16 %v6634, %v6633
  %v7683 = vpack.c.b16 %v6636, %v6635
  %v7684 = vpack.c.b16 %v6638, %v6637
  %v7685 = vpack.c.b16 %v6640, %v6639
  %v7686 = vpack.c.b16 %v6642, %v6641
  %v7687 = vpack.c.b16 %v6644, %v6643
  %v7688 = vpack.c.b16 %v6646, %v6645
  %v7689 = vpack.c.b16 %v6648, %v6647
  %v7690 = vpack.c.b16 %v6650, %v6649
  %v7691 = vpack.c.b16 %v6652, %v6651
  %v7692 = vpack.c.b16 %v6654, %v6653
  %v7693 = vpack.c.b16 %v6656, %v6655
  %v7694 = vpack.c.b16 %v6658, %v6657
  %v7695 = vpack.c.b16 %v6660, %v6659
  %v7696 = vpack.c.b16 %v6662, %v6661
  %v7697 = vpack.c.b16 %v6664, %v6663
  %v7698 = vpack.c.b16 %v6666, %v6665
  %v7699 = vpack.c.b16 %v6668, %v6667
  %v7700 = vpack.c.b16 %v6670, %v6669
  %v7701 = vpack.c.b16 %v6672, %v6671
  %v7702 = vpack.c.b16 %v6674, %v6673
  %v7703 = vpack.c.b16 %v6676, %v6675
  %v7704 = vpack.c.b16 %v6678, %v6677
  %v7705 = vpack.c.b16 %v6680, %v6679
  %v7706 = vpack.c.b16 %v6682, %v6681
  %8731 = vmatpush.bf16.msra.mxu0 %v6690
  %8732 = vmatpush.bf16.msra.mxu0 %v6689
  %8733 = vmatpush.bf16.msra.mxu0 %v6688
  %8734 = vmatpush.bf16.msra.mxu0 %v6687
  %8735 = vmatpush.bf16.msra.mxu0 %v6686
  %8736 = vmatpush.bf16.msra.mxu0 %v6685
  %8737 = vmatpush.bf16.msra.mxu0 %v6684
  %8738 = vmatpush.bf16.msra.mxu0 %v6683
  %8739 = vmatmul.bf16.gmra.mxu0 %v2331
  %v8740 = vpop.f32.mrf.mxu0
  %v8741 = vadd.f32 %v2137, %v8740
  %v8742 = vpop.f32.mrf.mxu0
  %8743 = vdwg.mxu0
  %8744 = vmatpush.bf16.msra.mxu0 %v6698
  %8745 = vmatpush.bf16.msra.mxu0 %v6697
  %8746 = vmatpush.bf16.msra.mxu0 %v6696
  %8747 = vmatpush.bf16.msra.mxu0 %v6695
  %8748 = vmatpush.bf16.msra.mxu0 %v6694
  %8749 = vmatpush.bf16.msra.mxu0 %v6693
  %8750 = vmatpush.bf16.msra.mxu0 %v6692
  %8751 = vmatpush.bf16.msra.mxu0 %v6691
  %8752 = vmatmul.bf16.gmra.mxu0 %v2332
  %v8753 = vpop.f32.mrf.mxu0
  %v8754 = vadd.f32 %v8741, %v8753
  %v8755 = vpop.f32.mrf.mxu0
  %8756 = vdwg.mxu0
  %8757 = vmatpush.bf16.msra.mxu0 %v6706
  %8758 = vmatpush.bf16.msra.mxu0 %v6705
  %8759 = vmatpush.bf16.msra.mxu0 %v6704
  %8760 = vmatpush.bf16.msra.mxu0 %v6703
  %8761 = vmatpush.bf16.msra.mxu0 %v6702
  %8762 = vmatpush.bf16.msra.mxu0 %v6701
  %8763 = vmatpush.bf16.msra.mxu0 %v6700
  %8764 = vmatpush.bf16.msra.mxu0 %v6699
  %8765 = vmatmul.bf16.gmra.mxu0 %v2333
  %v8766 = vpop.f32.mrf.mxu0
  %v8767 = vadd.f32 %v8754, %v8766
  %v8768 = vpop.f32.mrf.mxu0
  %8769 = vdwg.mxu0
  %8770 = vmatpush.bf16.msra.mxu0 %v6714
  %8771 = vmatpush.bf16.msra.mxu0 %v6713
  %8772 = vmatpush.bf16.msra.mxu0 %v6712
  %8773 = vmatpush.bf16.msra.mxu0 %v6711
  %8774 = vmatpush.bf16.msra.mxu0 %v6710
  %8775 = vmatpush.bf16.msra.mxu0 %v6709
  %8776 = vmatpush.bf16.msra.mxu0 %v6708
  %8777 = vmatpush.bf16.msra.mxu0 %v6707
  %8778 = vmatmul.bf16.gmra.mxu0 %v2334
  %v8779 = vpop.f32.mrf.mxu0
  %v8780 = vadd.f32 %v8767, %v8779
  %v8781 = vpop.f32.mrf.mxu0
  %8782 = vdwg.mxu0
  %8783 = vmatpush.bf16.msra.mxu0 %v6722
  %8784 = vmatpush.bf16.msra.mxu0 %v6721
  %8785 = vmatpush.bf16.msra.mxu0 %v6720
  %8786 = vmatpush.bf16.msra.mxu0 %v6719
  %8787 = vmatpush.bf16.msra.mxu0 %v6718
  %8788 = vmatpush.bf16.msra.mxu0 %v6717
  %8789 = vmatpush.bf16.msra.mxu0 %v6716
  %8790 = vmatpush.bf16.msra.mxu0 %v6715
  %8791 = vmatmul.bf16.gmra.mxu0 %v2335
  %v8792 = vpop.f32.mrf.mxu0
  %v8793 = vadd.f32 %v8780, %v8792
  %v8794 = vpop.f32.mrf.mxu0
  %8795 = vdwg.mxu0
  %8796 = vmatpush.bf16.msra.mxu0 %v6730
  %8797 = vmatpush.bf16.msra.mxu0 %v6729
  %8798 = vmatpush.bf16.msra.mxu0 %v6728
  %8799 = vmatpush.bf16.msra.mxu0 %v6727
  %8800 = vmatpush.bf16.msra.mxu0 %v6726
  %8801 = vmatpush.bf16.msra.mxu0 %v6725
  %8802 = vmatpush.bf16.msra.mxu0 %v6724
  %8803 = vmatpush.bf16.msra.mxu0 %v6723
  %8804 = vmatmul.bf16.gmra.mxu0 %v2336
  %v8805 = vpop.f32.mrf.mxu0
  %v8806 = vadd.f32 %v8793, %v8805
  %v8807 = vpop.f32.mrf.mxu0
  %8808 = vdwg.mxu0
  %8809 = vmatpush.bf16.msra.mxu0 %v6738
  %8810 = vmatpush.bf16.msra.mxu0 %v6737
  %8811 = vmatpush.bf16.msra.mxu0 %v6736
  %8812 = vmatpush.bf16.msra.mxu0 %v6735
  %8813 = vmatpush.bf16.msra.mxu0 %v6734
  %8814 = vmatpush.bf16.msra.mxu0 %v6733
  %8815 = vmatpush.bf16.msra.mxu0 %v6732
  %8816 = vmatpush.bf16.msra.mxu0 %v6731
  %8817 = vmatmul.bf16.gmra.mxu0 %v2337
  %v8818 = vpop.f32.mrf.mxu0
  %v8819 = vadd.f32 %v8806, %v8818
  %v8820 = vpop.f32.mrf.mxu0
  %8821 = vdwg.mxu0
  %8822 = vmatpush.bf16.msra.mxu0 %v6746
  %8823 = vmatpush.bf16.msra.mxu0 %v6745
  %8824 = vmatpush.bf16.msra.mxu0 %v6744
  %8825 = vmatpush.bf16.msra.mxu0 %v6743
  %8826 = vmatpush.bf16.msra.mxu0 %v6742
  %8827 = vmatpush.bf16.msra.mxu0 %v6741
  %8828 = vmatpush.bf16.msra.mxu0 %v6740
  %8829 = vmatpush.bf16.msra.mxu0 %v6739
  %8830 = vmatmul.bf16.gmra.mxu0 %v2338
  %v8831 = vpop.f32.mrf.mxu0
  %v8832 = vadd.f32 %v8819, %v8831
  %v8833 = vpop.f32.mrf.mxu0
  %8834 = vdwg.mxu0
  %8835 = vmatpush.bf16.msra.mxu0 %v6754
  %8836 = vmatpush.bf16.msra.mxu0 %v6753
  %8837 = vmatpush.bf16.msra.mxu0 %v6752
  %8838 = vmatpush.bf16.msra.mxu0 %v6751
  %8839 = vmatpush.bf16.msra.mxu0 %v6750
  %8840 = vmatpush.bf16.msra.mxu0 %v6749
  %8841 = vmatpush.bf16.msra.mxu0 %v6748
  %8842 = vmatpush.bf16.msra.mxu0 %v6747
  %8843 = vmatmul.bf16.gmra.mxu0 %v2339
  %v8844 = vpop.f32.mrf.mxu0
  %v8845 = vadd.f32 %v8832, %v8844
  %v8846 = vpop.f32.mrf.mxu0
  %8847 = vdwg.mxu0
  %8848 = vmatpush.bf16.msra.mxu0 %v6762
  %8849 = vmatpush.bf16.msra.mxu0 %v6761
  %8850 = vmatpush.bf16.msra.mxu0 %v6760
  %8851 = vmatpush.bf16.msra.mxu0 %v6759
  %8852 = vmatpush.bf16.msra.mxu0 %v6758
  %8853 = vmatpush.bf16.msra.mxu0 %v6757
  %8854 = vmatpush.bf16.msra.mxu0 %v6756
  %8855 = vmatpush.bf16.msra.mxu0 %v6755
  %8856 = vmatmul.bf16.gmra.mxu0 %v2340
  %v8857 = vpop.f32.mrf.mxu0
  %v8858 = vadd.f32 %v8845, %v8857
  %v8859 = vpop.f32.mrf.mxu0
  %8860 = vdwg.mxu0
  %8861 = vmatpush.bf16.msra.mxu0 %v6770
  %8862 = vmatpush.bf16.msra.mxu0 %v6769
  %8863 = vmatpush.bf16.msra.mxu0 %v6768
  %8864 = vmatpush.bf16.msra.mxu0 %v6767
  %8865 = vmatpush.bf16.msra.mxu0 %v6766
  %8866 = vmatpush.bf16.msra.mxu0 %v6765
  %8867 = vmatpush.bf16.msra.mxu0 %v6764
  %8868 = vmatpush.bf16.msra.mxu0 %v6763
  %8869 = vmatmul.bf16.gmra.mxu0 %v2341
  %v8870 = vpop.f32.mrf.mxu0
  %v8871 = vadd.f32 %v8858, %v8870
  %v8872 = vpop.f32.mrf.mxu0
  %8873 = vdwg.mxu0
  %8874 = vmatpush.bf16.msra.mxu0 %v6778
  %8875 = vmatpush.bf16.msra.mxu0 %v6777
  %8876 = vmatpush.bf16.msra.mxu0 %v6776
  %8877 = vmatpush.bf16.msra.mxu0 %v6775
  %8878 = vmatpush.bf16.msra.mxu0 %v6774
  %8879 = vmatpush.bf16.msra.mxu0 %v6773
  %8880 = vmatpush.bf16.msra.mxu0 %v6772
  %8881 = vmatpush.bf16.msra.mxu0 %v6771
  %8882 = vmatmul.bf16.gmra.mxu0 %v2342
  %v8883 = vpop.f32.mrf.mxu0
  %v8884 = vadd.f32 %v8871, %v8883
  %v8885 = vpop.f32.mrf.mxu0
  %8886 = vdwg.mxu0
  %8887 = vmatpush.bf16.msra.mxu0 %v6786
  %8888 = vmatpush.bf16.msra.mxu0 %v6785
  %8889 = vmatpush.bf16.msra.mxu0 %v6784
  %8890 = vmatpush.bf16.msra.mxu0 %v6783
  %8891 = vmatpush.bf16.msra.mxu0 %v6782
  %8892 = vmatpush.bf16.msra.mxu0 %v6781
  %8893 = vmatpush.bf16.msra.mxu0 %v6780
  %8894 = vmatpush.bf16.msra.mxu0 %v6779
  %8895 = vmatmul.bf16.gmra.mxu0 %v2343
  %v8896 = vpop.f32.mrf.mxu0
  %v8897 = vadd.f32 %v8884, %v8896
  %v8898 = vpop.f32.mrf.mxu0
  %8899 = vdwg.mxu0
  %8900 = vmatpush.bf16.msra.mxu0 %v6794
  %8901 = vmatpush.bf16.msra.mxu0 %v6793
  %8902 = vmatpush.bf16.msra.mxu0 %v6792
  %8903 = vmatpush.bf16.msra.mxu0 %v6791
  %8904 = vmatpush.bf16.msra.mxu0 %v6790
  %8905 = vmatpush.bf16.msra.mxu0 %v6789
  %8906 = vmatpush.bf16.msra.mxu0 %v6788
  %8907 = vmatpush.bf16.msra.mxu0 %v6787
  %8908 = vmatmul.bf16.gmra.mxu0 %v2344
  %v8909 = vpop.f32.mrf.mxu0
  %v8910 = vadd.f32 %v8897, %v8909
  %v8911 = vpop.f32.mrf.mxu0
  %8912 = vdwg.mxu0
  %8913 = vmatpush.bf16.msra.mxu0 %v6802
  %8914 = vmatpush.bf16.msra.mxu0 %v6801
  %8915 = vmatpush.bf16.msra.mxu0 %v6800
  %8916 = vmatpush.bf16.msra.mxu0 %v6799
  %8917 = vmatpush.bf16.msra.mxu0 %v6798
  %8918 = vmatpush.bf16.msra.mxu0 %v6797
  %8919 = vmatpush.bf16.msra.mxu0 %v6796
  %8920 = vmatpush.bf16.msra.mxu0 %v6795
  %8921 = vmatmul.bf16.gmra.mxu0 %v2345
  %v8922 = vpop.f32.mrf.mxu0
  %v8923 = vadd.f32 %v8910, %v8922
  %v8924 = vpop.f32.mrf.mxu0
  %8925 = vdwg.mxu0
  %8926 = vmatpush.bf16.msra.mxu0 %v6810
  %8927 = vmatpush.bf16.msra.mxu0 %v6809
  %8928 = vmatpush.bf16.msra.mxu0 %v6808
  %8929 = vmatpush.bf16.msra.mxu0 %v6807
  %8930 = vmatpush.bf16.msra.mxu0 %v6806
  %8931 = vmatpush.bf16.msra.mxu0 %v6805
  %8932 = vmatpush.bf16.msra.mxu0 %v6804
  %8933 = vmatpush.bf16.msra.mxu0 %v6803
  %8934 = vmatmul.bf16.gmra.mxu0 %v2346
  %v8935 = vpop.f32.mrf.mxu0
  %v8936 = vadd.f32 %v8923, %v8935
  %v8937 = vpop.f32.mrf.mxu0
  %8938 = vdwg.mxu0
  %8939 = vmatpush.bf16.msra.mxu0 %v6818
  %8940 = vmatpush.bf16.msra.mxu0 %v6817
  %8941 = vmatpush.bf16.msra.mxu0 %v6816
  %8942 = vmatpush.bf16.msra.mxu0 %v6815
  %8943 = vmatpush.bf16.msra.mxu0 %v6814
  %8944 = vmatpush.bf16.msra.mxu0 %v6813
  %8945 = vmatpush.bf16.msra.mxu0 %v6812
  %8946 = vmatpush.bf16.msra.mxu0 %v6811
  %8947 = vmatmul.bf16.gmra.mxu0 %v2347
  %v8948 = vpop.f32.mrf.mxu0
  %v8949 = vadd.f32 %v8936, %v8948
  %v8950 = vpop.f32.mrf.mxu0
  %8951 = vdwg.mxu0
  %8952 = vmatpush.bf16.msra.mxu0 %v6826
  %8953 = vmatpush.bf16.msra.mxu0 %v6825
  %8954 = vmatpush.bf16.msra.mxu0 %v6824
  %8955 = vmatpush.bf16.msra.mxu0 %v6823
  %8956 = vmatpush.bf16.msra.mxu0 %v6822
  %8957 = vmatpush.bf16.msra.mxu0 %v6821
  %8958 = vmatpush.bf16.msra.mxu0 %v6820
  %8959 = vmatpush.bf16.msra.mxu0 %v6819
  %8960 = vmatmul.bf16.gmra.mxu0 %v2348
  %v8961 = vpop.f32.mrf.mxu0
  %v8962 = vadd.f32 %v8949, %v8961
  %v8963 = vpop.f32.mrf.mxu0
  %8964 = vdwg.mxu0
  %8965 = vmatpush.bf16.msra.mxu0 %v6834
  %8966 = vmatpush.bf16.msra.mxu0 %v6833
  %8967 = vmatpush.bf16.msra.mxu0 %v6832
  %8968 = vmatpush.bf16.msra.mxu0 %v6831
  %8969 = vmatpush.bf16.msra.mxu0 %v6830
  %8970 = vmatpush.bf16.msra.mxu0 %v6829
  %8971 = vmatpush.bf16.msra.mxu0 %v6828
  %8972 = vmatpush.bf16.msra.mxu0 %v6827
  %8973 = vmatmul.bf16.gmra.mxu0 %v2349
  %v8974 = vpop.f32.mrf.mxu0
  %v8975 = vadd.f32 %v8962, %v8974
  %v8976 = vpop.f32.mrf.mxu0
  %8977 = vdwg.mxu0
  %8978 = vmatpush.bf16.msra.mxu0 %v6842
  %8979 = vmatpush.bf16.msra.mxu0 %v6841
  %8980 = vmatpush.bf16.msra.mxu0 %v6840
  %8981 = vmatpush.bf16.msra.mxu0 %v6839
  %8982 = vmatpush.bf16.msra.mxu0 %v6838
  %8983 = vmatpush.bf16.msra.mxu0 %v6837
  %8984 = vmatpush.bf16.msra.mxu0 %v6836
  %8985 = vmatpush.bf16.msra.mxu0 %v6835
  %8986 = vmatmul.bf16.gmra.mxu0 %v2350
  %v8987 = vpop.f32.mrf.mxu0
  %v8988 = vadd.f32 %v8975, %v8987
  %v8989 = vpop.f32.mrf.mxu0
  %8990 = vdwg.mxu0
  %8991 = vmatpush.bf16.msra.mxu0 %v6850
  %8992 = vmatpush.bf16.msra.mxu0 %v6849
  %8993 = vmatpush.bf16.msra.mxu0 %v6848
  %8994 = vmatpush.bf16.msra.mxu0 %v6847
  %8995 = vmatpush.bf16.msra.mxu0 %v6846
  %8996 = vmatpush.bf16.msra.mxu0 %v6845
  %8997 = vmatpush.bf16.msra.mxu0 %v6844
  %8998 = vmatpush.bf16.msra.mxu0 %v6843
  %8999 = vmatmul.bf16.gmra.mxu0 %v2351
  %v9000 = vpop.f32.mrf.mxu0
  %v9001 = vadd.f32 %v8988, %v9000
  %v9002 = vpop.f32.mrf.mxu0
  %9003 = vdwg.mxu0
  %9004 = vmatpush.bf16.msra.mxu0 %v6858
  %9005 = vmatpush.bf16.msra.mxu0 %v6857
  %9006 = vmatpush.bf16.msra.mxu0 %v6856
  %9007 = vmatpush.bf16.msra.mxu0 %v6855
  %9008 = vmatpush.bf16.msra.mxu0 %v6854
  %9009 = vmatpush.bf16.msra.mxu0 %v6853
  %9010 = vmatpush.bf16.msra.mxu0 %v6852
  %9011 = vmatpush.bf16.msra.mxu0 %v6851
  %9012 = vmatmul.bf16.gmra.mxu0 %v2352
  %v9013 = vpop.f32.mrf.mxu0
  %v9014 = vadd.f32 %v9001, %v9013
  %v9015 = vpop.f32.mrf.mxu0
  %9016 = vdwg.mxu0
  %9017 = vmatpush.bf16.msra.mxu0 %v6866
  %9018 = vmatpush.bf16.msra.mxu0 %v6865
  %9019 = vmatpush.bf16.msra.mxu0 %v6864
  %9020 = vmatpush.bf16.msra.mxu0 %v6863
  %9021 = vmatpush.bf16.msra.mxu0 %v6862
  %9022 = vmatpush.bf16.msra.mxu0 %v6861
  %9023 = vmatpush.bf16.msra.mxu0 %v6860
  %9024 = vmatpush.bf16.msra.mxu0 %v6859
  %9025 = vmatmul.bf16.gmra.mxu0 %v2353
  %v9026 = vpop.f32.mrf.mxu0
  %v9027 = vadd.f32 %v9014, %v9026
  %v9028 = vpop.f32.mrf.mxu0
  %9029 = vdwg.mxu0
  %9030 = vmatpush.bf16.msra.mxu0 %v6874
  %9031 = vmatpush.bf16.msra.mxu0 %v6873
  %9032 = vmatpush.bf16.msra.mxu0 %v6872
  %9033 = vmatpush.bf16.msra.mxu0 %v6871
  %9034 = vmatpush.bf16.msra.mxu0 %v6870
  %9035 = vmatpush.bf16.msra.mxu0 %v6869
  %9036 = vmatpush.bf16.msra.mxu0 %v6868
  %9037 = vmatpush.bf16.msra.mxu0 %v6867
  %9038 = vmatmul.bf16.gmra.mxu0 %v2354
  %v9039 = vpop.f32.mrf.mxu0
  %v9040 = vadd.f32 %v9027, %v9039
  %v9041 = vpop.f32.mrf.mxu0
  %9042 = vdwg.mxu0
  %9043 = vmatpush.bf16.msra.mxu0 %v6882
  %9044 = vmatpush.bf16.msra.mxu0 %v6881
  %9045 = vmatpush.bf16.msra.mxu0 %v6880
  %9046 = vmatpush.bf16.msra.mxu0 %v6879
  %9047 = vmatpush.bf16.msra.mxu0 %v6878
  %9048 = vmatpush.bf16.msra.mxu0 %v6877
  %9049 = vmatpush.bf16.msra.mxu0 %v6876
  %9050 = vmatpush.bf16.msra.mxu0 %v6875
  %9051 = vmatmul.bf16.gmra.mxu0 %v2355
  %v9052 = vpop.f32.mrf.mxu0
  %v9053 = vadd.f32 %v9040, %v9052
  %v9054 = vpop.f32.mrf.mxu0
  %9055 = vdwg.mxu0
  %9056 = vmatpush.bf16.msra.mxu0 %v6890
  %9057 = vmatpush.bf16.msra.mxu0 %v6889
  %9058 = vmatpush.bf16.msra.mxu0 %v6888
  %9059 = vmatpush.bf16.msra.mxu0 %v6887
  %9060 = vmatpush.bf16.msra.mxu0 %v6886
  %9061 = vmatpush.bf16.msra.mxu0 %v6885
  %9062 = vmatpush.bf16.msra.mxu0 %v6884
  %9063 = vmatpush.bf16.msra.mxu0 %v6883
  %9064 = vmatmul.bf16.gmra.mxu0 %v2356
  %v9065 = vpop.f32.mrf.mxu0
  %v9066 = vadd.f32 %v9053, %v9065
  %v9067 = vpop.f32.mrf.mxu0
  %9068 = vdwg.mxu0
  %9069 = vmatpush.bf16.msra.mxu0 %v6898
  %9070 = vmatpush.bf16.msra.mxu0 %v6897
  %9071 = vmatpush.bf16.msra.mxu0 %v6896
  %9072 = vmatpush.bf16.msra.mxu0 %v6895
  %9073 = vmatpush.bf16.msra.mxu0 %v6894
  %9074 = vmatpush.bf16.msra.mxu0 %v6893
  %9075 = vmatpush.bf16.msra.mxu0 %v6892
  %9076 = vmatpush.bf16.msra.mxu0 %v6891
  %9077 = vmatmul.bf16.gmra.mxu0 %v2357
  %v9078 = vpop.f32.mrf.mxu0
  %v9079 = vadd.f32 %v9066, %v9078
  %v9080 = vpop.f32.mrf.mxu0
  %9081 = vdwg.mxu0
  %9082 = vmatpush.bf16.msra.mxu0 %v6906
  %9083 = vmatpush.bf16.msra.mxu0 %v6905
  %9084 = vmatpush.bf16.msra.mxu0 %v6904
  %9085 = vmatpush.bf16.msra.mxu0 %v6903
  %9086 = vmatpush.bf16.msra.mxu0 %v6902
  %9087 = vmatpush.bf16.msra.mxu0 %v6901
  %9088 = vmatpush.bf16.msra.mxu0 %v6900
  %9089 = vmatpush.bf16.msra.mxu0 %v6899
  %9090 = vmatmul.bf16.gmra.mxu0 %v2358
  %v9091 = vpop.f32.mrf.mxu0
  %v9092 = vadd.f32 %v9079, %v9091
  %v9093 = vpop.f32.mrf.mxu0
  %9094 = vdwg.mxu0
  %9095 = vmatpush.bf16.msra.mxu0 %v6914
  %9096 = vmatpush.bf16.msra.mxu0 %v6913
  %9097 = vmatpush.bf16.msra.mxu0 %v6912
  %9098 = vmatpush.bf16.msra.mxu0 %v6911
  %9099 = vmatpush.bf16.msra.mxu0 %v6910
  %9100 = vmatpush.bf16.msra.mxu0 %v6909
  %9101 = vmatpush.bf16.msra.mxu0 %v6908
  %9102 = vmatpush.bf16.msra.mxu0 %v6907
  %9103 = vmatmul.bf16.gmra.mxu0 %v2359
  %v9104 = vpop.f32.mrf.mxu0
  %v9105 = vadd.f32 %v9092, %v9104
  %v9106 = vpop.f32.mrf.mxu0
  %9107 = vdwg.mxu0
  %9108 = vmatpush.bf16.msra.mxu0 %v6922
  %9109 = vmatpush.bf16.msra.mxu0 %v6921
  %9110 = vmatpush.bf16.msra.mxu0 %v6920
  %9111 = vmatpush.bf16.msra.mxu0 %v6919
  %9112 = vmatpush.bf16.msra.mxu0 %v6918
  %9113 = vmatpush.bf16.msra.mxu0 %v6917
  %9114 = vmatpush.bf16.msra.mxu0 %v6916
  %9115 = vmatpush.bf16.msra.mxu0 %v6915
  %9116 = vmatmul.bf16.gmra.mxu0 %v2360
  %v9117 = vpop.f32.mrf.mxu0
  %v9118 = vadd.f32 %v9105, %v9117
  %v9119 = vpop.f32.mrf.mxu0
  %9120 = vdwg.mxu0
  %9121 = vmatpush.bf16.msra.mxu0 %v6930
  %9122 = vmatpush.bf16.msra.mxu0 %v6929
  %9123 = vmatpush.bf16.msra.mxu0 %v6928
  %9124 = vmatpush.bf16.msra.mxu0 %v6927
  %9125 = vmatpush.bf16.msra.mxu0 %v6926
  %9126 = vmatpush.bf16.msra.mxu0 %v6925
  %9127 = vmatpush.bf16.msra.mxu0 %v6924
  %9128 = vmatpush.bf16.msra.mxu0 %v6923
  %9129 = vmatmul.bf16.gmra.mxu0 %v2361
  %v9130 = vpop.f32.mrf.mxu0
  %v9131 = vadd.f32 %v9118, %v9130
  %v9132 = vpop.f32.mrf.mxu0
  %9133 = vdwg.mxu0
  %9134 = vmatpush.bf16.msra.mxu0 %v6938
  %9135 = vmatpush.bf16.msra.mxu0 %v6937
  %9136 = vmatpush.bf16.msra.mxu0 %v6936
  %9137 = vmatpush.bf16.msra.mxu0 %v6935
  %9138 = vmatpush.bf16.msra.mxu0 %v6934
  %9139 = vmatpush.bf16.msra.mxu0 %v6933
  %9140 = vmatpush.bf16.msra.mxu0 %v6932
  %9141 = vmatpush.bf16.msra.mxu0 %v6931
  %9142 = vmatmul.bf16.gmra.mxu0 %v2362
  %v9143 = vpop.f32.mrf.mxu0
  %v9144 = vadd.f32 %v9131, %v9143
  %v9145 = vpop.f32.mrf.mxu0
  %9146 = vdwg.mxu0
  %9147 = vmatpush.bf16.msra.mxu0 %v6946
  %9148 = vmatpush.bf16.msra.mxu0 %v6945
  %9149 = vmatpush.bf16.msra.mxu0 %v6944
  %9150 = vmatpush.bf16.msra.mxu0 %v6943
  %9151 = vmatpush.bf16.msra.mxu0 %v6942
  %9152 = vmatpush.bf16.msra.mxu0 %v6941
  %9153 = vmatpush.bf16.msra.mxu0 %v6940
  %9154 = vmatpush.bf16.msra.mxu0 %v6939
  %9155 = vmatmul.bf16.gmra.mxu0 %v2363
  %v9156 = vpop.f32.mrf.mxu0
  %v9157 = vadd.f32 %v9144, %v9156
  %v9158 = vpop.f32.mrf.mxu0
  %9159 = vdwg.mxu0
  %9160 = vmatpush.bf16.msra.mxu0 %v6954
  %9161 = vmatpush.bf16.msra.mxu0 %v6953
  %9162 = vmatpush.bf16.msra.mxu0 %v6952
  %9163 = vmatpush.bf16.msra.mxu0 %v6951
  %9164 = vmatpush.bf16.msra.mxu0 %v6950
  %9165 = vmatpush.bf16.msra.mxu0 %v6949
  %9166 = vmatpush.bf16.msra.mxu0 %v6948
  %9167 = vmatpush.bf16.msra.mxu0 %v6947
  %9168 = vmatmul.bf16.gmra.mxu0 %v2364
  %v9169 = vpop.f32.mrf.mxu0
  %v9170 = vadd.f32 %v9157, %v9169
  %v9171 = vpop.f32.mrf.mxu0
  %9172 = vdwg.mxu0
  %9173 = vmatpush.bf16.msra.mxu0 %v6962
  %9174 = vmatpush.bf16.msra.mxu0 %v6961
  %9175 = vmatpush.bf16.msra.mxu0 %v6960
  %9176 = vmatpush.bf16.msra.mxu0 %v6959
  %9177 = vmatpush.bf16.msra.mxu0 %v6958
  %9178 = vmatpush.bf16.msra.mxu0 %v6957
  %9179 = vmatpush.bf16.msra.mxu0 %v6956
  %9180 = vmatpush.bf16.msra.mxu0 %v6955
  %9181 = vmatmul.bf16.gmra.mxu0 %v2365
  %v9182 = vpop.f32.mrf.mxu0
  %v9183 = vadd.f32 %v9170, %v9182
  %v9184 = vpop.f32.mrf.mxu0
  %9185 = vdwg.mxu0
  %9186 = vmatpush.bf16.msra.mxu0 %v6970
  %9187 = vmatpush.bf16.msra.mxu0 %v6969
  %9188 = vmatpush.bf16.msra.mxu0 %v6968
  %9189 = vmatpush.bf16.msra.mxu0 %v6967
  %9190 = vmatpush.bf16.msra.mxu0 %v6966
  %9191 = vmatpush.bf16.msra.mxu0 %v6965
  %9192 = vmatpush.bf16.msra.mxu0 %v6964
  %9193 = vmatpush.bf16.msra.mxu0 %v6963
  %9194 = vmatmul.bf16.gmra.mxu0 %v2366
  %v9195 = vpop.f32.mrf.mxu0
  %v9196 = vadd.f32 %v9183, %v9195
  %v9197 = vpop.f32.mrf.mxu0
  %9198 = vdwg.mxu0
  %9199 = vmatpush.bf16.msra.mxu0 %v6978
  %9200 = vmatpush.bf16.msra.mxu0 %v6977
  %9201 = vmatpush.bf16.msra.mxu0 %v6976
  %9202 = vmatpush.bf16.msra.mxu0 %v6975
  %9203 = vmatpush.bf16.msra.mxu0 %v6974
  %9204 = vmatpush.bf16.msra.mxu0 %v6973
  %9205 = vmatpush.bf16.msra.mxu0 %v6972
  %9206 = vmatpush.bf16.msra.mxu0 %v6971
  %9207 = vmatmul.bf16.gmra.mxu0 %v2367
  %v9208 = vpop.f32.mrf.mxu0
  %v9209 = vadd.f32 %v9196, %v9208
  %v9210 = vpop.f32.mrf.mxu0
  %9211 = vdwg.mxu0
  %9212 = vmatpush.bf16.msra.mxu0 %v6986
  %9213 = vmatpush.bf16.msra.mxu0 %v6985
  %9214 = vmatpush.bf16.msra.mxu0 %v6984
  %9215 = vmatpush.bf16.msra.mxu0 %v6983
  %9216 = vmatpush.bf16.msra.mxu0 %v6982
  %9217 = vmatpush.bf16.msra.mxu0 %v6981
  %9218 = vmatpush.bf16.msra.mxu0 %v6980
  %9219 = vmatpush.bf16.msra.mxu0 %v6979
  %9220 = vmatmul.bf16.gmra.mxu0 %v2368
  %v9221 = vpop.f32.mrf.mxu0
  %v9222 = vadd.f32 %v9209, %v9221
  %v9223 = vpop.f32.mrf.mxu0
  %9224 = vdwg.mxu0
  %9225 = vmatpush.bf16.msra.mxu0 %v6994
  %9226 = vmatpush.bf16.msra.mxu0 %v6993
  %9227 = vmatpush.bf16.msra.mxu0 %v6992
  %9228 = vmatpush.bf16.msra.mxu0 %v6991
  %9229 = vmatpush.bf16.msra.mxu0 %v6990
  %9230 = vmatpush.bf16.msra.mxu0 %v6989
  %9231 = vmatpush.bf16.msra.mxu0 %v6988
  %9232 = vmatpush.bf16.msra.mxu0 %v6987
  %9233 = vmatmul.bf16.gmra.mxu0 %v2369
  %v9234 = vpop.f32.mrf.mxu0
  %v9235 = vadd.f32 %v9222, %v9234
  %v9236 = vpop.f32.mrf.mxu0
  %9237 = vdwg.mxu0
  %9238 = vmatpush.bf16.msra.mxu0 %v7002
  %9239 = vmatpush.bf16.msra.mxu0 %v7001
  %9240 = vmatpush.bf16.msra.mxu0 %v7000
  %9241 = vmatpush.bf16.msra.mxu0 %v6999
  %9242 = vmatpush.bf16.msra.mxu0 %v6998
  %9243 = vmatpush.bf16.msra.mxu0 %v6997
  %9244 = vmatpush.bf16.msra.mxu0 %v6996
  %9245 = vmatpush.bf16.msra.mxu0 %v6995
  %9246 = vmatmul.bf16.gmra.mxu0 %v2370
  %v9247 = vpop.f32.mrf.mxu0
  %v9248 = vadd.f32 %v9235, %v9247
  %v9249 = vpop.f32.mrf.mxu0
  %9250 = vdwg.mxu0
  %9251 = vmatpush.bf16.msra.mxu0 %v7010
  %9252 = vmatpush.bf16.msra.mxu0 %v7009
  %9253 = vmatpush.bf16.msra.mxu0 %v7008
  %9254 = vmatpush.bf16.msra.mxu0 %v7007
  %9255 = vmatpush.bf16.msra.mxu0 %v7006
  %9256 = vmatpush.bf16.msra.mxu0 %v7005
  %9257 = vmatpush.bf16.msra.mxu0 %v7004
  %9258 = vmatpush.bf16.msra.mxu0 %v7003
  %9259 = vmatmul.bf16.gmra.mxu0 %v2371
  %v9260 = vpop.f32.mrf.mxu0
  %v9261 = vadd.f32 %v9248, %v9260
  %v9262 = vpop.f32.mrf.mxu0
  %9263 = vdwg.mxu0
  %9264 = vmatpush.bf16.msra.mxu0 %v7018
  %9265 = vmatpush.bf16.msra.mxu0 %v7017
  %9266 = vmatpush.bf16.msra.mxu0 %v7016
  %9267 = vmatpush.bf16.msra.mxu0 %v7015
  %9268 = vmatpush.bf16.msra.mxu0 %v7014
  %9269 = vmatpush.bf16.msra.mxu0 %v7013
  %9270 = vmatpush.bf16.msra.mxu0 %v7012
  %9271 = vmatpush.bf16.msra.mxu0 %v7011
  %9272 = vmatmul.bf16.gmra.mxu0 %v2372
  %v9273 = vpop.f32.mrf.mxu0
  %v9274 = vadd.f32 %v9261, %v9273
  %v9275 = vpop.f32.mrf.mxu0
  %9276 = vdwg.mxu0
  %9277 = vmatpush.bf16.msra.mxu0 %v7026
  %9278 = vmatpush.bf16.msra.mxu0 %v7025
  %9279 = vmatpush.bf16.msra.mxu0 %v7024
  %9280 = vmatpush.bf16.msra.mxu0 %v7023
  %9281 = vmatpush.bf16.msra.mxu0 %v7022
  %9282 = vmatpush.bf16.msra.mxu0 %v7021
  %9283 = vmatpush.bf16.msra.mxu0 %v7020
  %9284 = vmatpush.bf16.msra.mxu0 %v7019
  %9285 = vmatmul.bf16.gmra.mxu0 %v2373
  %v9286 = vpop.f32.mrf.mxu0
  %v9287 = vadd.f32 %v9274, %v9286
  %v9288 = vpop.f32.mrf.mxu0
  %9289 = vdwg.mxu0
  %9290 = vmatpush.bf16.msra.mxu0 %v7034
  %9291 = vmatpush.bf16.msra.mxu0 %v7033
  %9292 = vmatpush.bf16.msra.mxu0 %v7032
  %9293 = vmatpush.bf16.msra.mxu0 %v7031
  %9294 = vmatpush.bf16.msra.mxu0 %v7030
  %9295 = vmatpush.bf16.msra.mxu0 %v7029
  %9296 = vmatpush.bf16.msra.mxu0 %v7028
  %9297 = vmatpush.bf16.msra.mxu0 %v7027
  %9298 = vmatmul.bf16.gmra.mxu0 %v2374
  %v9299 = vpop.f32.mrf.mxu0
  %v9300 = vadd.f32 %v9287, %v9299
  %v9301 = vpop.f32.mrf.mxu0
  %9302 = vdwg.mxu0
  %9303 = vmatpush.bf16.msra.mxu0 %v7042
  %9304 = vmatpush.bf16.msra.mxu0 %v7041
  %9305 = vmatpush.bf16.msra.mxu0 %v7040
  %9306 = vmatpush.bf16.msra.mxu0 %v7039
  %9307 = vmatpush.bf16.msra.mxu0 %v7038
  %9308 = vmatpush.bf16.msra.mxu0 %v7037
  %9309 = vmatpush.bf16.msra.mxu0 %v7036
  %9310 = vmatpush.bf16.msra.mxu0 %v7035
  %9311 = vmatmul.bf16.gmra.mxu0 %v2375
  %v9312 = vpop.f32.mrf.mxu0
  %v9313 = vadd.f32 %v9300, %v9312
  %v9314 = vpop.f32.mrf.mxu0
  %9315 = vdwg.mxu0
  %9316 = vmatpush.bf16.msra.mxu0 %v7050
  %9317 = vmatpush.bf16.msra.mxu0 %v7049
  %9318 = vmatpush.bf16.msra.mxu0 %v7048
  %9319 = vmatpush.bf16.msra.mxu0 %v7047
  %9320 = vmatpush.bf16.msra.mxu0 %v7046
  %9321 = vmatpush.bf16.msra.mxu0 %v7045
  %9322 = vmatpush.bf16.msra.mxu0 %v7044
  %9323 = vmatpush.bf16.msra.mxu0 %v7043
  %9324 = vmatmul.bf16.gmra.mxu0 %v2376
  %v9325 = vpop.f32.mrf.mxu0
  %v9326 = vadd.f32 %v9313, %v9325
  %v9327 = vpop.f32.mrf.mxu0
  %9328 = vdwg.mxu0
  %9329 = vmatpush.bf16.msra.mxu0 %v7058
  %9330 = vmatpush.bf16.msra.mxu0 %v7057
  %9331 = vmatpush.bf16.msra.mxu0 %v7056
  %9332 = vmatpush.bf16.msra.mxu0 %v7055
  %9333 = vmatpush.bf16.msra.mxu0 %v7054
  %9334 = vmatpush.bf16.msra.mxu0 %v7053
  %9335 = vmatpush.bf16.msra.mxu0 %v7052
  %9336 = vmatpush.bf16.msra.mxu0 %v7051
  %9337 = vmatmul.bf16.gmra.mxu0 %v2377
  %v9338 = vpop.f32.mrf.mxu0
  %v9339 = vadd.f32 %v9326, %v9338
  %v9340 = vpop.f32.mrf.mxu0
  %9341 = vdwg.mxu0
  %9342 = vmatpush.bf16.msra.mxu0 %v7066
  %9343 = vmatpush.bf16.msra.mxu0 %v7065
  %9344 = vmatpush.bf16.msra.mxu0 %v7064
  %9345 = vmatpush.bf16.msra.mxu0 %v7063
  %9346 = vmatpush.bf16.msra.mxu0 %v7062
  %9347 = vmatpush.bf16.msra.mxu0 %v7061
  %9348 = vmatpush.bf16.msra.mxu0 %v7060
  %9349 = vmatpush.bf16.msra.mxu0 %v7059
  %9350 = vmatmul.bf16.gmra.mxu0 %v2378
  %v9351 = vpop.f32.mrf.mxu0
  %v9352 = vadd.f32 %v9339, %v9351
  %v9353 = vpop.f32.mrf.mxu0
  %9354 = vdwg.mxu0
  %9355 = vmatpush.bf16.msra.mxu0 %v7074
  %9356 = vmatpush.bf16.msra.mxu0 %v7073
  %9357 = vmatpush.bf16.msra.mxu0 %v7072
  %9358 = vmatpush.bf16.msra.mxu0 %v7071
  %9359 = vmatpush.bf16.msra.mxu0 %v7070
  %9360 = vmatpush.bf16.msra.mxu0 %v7069
  %9361 = vmatpush.bf16.msra.mxu0 %v7068
  %9362 = vmatpush.bf16.msra.mxu0 %v7067
  %9363 = vmatmul.bf16.gmra.mxu0 %v2379
  %v9364 = vpop.f32.mrf.mxu0
  %v9365 = vadd.f32 %v9352, %v9364
  %v9366 = vpop.f32.mrf.mxu0
  %9367 = vdwg.mxu0
  %9368 = vmatpush.bf16.msra.mxu0 %v7082
  %9369 = vmatpush.bf16.msra.mxu0 %v7081
  %9370 = vmatpush.bf16.msra.mxu0 %v7080
  %9371 = vmatpush.bf16.msra.mxu0 %v7079
  %9372 = vmatpush.bf16.msra.mxu0 %v7078
  %9373 = vmatpush.bf16.msra.mxu0 %v7077
  %9374 = vmatpush.bf16.msra.mxu0 %v7076
  %9375 = vmatpush.bf16.msra.mxu0 %v7075
  %9376 = vmatmul.bf16.gmra.mxu0 %v2380
  %v9377 = vpop.f32.mrf.mxu0
  %v9378 = vadd.f32 %v9365, %v9377
  %v9379 = vpop.f32.mrf.mxu0
  %9380 = vdwg.mxu0
  %9381 = vmatpush.bf16.msra.mxu0 %v7090
  %9382 = vmatpush.bf16.msra.mxu0 %v7089
  %9383 = vmatpush.bf16.msra.mxu0 %v7088
  %9384 = vmatpush.bf16.msra.mxu0 %v7087
  %9385 = vmatpush.bf16.msra.mxu0 %v7086
  %9386 = vmatpush.bf16.msra.mxu0 %v7085
  %9387 = vmatpush.bf16.msra.mxu0 %v7084
  %9388 = vmatpush.bf16.msra.mxu0 %v7083
  %9389 = vmatmul.bf16.gmra.mxu0 %v2381
  %v9390 = vpop.f32.mrf.mxu0
  %v9391 = vadd.f32 %v9378, %v9390
  %v9392 = vpop.f32.mrf.mxu0
  %9393 = vdwg.mxu0
  %9394 = vmatpush.bf16.msra.mxu0 %v7098
  %9395 = vmatpush.bf16.msra.mxu0 %v7097
  %9396 = vmatpush.bf16.msra.mxu0 %v7096
  %9397 = vmatpush.bf16.msra.mxu0 %v7095
  %9398 = vmatpush.bf16.msra.mxu0 %v7094
  %9399 = vmatpush.bf16.msra.mxu0 %v7093
  %9400 = vmatpush.bf16.msra.mxu0 %v7092
  %9401 = vmatpush.bf16.msra.mxu0 %v7091
  %9402 = vmatmul.bf16.gmra.mxu0 %v2382
  %v9403 = vpop.f32.mrf.mxu0
  %v9404 = vadd.f32 %v9391, %v9403
  %v9405 = vpop.f32.mrf.mxu0
  %9406 = vdwg.mxu0
  %9407 = vmatpush.bf16.msra.mxu0 %v7106
  %9408 = vmatpush.bf16.msra.mxu0 %v7105
  %9409 = vmatpush.bf16.msra.mxu0 %v7104
  %9410 = vmatpush.bf16.msra.mxu0 %v7103
  %9411 = vmatpush.bf16.msra.mxu0 %v7102
  %9412 = vmatpush.bf16.msra.mxu0 %v7101
  %9413 = vmatpush.bf16.msra.mxu0 %v7100
  %9414 = vmatpush.bf16.msra.mxu0 %v7099
  %9415 = vmatmul.bf16.gmra.mxu0 %v2383
  %v9416 = vpop.f32.mrf.mxu0
  %v9417 = vadd.f32 %v9404, %v9416
  %v9418 = vpop.f32.mrf.mxu0
  %9419 = vdwg.mxu0
  %9420 = vmatpush.bf16.msra.mxu0 %v7114
  %9421 = vmatpush.bf16.msra.mxu0 %v7113
  %9422 = vmatpush.bf16.msra.mxu0 %v7112
  %9423 = vmatpush.bf16.msra.mxu0 %v7111
  %9424 = vmatpush.bf16.msra.mxu0 %v7110
  %9425 = vmatpush.bf16.msra.mxu0 %v7109
  %9426 = vmatpush.bf16.msra.mxu0 %v7108
  %9427 = vmatpush.bf16.msra.mxu0 %v7107
  %9428 = vmatmul.bf16.gmra.mxu0 %v2384
  %v9429 = vpop.f32.mrf.mxu0
  %v9430 = vadd.f32 %v9417, %v9429
  %v9431 = vpop.f32.mrf.mxu0
  %9432 = vdwg.mxu0
  %9433 = vmatpush.bf16.msra.mxu0 %v7122
  %9434 = vmatpush.bf16.msra.mxu0 %v7121
  %9435 = vmatpush.bf16.msra.mxu0 %v7120
  %9436 = vmatpush.bf16.msra.mxu0 %v7119
  %9437 = vmatpush.bf16.msra.mxu0 %v7118
  %9438 = vmatpush.bf16.msra.mxu0 %v7117
  %9439 = vmatpush.bf16.msra.mxu0 %v7116
  %9440 = vmatpush.bf16.msra.mxu0 %v7115
  %9441 = vmatmul.bf16.gmra.mxu0 %v2385
  %v9442 = vpop.f32.mrf.mxu0
  %v9443 = vadd.f32 %v9430, %v9442
  %v9444 = vpop.f32.mrf.mxu0
  %9445 = vdwg.mxu0
  %9446 = vmatpush.bf16.msra.mxu0 %v7130
  %9447 = vmatpush.bf16.msra.mxu0 %v7129
  %9448 = vmatpush.bf16.msra.mxu0 %v7128
  %9449 = vmatpush.bf16.msra.mxu0 %v7127
  %9450 = vmatpush.bf16.msra.mxu0 %v7126
  %9451 = vmatpush.bf16.msra.mxu0 %v7125
  %9452 = vmatpush.bf16.msra.mxu0 %v7124
  %9453 = vmatpush.bf16.msra.mxu0 %v7123
  %9454 = vmatmul.bf16.gmra.mxu0 %v2386
  %v9455 = vpop.f32.mrf.mxu0
  %v9456 = vadd.f32 %v9443, %v9455
  %v9457 = vpop.f32.mrf.mxu0
  %9458 = vdwg.mxu0
  %9459 = vmatpush.bf16.msra.mxu0 %v7138
  %9460 = vmatpush.bf16.msra.mxu0 %v7137
  %9461 = vmatpush.bf16.msra.mxu0 %v7136
  %9462 = vmatpush.bf16.msra.mxu0 %v7135
  %9463 = vmatpush.bf16.msra.mxu0 %v7134
  %9464 = vmatpush.bf16.msra.mxu0 %v7133
  %9465 = vmatpush.bf16.msra.mxu0 %v7132
  %9466 = vmatpush.bf16.msra.mxu0 %v7131
  %9467 = vmatmul.bf16.gmra.mxu0 %v2387
  %v9468 = vpop.f32.mrf.mxu0
  %v9469 = vadd.f32 %v9456, %v9468
  %v9470 = vpop.f32.mrf.mxu0
  %9471 = vdwg.mxu0
  %9472 = vmatpush.bf16.msra.mxu0 %v7146
  %9473 = vmatpush.bf16.msra.mxu0 %v7145
  %9474 = vmatpush.bf16.msra.mxu0 %v7144
  %9475 = vmatpush.bf16.msra.mxu0 %v7143
  %9476 = vmatpush.bf16.msra.mxu0 %v7142
  %9477 = vmatpush.bf16.msra.mxu0 %v7141
  %9478 = vmatpush.bf16.msra.mxu0 %v7140
  %9479 = vmatpush.bf16.msra.mxu0 %v7139
  %9480 = vmatmul.bf16.gmra.mxu0 %v2388
  %v9481 = vpop.f32.mrf.mxu0
  %v9482 = vadd.f32 %v9469, %v9481
  %v9483 = vpop.f32.mrf.mxu0
  %9484 = vdwg.mxu0
  %9485 = vmatpush.bf16.msra.mxu0 %v7154
  %9486 = vmatpush.bf16.msra.mxu0 %v7153
  %9487 = vmatpush.bf16.msra.mxu0 %v7152
  %9488 = vmatpush.bf16.msra.mxu0 %v7151
  %9489 = vmatpush.bf16.msra.mxu0 %v7150
  %9490 = vmatpush.bf16.msra.mxu0 %v7149
  %9491 = vmatpush.bf16.msra.mxu0 %v7148
  %9492 = vmatpush.bf16.msra.mxu0 %v7147
  %9493 = vmatmul.bf16.gmra.mxu0 %v2389
  %v9494 = vpop.f32.mrf.mxu0
  %v9495 = vadd.f32 %v9482, %v9494
  %v9496 = vpop.f32.mrf.mxu0
  %9497 = vdwg.mxu0
  %9498 = vmatpush.bf16.msra.mxu0 %v7162
  %9499 = vmatpush.bf16.msra.mxu0 %v7161
  %9500 = vmatpush.bf16.msra.mxu0 %v7160
  %9501 = vmatpush.bf16.msra.mxu0 %v7159
  %9502 = vmatpush.bf16.msra.mxu0 %v7158
  %9503 = vmatpush.bf16.msra.mxu0 %v7157
  %9504 = vmatpush.bf16.msra.mxu0 %v7156
  %9505 = vmatpush.bf16.msra.mxu0 %v7155
  %9506 = vmatmul.bf16.gmra.mxu0 %v2390
  %v9507 = vpop.f32.mrf.mxu0
  %v9508 = vadd.f32 %v9495, %v9507
  %v9509 = vpop.f32.mrf.mxu0
  %9510 = vdwg.mxu0
  %9511 = vmatpush.bf16.msra.mxu0 %v7170
  %9512 = vmatpush.bf16.msra.mxu0 %v7169
  %9513 = vmatpush.bf16.msra.mxu0 %v7168
  %9514 = vmatpush.bf16.msra.mxu0 %v7167
  %9515 = vmatpush.bf16.msra.mxu0 %v7166
  %9516 = vmatpush.bf16.msra.mxu0 %v7165
  %9517 = vmatpush.bf16.msra.mxu0 %v7164
  %9518 = vmatpush.bf16.msra.mxu0 %v7163
  %9519 = vmatmul.bf16.gmra.mxu0 %v2391
  %v9520 = vpop.f32.mrf.mxu0
  %v9521 = vadd.f32 %v9508, %v9520
  %v9522 = vpop.f32.mrf.mxu0
  %9523 = vdwg.mxu0
  %9524 = vmatpush.bf16.msra.mxu0 %v7178
  %9525 = vmatpush.bf16.msra.mxu0 %v7177
  %9526 = vmatpush.bf16.msra.mxu0 %v7176
  %9527 = vmatpush.bf16.msra.mxu0 %v7175
  %9528 = vmatpush.bf16.msra.mxu0 %v7174
  %9529 = vmatpush.bf16.msra.mxu0 %v7173
  %9530 = vmatpush.bf16.msra.mxu0 %v7172
  %9531 = vmatpush.bf16.msra.mxu0 %v7171
  %9532 = vmatmul.bf16.gmra.mxu0 %v2392
  %v9533 = vpop.f32.mrf.mxu0
  %v9534 = vadd.f32 %v9521, %v9533
  %v9535 = vpop.f32.mrf.mxu0
  %9536 = vdwg.mxu0
  %9537 = vmatpush.bf16.msra.mxu0 %v7186
  %9538 = vmatpush.bf16.msra.mxu0 %v7185
  %9539 = vmatpush.bf16.msra.mxu0 %v7184
  %9540 = vmatpush.bf16.msra.mxu0 %v7183
  %9541 = vmatpush.bf16.msra.mxu0 %v7182
  %9542 = vmatpush.bf16.msra.mxu0 %v7181
  %9543 = vmatpush.bf16.msra.mxu0 %v7180
  %9544 = vmatpush.bf16.msra.mxu0 %v7179
  %9545 = vmatmul.bf16.gmra.mxu0 %v2393
  %v9546 = vpop.f32.mrf.mxu0
  %v9547 = vadd.f32 %v9534, %v9546
  %v9548 = vpop.f32.mrf.mxu0
  %9549 = vdwg.mxu0
  %9550 = vmatpush.bf16.msra.mxu0 %v7194
  %9551 = vmatpush.bf16.msra.mxu0 %v7193
  %9552 = vmatpush.bf16.msra.mxu0 %v7192
  %9553 = vmatpush.bf16.msra.mxu0 %v7191
  %9554 = vmatpush.bf16.msra.mxu0 %v7190
  %9555 = vmatpush.bf16.msra.mxu0 %v7189
  %9556 = vmatpush.bf16.msra.mxu0 %v7188
  %9557 = vmatpush.bf16.msra.mxu0 %v7187
  %9558 = vmatmul.bf16.gmra.mxu0 %v2394
  %v9559 = vpop.f32.mrf.mxu0
  %v9560 = vadd.f32 %v9547, %v9559
  %v9561 = vpop.f32.mrf.mxu0
  %9562 = vdwg.mxu0
  %9563 = vmatpush.bf16.msra.mxu0 %v7202
  %9564 = vmatpush.bf16.msra.mxu0 %v7201
  %9565 = vmatpush.bf16.msra.mxu0 %v7200
  %9566 = vmatpush.bf16.msra.mxu0 %v7199
  %9567 = vmatpush.bf16.msra.mxu0 %v7198
  %9568 = vmatpush.bf16.msra.mxu0 %v7197
  %9569 = vmatpush.bf16.msra.mxu0 %v7196
  %9570 = vmatpush.bf16.msra.mxu0 %v7195
  %9571 = vmatmul.bf16.gmra.mxu0 %v2395
  %v9572 = vpop.f32.mrf.mxu0
  %v9573 = vadd.f32 %v9560, %v9572
  %v9574 = vpop.f32.mrf.mxu0
  %9575 = vdwg.mxu0
  %9576 = vmatpush.bf16.msra.mxu0 %v7210
  %9577 = vmatpush.bf16.msra.mxu0 %v7209
  %9578 = vmatpush.bf16.msra.mxu0 %v7208
  %9579 = vmatpush.bf16.msra.mxu0 %v7207
  %9580 = vmatpush.bf16.msra.mxu0 %v7206
  %9581 = vmatpush.bf16.msra.mxu0 %v7205
  %9582 = vmatpush.bf16.msra.mxu0 %v7204
  %9583 = vmatpush.bf16.msra.mxu0 %v7203
  %9584 = vmatmul.bf16.gmra.mxu0 %v2396
  %v9585 = vpop.f32.mrf.mxu0
  %v9586 = vadd.f32 %v9573, %v9585
  %v9587 = vpop.f32.mrf.mxu0
  %9588 = vdwg.mxu0
  %9589 = vmatpush.bf16.msra.mxu0 %v7218
  %9590 = vmatpush.bf16.msra.mxu0 %v7217
  %9591 = vmatpush.bf16.msra.mxu0 %v7216
  %9592 = vmatpush.bf16.msra.mxu0 %v7215
  %9593 = vmatpush.bf16.msra.mxu0 %v7214
  %9594 = vmatpush.bf16.msra.mxu0 %v7213
  %9595 = vmatpush.bf16.msra.mxu0 %v7212
  %9596 = vmatpush.bf16.msra.mxu0 %v7211
  %9597 = vmatmul.bf16.gmra.mxu0 %v2397
  %v9598 = vpop.f32.mrf.mxu0
  %v9599 = vadd.f32 %v9586, %v9598
  %v9600 = vpop.f32.mrf.mxu0
  %9601 = vdwg.mxu0
  %9602 = vmatpush.bf16.msra.mxu0 %v7226
  %9603 = vmatpush.bf16.msra.mxu0 %v7225
  %9604 = vmatpush.bf16.msra.mxu0 %v7224
  %9605 = vmatpush.bf16.msra.mxu0 %v7223
  %9606 = vmatpush.bf16.msra.mxu0 %v7222
  %9607 = vmatpush.bf16.msra.mxu0 %v7221
  %9608 = vmatpush.bf16.msra.mxu0 %v7220
  %9609 = vmatpush.bf16.msra.mxu0 %v7219
  %9610 = vmatmul.bf16.gmra.mxu0 %v2398
  %v9611 = vpop.f32.mrf.mxu0
  %v9612 = vadd.f32 %v9599, %v9611
  %v9613 = vpop.f32.mrf.mxu0
  %9614 = vdwg.mxu0
  %9615 = vmatpush.bf16.msra.mxu0 %v7234
  %9616 = vmatpush.bf16.msra.mxu0 %v7233
  %9617 = vmatpush.bf16.msra.mxu0 %v7232
  %9618 = vmatpush.bf16.msra.mxu0 %v7231
  %9619 = vmatpush.bf16.msra.mxu0 %v7230
  %9620 = vmatpush.bf16.msra.mxu0 %v7229
  %9621 = vmatpush.bf16.msra.mxu0 %v7228
  %9622 = vmatpush.bf16.msra.mxu0 %v7227
  %9623 = vmatmul.bf16.gmra.mxu0 %v2399
  %v9624 = vpop.f32.mrf.mxu0
  %v9625 = vadd.f32 %v9612, %v9624
  %v9626 = vpop.f32.mrf.mxu0
  %9627 = vdwg.mxu0
  %9628 = vmatpush.bf16.msra.mxu0 %v7242
  %9629 = vmatpush.bf16.msra.mxu0 %v7241
  %9630 = vmatpush.bf16.msra.mxu0 %v7240
  %9631 = vmatpush.bf16.msra.mxu0 %v7239
  %9632 = vmatpush.bf16.msra.mxu0 %v7238
  %9633 = vmatpush.bf16.msra.mxu0 %v7237
  %9634 = vmatpush.bf16.msra.mxu0 %v7236
  %9635 = vmatpush.bf16.msra.mxu0 %v7235
  %9636 = vmatmul.bf16.gmra.mxu0 %v2400
  %v9637 = vpop.f32.mrf.mxu0
  %v9638 = vadd.f32 %v9625, %v9637
  %v9639 = vpop.f32.mrf.mxu0
  %9640 = vdwg.mxu0
  %9641 = vmatpush.bf16.msra.mxu0 %v7250
  %9642 = vmatpush.bf16.msra.mxu0 %v7249
  %9643 = vmatpush.bf16.msra.mxu0 %v7248
  %9644 = vmatpush.bf16.msra.mxu0 %v7247
  %9645 = vmatpush.bf16.msra.mxu0 %v7246
  %9646 = vmatpush.bf16.msra.mxu0 %v7245
  %9647 = vmatpush.bf16.msra.mxu0 %v7244
  %9648 = vmatpush.bf16.msra.mxu0 %v7243
  %9649 = vmatmul.bf16.gmra.mxu0 %v2401
  %v9650 = vpop.f32.mrf.mxu0
  %v9651 = vadd.f32 %v9638, %v9650
  %v9652 = vpop.f32.mrf.mxu0
  %9653 = vdwg.mxu0
  %9654 = vmatpush.bf16.msra.mxu0 %v7258
  %9655 = vmatpush.bf16.msra.mxu0 %v7257
  %9656 = vmatpush.bf16.msra.mxu0 %v7256
  %9657 = vmatpush.bf16.msra.mxu0 %v7255
  %9658 = vmatpush.bf16.msra.mxu0 %v7254
  %9659 = vmatpush.bf16.msra.mxu0 %v7253
  %9660 = vmatpush.bf16.msra.mxu0 %v7252
  %9661 = vmatpush.bf16.msra.mxu0 %v7251
  %9662 = vmatmul.bf16.gmra.mxu0 %v2402
  %v9663 = vpop.f32.mrf.mxu0
  %v9664 = vadd.f32 %v9651, %v9663
  %v9665 = vpop.f32.mrf.mxu0
  %9666 = vdwg.mxu0
  %9667 = vmatpush.bf16.msra.mxu0 %v7266
  %9668 = vmatpush.bf16.msra.mxu0 %v7265
  %9669 = vmatpush.bf16.msra.mxu0 %v7264
  %9670 = vmatpush.bf16.msra.mxu0 %v7263
  %9671 = vmatpush.bf16.msra.mxu0 %v7262
  %9672 = vmatpush.bf16.msra.mxu0 %v7261
  %9673 = vmatpush.bf16.msra.mxu0 %v7260
  %9674 = vmatpush.bf16.msra.mxu0 %v7259
  %9675 = vmatmul.bf16.gmra.mxu0 %v2403
  %v9676 = vpop.f32.mrf.mxu0
  %v9677 = vadd.f32 %v9664, %v9676
  %v9678 = vpop.f32.mrf.mxu0
  %9679 = vdwg.mxu0
  %9680 = vmatpush.bf16.msra.mxu0 %v7274
  %9681 = vmatpush.bf16.msra.mxu0 %v7273
  %9682 = vmatpush.bf16.msra.mxu0 %v7272
  %9683 = vmatpush.bf16.msra.mxu0 %v7271
  %9684 = vmatpush.bf16.msra.mxu0 %v7270
  %9685 = vmatpush.bf16.msra.mxu0 %v7269
  %9686 = vmatpush.bf16.msra.mxu0 %v7268
  %9687 = vmatpush.bf16.msra.mxu0 %v7267
  %9688 = vmatmul.bf16.gmra.mxu0 %v2404
  %v9689 = vpop.f32.mrf.mxu0
  %v9690 = vadd.f32 %v9677, %v9689
  %v9691 = vpop.f32.mrf.mxu0
  %9692 = vdwg.mxu0
  %9693 = vmatpush.bf16.msra.mxu0 %v7282
  %9694 = vmatpush.bf16.msra.mxu0 %v7281
  %9695 = vmatpush.bf16.msra.mxu0 %v7280
  %9696 = vmatpush.bf16.msra.mxu0 %v7279
  %9697 = vmatpush.bf16.msra.mxu0 %v7278
  %9698 = vmatpush.bf16.msra.mxu0 %v7277
  %9699 = vmatpush.bf16.msra.mxu0 %v7276
  %9700 = vmatpush.bf16.msra.mxu0 %v7275
  %9701 = vmatmul.bf16.gmra.mxu0 %v2405
  %v9702 = vpop.f32.mrf.mxu0
  %v9703 = vadd.f32 %v9690, %v9702
  %v9704 = vpop.f32.mrf.mxu0
  %9705 = vdwg.mxu0
  %9706 = vmatpush.bf16.msra.mxu0 %v7290
  %9707 = vmatpush.bf16.msra.mxu0 %v7289
  %9708 = vmatpush.bf16.msra.mxu0 %v7288
  %9709 = vmatpush.bf16.msra.mxu0 %v7287
  %9710 = vmatpush.bf16.msra.mxu0 %v7286
  %9711 = vmatpush.bf16.msra.mxu0 %v7285
  %9712 = vmatpush.bf16.msra.mxu0 %v7284
  %9713 = vmatpush.bf16.msra.mxu0 %v7283
  %9714 = vmatmul.bf16.gmra.mxu0 %v2406
  %v9715 = vpop.f32.mrf.mxu0
  %v9716 = vadd.f32 %v9703, %v9715
  %v9717 = vpop.f32.mrf.mxu0
  %9718 = vdwg.mxu0
  %9719 = vmatpush.bf16.msra.mxu0 %v7298
  %9720 = vmatpush.bf16.msra.mxu0 %v7297
  %9721 = vmatpush.bf16.msra.mxu0 %v7296
  %9722 = vmatpush.bf16.msra.mxu0 %v7295
  %9723 = vmatpush.bf16.msra.mxu0 %v7294
  %9724 = vmatpush.bf16.msra.mxu0 %v7293
  %9725 = vmatpush.bf16.msra.mxu0 %v7292
  %9726 = vmatpush.bf16.msra.mxu0 %v7291
  %9727 = vmatmul.bf16.gmra.mxu0 %v2407
  %v9728 = vpop.f32.mrf.mxu0
  %v9729 = vadd.f32 %v9716, %v9728
  %v9730 = vpop.f32.mrf.mxu0
  %9731 = vdwg.mxu0
  %9732 = vmatpush.bf16.msra.mxu0 %v7306
  %9733 = vmatpush.bf16.msra.mxu0 %v7305
  %9734 = vmatpush.bf16.msra.mxu0 %v7304
  %9735 = vmatpush.bf16.msra.mxu0 %v7303
  %9736 = vmatpush.bf16.msra.mxu0 %v7302
  %9737 = vmatpush.bf16.msra.mxu0 %v7301
  %9738 = vmatpush.bf16.msra.mxu0 %v7300
  %9739 = vmatpush.bf16.msra.mxu0 %v7299
  %9740 = vmatmul.bf16.gmra.mxu0 %v2408
  %v9741 = vpop.f32.mrf.mxu0
  %v9742 = vadd.f32 %v9729, %v9741
  %v9743 = vpop.f32.mrf.mxu0
  %9744 = vdwg.mxu0
  %9745 = vmatpush.bf16.msra.mxu0 %v7314
  %9746 = vmatpush.bf16.msra.mxu0 %v7313
  %9747 = vmatpush.bf16.msra.mxu0 %v7312
  %9748 = vmatpush.bf16.msra.mxu0 %v7311
  %9749 = vmatpush.bf16.msra.mxu0 %v7310
  %9750 = vmatpush.bf16.msra.mxu0 %v7309
  %9751 = vmatpush.bf16.msra.mxu0 %v7308
  %9752 = vmatpush.bf16.msra.mxu0 %v7307
  %9753 = vmatmul.bf16.gmra.mxu0 %v2409
  %v9754 = vpop.f32.mrf.mxu0
  %v9755 = vadd.f32 %v9742, %v9754
  %v9756 = vpop.f32.mrf.mxu0
  %9757 = vdwg.mxu0
  %9758 = vmatpush.bf16.msra.mxu0 %v7322
  %9759 = vmatpush.bf16.msra.mxu0 %v7321
  %9760 = vmatpush.bf16.msra.mxu0 %v7320
  %9761 = vmatpush.bf16.msra.mxu0 %v7319
  %9762 = vmatpush.bf16.msra.mxu0 %v7318
  %9763 = vmatpush.bf16.msra.mxu0 %v7317
  %9764 = vmatpush.bf16.msra.mxu0 %v7316
  %9765 = vmatpush.bf16.msra.mxu0 %v7315
  %9766 = vmatmul.bf16.gmra.mxu0 %v2410
  %v9767 = vpop.f32.mrf.mxu0
  %v9768 = vadd.f32 %v9755, %v9767
  %v9769 = vpop.f32.mrf.mxu0
  %9770 = vdwg.mxu0
  %9771 = vmatpush.bf16.msra.mxu0 %v7330
  %9772 = vmatpush.bf16.msra.mxu0 %v7329
  %9773 = vmatpush.bf16.msra.mxu0 %v7328
  %9774 = vmatpush.bf16.msra.mxu0 %v7327
  %9775 = vmatpush.bf16.msra.mxu0 %v7326
  %9776 = vmatpush.bf16.msra.mxu0 %v7325
  %9777 = vmatpush.bf16.msra.mxu0 %v7324
  %9778 = vmatpush.bf16.msra.mxu0 %v7323
  %9779 = vmatmul.bf16.gmra.mxu0 %v2411
  %v9780 = vpop.f32.mrf.mxu0
  %v9781 = vadd.f32 %v9768, %v9780
  %v9782 = vpop.f32.mrf.mxu0
  %9783 = vdwg.mxu0
  %9784 = vmatpush.bf16.msra.mxu0 %v7338
  %9785 = vmatpush.bf16.msra.mxu0 %v7337
  %9786 = vmatpush.bf16.msra.mxu0 %v7336
  %9787 = vmatpush.bf16.msra.mxu0 %v7335
  %9788 = vmatpush.bf16.msra.mxu0 %v7334
  %9789 = vmatpush.bf16.msra.mxu0 %v7333
  %9790 = vmatpush.bf16.msra.mxu0 %v7332
  %9791 = vmatpush.bf16.msra.mxu0 %v7331
  %9792 = vmatmul.bf16.gmra.mxu0 %v2412
  %v9793 = vpop.f32.mrf.mxu0
  %v9794 = vadd.f32 %v9781, %v9793
  %v9795 = vpop.f32.mrf.mxu0
  %9796 = vdwg.mxu0
  %9797 = vmatpush.bf16.msra.mxu0 %v7346
  %9798 = vmatpush.bf16.msra.mxu0 %v7345
  %9799 = vmatpush.bf16.msra.mxu0 %v7344
  %9800 = vmatpush.bf16.msra.mxu0 %v7343
  %9801 = vmatpush.bf16.msra.mxu0 %v7342
  %9802 = vmatpush.bf16.msra.mxu0 %v7341
  %9803 = vmatpush.bf16.msra.mxu0 %v7340
  %9804 = vmatpush.bf16.msra.mxu0 %v7339
  %9805 = vmatmul.bf16.gmra.mxu0 %v2413
  %v9806 = vpop.f32.mrf.mxu0
  %v9807 = vadd.f32 %v9794, %v9806
  %v9808 = vpop.f32.mrf.mxu0
  %9809 = vdwg.mxu0
  %9810 = vmatpush.bf16.msra.mxu0 %v7354
  %9811 = vmatpush.bf16.msra.mxu0 %v7353
  %9812 = vmatpush.bf16.msra.mxu0 %v7352
  %9813 = vmatpush.bf16.msra.mxu0 %v7351
  %9814 = vmatpush.bf16.msra.mxu0 %v7350
  %9815 = vmatpush.bf16.msra.mxu0 %v7349
  %9816 = vmatpush.bf16.msra.mxu0 %v7348
  %9817 = vmatpush.bf16.msra.mxu0 %v7347
  %9818 = vmatmul.bf16.gmra.mxu0 %v2414
  %v9819 = vpop.f32.mrf.mxu0
  %v9820 = vadd.f32 %v9807, %v9819
  %v9821 = vpop.f32.mrf.mxu0
  %9822 = vdwg.mxu0
  %9823 = vmatpush.bf16.msra.mxu0 %v7362
  %9824 = vmatpush.bf16.msra.mxu0 %v7361
  %9825 = vmatpush.bf16.msra.mxu0 %v7360
  %9826 = vmatpush.bf16.msra.mxu0 %v7359
  %9827 = vmatpush.bf16.msra.mxu0 %v7358
  %9828 = vmatpush.bf16.msra.mxu0 %v7357
  %9829 = vmatpush.bf16.msra.mxu0 %v7356
  %9830 = vmatpush.bf16.msra.mxu0 %v7355
  %9831 = vmatmul.bf16.gmra.mxu0 %v2415
  %v9832 = vpop.f32.mrf.mxu0
  %v9833 = vadd.f32 %v9820, %v9832
  %v9834 = vpop.f32.mrf.mxu0
  %9835 = vdwg.mxu0
  %9836 = vmatpush.bf16.msra.mxu0 %v7370
  %9837 = vmatpush.bf16.msra.mxu0 %v7369
  %9838 = vmatpush.bf16.msra.mxu0 %v7368
  %9839 = vmatpush.bf16.msra.mxu0 %v7367
  %9840 = vmatpush.bf16.msra.mxu0 %v7366
  %9841 = vmatpush.bf16.msra.mxu0 %v7365
  %9842 = vmatpush.bf16.msra.mxu0 %v7364
  %9843 = vmatpush.bf16.msra.mxu0 %v7363
  %9844 = vmatmul.bf16.gmra.mxu0 %v2416
  %v9845 = vpop.f32.mrf.mxu0
  %v9846 = vadd.f32 %v9833, %v9845
  %v9847 = vpop.f32.mrf.mxu0
  %9848 = vdwg.mxu0
  %9849 = vmatpush.bf16.msra.mxu0 %v7378
  %9850 = vmatpush.bf16.msra.mxu0 %v7377
  %9851 = vmatpush.bf16.msra.mxu0 %v7376
  %9852 = vmatpush.bf16.msra.mxu0 %v7375
  %9853 = vmatpush.bf16.msra.mxu0 %v7374
  %9854 = vmatpush.bf16.msra.mxu0 %v7373
  %9855 = vmatpush.bf16.msra.mxu0 %v7372
  %9856 = vmatpush.bf16.msra.mxu0 %v7371
  %9857 = vmatmul.bf16.gmra.mxu0 %v2417
  %v9858 = vpop.f32.mrf.mxu0
  %v9859 = vadd.f32 %v9846, %v9858
  %v9860 = vpop.f32.mrf.mxu0
  %9861 = vdwg.mxu0
  %9862 = vmatpush.bf16.msra.mxu0 %v7386
  %9863 = vmatpush.bf16.msra.mxu0 %v7385
  %9864 = vmatpush.bf16.msra.mxu0 %v7384
  %9865 = vmatpush.bf16.msra.mxu0 %v7383
  %9866 = vmatpush.bf16.msra.mxu0 %v7382
  %9867 = vmatpush.bf16.msra.mxu0 %v7381
  %9868 = vmatpush.bf16.msra.mxu0 %v7380
  %9869 = vmatpush.bf16.msra.mxu0 %v7379
  %9870 = vmatmul.bf16.gmra.mxu0 %v2418
  %v9871 = vpop.f32.mrf.mxu0
  %v9872 = vadd.f32 %v9859, %v9871
  %v9873 = vpop.f32.mrf.mxu0
  %9874 = vdwg.mxu0
  %9875 = vmatpush.bf16.msra.mxu0 %v7394
  %9876 = vmatpush.bf16.msra.mxu0 %v7393
  %9877 = vmatpush.bf16.msra.mxu0 %v7392
  %9878 = vmatpush.bf16.msra.mxu0 %v7391
  %9879 = vmatpush.bf16.msra.mxu0 %v7390
  %9880 = vmatpush.bf16.msra.mxu0 %v7389
  %9881 = vmatpush.bf16.msra.mxu0 %v7388
  %9882 = vmatpush.bf16.msra.mxu0 %v7387
  %9883 = vmatmul.bf16.gmra.mxu0 %v2419
  %v9884 = vpop.f32.mrf.mxu0
  %v9885 = vadd.f32 %v9872, %v9884
  %v9886 = vpop.f32.mrf.mxu0
  %9887 = vdwg.mxu0
  %9888 = vmatpush.bf16.msra.mxu0 %v7402
  %9889 = vmatpush.bf16.msra.mxu0 %v7401
  %9890 = vmatpush.bf16.msra.mxu0 %v7400
  %9891 = vmatpush.bf16.msra.mxu0 %v7399
  %9892 = vmatpush.bf16.msra.mxu0 %v7398
  %9893 = vmatpush.bf16.msra.mxu0 %v7397
  %9894 = vmatpush.bf16.msra.mxu0 %v7396
  %9895 = vmatpush.bf16.msra.mxu0 %v7395
  %9896 = vmatmul.bf16.gmra.mxu0 %v2420
  %v9897 = vpop.f32.mrf.mxu0
  %v9898 = vadd.f32 %v9885, %v9897
  %v9899 = vpop.f32.mrf.mxu0
  %9900 = vdwg.mxu0
  %9901 = vmatpush.bf16.msra.mxu0 %v7410
  %9902 = vmatpush.bf16.msra.mxu0 %v7409
  %9903 = vmatpush.bf16.msra.mxu0 %v7408
  %9904 = vmatpush.bf16.msra.mxu0 %v7407
  %9905 = vmatpush.bf16.msra.mxu0 %v7406
  %9906 = vmatpush.bf16.msra.mxu0 %v7405
  %9907 = vmatpush.bf16.msra.mxu0 %v7404
  %9908 = vmatpush.bf16.msra.mxu0 %v7403
  %9909 = vmatmul.bf16.gmra.mxu0 %v2421
  %v9910 = vpop.f32.mrf.mxu0
  %v9911 = vadd.f32 %v9898, %v9910
  %v9912 = vpop.f32.mrf.mxu0
  %9913 = vdwg.mxu0
  %9914 = vmatpush.bf16.msra.mxu0 %v7418
  %9915 = vmatpush.bf16.msra.mxu0 %v7417
  %9916 = vmatpush.bf16.msra.mxu0 %v7416
  %9917 = vmatpush.bf16.msra.mxu0 %v7415
  %9918 = vmatpush.bf16.msra.mxu0 %v7414
  %9919 = vmatpush.bf16.msra.mxu0 %v7413
  %9920 = vmatpush.bf16.msra.mxu0 %v7412
  %9921 = vmatpush.bf16.msra.mxu0 %v7411
  %9922 = vmatmul.bf16.gmra.mxu0 %v2422
  %v9923 = vpop.f32.mrf.mxu0
  %v9924 = vadd.f32 %v9911, %v9923
  %v9925 = vpop.f32.mrf.mxu0
  %9926 = vdwg.mxu0
  %9927 = vmatpush.bf16.msra.mxu0 %v7426
  %9928 = vmatpush.bf16.msra.mxu0 %v7425
  %9929 = vmatpush.bf16.msra.mxu0 %v7424
  %9930 = vmatpush.bf16.msra.mxu0 %v7423
  %9931 = vmatpush.bf16.msra.mxu0 %v7422
  %9932 = vmatpush.bf16.msra.mxu0 %v7421
  %9933 = vmatpush.bf16.msra.mxu0 %v7420
  %9934 = vmatpush.bf16.msra.mxu0 %v7419
  %9935 = vmatmul.bf16.gmra.mxu0 %v2423
  %v9936 = vpop.f32.mrf.mxu0
  %v9937 = vadd.f32 %v9924, %v9936
  %v9938 = vpop.f32.mrf.mxu0
  %9939 = vdwg.mxu0
  %9940 = vmatpush.bf16.msra.mxu0 %v7434
  %9941 = vmatpush.bf16.msra.mxu0 %v7433
  %9942 = vmatpush.bf16.msra.mxu0 %v7432
  %9943 = vmatpush.bf16.msra.mxu0 %v7431
  %9944 = vmatpush.bf16.msra.mxu0 %v7430
  %9945 = vmatpush.bf16.msra.mxu0 %v7429
  %9946 = vmatpush.bf16.msra.mxu0 %v7428
  %9947 = vmatpush.bf16.msra.mxu0 %v7427
  %9948 = vmatmul.bf16.gmra.mxu0 %v2424
  %v9949 = vpop.f32.mrf.mxu0
  %v9950 = vadd.f32 %v9937, %v9949
  %v9951 = vpop.f32.mrf.mxu0
  %9952 = vdwg.mxu0
  %9953 = vmatpush.bf16.msra.mxu0 %v7442
  %9954 = vmatpush.bf16.msra.mxu0 %v7441
  %9955 = vmatpush.bf16.msra.mxu0 %v7440
  %9956 = vmatpush.bf16.msra.mxu0 %v7439
  %9957 = vmatpush.bf16.msra.mxu0 %v7438
  %9958 = vmatpush.bf16.msra.mxu0 %v7437
  %9959 = vmatpush.bf16.msra.mxu0 %v7436
  %9960 = vmatpush.bf16.msra.mxu0 %v7435
  %9961 = vmatmul.bf16.gmra.mxu0 %v2425
  %v9962 = vpop.f32.mrf.mxu0
  %v9963 = vadd.f32 %v9950, %v9962
  %v9964 = vpop.f32.mrf.mxu0
  %9965 = vdwg.mxu0
  %9966 = vmatpush.bf16.msra.mxu0 %v7450
  %9967 = vmatpush.bf16.msra.mxu0 %v7449
  %9968 = vmatpush.bf16.msra.mxu0 %v7448
  %9969 = vmatpush.bf16.msra.mxu0 %v7447
  %9970 = vmatpush.bf16.msra.mxu0 %v7446
  %9971 = vmatpush.bf16.msra.mxu0 %v7445
  %9972 = vmatpush.bf16.msra.mxu0 %v7444
  %9973 = vmatpush.bf16.msra.mxu0 %v7443
  %9974 = vmatmul.bf16.gmra.mxu0 %v2426
  %v9975 = vpop.f32.mrf.mxu0
  %v9976 = vadd.f32 %v9963, %v9975
  %v9977 = vpop.f32.mrf.mxu0
  %9978 = vdwg.mxu0
  %9979 = vmatpush.bf16.msra.mxu0 %v7458
  %9980 = vmatpush.bf16.msra.mxu0 %v7457
  %9981 = vmatpush.bf16.msra.mxu0 %v7456
  %9982 = vmatpush.bf16.msra.mxu0 %v7455
  %9983 = vmatpush.bf16.msra.mxu0 %v7454
  %9984 = vmatpush.bf16.msra.mxu0 %v7453
  %9985 = vmatpush.bf16.msra.mxu0 %v7452
  %9986 = vmatpush.bf16.msra.mxu0 %v7451
  %9987 = vmatmul.bf16.gmra.mxu0 %v2427
  %v9988 = vpop.f32.mrf.mxu0
  %v9989 = vadd.f32 %v9976, %v9988
  %v9990 = vpop.f32.mrf.mxu0
  %9991 = vdwg.mxu0
  %9992 = vmatpush.bf16.msra.mxu0 %v7466
  %9993 = vmatpush.bf16.msra.mxu0 %v7465
  %9994 = vmatpush.bf16.msra.mxu0 %v7464
  %9995 = vmatpush.bf16.msra.mxu0 %v7463
  %9996 = vmatpush.bf16.msra.mxu0 %v7462
  %9997 = vmatpush.bf16.msra.mxu0 %v7461
  %9998 = vmatpush.bf16.msra.mxu0 %v7460
  %9999 = vmatpush.bf16.msra.mxu0 %v7459
  %10000 = vmatmul.bf16.gmra.mxu0 %v2428
  %v10001 = vpop.f32.mrf.mxu0
  %v10002 = vadd.f32 %v9989, %v10001
  %v10003 = vpop.f32.mrf.mxu0
  %10004 = vdwg.mxu0
  %10005 = vmatpush.bf16.msra.mxu0 %v7474
  %10006 = vmatpush.bf16.msra.mxu0 %v7473
  %10007 = vmatpush.bf16.msra.mxu0 %v7472
  %10008 = vmatpush.bf16.msra.mxu0 %v7471
  %10009 = vmatpush.bf16.msra.mxu0 %v7470
  %10010 = vmatpush.bf16.msra.mxu0 %v7469
  %10011 = vmatpush.bf16.msra.mxu0 %v7468
  %10012 = vmatpush.bf16.msra.mxu0 %v7467
  %10013 = vmatmul.bf16.gmra.mxu0 %v2429
  %v10014 = vpop.f32.mrf.mxu0
  %v10015 = vadd.f32 %v10002, %v10014
  %v10016 = vpop.f32.mrf.mxu0
  %10017 = vdwg.mxu0
  %10018 = vmatpush.bf16.msra.mxu0 %v7482
  %10019 = vmatpush.bf16.msra.mxu0 %v7481
  %10020 = vmatpush.bf16.msra.mxu0 %v7480
  %10021 = vmatpush.bf16.msra.mxu0 %v7479
  %10022 = vmatpush.bf16.msra.mxu0 %v7478
  %10023 = vmatpush.bf16.msra.mxu0 %v7477
  %10024 = vmatpush.bf16.msra.mxu0 %v7476
  %10025 = vmatpush.bf16.msra.mxu0 %v7475
  %10026 = vmatmul.bf16.gmra.mxu0 %v2430
  %v10027 = vpop.f32.mrf.mxu0
  %v10028 = vadd.f32 %v10015, %v10027
  %v10029 = vpop.f32.mrf.mxu0
  %10030 = vdwg.mxu0
  %10031 = vmatpush.bf16.msra.mxu0 %v7490
  %10032 = vmatpush.bf16.msra.mxu0 %v7489
  %10033 = vmatpush.bf16.msra.mxu0 %v7488
  %10034 = vmatpush.bf16.msra.mxu0 %v7487
  %10035 = vmatpush.bf16.msra.mxu0 %v7486
  %10036 = vmatpush.bf16.msra.mxu0 %v7485
  %10037 = vmatpush.bf16.msra.mxu0 %v7484
  %10038 = vmatpush.bf16.msra.mxu0 %v7483
  %10039 = vmatmul.bf16.gmra.mxu0 %v2431
  %v10040 = vpop.f32.mrf.mxu0
  %v10041 = vadd.f32 %v10028, %v10040
  %v10042 = vpop.f32.mrf.mxu0
  %10043 = vdwg.mxu0
  %10044 = vmatpush.bf16.msra.mxu0 %v7498
  %10045 = vmatpush.bf16.msra.mxu0 %v7497
  %10046 = vmatpush.bf16.msra.mxu0 %v7496
  %10047 = vmatpush.bf16.msra.mxu0 %v7495
  %10048 = vmatpush.bf16.msra.mxu0 %v7494
  %10049 = vmatpush.bf16.msra.mxu0 %v7493
  %10050 = vmatpush.bf16.msra.mxu0 %v7492
  %10051 = vmatpush.bf16.msra.mxu0 %v7491
  %10052 = vmatmul.bf16.gmra.mxu0 %v2432
  %v10053 = vpop.f32.mrf.mxu0
  %v10054 = vadd.f32 %v10041, %v10053
  %v10055 = vpop.f32.mrf.mxu0
  %10056 = vdwg.mxu0
  %10057 = vmatpush.bf16.msra.mxu0 %v7506
  %10058 = vmatpush.bf16.msra.mxu0 %v7505
  %10059 = vmatpush.bf16.msra.mxu0 %v7504
  %10060 = vmatpush.bf16.msra.mxu0 %v7503
  %10061 = vmatpush.bf16.msra.mxu0 %v7502
  %10062 = vmatpush.bf16.msra.mxu0 %v7501
  %10063 = vmatpush.bf16.msra.mxu0 %v7500
  %10064 = vmatpush.bf16.msra.mxu0 %v7499
  %10065 = vmatmul.bf16.gmra.mxu0 %v2433
  %v10066 = vpop.f32.mrf.mxu0
  %v10067 = vadd.f32 %v10054, %v10066
  %v10068 = vpop.f32.mrf.mxu0
  %10069 = vdwg.mxu0
  %10070 = vmatpush.bf16.msra.mxu0 %v7514
  %10071 = vmatpush.bf16.msra.mxu0 %v7513
  %10072 = vmatpush.bf16.msra.mxu0 %v7512
  %10073 = vmatpush.bf16.msra.mxu0 %v7511
  %10074 = vmatpush.bf16.msra.mxu0 %v7510
  %10075 = vmatpush.bf16.msra.mxu0 %v7509
  %10076 = vmatpush.bf16.msra.mxu0 %v7508
  %10077 = vmatpush.bf16.msra.mxu0 %v7507
  %10078 = vmatmul.bf16.gmra.mxu0 %v2434
  %v10079 = vpop.f32.mrf.mxu0
  %v10080 = vadd.f32 %v10067, %v10079
  %v10081 = vpop.f32.mrf.mxu0
  %10082 = vdwg.mxu0
  %10083 = vmatpush.bf16.msra.mxu0 %v7522
  %10084 = vmatpush.bf16.msra.mxu0 %v7521
  %10085 = vmatpush.bf16.msra.mxu0 %v7520
  %10086 = vmatpush.bf16.msra.mxu0 %v7519
  %10087 = vmatpush.bf16.msra.mxu0 %v7518
  %10088 = vmatpush.bf16.msra.mxu0 %v7517
  %10089 = vmatpush.bf16.msra.mxu0 %v7516
  %10090 = vmatpush.bf16.msra.mxu0 %v7515
  %10091 = vmatmul.bf16.gmra.mxu0 %v2435
  %v10092 = vpop.f32.mrf.mxu0
  %v10093 = vadd.f32 %v10080, %v10092
  %v10094 = vpop.f32.mrf.mxu0
  %10095 = vdwg.mxu0
  %10096 = vmatpush.bf16.msra.mxu0 %v7530
  %10097 = vmatpush.bf16.msra.mxu0 %v7529
  %10098 = vmatpush.bf16.msra.mxu0 %v7528
  %10099 = vmatpush.bf16.msra.mxu0 %v7527
  %10100 = vmatpush.bf16.msra.mxu0 %v7526
  %10101 = vmatpush.bf16.msra.mxu0 %v7525
  %10102 = vmatpush.bf16.msra.mxu0 %v7524
  %10103 = vmatpush.bf16.msra.mxu0 %v7523
  %10104 = vmatmul.bf16.gmra.mxu0 %v2436
  %v10105 = vpop.f32.mrf.mxu0
  %v10106 = vadd.f32 %v10093, %v10105
  %v10107 = vpop.f32.mrf.mxu0
  %10108 = vdwg.mxu0
  %10109 = vmatpush.bf16.msra.mxu0 %v7538
  %10110 = vmatpush.bf16.msra.mxu0 %v7537
  %10111 = vmatpush.bf16.msra.mxu0 %v7536
  %10112 = vmatpush.bf16.msra.mxu0 %v7535
  %10113 = vmatpush.bf16.msra.mxu0 %v7534
  %10114 = vmatpush.bf16.msra.mxu0 %v7533
  %10115 = vmatpush.bf16.msra.mxu0 %v7532
  %10116 = vmatpush.bf16.msra.mxu0 %v7531
  %10117 = vmatmul.bf16.gmra.mxu0 %v2437
  %v10118 = vpop.f32.mrf.mxu0
  %v10119 = vadd.f32 %v10106, %v10118
  %v10120 = vpop.f32.mrf.mxu0
  %10121 = vdwg.mxu0
  %10122 = vmatpush.bf16.msra.mxu0 %v7546
  %10123 = vmatpush.bf16.msra.mxu0 %v7545
  %10124 = vmatpush.bf16.msra.mxu0 %v7544
  %10125 = vmatpush.bf16.msra.mxu0 %v7543
  %10126 = vmatpush.bf16.msra.mxu0 %v7542
  %10127 = vmatpush.bf16.msra.mxu0 %v7541
  %10128 = vmatpush.bf16.msra.mxu0 %v7540
  %10129 = vmatpush.bf16.msra.mxu0 %v7539
  %10130 = vmatmul.bf16.gmra.mxu0 %v2438
  %v10131 = vpop.f32.mrf.mxu0
  %v10132 = vadd.f32 %v10119, %v10131
  %v10133 = vpop.f32.mrf.mxu0
  %10134 = vdwg.mxu0
  %10135 = vmatpush.bf16.msra.mxu0 %v7554
  %10136 = vmatpush.bf16.msra.mxu0 %v7553
  %10137 = vmatpush.bf16.msra.mxu0 %v7552
  %10138 = vmatpush.bf16.msra.mxu0 %v7551
  %10139 = vmatpush.bf16.msra.mxu0 %v7550
  %10140 = vmatpush.bf16.msra.mxu0 %v7549
  %10141 = vmatpush.bf16.msra.mxu0 %v7548
  %10142 = vmatpush.bf16.msra.mxu0 %v7547
  %10143 = vmatmul.bf16.gmra.mxu0 %v2439
  %v10144 = vpop.f32.mrf.mxu0
  %v10145 = vadd.f32 %v10132, %v10144
  %v10146 = vpop.f32.mrf.mxu0
  %10147 = vdwg.mxu0
  %10148 = vmatpush.bf16.msra.mxu0 %v7562
  %10149 = vmatpush.bf16.msra.mxu0 %v7561
  %10150 = vmatpush.bf16.msra.mxu0 %v7560
  %10151 = vmatpush.bf16.msra.mxu0 %v7559
  %10152 = vmatpush.bf16.msra.mxu0 %v7558
  %10153 = vmatpush.bf16.msra.mxu0 %v7557
  %10154 = vmatpush.bf16.msra.mxu0 %v7556
  %10155 = vmatpush.bf16.msra.mxu0 %v7555
  %10156 = vmatmul.bf16.gmra.mxu0 %v2440
  %v10157 = vpop.f32.mrf.mxu0
  %v10158 = vadd.f32 %v10145, %v10157
  %v10159 = vpop.f32.mrf.mxu0
  %10160 = vdwg.mxu0
  %10161 = vmatpush.bf16.msra.mxu0 %v7570
  %10162 = vmatpush.bf16.msra.mxu0 %v7569
  %10163 = vmatpush.bf16.msra.mxu0 %v7568
  %10164 = vmatpush.bf16.msra.mxu0 %v7567
  %10165 = vmatpush.bf16.msra.mxu0 %v7566
  %10166 = vmatpush.bf16.msra.mxu0 %v7565
  %10167 = vmatpush.bf16.msra.mxu0 %v7564
  %10168 = vmatpush.bf16.msra.mxu0 %v7563
  %10169 = vmatmul.bf16.gmra.mxu0 %v2441
  %v10170 = vpop.f32.mrf.mxu0
  %v10171 = vadd.f32 %v10158, %v10170
  %v10172 = vpop.f32.mrf.mxu0
  %10173 = vdwg.mxu0
  %10174 = vmatpush.bf16.msra.mxu0 %v7578
  %10175 = vmatpush.bf16.msra.mxu0 %v7577
  %10176 = vmatpush.bf16.msra.mxu0 %v7576
  %10177 = vmatpush.bf16.msra.mxu0 %v7575
  %10178 = vmatpush.bf16.msra.mxu0 %v7574
  %10179 = vmatpush.bf16.msra.mxu0 %v7573
  %10180 = vmatpush.bf16.msra.mxu0 %v7572
  %10181 = vmatpush.bf16.msra.mxu0 %v7571
  %10182 = vmatmul.bf16.gmra.mxu0 %v2442
  %v10183 = vpop.f32.mrf.mxu0
  %v10184 = vadd.f32 %v10171, %v10183
  %v10185 = vpop.f32.mrf.mxu0
  %10186 = vdwg.mxu0
  %10187 = vmatpush.bf16.msra.mxu0 %v7586
  %10188 = vmatpush.bf16.msra.mxu0 %v7585
  %10189 = vmatpush.bf16.msra.mxu0 %v7584
  %10190 = vmatpush.bf16.msra.mxu0 %v7583
  %10191 = vmatpush.bf16.msra.mxu0 %v7582
  %10192 = vmatpush.bf16.msra.mxu0 %v7581
  %10193 = vmatpush.bf16.msra.mxu0 %v7580
  %10194 = vmatpush.bf16.msra.mxu0 %v7579
  %10195 = vmatmul.bf16.gmra.mxu0 %v2443
  %v10196 = vpop.f32.mrf.mxu0
  %v10197 = vadd.f32 %v10184, %v10196
  %v10198 = vpop.f32.mrf.mxu0
  %10199 = vdwg.mxu0
  %10200 = vmatpush.bf16.msra.mxu0 %v7594
  %10201 = vmatpush.bf16.msra.mxu0 %v7593
  %10202 = vmatpush.bf16.msra.mxu0 %v7592
  %10203 = vmatpush.bf16.msra.mxu0 %v7591
  %10204 = vmatpush.bf16.msra.mxu0 %v7590
  %10205 = vmatpush.bf16.msra.mxu0 %v7589
  %10206 = vmatpush.bf16.msra.mxu0 %v7588
  %10207 = vmatpush.bf16.msra.mxu0 %v7587
  %10208 = vmatmul.bf16.gmra.mxu0 %v2444
  %v10209 = vpop.f32.mrf.mxu0
  %v10210 = vadd.f32 %v10197, %v10209
  %v10211 = vpop.f32.mrf.mxu0
  %10212 = vdwg.mxu0
  %10213 = vmatpush.bf16.msra.mxu0 %v7602
  %10214 = vmatpush.bf16.msra.mxu0 %v7601
  %10215 = vmatpush.bf16.msra.mxu0 %v7600
  %10216 = vmatpush.bf16.msra.mxu0 %v7599
  %10217 = vmatpush.bf16.msra.mxu0 %v7598
  %10218 = vmatpush.bf16.msra.mxu0 %v7597
  %10219 = vmatpush.bf16.msra.mxu0 %v7596
  %10220 = vmatpush.bf16.msra.mxu0 %v7595
  %10221 = vmatmul.bf16.gmra.mxu0 %v2445
  %v10222 = vpop.f32.mrf.mxu0
  %v10223 = vadd.f32 %v10210, %v10222
  %v10224 = vpop.f32.mrf.mxu0
  %10225 = vdwg.mxu0
  %10226 = vmatpush.bf16.msra.mxu0 %v7610
  %10227 = vmatpush.bf16.msra.mxu0 %v7609
  %10228 = vmatpush.bf16.msra.mxu0 %v7608
  %10229 = vmatpush.bf16.msra.mxu0 %v7607
  %10230 = vmatpush.bf16.msra.mxu0 %v7606
  %10231 = vmatpush.bf16.msra.mxu0 %v7605
  %10232 = vmatpush.bf16.msra.mxu0 %v7604
  %10233 = vmatpush.bf16.msra.mxu0 %v7603
  %10234 = vmatmul.bf16.gmra.mxu0 %v2446
  %v10235 = vpop.f32.mrf.mxu0
  %v10236 = vadd.f32 %v10223, %v10235
  %v10237 = vpop.f32.mrf.mxu0
  %10238 = vdwg.mxu0
  %10239 = vmatpush.bf16.msra.mxu0 %v7618
  %10240 = vmatpush.bf16.msra.mxu0 %v7617
  %10241 = vmatpush.bf16.msra.mxu0 %v7616
  %10242 = vmatpush.bf16.msra.mxu0 %v7615
  %10243 = vmatpush.bf16.msra.mxu0 %v7614
  %10244 = vmatpush.bf16.msra.mxu0 %v7613
  %10245 = vmatpush.bf16.msra.mxu0 %v7612
  %10246 = vmatpush.bf16.msra.mxu0 %v7611
  %10247 = vmatmul.bf16.gmra.mxu0 %v2447
  %v10248 = vpop.f32.mrf.mxu0
  %v10249 = vadd.f32 %v10236, %v10248
  %v10250 = vpop.f32.mrf.mxu0
  %10251 = vdwg.mxu0
  %10252 = vmatpush.bf16.msra.mxu0 %v7626
  %10253 = vmatpush.bf16.msra.mxu0 %v7625
  %10254 = vmatpush.bf16.msra.mxu0 %v7624
  %10255 = vmatpush.bf16.msra.mxu0 %v7623
  %10256 = vmatpush.bf16.msra.mxu0 %v7622
  %10257 = vmatpush.bf16.msra.mxu0 %v7621
  %10258 = vmatpush.bf16.msra.mxu0 %v7620
  %10259 = vmatpush.bf16.msra.mxu0 %v7619
  %10260 = vmatmul.bf16.gmra.mxu0 %v2448
  %v10261 = vpop.f32.mrf.mxu0
  %v10262 = vadd.f32 %v10249, %v10261
  %v10263 = vpop.f32.mrf.mxu0
  %10264 = vdwg.mxu0
  %10265 = vmatpush.bf16.msra.mxu0 %v7634
  %10266 = vmatpush.bf16.msra.mxu0 %v7633
  %10267 = vmatpush.bf16.msra.mxu0 %v7632
  %10268 = vmatpush.bf16.msra.mxu0 %v7631
  %10269 = vmatpush.bf16.msra.mxu0 %v7630
  %10270 = vmatpush.bf16.msra.mxu0 %v7629
  %10271 = vmatpush.bf16.msra.mxu0 %v7628
  %10272 = vmatpush.bf16.msra.mxu0 %v7627
  %10273 = vmatmul.bf16.gmra.mxu0 %v2449
  %v10274 = vpop.f32.mrf.mxu0
  %v10275 = vadd.f32 %v10262, %v10274
  %v10276 = vpop.f32.mrf.mxu0
  %10277 = vdwg.mxu0
  %10278 = vmatpush.bf16.msra.mxu0 %v7642
  %10279 = vmatpush.bf16.msra.mxu0 %v7641
  %10280 = vmatpush.bf16.msra.mxu0 %v7640
  %10281 = vmatpush.bf16.msra.mxu0 %v7639
  %10282 = vmatpush.bf16.msra.mxu0 %v7638
  %10283 = vmatpush.bf16.msra.mxu0 %v7637
  %10284 = vmatpush.bf16.msra.mxu0 %v7636
  %10285 = vmatpush.bf16.msra.mxu0 %v7635
  %10286 = vmatmul.bf16.gmra.mxu0 %v2450
  %v10287 = vpop.f32.mrf.mxu0
  %v10288 = vadd.f32 %v10275, %v10287
  %v10289 = vpop.f32.mrf.mxu0
  %10290 = vdwg.mxu0
  %10291 = vmatpush.bf16.msra.mxu0 %v7650
  %10292 = vmatpush.bf16.msra.mxu0 %v7649
  %10293 = vmatpush.bf16.msra.mxu0 %v7648
  %10294 = vmatpush.bf16.msra.mxu0 %v7647
  %10295 = vmatpush.bf16.msra.mxu0 %v7646
  %10296 = vmatpush.bf16.msra.mxu0 %v7645
  %10297 = vmatpush.bf16.msra.mxu0 %v7644
  %10298 = vmatpush.bf16.msra.mxu0 %v7643
  %10299 = vmatmul.bf16.gmra.mxu0 %v2451
  %v10300 = vpop.f32.mrf.mxu0
  %v10301 = vadd.f32 %v10288, %v10300
  %v10302 = vpop.f32.mrf.mxu0
  %10303 = vdwg.mxu0
  %10304 = vmatpush.bf16.msra.mxu0 %v7658
  %10305 = vmatpush.bf16.msra.mxu0 %v7657
  %10306 = vmatpush.bf16.msra.mxu0 %v7656
  %10307 = vmatpush.bf16.msra.mxu0 %v7655
  %10308 = vmatpush.bf16.msra.mxu0 %v7654
  %10309 = vmatpush.bf16.msra.mxu0 %v7653
  %10310 = vmatpush.bf16.msra.mxu0 %v7652
  %10311 = vmatpush.bf16.msra.mxu0 %v7651
  %10312 = vmatmul.bf16.gmra.mxu0 %v2452
  %v10313 = vpop.f32.mrf.mxu0
  %v10314 = vadd.f32 %v10301, %v10313
  %v10315 = vpop.f32.mrf.mxu0
  %10316 = vdwg.mxu0
  %10317 = vmatpush.bf16.msra.mxu0 %v7666
  %10318 = vmatpush.bf16.msra.mxu0 %v7665
  %10319 = vmatpush.bf16.msra.mxu0 %v7664
  %10320 = vmatpush.bf16.msra.mxu0 %v7663
  %10321 = vmatpush.bf16.msra.mxu0 %v7662
  %10322 = vmatpush.bf16.msra.mxu0 %v7661
  %10323 = vmatpush.bf16.msra.mxu0 %v7660
  %10324 = vmatpush.bf16.msra.mxu0 %v7659
  %10325 = vmatmul.bf16.gmra.mxu0 %v2453
  %v10326 = vpop.f32.mrf.mxu0
  %v10327 = vadd.f32 %v10314, %v10326
  %v10328 = vpop.f32.mrf.mxu0
  %10329 = vdwg.mxu0
  %10330 = vmatpush.bf16.msra.mxu0 %v7674
  %10331 = vmatpush.bf16.msra.mxu0 %v7673
  %10332 = vmatpush.bf16.msra.mxu0 %v7672
  %10333 = vmatpush.bf16.msra.mxu0 %v7671
  %10334 = vmatpush.bf16.msra.mxu0 %v7670
  %10335 = vmatpush.bf16.msra.mxu0 %v7669
  %10336 = vmatpush.bf16.msra.mxu0 %v7668
  %10337 = vmatpush.bf16.msra.mxu0 %v7667
  %10338 = vmatmul.bf16.gmra.mxu0 %v2454
  %v10339 = vpop.f32.mrf.mxu0
  %v10340 = vadd.f32 %v10327, %v10339
  %v10341 = vpop.f32.mrf.mxu0
  %10342 = vdwg.mxu0
  %10343 = vmatpush.bf16.msra.mxu0 %v7682
  %10344 = vmatpush.bf16.msra.mxu0 %v7681
  %10345 = vmatpush.bf16.msra.mxu0 %v7680
  %10346 = vmatpush.bf16.msra.mxu0 %v7679
  %10347 = vmatpush.bf16.msra.mxu0 %v7678
  %10348 = vmatpush.bf16.msra.mxu0 %v7677
  %10349 = vmatpush.bf16.msra.mxu0 %v7676
  %10350 = vmatpush.bf16.msra.mxu0 %v7675
  %10351 = vmatmul.bf16.gmra.mxu0 %v2455
  %v10352 = vpop.f32.mrf.mxu0
  %v10353 = vadd.f32 %v10340, %v10352
  %v10354 = vpop.f32.mrf.mxu0
  %10355 = vdwg.mxu0
  %10356 = vmatpush.bf16.msra.mxu0 %v7690
  %10357 = vmatpush.bf16.msra.mxu0 %v7689
  %10358 = vmatpush.bf16.msra.mxu0 %v7688
  %10359 = vmatpush.bf16.msra.mxu0 %v7687
  %10360 = vmatpush.bf16.msra.mxu0 %v7686
  %10361 = vmatpush.bf16.msra.mxu0 %v7685
  %10362 = vmatpush.bf16.msra.mxu0 %v7684
  %10363 = vmatpush.bf16.msra.mxu0 %v7683
  %10364 = vmatmul.bf16.gmra.mxu0 %v2456
  %v10365 = vpop.f32.mrf.mxu0
  %v10366 = vadd.f32 %v10353, %v10365
  %v10367 = vpop.f32.mrf.mxu0
  %10368 = vdwg.mxu0
  %10369 = vmatpush.bf16.msra.mxu0 %v7698
  %10370 = vmatpush.bf16.msra.mxu0 %v7697
  %10371 = vmatpush.bf16.msra.mxu0 %v7696
  %10372 = vmatpush.bf16.msra.mxu0 %v7695
  %10373 = vmatpush.bf16.msra.mxu0 %v7694
  %10374 = vmatpush.bf16.msra.mxu0 %v7693
  %10375 = vmatpush.bf16.msra.mxu0 %v7692
  %10376 = vmatpush.bf16.msra.mxu0 %v7691
  %10377 = vmatmul.bf16.gmra.mxu0 %v2457
  %v10378 = vpop.f32.mrf.mxu0
  %v10379 = vadd.f32 %v10366, %v10378
  %v10380 = vpop.f32.mrf.mxu0
  %10381 = vdwg.mxu0
  %10382 = vmatpush.bf16.msra.mxu0 %v7706
  %10383 = vmatpush.bf16.msra.mxu0 %v7705
  %10384 = vmatpush.bf16.msra.mxu0 %v7704
  %10385 = vmatpush.bf16.msra.mxu0 %v7703
  %10386 = vmatpush.bf16.msra.mxu0 %v7702
  %10387 = vmatpush.bf16.msra.mxu0 %v7701
  %10388 = vmatpush.bf16.msra.mxu0 %v7700
  %10389 = vmatpush.bf16.msra.mxu0 %v7699
  %10390 = vmatmul.bf16.gmra.mxu0 %v2458
  %v10391 = vpop.f32.mrf.mxu0
  %v10392 = vadd.f32 %v10379, %v10391
  %v10393 = vpop.f32.mrf.mxu0
  %10394 = vdwg.mxu0
  %v10395 = vmax.f32 %v10392, 0.0
  %v10396 = vld [vmem:[%s3] sm:$0xff]
  %v10397 = vmul.f32 %v10395, %v10396
  %v10398 = vpack.c.bf16 %v10397, %v10397
  %v10399 = vld [vmem:[%s4] sm:$0xf]
  %v10400 = vld [vmem:[%s4 + $0x4] sm:$0xf]
  %v10401 = vld [vmem:[%s4 + $0x8] sm:$0xf]
  %v10402 = vld [vmem:[%s4 + $0xc] sm:$0xf]
  %v10403 = vld [vmem:[%s4 + $0x10] sm:$0xf]
  %v10404 = vld [vmem:[%s4 + $0x14] sm:$0xf]
  %v10405 = vld [vmem:[%s4 + $0x18] sm:$0xf]
  %v10406 = vld [vmem:[%s4 + $0x1c] sm:$0xf]
  %v10407 = vld [vmem:[%s4 + $0x20] sm:$0xf]
  %v10408 = vld [vmem:[%s4 + $0x24] sm:$0xf]
  %v10409 = vld [vmem:[%s4 + $0x28] sm:$0xf]
  %v10410 = vld [vmem:[%s4 + $0x2c] sm:$0xf]
  %v10411 = vld [vmem:[%s4 + $0x30] sm:$0xf]
  %v10412 = vld [vmem:[%s4 + $0x34] sm:$0xf]
  %v10413 = vld [vmem:[%s4 + $0x38] sm:$0xf]
  %v10414 = vld [vmem:[%s4 + $0x3c] sm:$0xf]
  %v10415 = vld [vmem:[%s5] sm:$0x1]
  %v10417 = vperm.slane %v10415, 0
  %v10435 = vunpack.c.l.b16 %v10399
  %v10436 = vunpack.c.l.b16 %v10400
  %v10437 = vunpack.c.l.b16 %v10401
  %v10438 = vunpack.c.l.b16 %v10402
  %v10439 = vunpack.c.l.b16 %v10403
  %v10440 = vunpack.c.l.b16 %v10404
  %v10441 = vunpack.c.l.b16 %v10405
  %v10442 = vunpack.c.l.b16 %v10406
  %v10443 = vunpack.c.l.b16 %v10407
  %v10444 = vunpack.c.l.b16 %v10408
  %v10445 = vunpack.c.l.b16 %v10409
  %v10446 = vunpack.c.l.b16 %v10410
  %v10447 = vunpack.c.l.b16 %v10411
  %v10448 = vunpack.c.l.b16 %v10412
  %v10449 = vunpack.c.l.b16 %v10413
  %v10450 = vunpack.c.l.b16 %v10414
  %v10451 = vpack.c.b16 %v10436, %v10435
  %v10452 = vpack.c.b16 %v10438, %v10437
  %v10453 = vpack.c.b16 %v10440, %v10439
  %v10454 = vpack.c.b16 %v10442, %v10441
  %v10455 = vpack.c.b16 %v10444, %v10443
  %v10456 = vpack.c.b16 %v10446, %v10445
  %v10457 = vpack.c.b16 %v10448, %v10447
  %v10458 = vpack.c.b16 %v10450, %v10449
  %10467 = vmatpush.bf16.msra.mxu0 %v10458
  %10468 = vmatpush.bf16.msra.mxu0 %v10457
  %10469 = vmatpush.bf16.msra.mxu0 %v10456
  %10470 = vmatpush.bf16.msra.mxu0 %v10455
  %10471 = vmatpush.bf16.msra.mxu0 %v10454
  %10472 = vmatpush.bf16.msra.mxu0 %v10453
  %10473 = vmatpush.bf16.msra.mxu0 %v10452
  %10474 = vmatpush.bf16.msra.mxu0 %v10451
  %10475 = vmatmul.bf16.gmra.mxu0 %v10398
  %v10476 = vpop.f32.mrf.mxu0
  %v10477 = vadd.f32 %v10417, %v10476
  %v10478 = vpop.f32.mrf.mxu0
  %10479 = vdwg.mxu0
  %10480 = vst [vmem:[%s6] sm:$0xff] %v10477
  // Predicated region
  $region26: #{cnn_model_forward.5} parent=0 // pred_check
    _
  $region27: #{cnn_model_forward.5} parent=0 // pred_check_branch
    %10482 = sbr.rel (0) target = $region29
  $region28: #{cnn_model_forward.5} parent=0 // pred_region
    _
  $region29: #{cnn_model_forward.5} parent=0 // pred_fallthru
    _
  // Predicated region
  $region30: #{cnn_model_forward.5} parent=0 // pred_check
    _
  $region31: #{cnn_model_forward.5} parent=0 // pred_check_branch
    %10484 = sbr.rel (0) target = $region33
  $region32: #{cnn_model_forward.5} parent=0 // pred_region
    _
  $region33: #{cnn_model_forward.5} parent=0 // pred_fallthru
    _

</llo_original>
